<compile_context>
chip_gen: v6e
topology: v6e:2x2x1
jax: 0.10.0
libtpu: 0.0.40
codegen_flags: <defaults>
</compile_context>

<pallas_src>
import jax
import jax.numpy as jnp
from jax.experimental import pallas as pl
from jax.experimental.pallas import tpu as pltpu

H = W = 16
HW = H * W
CIN = 4
COUT = 8
KH = KW = 3
NUM_CLASSES = 10
NC_PAD = 128                 # lane-dense logits slab, sliced back to NUM_CLASSES
K_IN = CIN * H * W           # 1024  (flattened NCHW pixels per image)
N_CONV = H * W * COUT        # 2048  (flattened conv activations per image)
BT_MAX = 256                 # batch-tile cap; ~13 MiB total VMEM worst case


def _backbone_kernel(x_ref, wconv_ref, bc_ref, wfc_ref, bf_ref, out_ref):
    """One batch tile (BT images) per grid step.

    x_ref    : (1, BT, CIN*H*W)       bf16  raw flattened NCHW pixels
    wconv_ref: (CIN*H*W, H*W*COUT)    bf16  conv as a dense Toeplitz operator
    bc_ref   : (1, H*W*COUT)          f32   conv bias tiled over (h, w)
    wfc_ref  : (H*W*COUT, NC_PAD)     bf16  global-avg-pool (1/HW) + fc folded
    bf_ref   : (1, NC_PAD)            f32   fc bias (lane padded)
    out_ref  : (1, BT, NC_PAD)        bf16  logits (lane padded)
    """
    x = x_ref[0]                                                   # (BT, 1024)

    # Whole conv of the tile as ONE MXU matmul, f32 accumulation.
    y = jnp.dot(x, wconv_ref[...], preferred_element_type=jnp.float32)  # (BT, 2048)
    # Bias + ReLU on a fully lane-dense (BT, 2048) slab (VPU).
    y = jnp.maximum(y + bc_ref[...], 0.0)

    # Pool + fc folded into a second matmul -> lane-dense (BT, 128) logits.
    logits = jnp.dot(y.astype(jnp.bfloat16), wfc_ref[...],
                     preferred_element_type=jnp.float32) + bf_ref[...]
    out_ref[0] = logits.astype(out_ref.dtype)


def _choose_batch_tile(B):
    if B <= 4:
        return 1          # grid = B steps (>= 2 when B >= 2: both v7x TCs busy)
    # Aim for >= 4 grid steps (2 pipelined steps per v7x TensorCore) while
    # keeping the tile under BT_MAX so VMEM stays well below the 32 MiB limit.
    return max(1, min(BT_MAX, pl.cdiv(B, 4)))


def _build_conv_toeplitz(wc):
    """Dense (CIN*H*W, H*W*COUT) operator equal to the 3x3 'SAME' conv."""
    w_full = jnp.zeros((CIN, H, W, H, W, COUT), jnp.float32)
    for kh in range(KH):
        for kw in range(KW):
            # Ah[i, h] = 1 iff input row i == output row h + (kh - 1)
            ah = jnp.eye(H, H, k=-(kh - 1), dtype=jnp.float32)
            bw = jnp.eye(W, W, k=-(kw - 1), dtype=jnp.float32)
            w_full = w_full + jnp.einsum('ih,jw,dc->dijhwc', ah, bw,
                                         wc[kh, kw].astype(jnp.float32))
    # rows: cin*H*W + i*W + j  (NCHW flatten)   cols: (h*W + w)*COUT + c
    return w_full.reshape(K_IN, N_CONV)


def custom_model_forward(x_nchw, params):
    """Forward of CustomModel: x -> model(x) -> logits (B, NUM_CLASSES)."""
    wc, bc, wf, bf = params
    B = x_nchw.shape[0]

    bt = _choose_batch_tile(B)
    grid_b = pl.cdiv(B, bt)
    b_pad = grid_b * bt

    # ---- XLA glue: flatten NCHW pixels (no transpose, no im2col), bf16 cast --
    x_flat = x_nchw.reshape(B, K_IN)
    if b_pad != B:
        x_flat = jnp.pad(x_flat, ((0, b_pad - B), (0, 0)))
    x_tiles = x_flat.reshape(grid_b, bt, K_IN).astype(jnp.bfloat16)

    # ---- fold the whole backbone into two GEMM operands ----
    w_conv = _build_conv_toeplitz(wc).astype(jnp.bfloat16)            # (1024, 2048)
    bc_full = jnp.tile(bc.astype(jnp.float32), HW).reshape(1, N_CONV)  # (1, 2048)
    w_fc = jnp.zeros((N_CONV, NC_PAD), jnp.float32).at[:, :NUM_CLASSES].set(
        jnp.tile(wf.astype(jnp.float32) / float(HW), (HW, 1))).astype(jnp.bfloat16)
    bf_p = jnp.zeros((1, NC_PAD), jnp.float32).at[0, :NUM_CLASSES].set(
        bf.astype(jnp.float32))

    flops = 2 * b_pad * K_IN * N_CONV + 2 * b_pad * N_CONV * NC_PAD
    bytes_accessed = (b_pad * K_IN * 2 + K_IN * N_CONV * 2 + N_CONV * 4
                      + N_CONV * NC_PAD * 2 + NC_PAD * 4 + b_pad * NC_PAD * 2)

    out = pl.pallas_call(
        _backbone_kernel,
        out_shape=jax.ShapeDtypeStruct((grid_b, bt, NC_PAD), jnp.bfloat16),
        grid_spec=pltpu.PrefetchScalarGridSpec(
            num_scalar_prefetch=0,
            grid=(grid_b,),
            in_specs=[
                pl.BlockSpec((1, bt, K_IN), lambda b: (b, 0, 0)),
                # Constant index_maps: weights DMA'd once and stay resident.
                pl.BlockSpec((K_IN, N_CONV), lambda b: (0, 0)),
                pl.BlockSpec((1, N_CONV), lambda b: (0, 0)),
                pl.BlockSpec((N_CONV, NC_PAD), lambda b: (0, 0)),
                pl.BlockSpec((1, NC_PAD), lambda b: (0, 0)),
            ],
            out_specs=pl.BlockSpec((1, bt, NC_PAD), lambda b: (b, 0, 0)),
        ),
        compiler_params=pltpu.CompilerParams(
            dimension_semantics=("parallel",),
            vmem_limit_bytes=32 * 1024 * 1024),
        cost_estimate=pl.CostEstimate(flops=flops, transcendentals=0,
                                      bytes_accessed=bytes_accessed),
    )(x_tiles, w_conv, bc_full, w_fc, bf_p)

    return out.reshape(b_pad, NC_PAD)[:B, :NUM_CLASSES].astype(jnp.float32)


def reference_forward(x_nchw, params):
    """Pure-JAX f32 reference for correctness check."""
    wc, bc, wf, bf = params
    x = jnp.transpose(x_nchw, (0, 2, 3, 1)).astype(jnp.float32)
    y = jax.lax.conv_general_dilated(
        x, wc, window_strides=(1, 1), padding='SAME',
        dimension_numbers=('NHWC', 'HWIO', 'NHWC')) + bc
    y = jnp.maximum(y, 0.0)
    pooled = y.mean(axis=(1, 2))
    return pooled @ wf + bf


def init_params(key):
    k1, k2, k3, k4 = jax.random.split(key, 4)
    wc = jax.random.normal(k1, (KH, KW, CIN, COUT), jnp.float32) * 0.1
    bc = jax.random.normal(k2, (COUT,), jnp.float32) * 0.01
    wf = jax.random.normal(k3, (COUT, NUM_CLASSES), jnp.float32) * 0.1
    bf = jax.random.normal(k4, (NUM_CLASSES,), jnp.float32) * 0.01
    return wc, bc, wf, bf


if __name__ == "__main__":
    key = jax.random.PRNGKey(0)
    kx, kp = jax.random.split(key)
    # PyTorch-convention NCHW input: batch=2, channels=4, spatial=16x16
    x = jax.random.normal(kx, (2, CIN, H, W), jnp.float32)
    params = init_params(kp)

    fwd = jax.jit(custom_model_forward)
    out = jax.block_until_ready(fwd(x, params))

    ref = reference_forward(x, params)
    assert out.shape == (2, NUM_CLASSES)
    # bf16 GEMM inputs / bf16 logits slab vs f32 reference -> modest tolerance
    assert jnp.allclose(out, ref, atol=1e-2, rtol=1e-2), "mismatch vs reference"

    print("KERNEL_OK")
</pallas_src>

<mosaic_0001>
module attributes {stable_mosaic.version = 11 : i64} {
  func.func @_backbone_kernel(%arg0: i32, %arg1: memref<1x1x1024xbf16, #tpu.memory_space<vmem>>, %arg2: memref<1024x2048xbf16, #tpu.memory_space<vmem>>, %arg3: memref<1x2048xf32, #tpu.memory_space<vmem>>, %arg4: memref<2048x128xbf16, #tpu.memory_space<vmem>>, %arg5: memref<1x128xf32, #tpu.memory_space<vmem>>, %arg6: memref<1x1x128xbf16, #tpu.memory_space<vmem>>) attributes {dimension_semantics = [#tpu.dimension_semantics<parallel>], iteration_bounds = array<i64: 2>, scalar_prefetch = 0 : i64, scratch_operands = 0 : i64, tpu.core_type = #tpu.core_type<tc>, window_params = [{transform_indices = @transform_0, window_bounds = array<i64: 1, 1, 1024>}, {pipeline_mode = #tpu.pipeline_mode<synchronous>, transform_indices = @transform_1, window_bounds = array<i64: 1024, 2048>}, {pipeline_mode = #tpu.pipeline_mode<synchronous>, transform_indices = @transform_2, window_bounds = array<i64: 1, 2048>}, {pipeline_mode = #tpu.pipeline_mode<synchronous>, transform_indices = @transform_3, window_bounds = array<i64: 2048, 128>}, {pipeline_mode = #tpu.pipeline_mode<synchronous>, transform_indices = @transform_4, window_bounds = array<i64: 1, 128>}, {transform_indices = @transform_5, window_bounds = array<i64: 1, 1, 128>}]} {
    %c0 = arith.constant 0 : index
    %c0_0 = arith.constant 0 : index
    %c0_1 = arith.constant 0 : index
    %0 = vector.load %arg1[%c0, %c0_0, %c0_1] : memref<1x1x1024xbf16, #tpu.memory_space<vmem>>, vector<1x1x1024xbf16>
    %1 = vector.shape_cast %0 : vector<1x1x1024xbf16> to vector<1x1024xbf16>
    %c0_2 = arith.constant 0 : index
    %c0_3 = arith.constant 0 : index
    %2 = vector.load %arg2[%c0_2, %c0_3] : memref<1024x2048xbf16, #tpu.memory_space<vmem>>, vector<1024x2048xbf16>
    %cst = arith.constant dense<0.000000e+00> : vector<1x2048xf32>
    %3 = tpu.matmul %1, %2, %cst {dimension_numbers = #tpu.dot_dimension_numbers<[1], [0], [0], [1], [0, 0, 1, 1], [], []>} : vector<1x1024xbf16>, vector<1024x2048xbf16>, vector<1x2048xf32> -> vector<1x2048xf32>
    %c0_4 = arith.constant 0 : index
    %c0_5 = arith.constant 0 : index
    %4 = vector.load %arg3[%c0_4, %c0_5] : memref<1x2048xf32, #tpu.memory_space<vmem>>, vector<1x2048xf32>
    %5 = arith.addf %3, %4 : vector<1x2048xf32>
    %cst_6 = arith.constant 0.000000e+00 : f32
    %6 = vector.broadcast %cst_6 : f32 to vector<1x2048xf32>
    %7 = arith.maximumf %5, %6 : vector<1x2048xf32>
    %8 = arith.truncf %7 : vector<1x2048xf32> to vector<1x2048xbf16>
    %c0_7 = arith.constant 0 : index
    %c0_8 = arith.constant 0 : index
    %9 = vector.load %arg4[%c0_7, %c0_8] : memref<2048x128xbf16, #tpu.memory_space<vmem>>, vector<2048x128xbf16>
    %cst_9 = arith.constant dense<0.000000e+00> : vector<1x128xf32>
    %10 = tpu.matmul %8, %9, %cst_9 {dimension_numbers = #tpu.dot_dimension_numbers<[1], [0], [0], [1], [0, 0, 1, 1], [], []>} : vector<1x2048xbf16>, vector<2048x128xbf16>, vector<1x128xf32> -> vector<1x128xf32>
    %c0_10 = arith.constant 0 : index
    %c0_11 = arith.constant 0 : index
    %11 = vector.load %arg5[%c0_10, %c0_11] : memref<1x128xf32, #tpu.memory_space<vmem>>, vector<1x128xf32>
    %12 = arith.addf %10, %11 : vector<1x128xf32>
    %13 = arith.truncf %12 : vector<1x128xf32> to vector<1x128xbf16>
    %c0_12 = arith.constant 0 : index
    %c0_13 = arith.constant 0 : index
    %c0_14 = arith.constant 0 : index
    %14 = vector.load %arg6[%c0_12, %c0_13, %c0_14] : memref<1x1x128xbf16, #tpu.memory_space<vmem>>, vector<1x1x128xbf16>
    %15 = vector.shape_cast %14 : vector<1x1x128xbf16> to vector<1x128xbf16>
    %16 = vector.shape_cast %13 : vector<1x128xbf16> to vector<1x1x128xbf16>
    tpu.vector_store %arg6[%c0_12, %c0_13, %c0_14], %16 {strides = array<i32>} : memref<1x1x128xbf16, #tpu.memory_space<vmem>>, vector<1x1x128xbf16>,
    return
  }
  func.func @transform_0(%arg0: i32) -> (i32, i32, i32) {
    %c0_i32 = arith.constant 0 : i32
    %c0_i32_0 = arith.constant 0 : i32
    %c0_i32_1 = arith.constant 0 : i32
    return %arg0, %c0_i32, %c0_i32_0 : i32, i32, i32
  }
  func.func @transform_1(%arg0: i32) -> (i32, i32) {
    %c0_i32 = arith.constant 0 : i32
    %c0_i32_0 = arith.constant 0 : i32
    %c0_i32_1 = arith.constant 0 : i32
    return %c0_i32, %c0_i32_0 : i32, i32
  }
  func.func @transform_2(%arg0: i32) -> (i32, i32) {
    %c0_i32 = arith.constant 0 : i32
    %c0_i32_0 = arith.constant 0 : i32
    %c0_i32_1 = arith.constant 0 : i32
    return %c0_i32, %c0_i32_0 : i32, i32
  }
  func.func @transform_3(%arg0: i32) -> (i32, i32) {
    %c0_i32 = arith.constant 0 : i32
    %c0_i32_0 = arith.constant 0 : i32
    %c0_i32_1 = arith.constant 0 : i32
    return %c0_i32, %c0_i32_0 : i32, i32
  }
  func.func @transform_4(%arg0: i32) -> (i32, i32) {
    %c0_i32 = arith.constant 0 : i32
    %c0_i32_0 = arith.constant 0 : i32
    %c0_i32_1 = arith.constant 0 : i32
    return %c0_i32, %c0_i32_0 : i32, i32
  }
  func.func @transform_5(%arg0: i32) -> (i32, i32, i32) {
    %c0_i32 = arith.constant 0 : i32
    %c0_i32_0 = arith.constant 0 : i32
    %c0_i32_1 = arith.constant 0 : i32
    return %arg0, %c0_i32, %c0_i32_0 : i32, i32, i32
  }
}

</mosaic_0001>

<llo_original>
// kernel: tile.13
$region0: #{tile.13}
  #allocation0 [shape = 's32[1]{0}', space=sflag, size = 0x4, scoped, tag = 'scoped memory for tile.13']
  %s0 = inlined_call_operand.vmem [shape: f32[8], index: 0, kind: input, shape index: {}]
  %s1 = inlined_call_operand.vmem [shape: f32[256,8], index: 1, kind: output, shape index: {}]
  // Predicated region
  $region2: #{tile.13} parent=0 // pred_check
    _
  $region3: #{tile.13} parent=0 // pred_check_branch
    %3 = sbr.rel (0) target = $region5
  $region4: #{tile.13} parent=0 // pred_region
    _
  $region5: #{tile.13} parent=0 // pred_fallthru
    _
  %v4 = vld [vmem:[%s0] ss:$0 sm:$0xff]
  %5 = vst [vmem:[%s1] sm:$0xff] %v4
  %s6 = scalar_lea.vmem %s1, 8
  %7 = vst [vmem:[%s6] sm:$0xff] %v4
  %s8 = scalar_lea.vmem %s1, 16
  %9 = vst [vmem:[%s8] sm:$0xff] %v4
  %s10 = scalar_lea.vmem %s1, 24
  %11 = vst [vmem:[%s10] sm:$0xff] %v4
  %s12 = scalar_lea.vmem %s1, 32
  %13 = vst [vmem:[%s12] sm:$0xff] %v4
  %s14 = scalar_lea.vmem %s1, 40
  %15 = vst [vmem:[%s14] sm:$0xff] %v4
  %s16 = scalar_lea.vmem %s1, 48
  %17 = vst [vmem:[%s16] sm:$0xff] %v4
  %s18 = scalar_lea.vmem %s1, 56
  %19 = vst [vmem:[%s18] sm:$0xff] %v4
  %s20 = scalar_lea.vmem %s1, 64
  %21 = vst [vmem:[%s20] sm:$0xff] %v4
  %s22 = scalar_lea.vmem %s1, 72
  %23 = vst [vmem:[%s22] sm:$0xff] %v4
  %s24 = scalar_lea.vmem %s1, 80
  %25 = vst [vmem:[%s24] sm:$0xff] %v4
  %s26 = scalar_lea.vmem %s1, 88
  %27 = vst [vmem:[%s26] sm:$0xff] %v4
  %s28 = scalar_lea.vmem %s1, 96
  %29 = vst [vmem:[%s28] sm:$0xff] %v4
  %s30 = scalar_lea.vmem %s1, 104
  %31 = vst [vmem:[%s30] sm:$0xff] %v4
  %s32 = scalar_lea.vmem %s1, 112
  %33 = vst [vmem:[%s32] sm:$0xff] %v4
  %s34 = scalar_lea.vmem %s1, 120
  %35 = vst [vmem:[%s34] sm:$0xff] %v4
  %s36 = scalar_lea.vmem %s1, 128
  %37 = vst [vmem:[%s36] sm:$0xff] %v4
  %s38 = scalar_lea.vmem %s1, 136
  %39 = vst [vmem:[%s38] sm:$0xff] %v4
  %s40 = scalar_lea.vmem %s1, 144
  %41 = vst [vmem:[%s40] sm:$0xff] %v4
  %s42 = scalar_lea.vmem %s1, 152
  %43 = vst [vmem:[%s42] sm:$0xff] %v4
  %s44 = scalar_lea.vmem %s1, 160
  %45 = vst [vmem:[%s44] sm:$0xff] %v4
  %s46 = scalar_lea.vmem %s1, 168
  %47 = vst [vmem:[%s46] sm:$0xff] %v4
  %s48 = scalar_lea.vmem %s1, 176
  %49 = vst [vmem:[%s48] sm:$0xff] %v4
  %s50 = scalar_lea.vmem %s1, 184
  %51 = vst [vmem:[%s50] sm:$0xff] %v4
  %s52 = scalar_lea.vmem %s1, 192
  %53 = vst [vmem:[%s52] sm:$0xff] %v4
  %s54 = scalar_lea.vmem %s1, 200
  %55 = vst [vmem:[%s54] sm:$0xff] %v4
  %s56 = scalar_lea.vmem %s1, 208
  %57 = vst [vmem:[%s56] sm:$0xff] %v4
  %s58 = scalar_lea.vmem %s1, 216
  %59 = vst [vmem:[%s58] sm:$0xff] %v4
  %s60 = scalar_lea.vmem %s1, 224
  %61 = vst [vmem:[%s60] sm:$0xff] %v4
  %s62 = scalar_lea.vmem %s1, 232
  %63 = vst [vmem:[%s62] sm:$0xff] %v4
  %s64 = scalar_lea.vmem %s1, 240
  %65 = vst [vmem:[%s64] sm:$0xff] %v4
  %s66 = scalar_lea.vmem %s1, 248
  %67 = vst [vmem:[%s66] sm:$0xff] %v4

// kernel: tile.14
$region0: #{tile.14}
  %s0 = inlined_call_operand.vmem [shape: f32[256,8], index: 0, kind: input, shape index: {}]
  %s1 = inlined_call_operand.vmem [shape: f32[1,2048], index: 1, kind: output, shape index: {}]
  $region1: #{tile.14} parent=0
    #allocation0 [shape = 'u8[65536]{0}', space=vmem, size = 0x10000, scoped, tag = 'scoped mem for output reshape']
    %s2 = smov 3
    %v3 = vld [vmem:[%s0] ss:$16 sm:%s2]
    %s4 = smov 12
    %v5 = vld [vmem:[%s0] ss:$16 sm:%s4]
    %vm6 = vcmask 1043458
    %v7 = vsel %vm6, %v5, %v3
    %s8 = smov 48
    %v9 = vld [vmem:[%s0] ss:$16 sm:%s8]
    %vm10 = vcmask 1045508
    %v11 = vsel %vm10, %v9, %v7
    %s12 = smov 192
    %v13 = vld [vmem:[%s0] ss:$16 sm:%s12]
    %vm14 = vcmask 1047558
    %v15 = vsel %vm14, %v13, %v11
    %vm16 = vcmask 64512
    %17 = vst.msk [vmem:[#allocation0] ss:$8 sm:$0xf] %vm16, %v15
    %18 = vst.msk [vmem:[#allocation0] ss:$8 sm:$0xf0] %vm16, %v15
    %s19 = scalar_lea.vmem %s0, 128
    %s20 = smov 3
    %v21 = vld [vmem:[%s19] ss:$16 sm:%s20]
    %s22 = scalar_lea.vmem %s0, 128
    %s23 = smov 12
    %v24 = vld [vmem:[%s22] ss:$16 sm:%s23]
    %vm25 = vcmask 1043458
    %v26 = vsel %vm25, %v24, %v21
    %s27 = scalar_lea.vmem %s0, 128
    %s28 = smov 48
    %v29 = vld [vmem:[%s27] ss:$16 sm:%s28]
    %vm30 = vcmask 1045508
    %v31 = vsel %vm30, %v29, %v26
    %s32 = scalar_lea.vmem %s0, 128
    %s33 = smov 192
    %v34 = vld [vmem:[%s32] ss:$16 sm:%s33]
    %vm35 = vcmask 1047558
    %v36 = vsel %vm35, %v34, %v31
    %vm37 = vcmask 64512
    %s38 = scalar_lea.vmem [#allocation0], 64
    %39 = vst.msk [vmem:[%s38] ss:$8 sm:$0xf] %vm37, %v36
    %s40 = scalar_lea.vmem [#allocation0], 64
    %41 = vst.msk [vmem:[%s40] ss:$8 sm:$0xf0] %vm37, %v36
    %s42 = scalar_lea.vmem %s0, 15
    %s43 = smov 3
    %v44 = vld [vmem:[%s42] ss:$16 sm:%s43]
    %s45 = scalar_lea.vmem %s0, 15
    %s46 = smov 12
    %v47 = vld [vmem:[%s45] ss:$16 sm:%s46]
    %vm48 = vcmask 1043458
    %v49 = vsel %vm48, %v47, %v44
    %s50 = scalar_lea.vmem %s0, 15
    %s51 = smov 48
    %v52 = vld [vmem:[%s50] ss:$16 sm:%s51]
    %vm53 = vcmask 1045508
    %v54 = vsel %vm53, %v52, %v49
    %s55 = scalar_lea.vmem %s0, 15
    %s56 = smov 192
    %v57 = vld [vmem:[%s55] ss:$16 sm:%s56]
    %vm58 = vcmask 1047558
    %v59 = vsel %vm58, %v57, %v54
    %60 = vrot.lane.b32.xlu0 %v59, 120
    %v61 = vpop.permute.xlu0 %60
    %vm62 = vcmask 1048512
    %63 = vst.msk [vmem:[#allocation0] ss:$8 sm:$0xf] %vm62, %v61
    %64 = vst.msk [vmem:[#allocation0] ss:$8 sm:$0xf0] %vm62, %v61
    %s65 = scalar_lea.vmem %s0, 143
    %s66 = smov 3
    %v67 = vld [vmem:[%s65] ss:$16 sm:%s66]
    %s68 = scalar_lea.vmem %s0, 143
    %s69 = smov 12
    %v70 = vld [vmem:[%s68] ss:$16 sm:%s69]
    %vm71 = vcmask 1043458
    %v72 = vsel %vm71, %v70, %v67
    %s73 = scalar_lea.vmem %s0, 143
    %s74 = smov 48
    %v75 = vld [vmem:[%s73] ss:$16 sm:%s74]
    %vm76 = vcmask 1045508
    %v77 = vsel %vm76, %v75, %v72
    %s78 = scalar_lea.vmem %s0, 143
    %s79 = smov 192
    %v80 = vld [vmem:[%s78] ss:$16 sm:%s79]
    %vm81 = vcmask 1047558
    %v82 = vsel %vm81, %v80, %v77
    %83 = vrot.lane.b32.xlu0 %v82, 120
    %v84 = vpop.permute.xlu0 %83
    %vm85 = vcmask 1048512
    %s86 = scalar_lea.vmem [#allocation0], 64
    %87 = vst.msk [vmem:[%s86] ss:$8 sm:$0xf] %vm85, %v84
    %s88 = scalar_lea.vmem [#allocation0], 64
    %89 = vst.msk [vmem:[%s88] ss:$8 sm:$0xf0] %vm85, %v84
    %s90 = scalar_lea.vmem %s0, 14
    %s91 = smov 3
    %v92 = vld [vmem:[%s90] ss:$16 sm:%s91]
    %s93 = scalar_lea.vmem %s0, 14
    %s94 = smov 12
    %v95 = vld [vmem:[%s93] ss:$16 sm:%s94]
    %vm96 = vcmask 1043458
    %v97 = vsel %vm96, %v95, %v92
    %s98 = scalar_lea.vmem %s0, 14
    %s99 = smov 48
    %v100 = vld [vmem:[%s98] ss:$16 sm:%s99]
    %vm101 = vcmask 1045508
    %v102 = vsel %vm101, %v100, %v97
    %s103 = scalar_lea.vmem %s0, 14
    %s104 = smov 192
    %v105 = vld [vmem:[%s103] ss:$16 sm:%s104]
    %vm106 = vcmask 1047558
    %v107 = vsel %vm106, %v105, %v102
    %108 = vrot.lane.b32.xlu0 %v107, 112
    %v109 = vpop.permute.xlu0 %108
    %vm110 = vcmask 982912
    %111 = vst.msk [vmem:[#allocation0] ss:$8 sm:$0xf] %vm110, %v109
    %112 = vst.msk [vmem:[#allocation0] ss:$8 sm:$0xf0] %vm110, %v109
    %s113 = scalar_lea.vmem %s0, 142
    %s114 = smov 3
    %v115 = vld [vmem:[%s113] ss:$16 sm:%s114]
    %s116 = scalar_lea.vmem %s0, 142
    %s117 = smov 12
    %v118 = vld [vmem:[%s116] ss:$16 sm:%s117]
    %vm119 = vcmask 1043458
    %v120 = vsel %vm119, %v118, %v115
    %s121 = scalar_lea.vmem %s0, 142
    %s122 = smov 48
    %v123 = vld [vmem:[%s121] ss:$16 sm:%s122]
    %vm124 = vcmask 1045508
    %v125 = vsel %vm124, %v123, %v120
    %s126 = scalar_lea.vmem %s0, 142
    %s127 = smov 192
    %v128 = vld [vmem:[%s126] ss:$16 sm:%s127]
    %vm129 = vcmask 1047558
    %v130 = vsel %vm129, %v128, %v125
    %131 = vrot.lane.b32.xlu0 %v130, 112
    %v132 = vpop.permute.xlu0 %131
    %vm133 = vcmask 982912
    %s134 = scalar_lea.vmem [#allocation0], 64
    %135 = vst.msk [vmem:[%s134] ss:$8 sm:$0xf] %vm133, %v132
    %s136 = scalar_lea.vmem [#allocation0], 64
    %137 = vst.msk [vmem:[%s136] ss:$8 sm:$0xf0] %vm133, %v132
    %s138 = scalar_lea.vmem %s0, 13
    %s139 = smov 3
    %v140 = vld [vmem:[%s138] ss:$16 sm:%s139]
    %s141 = scalar_lea.vmem %s0, 13
    %s142 = smov 12
    %v143 = vld [vmem:[%s141] ss:$16 sm:%s142]
    %vm144 = vcmask 1043458
    %v145 = vsel %vm144, %v143, %v140
    %s146 = scalar_lea.vmem %s0, 13
    %s147 = smov 48
    %v148 = vld [vmem:[%s146] ss:$16 sm:%s147]
    %vm149 = vcmask 1045508
    %v150 = vsel %vm149, %v148, %v145
    %s151 = scalar_lea.vmem %s0, 13
    %s152 = smov 192
    %v153 = vld [vmem:[%s151] ss:$16 sm:%s152]
    %vm154 = vcmask 1047558
    %v155 = vsel %vm154, %v153, %v150
    %156 = vrot.lane.b32.xlu0 %v155, 104
    %v157 = vpop.permute.xlu0 %156
    %vm158 = vcmask 917312
    %159 = vst.msk [vmem:[#allocation0] ss:$8 sm:$0xf] %vm158, %v157
    %160 = vst.msk [vmem:[#allocation0] ss:$8 sm:$0xf0] %vm158, %v157
    %s161 = scalar_lea.vmem %s0, 141
    %s162 = smov 3
    %v163 = vld [vmem:[%s161] ss:$16 sm:%s162]
    %s164 = scalar_lea.vmem %s0, 141
    %s165 = smov 12
    %v166 = vld [vmem:[%s164] ss:$16 sm:%s165]
    %vm167 = vcmask 1043458
    %v168 = vsel %vm167, %v166, %v163
    %s169 = scalar_lea.vmem %s0, 141
    %s170 = smov 48
    %v171 = vld [vmem:[%s169] ss:$16 sm:%s170]
    %vm172 = vcmask 1045508
    %v173 = vsel %vm172, %v171, %v168
    %s174 = scalar_lea.vmem %s0, 141
    %s175 = smov 192
    %v176 = vld [vmem:[%s174] ss:$16 sm:%s175]
    %vm177 = vcmask 1047558
    %v178 = vsel %vm177, %v176, %v173
    %179 = vrot.lane.b32.xlu0 %v178, 104
    %v180 = vpop.permute.xlu0 %179
    %vm181 = vcmask 917312
    %s182 = scalar_lea.vmem [#allocation0], 64
    %183 = vst.msk [vmem:[%s182] ss:$8 sm:$0xf] %vm181, %v180
    %s184 = scalar_lea.vmem [#allocation0], 64
    %185 = vst.msk [vmem:[%s184] ss:$8 sm:$0xf0] %vm181, %v180
    %s186 = scalar_lea.vmem %s0, 12
    %s187 = smov 3
    %v188 = vld [vmem:[%s186] ss:$16 sm:%s187]
    %s189 = scalar_lea.vmem %s0, 12
    %s190 = smov 12
    %v191 = vld [vmem:[%s189] ss:$16 sm:%s190]
    %vm192 = vcmask 1043458
    %v193 = vsel %vm192, %v191, %v188
    %s194 = scalar_lea.vmem %s0, 12
    %s195 = smov 48
    %v196 = vld [vmem:[%s194] ss:$16 sm:%s195]
    %vm197 = vcmask 1045508
    %v198 = vsel %vm197, %v196, %v193
    %s199 = scalar_lea.vmem %s0, 12
    %s200 = smov 192
    %v201 = vld [vmem:[%s199] ss:$16 sm:%s200]
    %vm202 = vcmask 1047558
    %v203 = vsel %vm202, %v201, %v198
    %204 = vrot.lane.b32.xlu0 %v203, 96
    %v205 = vpop.permute.xlu0 %204
    %vm206 = vcmask 851712
    %207 = vst.msk [vmem:[#allocation0] ss:$8 sm:$0xf] %vm206, %v205
    %208 = vst.msk [vmem:[#allocation0] ss:$8 sm:$0xf0] %vm206, %v205
    %s209 = scalar_lea.vmem %s0, 140
    %s210 = smov 3
    %v211 = vld [vmem:[%s209] ss:$16 sm:%s210]
    %s212 = scalar_lea.vmem %s0, 140
    %s213 = smov 12
    %v214 = vld [vmem:[%s212] ss:$16 sm:%s213]
    %vm215 = vcmask 1043458
    %v216 = vsel %vm215, %v214, %v211
    %s217 = scalar_lea.vmem %s0, 140
    %s218 = smov 48
    %v219 = vld [vmem:[%s217] ss:$16 sm:%s218]
    %vm220 = vcmask 1045508
    %v221 = vsel %vm220, %v219, %v216
    %s222 = scalar_lea.vmem %s0, 140
    %s223 = smov 192
    %v224 = vld [vmem:[%s222] ss:$16 sm:%s223]
    %vm225 = vcmask 1047558
    %v226 = vsel %vm225, %v224, %v221
    %227 = vrot.lane.b32.xlu0 %v226, 96
    %v228 = vpop.permute.xlu0 %227
    %vm229 = vcmask 851712
    %s230 = scalar_lea.vmem [#allocation0], 64
    %231 = vst.msk [vmem:[%s230] ss:$8 sm:$0xf] %vm229, %v228
    %s232 = scalar_lea.vmem [#allocation0], 64
    %233 = vst.msk [vmem:[%s232] ss:$8 sm:$0xf0] %vm229, %v228
    %s234 = scalar_lea.vmem %s0, 11
    %s235 = smov 3
    %v236 = vld [vmem:[%s234] ss:$16 sm:%s235]
    %s237 = scalar_lea.vmem %s0, 11
    %s238 = smov 12
    %v239 = vld [vmem:[%s237] ss:$16 sm:%s238]
    %vm240 = vcmask 1043458
    %v241 = vsel %vm240, %v239, %v236
    %s242 = scalar_lea.vmem %s0, 11
    %s243 = smov 48
    %v244 = vld [vmem:[%s242] ss:$16 sm:%s243]
    %vm245 = vcmask 1045508
    %v246 = vsel %vm245, %v244, %v241
    %s247 = scalar_lea.vmem %s0, 11
    %s248 = smov 192
    %v249 = vld [vmem:[%s247] ss:$16 sm:%s248]
    %vm250 = vcmask 1047558
    %v251 = vsel %vm250, %v249, %v246
    %252 = vrot.lane.b32.xlu0 %v251, 88
    %v253 = vpop.permute.xlu0 %252
    %vm254 = vcmask 786112
    %255 = vst.msk [vmem:[#allocation0] ss:$8 sm:$0xf] %vm254, %v253
    %256 = vst.msk [vmem:[#allocation0] ss:$8 sm:$0xf0] %vm254, %v253
    %s257 = scalar_lea.vmem %s0, 139
    %s258 = smov 3
    %v259 = vld [vmem:[%s257] ss:$16 sm:%s258]
    %s260 = scalar_lea.vmem %s0, 139
    %s261 = smov 12
    %v262 = vld [vmem:[%s260] ss:$16 sm:%s261]
    %vm263 = vcmask 1043458
    %v264 = vsel %vm263, %v262, %v259
    %s265 = scalar_lea.vmem %s0, 139
    %s266 = smov 48
    %v267 = vld [vmem:[%s265] ss:$16 sm:%s266]
    %vm268 = vcmask 1045508
    %v269 = vsel %vm268, %v267, %v264
    %s270 = scalar_lea.vmem %s0, 139
    %s271 = smov 192
    %v272 = vld [vmem:[%s270] ss:$16 sm:%s271]
    %vm273 = vcmask 1047558
    %v274 = vsel %vm273, %v272, %v269
    %275 = vrot.lane.b32.xlu0 %v274, 88
    %v276 = vpop.permute.xlu0 %275
    %vm277 = vcmask 786112
    %s278 = scalar_lea.vmem [#allocation0], 64
    %279 = vst.msk [vmem:[%s278] ss:$8 sm:$0xf] %vm277, %v276
    %s280 = scalar_lea.vmem [#allocation0], 64
    %281 = vst.msk [vmem:[%s280] ss:$8 sm:$0xf0] %vm277, %v276
    %s282 = scalar_lea.vmem %s0, 10
    %s283 = smov 3
    %v284 = vld [vmem:[%s282] ss:$16 sm:%s283]
    %s285 = scalar_lea.vmem %s0, 10
    %s286 = smov 12
    %v287 = vld [vmem:[%s285] ss:$16 sm:%s286]
    %vm288 = vcmask 1043458
    %v289 = vsel %vm288, %v287, %v284
    %s290 = scalar_lea.vmem %s0, 10
    %s291 = smov 48
    %v292 = vld [vmem:[%s290] ss:$16 sm:%s291]
    %vm293 = vcmask 1045508
    %v294 = vsel %vm293, %v292, %v289
    %s295 = scalar_lea.vmem %s0, 10
    %s296 = smov 192
    %v297 = vld [vmem:[%s295] ss:$16 sm:%s296]
    %vm298 = vcmask 1047558
    %v299 = vsel %vm298, %v297, %v294
    %300 = vrot.lane.b32.xlu0 %v299, 80
    %v301 = vpop.permute.xlu0 %300
    %vm302 = vcmask 720512
    %303 = vst.msk [vmem:[#allocation0] ss:$8 sm:$0xf] %vm302, %v301
    %304 = vst.msk [vmem:[#allocation0] ss:$8 sm:$0xf0] %vm302, %v301
    %s305 = scalar_lea.vmem %s0, 138
    %s306 = smov 3
    %v307 = vld [vmem:[%s305] ss:$16 sm:%s306]
    %s308 = scalar_lea.vmem %s0, 138
    %s309 = smov 12
    %v310 = vld [vmem:[%s308] ss:$16 sm:%s309]
    %vm311 = vcmask 1043458
    %v312 = vsel %vm311, %v310, %v307
    %s313 = scalar_lea.vmem %s0, 138
    %s314 = smov 48
    %v315 = vld [vmem:[%s313] ss:$16 sm:%s314]
    %vm316 = vcmask 1045508
    %v317 = vsel %vm316, %v315, %v312
    %s318 = scalar_lea.vmem %s0, 138
    %s319 = smov 192
    %v320 = vld [vmem:[%s318] ss:$16 sm:%s319]
    %vm321 = vcmask 1047558
    %v322 = vsel %vm321, %v320, %v317
    %323 = vrot.lane.b32.xlu0 %v322, 80
    %v324 = vpop.permute.xlu0 %323
    %vm325 = vcmask 720512
    %s326 = scalar_lea.vmem [#allocation0], 64
    %327 = vst.msk [vmem:[%s326] ss:$8 sm:$0xf] %vm325, %v324
    %s328 = scalar_lea.vmem [#allocation0], 64
    %329 = vst.msk [vmem:[%s328] ss:$8 sm:$0xf0] %vm325, %v324
    %s330 = scalar_lea.vmem %s0, 9
    %s331 = smov 3
    %v332 = vld [vmem:[%s330] ss:$16 sm:%s331]
    %s333 = scalar_lea.vmem %s0, 9
    %s334 = smov 12
    %v335 = vld [vmem:[%s333] ss:$16 sm:%s334]
    %vm336 = vcmask 1043458
    %v337 = vsel %vm336, %v335, %v332
    %s338 = scalar_lea.vmem %s0, 9
    %s339 = smov 48
    %v340 = vld [vmem:[%s338] ss:$16 sm:%s339]
    %vm341 = vcmask 1045508
    %v342 = vsel %vm341, %v340, %v337
    %s343 = scalar_lea.vmem %s0, 9
    %s344 = smov 192
    %v345 = vld [vmem:[%s343] ss:$16 sm:%s344]
    %vm346 = vcmask 1047558
    %v347 = vsel %vm346, %v345, %v342
    %348 = vrot.lane.b32.xlu0 %v347, 72
    %v349 = vpop.permute.xlu0 %348
    %vm350 = vcmask 654912
    %351 = vst.msk [vmem:[#allocation0] ss:$8 sm:$0xf] %vm350, %v349
    %352 = vst.msk [vmem:[#allocation0] ss:$8 sm:$0xf0] %vm350, %v349
    %s353 = scalar_lea.vmem %s0, 137
    %s354 = smov 3
    %v355 = vld [vmem:[%s353] ss:$16 sm:%s354]
    %s356 = scalar_lea.vmem %s0, 137
    %s357 = smov 12
    %v358 = vld [vmem:[%s356] ss:$16 sm:%s357]
    %vm359 = vcmask 1043458
    %v360 = vsel %vm359, %v358, %v355
    %s361 = scalar_lea.vmem %s0, 137
    %s362 = smov 48
    %v363 = vld [vmem:[%s361] ss:$16 sm:%s362]
    %vm364 = vcmask 1045508
    %v365 = vsel %vm364, %v363, %v360
    %s366 = scalar_lea.vmem %s0, 137
    %s367 = smov 192
    %v368 = vld [vmem:[%s366] ss:$16 sm:%s367]
    %vm369 = vcmask 1047558
    %v370 = vsel %vm369, %v368, %v365
    %371 = vrot.lane.b32.xlu0 %v370, 72
    %v372 = vpop.permute.xlu0 %371
    %vm373 = vcmask 654912
    %s374 = scalar_lea.vmem [#allocation0], 64
    %375 = vst.msk [vmem:[%s374] ss:$8 sm:$0xf] %vm373, %v372
    %s376 = scalar_lea.vmem [#allocation0], 64
    %377 = vst.msk [vmem:[%s376] ss:$8 sm:$0xf0] %vm373, %v372
    %s378 = scalar_lea.vmem %s0, 8
    %s379 = smov 3
    %v380 = vld [vmem:[%s378] ss:$16 sm:%s379]
    %s381 = scalar_lea.vmem %s0, 8
    %s382 = smov 12
    %v383 = vld [vmem:[%s381] ss:$16 sm:%s382]
    %vm384 = vcmask 1043458
    %v385 = vsel %vm384, %v383, %v380
    %s386 = scalar_lea.vmem %s0, 8
    %s387 = smov 48
    %v388 = vld [vmem:[%s386] ss:$16 sm:%s387]
    %vm389 = vcmask 1045508
    %v390 = vsel %vm389, %v388, %v385
    %s391 = scalar_lea.vmem %s0, 8
    %s392 = smov 192
    %v393 = vld [vmem:[%s391] ss:$16 sm:%s392]
    %vm394 = vcmask 1047558
    %v395 = vsel %vm394, %v393, %v390
    %396 = vrot.lane.b32.xlu0 %v395, 64
    %v397 = vpop.permute.xlu0 %396
    %vm398 = vcmask 589312
    %399 = vst.msk [vmem:[#allocation0] ss:$8 sm:$0xf] %vm398, %v397
    %400 = vst.msk [vmem:[#allocation0] ss:$8 sm:$0xf0] %vm398, %v397
    %s401 = scalar_lea.vmem %s0, 136
    %s402 = smov 3
    %v403 = vld [vmem:[%s401] ss:$16 sm:%s402]
    %s404 = scalar_lea.vmem %s0, 136
    %s405 = smov 12
    %v406 = vld [vmem:[%s404] ss:$16 sm:%s405]
    %vm407 = vcmask 1043458
    %v408 = vsel %vm407, %v406, %v403
    %s409 = scalar_lea.vmem %s0, 136
    %s410 = smov 48
    %v411 = vld [vmem:[%s409] ss:$16 sm:%s410]
    %vm412 = vcmask 1045508
    %v413 = vsel %vm412, %v411, %v408
    %s414 = scalar_lea.vmem %s0, 136
    %s415 = smov 192
    %v416 = vld [vmem:[%s414] ss:$16 sm:%s415]
    %vm417 = vcmask 1047558
    %v418 = vsel %vm417, %v416, %v413
    %419 = vrot.lane.b32.xlu0 %v418, 64
    %v420 = vpop.permute.xlu0 %419
    %vm421 = vcmask 589312
    %s422 = scalar_lea.vmem [#allocation0], 64
    %423 = vst.msk [vmem:[%s422] ss:$8 sm:$0xf] %vm421, %v420
    %s424 = scalar_lea.vmem [#allocation0], 64
    %425 = vst.msk [vmem:[%s424] ss:$8 sm:$0xf0] %vm421, %v420
    %s426 = scalar_lea.vmem %s0, 7
    %s427 = smov 3
    %v428 = vld [vmem:[%s426] ss:$16 sm:%s427]
    %s429 = scalar_lea.vmem %s0, 7
    %s430 = smov 12
    %v431 = vld [vmem:[%s429] ss:$16 sm:%s430]
    %vm432 = vcmask 1043458
    %v433 = vsel %vm432, %v431, %v428
    %s434 = scalar_lea.vmem %s0, 7
    %s435 = smov 48
    %v436 = vld [vmem:[%s434] ss:$16 sm:%s435]
    %vm437 = vcmask 1045508
    %v438 = vsel %vm437, %v436, %v433
    %s439 = scalar_lea.vmem %s0, 7
    %s440 = smov 192
    %v441 = vld [vmem:[%s439] ss:$16 sm:%s440]
    %vm442 = vcmask 1047558
    %v443 = vsel %vm442, %v441, %v438
    %444 = vrot.lane.b32.xlu0 %v443, 56
    %v445 = vpop.permute.xlu0 %444
    %vm446 = vcmask 523712
    %447 = vst.msk [vmem:[#allocation0] ss:$8 sm:$0xf] %vm446, %v445
    %448 = vst.msk [vmem:[#allocation0] ss:$8 sm:$0xf0] %vm446, %v445
    %s449 = scalar_lea.vmem %s0, 135
    %s450 = smov 3
    %v451 = vld [vmem:[%s449] ss:$16 sm:%s450]
    %s452 = scalar_lea.vmem %s0, 135
    %s453 = smov 12
    %v454 = vld [vmem:[%s452] ss:$16 sm:%s453]
    %vm455 = vcmask 1043458
    %v456 = vsel %vm455, %v454, %v451
    %s457 = scalar_lea.vmem %s0, 135
    %s458 = smov 48
    %v459 = vld [vmem:[%s457] ss:$16 sm:%s458]
    %vm460 = vcmask 1045508
    %v461 = vsel %vm460, %v459, %v456
    %s462 = scalar_lea.vmem %s0, 135
    %s463 = smov 192
    %v464 = vld [vmem:[%s462] ss:$16 sm:%s463]
    %vm465 = vcmask 1047558
    %v466 = vsel %vm465, %v464, %v461
    %467 = vrot.lane.b32.xlu0 %v466, 56
    %v468 = vpop.permute.xlu0 %467
    %vm469 = vcmask 523712
    %s470 = scalar_lea.vmem [#allocation0], 64
    %471 = vst.msk [vmem:[%s470] ss:$8 sm:$0xf] %vm469, %v468
    %s472 = scalar_lea.vmem [#allocation0], 64
    %473 = vst.msk [vmem:[%s472] ss:$8 sm:$0xf0] %vm469, %v468
    %s474 = scalar_lea.vmem %s0, 6
    %s475 = smov 3
    %v476 = vld [vmem:[%s474] ss:$16 sm:%s475]
    %s477 = scalar_lea.vmem %s0, 6
    %s478 = smov 12
    %v479 = vld [vmem:[%s477] ss:$16 sm:%s478]
    %vm480 = vcmask 1043458
    %v481 = vsel %vm480, %v479, %v476
    %s482 = scalar_lea.vmem %s0, 6
    %s483 = smov 48
    %v484 = vld [vmem:[%s482] ss:$16 sm:%s483]
    %vm485 = vcmask 1045508
    %v486 = vsel %vm485, %v484, %v481
    %s487 = scalar_lea.vmem %s0, 6
    %s488 = smov 192
    %v489 = vld [vmem:[%s487] ss:$16 sm:%s488]
    %vm490 = vcmask 1047558
    %v491 = vsel %vm490, %v489, %v486
    %492 = vrot.lane.b32.xlu0 %v491, 48
    %v493 = vpop.permute.xlu0 %492
    %vm494 = vcmask 458112
    %495 = vst.msk [vmem:[#allocation0] ss:$8 sm:$0xf] %vm494, %v493
    %496 = vst.msk [vmem:[#allocation0] ss:$8 sm:$0xf0] %vm494, %v493
    %s497 = scalar_lea.vmem %s0, 134
    %s498 = smov 3
    %v499 = vld [vmem:[%s497] ss:$16 sm:%s498]
    %s500 = scalar_lea.vmem %s0, 134
    %s501 = smov 12
    %v502 = vld [vmem:[%s500] ss:$16 sm:%s501]
    %vm503 = vcmask 1043458
    %v504 = vsel %vm503, %v502, %v499
    %s505 = scalar_lea.vmem %s0, 134
    %s506 = smov 48
    %v507 = vld [vmem:[%s505] ss:$16 sm:%s506]
    %vm508 = vcmask 1045508
    %v509 = vsel %vm508, %v507, %v504
    %s510 = scalar_lea.vmem %s0, 134
    %s511 = smov 192
    %v512 = vld [vmem:[%s510] ss:$16 sm:%s511]
    %vm513 = vcmask 1047558
    %v514 = vsel %vm513, %v512, %v509
    %515 = vrot.lane.b32.xlu0 %v514, 48
    %v516 = vpop.permute.xlu0 %515
    %vm517 = vcmask 458112
    %s518 = scalar_lea.vmem [#allocation0], 64
    %519 = vst.msk [vmem:[%s518] ss:$8 sm:$0xf] %vm517, %v516
    %s520 = scalar_lea.vmem [#allocation0], 64
    %521 = vst.msk [vmem:[%s520] ss:$8 sm:$0xf0] %vm517, %v516
    %s522 = scalar_lea.vmem %s0, 5
    %s523 = smov 3
    %v524 = vld [vmem:[%s522] ss:$16 sm:%s523]
    %s525 = scalar_lea.vmem %s0, 5
    %s526 = smov 12
    %v527 = vld [vmem:[%s525] ss:$16 sm:%s526]
    %vm528 = vcmask 1043458
    %v529 = vsel %vm528, %v527, %v524
    %s530 = scalar_lea.vmem %s0, 5
    %s531 = smov 48
    %v532 = vld [vmem:[%s530] ss:$16 sm:%s531]
    %vm533 = vcmask 1045508
    %v534 = vsel %vm533, %v532, %v529
    %s535 = scalar_lea.vmem %s0, 5
    %s536 = smov 192
    %v537 = vld [vmem:[%s535] ss:$16 sm:%s536]
    %vm538 = vcmask 1047558
    %v539 = vsel %vm538, %v537, %v534
    %540 = vrot.lane.b32.xlu0 %v539, 40
    %v541 = vpop.permute.xlu0 %540
    %vm542 = vcmask 392512
    %543 = vst.msk [vmem:[#allocation0] ss:$8 sm:$0xf] %vm542, %v541
    %544 = vst.msk [vmem:[#allocation0] ss:$8 sm:$0xf0] %vm542, %v541
    %s545 = scalar_lea.vmem %s0, 133
    %s546 = smov 3
    %v547 = vld [vmem:[%s545] ss:$16 sm:%s546]
    %s548 = scalar_lea.vmem %s0, 133
    %s549 = smov 12
    %v550 = vld [vmem:[%s548] ss:$16 sm:%s549]
    %vm551 = vcmask 1043458
    %v552 = vsel %vm551, %v550, %v547
    %s553 = scalar_lea.vmem %s0, 133
    %s554 = smov 48
    %v555 = vld [vmem:[%s553] ss:$16 sm:%s554]
    %vm556 = vcmask 1045508
    %v557 = vsel %vm556, %v555, %v552
    %s558 = scalar_lea.vmem %s0, 133
    %s559 = smov 192
    %v560 = vld [vmem:[%s558] ss:$16 sm:%s559]
    %vm561 = vcmask 1047558
    %v562 = vsel %vm561, %v560, %v557
    %563 = vrot.lane.b32.xlu0 %v562, 40
    %v564 = vpop.permute.xlu0 %563
    %vm565 = vcmask 392512
    %s566 = scalar_lea.vmem [#allocation0], 64
    %567 = vst.msk [vmem:[%s566] ss:$8 sm:$0xf] %vm565, %v564
    %s568 = scalar_lea.vmem [#allocation0], 64
    %569 = vst.msk [vmem:[%s568] ss:$8 sm:$0xf0] %vm565, %v564
    %s570 = scalar_lea.vmem %s0, 4
    %s571 = smov 3
    %v572 = vld [vmem:[%s570] ss:$16 sm:%s571]
    %s573 = scalar_lea.vmem %s0, 4
    %s574 = smov 12
    %v575 = vld [vmem:[%s573] ss:$16 sm:%s574]
    %vm576 = vcmask 1043458
    %v577 = vsel %vm576, %v575, %v572
    %s578 = scalar_lea.vmem %s0, 4
    %s579 = smov 48
    %v580 = vld [vmem:[%s578] ss:$16 sm:%s579]
    %vm581 = vcmask 1045508
    %v582 = vsel %vm581, %v580, %v577
    %s583 = scalar_lea.vmem %s0, 4
    %s584 = smov 192
    %v585 = vld [vmem:[%s583] ss:$16 sm:%s584]
    %vm586 = vcmask 1047558
    %v587 = vsel %vm586, %v585, %v582
    %588 = vrot.lane.b32.xlu0 %v587, 32
    %v589 = vpop.permute.xlu0 %588
    %vm590 = vcmask 326912
    %591 = vst.msk [vmem:[#allocation0] ss:$8 sm:$0xf] %vm590, %v589
    %592 = vst.msk [vmem:[#allocation0] ss:$8 sm:$0xf0] %vm590, %v589
    %s593 = scalar_lea.vmem %s0, 132
    %s594 = smov 3
    %v595 = vld [vmem:[%s593] ss:$16 sm:%s594]
    %s596 = scalar_lea.vmem %s0, 132
    %s597 = smov 12
    %v598 = vld [vmem:[%s596] ss:$16 sm:%s597]
    %vm599 = vcmask 1043458
    %v600 = vsel %vm599, %v598, %v595
    %s601 = scalar_lea.vmem %s0, 132
    %s602 = smov 48
    %v603 = vld [vmem:[%s601] ss:$16 sm:%s602]
    %vm604 = vcmask 1045508
    %v605 = vsel %vm604, %v603, %v600
    %s606 = scalar_lea.vmem %s0, 132
    %s607 = smov 192
    %v608 = vld [vmem:[%s606] ss:$16 sm:%s607]
    %vm609 = vcmask 1047558
    %v610 = vsel %vm609, %v608, %v605
    %611 = vrot.lane.b32.xlu0 %v610, 32
    %v612 = vpop.permute.xlu0 %611
    %vm613 = vcmask 326912
    %s614 = scalar_lea.vmem [#allocation0], 64
    %615 = vst.msk [vmem:[%s614] ss:$8 sm:$0xf] %vm613, %v612
    %s616 = scalar_lea.vmem [#allocation0], 64
    %617 = vst.msk [vmem:[%s616] ss:$8 sm:$0xf0] %vm613, %v612
    %s618 = scalar_lea.vmem %s0, 3
    %s619 = smov 3
    %v620 = vld [vmem:[%s618] ss:$16 sm:%s619]
    %s621 = scalar_lea.vmem %s0, 3
    %s622 = smov 12
    %v623 = vld [vmem:[%s621] ss:$16 sm:%s622]
    %vm624 = vcmask 1043458
    %v625 = vsel %vm624, %v623, %v620
    %s626 = scalar_lea.vmem %s0, 3
    %s627 = smov 48
    %v628 = vld [vmem:[%s626] ss:$16 sm:%s627]
    %vm629 = vcmask 1045508
    %v630 = vsel %vm629, %v628, %v625
    %s631 = scalar_lea.vmem %s0, 3
    %s632 = smov 192
    %v633 = vld [vmem:[%s631] ss:$16 sm:%s632]
    %vm634 = vcmask 1047558
    %v635 = vsel %vm634, %v633, %v630
    %636 = vrot.lane.b32.xlu0 %v635, 24
    %v637 = vpop.permute.xlu0 %636
    %vm638 = vcmask 261312
    %639 = vst.msk [vmem:[#allocation0] ss:$8 sm:$0xf] %vm638, %v637
    %640 = vst.msk [vmem:[#allocation0] ss:$8 sm:$0xf0] %vm638, %v637
    %s641 = scalar_lea.vmem %s0, 131
    %s642 = smov 3
    %v643 = vld [vmem:[%s641] ss:$16 sm:%s642]
    %s644 = scalar_lea.vmem %s0, 131
    %s645 = smov 12
    %v646 = vld [vmem:[%s644] ss:$16 sm:%s645]
    %vm647 = vcmask 1043458
    %v648 = vsel %vm647, %v646, %v643
    %s649 = scalar_lea.vmem %s0, 131
    %s650 = smov 48
    %v651 = vld [vmem:[%s649] ss:$16 sm:%s650]
    %vm652 = vcmask 1045508
    %v653 = vsel %vm652, %v651, %v648
    %s654 = scalar_lea.vmem %s0, 131
    %s655 = smov 192
    %v656 = vld [vmem:[%s654] ss:$16 sm:%s655]
    %vm657 = vcmask 1047558
    %v658 = vsel %vm657, %v656, %v653
    %659 = vrot.lane.b32.xlu0 %v658, 24
    %v660 = vpop.permute.xlu0 %659
    %vm661 = vcmask 261312
    %s662 = scalar_lea.vmem [#allocation0], 64
    %663 = vst.msk [vmem:[%s662] ss:$8 sm:$0xf] %vm661, %v660
    %s664 = scalar_lea.vmem [#allocation0], 64
    %665 = vst.msk [vmem:[%s664] ss:$8 sm:$0xf0] %vm661, %v660
    %s666 = scalar_lea.vmem %s0, 2
    %s667 = smov 3
    %v668 = vld [vmem:[%s666] ss:$16 sm:%s667]
    %s669 = scalar_lea.vmem %s0, 2
    %s670 = smov 12
    %v671 = vld [vmem:[%s669] ss:$16 sm:%s670]
    %vm672 = vcmask 1043458
    %v673 = vsel %vm672, %v671, %v668
    %s674 = scalar_lea.vmem %s0, 2
    %s675 = smov 48
    %v676 = vld [vmem:[%s674] ss:$16 sm:%s675]
    %vm677 = vcmask 1045508
    %v678 = vsel %vm677, %v676, %v673
    %s679 = scalar_lea.vmem %s0, 2
    %s680 = smov 192
    %v681 = vld [vmem:[%s679] ss:$16 sm:%s680]
    %vm682 = vcmask 1047558
    %v683 = vsel %vm682, %v681, %v678
    %684 = vrot.lane.b32.xlu0 %v683, 16
    %v685 = vpop.permute.xlu0 %684
    %vm686 = vcmask 195712
    %687 = vst.msk [vmem:[#allocation0] ss:$8 sm:$0xf] %vm686, %v685
    %688 = vst.msk [vmem:[#allocation0] ss:$8 sm:$0xf0] %vm686, %v685
    %s689 = scalar_lea.vmem %s0, 130
    %s690 = smov 3
    %v691 = vld [vmem:[%s689] ss:$16 sm:%s690]
    %s692 = scalar_lea.vmem %s0, 130
    %s693 = smov 12
    %v694 = vld [vmem:[%s692] ss:$16 sm:%s693]
    %vm695 = vcmask 1043458
    %v696 = vsel %vm695, %v694, %v691
    %s697 = scalar_lea.vmem %s0, 130
    %s698 = smov 48
    %v699 = vld [vmem:[%s697] ss:$16 sm:%s698]
    %vm700 = vcmask 1045508
    %v701 = vsel %vm700, %v699, %v696
    %s702 = scalar_lea.vmem %s0, 130
    %s703 = smov 192
    %v704 = vld [vmem:[%s702] ss:$16 sm:%s703]
    %vm705 = vcmask 1047558
    %v706 = vsel %vm705, %v704, %v701
    %707 = vrot.lane.b32.xlu0 %v706, 16
    %v708 = vpop.permute.xlu0 %707
    %vm709 = vcmask 195712
    %s710 = scalar_lea.vmem [#allocation0], 64
    %711 = vst.msk [vmem:[%s710] ss:$8 sm:$0xf] %vm709, %v708
    %s712 = scalar_lea.vmem [#allocation0], 64
    %713 = vst.msk [vmem:[%s712] ss:$8 sm:$0xf0] %vm709, %v708
    %s714 = scalar_lea.vmem %s0, 1
    %s715 = smov 3
    %v716 = vld [vmem:[%s714] ss:$16 sm:%s715]
    %s717 = scalar_lea.vmem %s0, 1
    %s718 = smov 12
    %v719 = vld [vmem:[%s717] ss:$16 sm:%s718]
    %vm720 = vcmask 1043458
    %v721 = vsel %vm720, %v719, %v716
    %s722 = scalar_lea.vmem %s0, 1
    %s723 = smov 48
    %v724 = vld [vmem:[%s722] ss:$16 sm:%s723]
    %vm725 = vcmask 1045508
    %v726 = vsel %vm725, %v724, %v721
    %s727 = scalar_lea.vmem %s0, 1
    %s728 = smov 192
    %v729 = vld [vmem:[%s727] ss:$16 sm:%s728]
    %vm730 = vcmask 1047558
    %v731 = vsel %vm730, %v729, %v726
    %732 = vrot.lane.b32.xlu0 %v731, 8
    %v733 = vpop.permute.xlu0 %732
    %vm734 = vcmask 130112
    %735 = vst.msk [vmem:[#allocation0] ss:$8 sm:$0xf] %vm734, %v733
    %736 = vst.msk [vmem:[#allocation0] ss:$8 sm:$0xf0] %vm734, %v733
    %s737 = scalar_lea.vmem %s0, 129
    %s738 = smov 3
    %v739 = vld [vmem:[%s737] ss:$16 sm:%s738]
    %s740 = scalar_lea.vmem %s0, 129
    %s741 = smov 12
    %v742 = vld [vmem:[%s740] ss:$16 sm:%s741]
    %vm743 = vcmask 1043458
    %v744 = vsel %vm743, %v742, %v739
    %s745 = scalar_lea.vmem %s0, 129
    %s746 = smov 48
    %v747 = vld [vmem:[%s745] ss:$16 sm:%s746]
    %vm748 = vcmask 1045508
    %v749 = vsel %vm748, %v747, %v744
    %s750 = scalar_lea.vmem %s0, 129
    %s751 = smov 192
    %v752 = vld [vmem:[%s750] ss:$16 sm:%s751]
    %vm753 = vcmask 1047558
    %v754 = vsel %vm753, %v752, %v749
    %755 = vrot.lane.b32.xlu0 %v754, 8
    %v756 = vpop.permute.xlu0 %755
    %vm757 = vcmask 130112
    %s758 = scalar_lea.vmem [#allocation0], 64
    %759 = vst.msk [vmem:[%s758] ss:$8 sm:$0xf] %vm757, %v756
    %s760 = scalar_lea.vmem [#allocation0], 64
    %761 = vst.msk [vmem:[%s760] ss:$8 sm:$0xf0] %vm757, %v756
    %s763 = sshll.u32 1, 1
    %s764 = ssub.s32 %s763, 1
    %v766 = vld [vmem:[#allocation0] sm:%s764]
    %s767 = sshll.u32 1, 1
    %s768 = ssub.s32 %s767, 1
    %769 = vst [vmem:[%s1] sm:%s768] %v766
    %s770 = scalar_lea.vmem [#allocation0], 8
    %v771 = vld [vmem:[%s770] sm:%s764]
    %s772 = sshll.u32 1, 1
    %s773 = ssub.s32 %s772, 1
    %s774 = scalar_lea.vmem %s1, 1
    %775 = vst [vmem:[%s774] sm:%s773] %v771
    %s776 = scalar_lea.vmem [#allocation0], 16
    %v777 = vld [vmem:[%s776] sm:%s764]
    %s778 = sshll.u32 1, 1
    %s779 = ssub.s32 %s778, 1
    %s780 = smul.addr 1, 2
    %s781 = scalar_lea.vmem %s1, %s780
    %782 = vst [vmem:[%s781] sm:%s779] %v777
    %s783 = scalar_lea.vmem [#allocation0], 24
    %v784 = vld [vmem:[%s783] sm:%s764]
    %s785 = sshll.u32 1, 1
    %s786 = ssub.s32 %s785, 1
    %s787 = smul.addr 1, 3
    %s788 = scalar_lea.vmem %s1, %s787
    %789 = vst [vmem:[%s788] sm:%s786] %v784
    %s790 = scalar_lea.vmem [#allocation0], 32
    %v791 = vld [vmem:[%s790] sm:%s764]
    %s792 = sshll.u32 1, 1
    %s793 = ssub.s32 %s792, 1
    %s794 = smul.addr 1, 4
    %s795 = scalar_lea.vmem %s1, %s794
    %796 = vst [vmem:[%s795] sm:%s793] %v791
    %s797 = scalar_lea.vmem [#allocation0], 40
    %v798 = vld [vmem:[%s797] sm:%s764]
    %s799 = sshll.u32 1, 1
    %s800 = ssub.s32 %s799, 1
    %s801 = smul.addr 1, 5
    %s802 = scalar_lea.vmem %s1, %s801
    %803 = vst [vmem:[%s802] sm:%s800] %v798
    %s804 = scalar_lea.vmem [#allocation0], 48
    %v805 = vld [vmem:[%s804] sm:%s764]
    %s806 = sshll.u32 1, 1
    %s807 = ssub.s32 %s806, 1
    %s808 = smul.addr 1, 6
    %s809 = scalar_lea.vmem %s1, %s808
    %810 = vst [vmem:[%s809] sm:%s807] %v805
    %s811 = scalar_lea.vmem [#allocation0], 56
    %v812 = vld [vmem:[%s811] sm:%s764]
    %s813 = sshll.u32 1, 1
    %s814 = ssub.s32 %s813, 1
    %s815 = smul.addr 1, 7
    %s816 = scalar_lea.vmem %s1, %s815
    %817 = vst [vmem:[%s816] sm:%s814] %v812
    %s818 = scalar_lea.vmem [#allocation0], 64
    %v819 = vld [vmem:[%s818] sm:%s764]
    %s820 = sshll.u32 1, 1
    %s821 = ssub.s32 %s820, 1
    %s822 = smul.addr 1, 8
    %s823 = scalar_lea.vmem %s1, %s822
    %824 = vst [vmem:[%s823] sm:%s821] %v819
    %s825 = scalar_lea.vmem [#allocation0], 72
    %v826 = vld [vmem:[%s825] sm:%s764]
    %s827 = sshll.u32 1, 1
    %s828 = ssub.s32 %s827, 1
    %s829 = smul.addr 1, 9
    %s830 = scalar_lea.vmem %s1, %s829
    %831 = vst [vmem:[%s830] sm:%s828] %v826
    %s832 = scalar_lea.vmem [#allocation0], 80
    %v833 = vld [vmem:[%s832] sm:%s764]
    %s834 = sshll.u32 1, 1
    %s835 = ssub.s32 %s834, 1
    %s836 = smul.addr 1, 10
    %s837 = scalar_lea.vmem %s1, %s836
    %838 = vst [vmem:[%s837] sm:%s835] %v833
    %s839 = scalar_lea.vmem [#allocation0], 88
    %v840 = vld [vmem:[%s839] sm:%s764]
    %s841 = sshll.u32 1, 1
    %s842 = ssub.s32 %s841, 1
    %s843 = smul.addr 1, 11
    %s844 = scalar_lea.vmem %s1, %s843
    %845 = vst [vmem:[%s844] sm:%s842] %v840
    %s846 = scalar_lea.vmem [#allocation0], 96
    %v847 = vld [vmem:[%s846] sm:%s764]
    %s848 = sshll.u32 1, 1
    %s849 = ssub.s32 %s848, 1
    %s850 = smul.addr 1, 12
    %s851 = scalar_lea.vmem %s1, %s850
    %852 = vst [vmem:[%s851] sm:%s849] %v847
    %s853 = scalar_lea.vmem [#allocation0], 104
    %v854 = vld [vmem:[%s853] sm:%s764]
    %s855 = sshll.u32 1, 1
    %s856 = ssub.s32 %s855, 1
    %s857 = smul.addr 1, 13
    %s858 = scalar_lea.vmem %s1, %s857
    %859 = vst [vmem:[%s858] sm:%s856] %v854
    %s860 = scalar_lea.vmem [#allocation0], 112
    %v861 = vld [vmem:[%s860] sm:%s764]
    %s862 = sshll.u32 1, 1
    %s863 = ssub.s32 %s862, 1
    %s864 = smul.addr 1, 14
    %s865 = scalar_lea.vmem %s1, %s864
    %866 = vst [vmem:[%s865] sm:%s863] %v861
    %s867 = scalar_lea.vmem [#allocation0], 120
    %v868 = vld [vmem:[%s867] sm:%s764]
    %s869 = sshll.u32 1, 1
    %s870 = ssub.s32 %s869, 1
    %s871 = smul.addr 1, 15
    %s872 = scalar_lea.vmem %s1, %s871
    %873 = vst [vmem:[%s872] sm:%s870] %v868

// kernel: custom_model_forward.1
$region0: #{custom_model_forward.1}
  #allocation0 [shape = 'u32[]', space=smem, size = 0x4, offset = 0x4, fixed_abs, tag = 'smem constant byte address 0x4 - core index']
  #allocation1 [shape = 'u32[144,128]{1,0:T(1,128)}', space=vmem, size = 0x12000, scoped, tag = 'internal scratch']
  %s0 = inlined_call_operand.vmem [shape: bf16[2,1,1024], index: 0, kind: input, shape index: {}]
  %s1 = inlined_call_operand.vmem [shape: bf16[1024,2048], index: 1, kind: input, shape index: {}]
  %s2 = inlined_call_operand.vmem [shape: f32[1,2048], index: 2, kind: input, shape index: {}]
  %s3 = inlined_call_operand.vmem [shape: bf16[2048,128], index: 3, kind: input, shape index: {}]
  %s4 = inlined_call_operand.vmem [shape: f32[1,128], index: 4, kind: input, shape index: {}]
  %s5 = inlined_call_operand.vmem [shape: bf16[2,1,128], index: 5, kind: output, shape index: {}]
  %s6 = sld [smem:[#allocation0]]
  $region53: #{custom_model_forward.1} parent=0
    _
  %s8 = ssub.s32 1, %s6
  %s9 = scalar_select 0, %s8, %s6
  loop: start=0, step=1, limit=4
  $region2: #{custom_model_forward.1} parent=0 // loop_pre_header
    _
  $region3: #{custom_model_forward.1} parent=0 // loop_header
    %s11 = sphi 0, %s15
    %p12 = scmp.ge.s32.totalorder %s11, 4
    %s21 = sphi 0, %s23
    %s24 = sphi 0, %s21
    %s25 = sphi 0, %s24
    %s41 = sphi 0, %s25
    %s45 = sphi 0, %s45
    %s47 = sphi 0, %s45
    %s48 = sphi 0, %s47
    %s62 = sphi 0, %s48
    %s66 = sphi 0, %s66
    %s68 = sphi 0, %s66
    %s69 = sphi 0, %s68
    %s83 = sphi 0, %s69
    %s87 = sphi 0, %s87
    %s89 = sphi 0, %s87
    %s90 = sphi 0, %s89
    %s104 = sphi 0, %s90
    %s108 = sphi 0, %s108
    %s110 = sphi 0, %s108
    %s111 = sphi 0, %s110
    %s125 = sphi 0, %s111
    %s131 = sphi 0, %s133
    %s134 = sphi 0, %s131
    %s135 = sphi 0, %s134
    %s151 = sphi 0, %s135
  $region4: #{custom_model_forward.1} parent=0 // loop_header_branch
    %14 = sbr.rel (%p12) target = $region8
  $region5: #{custom_model_forward.1} parent=0 // loop_body
    %s16 = ssub.s32 %s11, 1
    %s17 = ssub.s32 %s11, 2
    %s18 = sadd.s32 %s11, 1
    %s19 = ssub.s32 %s11, %s18
    %p20 = scmp.eq.s32.totalorder %s19, 0
    %s22 = sadd.s32 %s21, 1
    %s23 = scalar_select %p20, %s21, %s22
    %p26 = pneg %p20
    %p27 = scmp.eq.s32.totalorder %s11, 1
    %p28 = por %p26, %p27
    %p29 = scmp.ne.s32.totalorder %s21, %s24
    %p30 = scmp.eq.s32.totalorder %s11, 0
    %p31 = por %p29, %p30
    %p32 = scmp.ne.s32.totalorder %s21, %s24
    %p33 = scmp.eq.s32.totalorder %s16, 1
    %p34 = por %p32, %p33
    %p35 = scmp.ne.s32.totalorder %s24, %s25
    %p36 = scmp.eq.s32.totalorder %s16, 0
    %p37 = por %p35, %p36
    %p38 = scmp.ne.s32.totalorder %s24, %s25
    %p39 = scmp.eq.s32.totalorder %s17, 1
    %p40 = por %p38, %p39
    %p42 = scmp.ne.s32.totalorder %s25, %s41
    %p43 = scmp.eq.s32.totalorder %s17, 0
    %p44 = por %p42, %p43
    %s46 = sadd.s32 %s45, 1
    %p49 = scmp.eq.s32.totalorder %s11, 1
    %p50 = scmp.ne.s32.totalorder %s45, %s47
    %p51 = scmp.eq.s32.totalorder %s11, 0
    %p52 = por %p50, %p51
    %p53 = scmp.ne.s32.totalorder %s45, %s47
    %p54 = scmp.eq.s32.totalorder %s16, 1
    %p55 = por %p53, %p54
    %p56 = scmp.ne.s32.totalorder %s47, %s48
    %p57 = scmp.eq.s32.totalorder %s16, 0
    %p58 = por %p56, %p57
    %p59 = scmp.ne.s32.totalorder %s47, %s48
    %p60 = scmp.eq.s32.totalorder %s17, 1
    %p61 = por %p59, %p60
    %p63 = scmp.ne.s32.totalorder %s48, %s62
    %p64 = scmp.eq.s32.totalorder %s17, 0
    %p65 = por %p63, %p64
    %s67 = sadd.s32 %s66, 1
    %p70 = scmp.eq.s32.totalorder %s11, 1
    %p71 = scmp.ne.s32.totalorder %s66, %s68
    %p72 = scmp.eq.s32.totalorder %s11, 0
    %p73 = por %p71, %p72
    %p74 = scmp.ne.s32.totalorder %s66, %s68
    %p75 = scmp.eq.s32.totalorder %s16, 1
    %p76 = por %p74, %p75
    %p77 = scmp.ne.s32.totalorder %s68, %s69
    %p78 = scmp.eq.s32.totalorder %s16, 0
    %p79 = por %p77, %p78
    %p80 = scmp.ne.s32.totalorder %s68, %s69
    %p81 = scmp.eq.s32.totalorder %s17, 1
    %p82 = por %p80, %p81
    %p84 = scmp.ne.s32.totalorder %s69, %s83
    %p85 = scmp.eq.s32.totalorder %s17, 0
    %p86 = por %p84, %p85
    %s88 = sadd.s32 %s87, 1
    %p91 = scmp.eq.s32.totalorder %s11, 1
    %p92 = scmp.ne.s32.totalorder %s87, %s89
    %p93 = scmp.eq.s32.totalorder %s11, 0
    %p94 = por %p92, %p93
    %p95 = scmp.ne.s32.totalorder %s87, %s89
    %p96 = scmp.eq.s32.totalorder %s16, 1
    %p97 = por %p95, %p96
    %p98 = scmp.ne.s32.totalorder %s89, %s90
    %p99 = scmp.eq.s32.totalorder %s16, 0
    %p100 = por %p98, %p99
    %p101 = scmp.ne.s32.totalorder %s89, %s90
    %p102 = scmp.eq.s32.totalorder %s17, 1
    %p103 = por %p101, %p102
    %p105 = scmp.ne.s32.totalorder %s90, %s104
    %p106 = scmp.eq.s32.totalorder %s17, 0
    %p107 = por %p105, %p106
    %s109 = sadd.s32 %s108, 1
    %p112 = scmp.eq.s32.totalorder %s11, 1
    %p113 = scmp.ne.s32.totalorder %s108, %s110
    %p114 = scmp.eq.s32.totalorder %s11, 0
    %p115 = por %p113, %p114
    %p116 = scmp.ne.s32.totalorder %s108, %s110
    %p117 = scmp.eq.s32.totalorder %s16, 1
    %p118 = por %p116, %p117
    %p119 = scmp.ne.s32.totalorder %s110, %s111
    %p120 = scmp.eq.s32.totalorder %s16, 0
    %p121 = por %p119, %p120
    %p122 = scmp.ne.s32.totalorder %s110, %s111
    %p123 = scmp.eq.s32.totalorder %s17, 1
    %p124 = por %p122, %p123
    %p126 = scmp.ne.s32.totalorder %s111, %s125
    %p127 = scmp.eq.s32.totalorder %s17, 0
    %p128 = por %p126, %p127
    %s129 = ssub.s32 %s11, %s18
    %p130 = scmp.eq.s32.totalorder %s129, 0
    %s132 = sadd.s32 %s131, 1
    %s133 = scalar_select %p130, %s131, %s132
    %p136 = pneg %p130
    %p137 = scmp.eq.s32.totalorder %s11, 1
    %p138 = por %p136, %p137
    %p139 = scmp.ne.s32.totalorder %s131, %s134
    %p140 = scmp.eq.s32.totalorder %s11, 0
    %p141 = por %p139, %p140
    %p142 = scmp.ne.s32.totalorder %s131, %s134
    %p143 = scmp.eq.s32.totalorder %s16, 1
    %p144 = por %p142, %p143
    %p145 = scmp.ne.s32.totalorder %s134, %s135
    %p146 = scmp.eq.s32.totalorder %s16, 0
    %p147 = por %p145, %p146
    %p148 = scmp.ne.s32.totalorder %s134, %s135
    %p149 = scmp.eq.s32.totalorder %s17, 1
    %p150 = por %p148, %p149
    %p152 = scmp.ne.s32.totalorder %s135, %s151
    %p153 = scmp.eq.s32.totalorder %s17, 0
    %p154 = por %p152, %p153
    %p155 = scmp.le.s32.totalorder 1, %s11
    %p156 = scmp.lt.s32.totalorder %s11, 3
    %p157 = pnand %p155, %p156
    %p158 = pneg %p157
    // Predicated region
    $region9: #{custom_model_forward.1} parent=5 // pred_check
      _
    $region10: #{custom_model_forward.1} parent=5 // pred_check_branch
      %160 = sbr.rel (%p157) target = $region12
    $region11: #{custom_model_forward.1} parent=5 // pred_region
      %s161 = ssub.s32 %s11, 1
      // Predicated region
      $region13: #{custom_model_forward.1} parent=11 // pred_check
        %p162 = pneg %p58
      $region14: #{custom_model_forward.1} parent=11 // pred_check_branch
        %164 = sbr.rel (%p162) target = $region16
      $region15: #{custom_model_forward.1} parent=11 // pred_region
        _
      $region16: #{custom_model_forward.1} parent=11 // pred_fallthru
        _
      // Predicated region
      $region17: #{custom_model_forward.1} parent=11 // pred_check
        %p165 = pneg %p79
      $region18: #{custom_model_forward.1} parent=11 // pred_check_branch
        %167 = sbr.rel (%p165) target = $region20
      $region19: #{custom_model_forward.1} parent=11 // pred_region
        _
      $region20: #{custom_model_forward.1} parent=11 // pred_fallthru
        _
      // Predicated region
      $region21: #{custom_model_forward.1} parent=11 // pred_check
        %p168 = pneg %p100
      $region22: #{custom_model_forward.1} parent=11 // pred_check_branch
        %170 = sbr.rel (%p168) target = $region24
      $region23: #{custom_model_forward.1} parent=11 // pred_region
        _
      $region24: #{custom_model_forward.1} parent=11 // pred_fallthru
        _
      // Predicated region
      $region25: #{custom_model_forward.1} parent=11 // pred_check
        %p171 = pneg %p121
      $region26: #{custom_model_forward.1} parent=11 // pred_check_branch
        %173 = sbr.rel (%p171) target = $region28
      $region27: #{custom_model_forward.1} parent=11 // pred_region
        _
      $region28: #{custom_model_forward.1} parent=11 // pred_fallthru
        _
    $region12: #{custom_model_forward.1} parent=5 // pred_fallthru
      _
    %p174 = scmp.lt.s32.totalorder %s11, 2
    // Predicated region
    $region29: #{custom_model_forward.1} parent=5 // pred_check
      %p175 = pneg %p174
    $region30: #{custom_model_forward.1} parent=5 // pred_check_branch
      %177 = sbr.rel (%p175) target = $region32
    $region31: #{custom_model_forward.1} parent=5 // pred_region
      // Predicated region
      $region33: #{custom_model_forward.1} parent=31 // pred_check
        %p178 = pneg %p31
      $region34: #{custom_model_forward.1} parent=31 // pred_check_branch
        %180 = sbr.rel (%p178) target = $region36
      $region35: #{custom_model_forward.1} parent=31 // pred_region
        %p181 = scmp.lt.s32.totalorder %s11, 1
        %s182 = scalar_select %p181, %s11, 1
        %s183 = smul.addr %s182, 8
        %s184 = scalar_lea.vmem %s0, %s183
      $region36: #{custom_model_forward.1} parent=31 // pred_fallthru
        _
    $region32: #{custom_model_forward.1} parent=5 // pred_fallthru
      _
    %p185 = scmp.le.s32.totalorder 1, %s11
    %p186 = scmp.lt.s32.totalorder %s11, 3
    %p187 = pnand %p185, %p186
    %p188 = pneg %p187
    // Predicated region
    $region37: #{custom_model_forward.1} parent=5 // pred_check
      _
    $region38: #{custom_model_forward.1} parent=5 // pred_check_branch
      %190 = sbr.rel (%p187) target = $region40
    $region39: #{custom_model_forward.1} parent=5 // pred_region
      %s191 = ssub.s32 %s11, 1
      %p192 = scmp.lt.s32.totalorder %s16, 1
      %s193 = scalar_select %p192, %s16, 1
      %s194 = smul.addr %s193, 8
      %s195 = scalar_lea.vmem %s0, %s194
      %p196 = pneg %p37
      %p197 = pneg %p34
      %p198 = pneg %p58
      %p199 = pneg %p55
      %p200 = pneg %p79
      %p201 = pneg %p76
      %p202 = pneg %p100
      %p203 = pneg %p97
      %p204 = pneg %p121
      %p205 = pneg %p118
      %p206 = pneg %p147
      %p207 = pneg %p144
      %p208 = scmp.lt.s32.totalorder %s16, 1
      %s209 = scalar_select %p208, %s16, 1
      %s210 = scalar_lea.vmem %s5, %s209
      %p211 = scmp.lt.s32.totalorder %s16, 1
      %s212 = scalar_select %p211, %s16, 1
      %s213 = smul.addr %s212, 8
      %s214 = scalar_lea.vmem %s0, %s213
      %p215 = scmp.lt.s32.totalorder %s16, 1
      %s216 = scalar_select %p215, %s16, 1
      %s217 = scalar_lea.vmem %s5, %s216
      %v219 = vld [vmem:[%s214] sm:$0xff]
      %v220 = vld [vmem:[%s1] sm:$0xff]
      %v221 = vld [vmem:[%s1 + $0x8] sm:$0xff]
      %v222 = vld [vmem:[%s1 + $0x10] sm:$0xff]
      %v223 = vld [vmem:[%s1 + $0x18] sm:$0xff]
      %v224 = vld [vmem:[%s1 + $0x20] sm:$0xff]
      %v225 = vld [vmem:[%s1 + $0x28] sm:$0xff]
      %v226 = vld [vmem:[%s1 + $0x30] sm:$0xff]
      %v227 = vld [vmem:[%s1 + $0x38] sm:$0xff]
      %v228 = vld [vmem:[%s1 + $0x40] sm:$0xff]
      %v229 = vld [vmem:[%s1 + $0x48] sm:$0xff]
      %v230 = vld [vmem:[%s1 + $0x50] sm:$0xff]
      %v231 = vld [vmem:[%s1 + $0x58] sm:$0xff]
      %v232 = vld [vmem:[%s1 + $0x60] sm:$0xff]
      %v233 = vld [vmem:[%s1 + $0x68] sm:$0xff]
      %v234 = vld [vmem:[%s1 + $0x70] sm:$0xff]
      %v235 = vld [vmem:[%s1 + $0x78] sm:$0xff]
      %v236 = vld [vmem:[%s1 + $0x80] sm:$0xff]
      %v237 = vld [vmem:[%s1 + $0x88] sm:$0xff]
      %v238 = vld [vmem:[%s1 + $0x90] sm:$0xff]
      %v239 = vld [vmem:[%s1 + $0x98] sm:$0xff]
      %v240 = vld [vmem:[%s1 + $0xa0] sm:$0xff]
      %v241 = vld [vmem:[%s1 + $0xa8] sm:$0xff]
      %v242 = vld [vmem:[%s1 + $0xb0] sm:$0xff]
      %v243 = vld [vmem:[%s1 + $0xb8] sm:$0xff]
      %v244 = vld [vmem:[%s1 + $0xc0] sm:$0xff]
      %v245 = vld [vmem:[%s1 + $0xc8] sm:$0xff]
      %v246 = vld [vmem:[%s1 + $0xd0] sm:$0xff]
      %v247 = vld [vmem:[%s1 + $0xd8] sm:$0xff]
      %v248 = vld [vmem:[%s1 + $0xe0] sm:$0xff]
      %v249 = vld [vmem:[%s1 + $0xe8] sm:$0xff]
      %v250 = vld [vmem:[%s1 + $0xf0] sm:$0xff]
      %v251 = vld [vmem:[%s1 + $0xf8] sm:$0xff]
      %v252 = vld [vmem:[%s1 + $0x100] sm:$0xff]
      %v253 = vld [vmem:[%s1 + $0x108] sm:$0xff]
      %v254 = vld [vmem:[%s1 + $0x110] sm:$0xff]
      %v255 = vld [vmem:[%s1 + $0x118] sm:$0xff]
      %v256 = vld [vmem:[%s1 + $0x120] sm:$0xff]
      %v257 = vld [vmem:[%s1 + $0x128] sm:$0xff]
      %v258 = vld [vmem:[%s1 + $0x130] sm:$0xff]
      %v259 = vld [vmem:[%s1 + $0x138] sm:$0xff]
      %v260 = vld [vmem:[%s1 + $0x140] sm:$0xff]
      %v261 = vld [vmem:[%s1 + $0x148] sm:$0xff]
      %v262 = vld [vmem:[%s1 + $0x150] sm:$0xff]
      %v263 = vld [vmem:[%s1 + $0x158] sm:$0xff]
      %v264 = vld [vmem:[%s1 + $0x160] sm:$0xff]
      %v265 = vld [vmem:[%s1 + $0x168] sm:$0xff]
      %v266 = vld [vmem:[%s1 + $0x170] sm:$0xff]
      %v267 = vld [vmem:[%s1 + $0x178] sm:$0xff]
      %v268 = vld [vmem:[%s1 + $0x180] sm:$0xff]
      %v269 = vld [vmem:[%s1 + $0x188] sm:$0xff]
      %v270 = vld [vmem:[%s1 + $0x190] sm:$0xff]
      %v271 = vld [vmem:[%s1 + $0x198] sm:$0xff]
      %v272 = vld [vmem:[%s1 + $0x1a0] sm:$0xff]
      %v273 = vld [vmem:[%s1 + $0x1a8] sm:$0xff]
      %v274 = vld [vmem:[%s1 + $0x1b0] sm:$0xff]
      %v275 = vld [vmem:[%s1 + $0x1b8] sm:$0xff]
      %v276 = vld [vmem:[%s1 + $0x1c0] sm:$0xff]
      %v277 = vld [vmem:[%s1 + $0x1c8] sm:$0xff]
      %v278 = vld [vmem:[%s1 + $0x1d0] sm:$0xff]
      %v279 = vld [vmem:[%s1 + $0x1d8] sm:$0xff]
      %v280 = vld [vmem:[%s1 + $0x1e0] sm:$0xff]
      %v281 = vld [vmem:[%s1 + $0x1e8] sm:$0xff]
      %v282 = vld [vmem:[%s1 + $0x1f0] sm:$0xff]
      %v283 = vld [vmem:[%s1 + $0x1f8] sm:$0xff]
      %v284 = vld [vmem:[%s1 + $0x200] sm:$0xff]
      %v285 = vld [vmem:[%s1 + $0x208] sm:$0xff]
      %v286 = vld [vmem:[%s1 + $0x210] sm:$0xff]
      %v287 = vld [vmem:[%s1 + $0x218] sm:$0xff]
      %v288 = vld [vmem:[%s1 + $0x220] sm:$0xff]
      %v289 = vld [vmem:[%s1 + $0x228] sm:$0xff]
      %v290 = vld [vmem:[%s1 + $0x230] sm:$0xff]
      %v291 = vld [vmem:[%s1 + $0x238] sm:$0xff]
      %v292 = vld [vmem:[%s1 + $0x240] sm:$0xff]
      %v293 = vld [vmem:[%s1 + $0x248] sm:$0xff]
      %v294 = vld [vmem:[%s1 + $0x250] sm:$0xff]
      %v295 = vld [vmem:[%s1 + $0x258] sm:$0xff]
      %v296 = vld [vmem:[%s1 + $0x260] sm:$0xff]
      %v297 = vld [vmem:[%s1 + $0x268] sm:$0xff]
      %v298 = vld [vmem:[%s1 + $0x270] sm:$0xff]
      %v299 = vld [vmem:[%s1 + $0x278] sm:$0xff]
      %v300 = vld [vmem:[%s1 + $0x280] sm:$0xff]
      %v301 = vld [vmem:[%s1 + $0x288] sm:$0xff]
      %v302 = vld [vmem:[%s1 + $0x290] sm:$0xff]
      %v303 = vld [vmem:[%s1 + $0x298] sm:$0xff]
      %v304 = vld [vmem:[%s1 + $0x2a0] sm:$0xff]
      %v305 = vld [vmem:[%s1 + $0x2a8] sm:$0xff]
      %v306 = vld [vmem:[%s1 + $0x2b0] sm:$0xff]
      %v307 = vld [vmem:[%s1 + $0x2b8] sm:$0xff]
      %v308 = vld [vmem:[%s1 + $0x2c0] sm:$0xff]
      %v309 = vld [vmem:[%s1 + $0x2c8] sm:$0xff]
      %v310 = vld [vmem:[%s1 + $0x2d0] sm:$0xff]
      %v311 = vld [vmem:[%s1 + $0x2d8] sm:$0xff]
      %v312 = vld [vmem:[%s1 + $0x2e0] sm:$0xff]
      %v313 = vld [vmem:[%s1 + $0x2e8] sm:$0xff]
      %v314 = vld [vmem:[%s1 + $0x2f0] sm:$0xff]
      %v315 = vld [vmem:[%s1 + $0x2f8] sm:$0xff]
      %v316 = vld [vmem:[%s1 + $0x300] sm:$0xff]
      %v317 = vld [vmem:[%s1 + $0x308] sm:$0xff]
      %v318 = vld [vmem:[%s1 + $0x310] sm:$0xff]
      %v319 = vld [vmem:[%s1 + $0x318] sm:$0xff]
      %v320 = vld [vmem:[%s1 + $0x320] sm:$0xff]
      %v321 = vld [vmem:[%s1 + $0x328] sm:$0xff]
      %v322 = vld [vmem:[%s1 + $0x330] sm:$0xff]
      %v323 = vld [vmem:[%s1 + $0x338] sm:$0xff]
      %v324 = vld [vmem:[%s1 + $0x340] sm:$0xff]
      %v325 = vld [vmem:[%s1 + $0x348] sm:$0xff]
      %v326 = vld [vmem:[%s1 + $0x350] sm:$0xff]
      %v327 = vld [vmem:[%s1 + $0x358] sm:$0xff]
      %v328 = vld [vmem:[%s1 + $0x360] sm:$0xff]
      %v329 = vld [vmem:[%s1 + $0x368] sm:$0xff]
      %v330 = vld [vmem:[%s1 + $0x370] sm:$0xff]
      %v331 = vld [vmem:[%s1 + $0x378] sm:$0xff]
      %v332 = vld [vmem:[%s1 + $0x380] sm:$0xff]
      %v333 = vld [vmem:[%s1 + $0x388] sm:$0xff]
      %v334 = vld [vmem:[%s1 + $0x390] sm:$0xff]
      %v335 = vld [vmem:[%s1 + $0x398] sm:$0xff]
      %v336 = vld [vmem:[%s1 + $0x3a0] sm:$0xff]
      %v337 = vld [vmem:[%s1 + $0x3a8] sm:$0xff]
      %v338 = vld [vmem:[%s1 + $0x3b0] sm:$0xff]
      %v339 = vld [vmem:[%s1 + $0x3b8] sm:$0xff]
      %v340 = vld [vmem:[%s1 + $0x3c0] sm:$0xff]
      %v341 = vld [vmem:[%s1 + $0x3c8] sm:$0xff]
      %v342 = vld [vmem:[%s1 + $0x3d0] sm:$0xff]
      %v343 = vld [vmem:[%s1 + $0x3d8] sm:$0xff]
      %v344 = vld [vmem:[%s1 + $0x3e0] sm:$0xff]
      %v345 = vld [vmem:[%s1 + $0x3e8] sm:$0xff]
      %v346 = vld [vmem:[%s1 + $0x3f0] sm:$0xff]
      %v347 = vld [vmem:[%s1 + $0x3f8] sm:$0xff]
      %v348 = vld [vmem:[%s1 + $0x400] sm:$0xff]
      %v349 = vld [vmem:[%s1 + $0x408] sm:$0xff]
      %v350 = vld [vmem:[%s1 + $0x410] sm:$0xff]
      %v351 = vld [vmem:[%s1 + $0x418] sm:$0xff]
      %v352 = vld [vmem:[%s1 + $0x420] sm:$0xff]
      %v353 = vld [vmem:[%s1 + $0x428] sm:$0xff]
      %v354 = vld [vmem:[%s1 + $0x430] sm:$0xff]
      %v355 = vld [vmem:[%s1 + $0x438] sm:$0xff]
      %v356 = vld [vmem:[%s1 + $0x440] sm:$0xff]
      %v357 = vld [vmem:[%s1 + $0x448] sm:$0xff]
      %v358 = vld [vmem:[%s1 + $0x450] sm:$0xff]
      %v359 = vld [vmem:[%s1 + $0x458] sm:$0xff]
      %v360 = vld [vmem:[%s1 + $0x460] sm:$0xff]
      %v361 = vld [vmem:[%s1 + $0x468] sm:$0xff]
      %v362 = vld [vmem:[%s1 + $0x470] sm:$0xff]
      %v363 = vld [vmem:[%s1 + $0x478] sm:$0xff]
      %v364 = vld [vmem:[%s1 + $0x480] sm:$0xff]
      %v365 = vld [vmem:[%s1 + $0x488] sm:$0xff]
      %v366 = vld [vmem:[%s1 + $0x490] sm:$0xff]
      %v367 = vld [vmem:[%s1 + $0x498] sm:$0xff]
      %v368 = vld [vmem:[%s1 + $0x4a0] sm:$0xff]
      %v369 = vld [vmem:[%s1 + $0x4a8] sm:$0xff]
      %v370 = vld [vmem:[%s1 + $0x4b0] sm:$0xff]
      %v371 = vld [vmem:[%s1 + $0x4b8] sm:$0xff]
      %v372 = vld [vmem:[%s1 + $0x4c0] sm:$0xff]
      %v373 = vld [vmem:[%s1 + $0x4c8] sm:$0xff]
      %v374 = vld [vmem:[%s1 + $0x4d0] sm:$0xff]
      %v375 = vld [vmem:[%s1 + $0x4d8] sm:$0xff]
      %v376 = vld [vmem:[%s1 + $0x4e0] sm:$0xff]
      %v377 = vld [vmem:[%s1 + $0x4e8] sm:$0xff]
      %v378 = vld [vmem:[%s1 + $0x4f0] sm:$0xff]
      %v379 = vld [vmem:[%s1 + $0x4f8] sm:$0xff]
      %v380 = vld [vmem:[%s1 + $0x500] sm:$0xff]
      %v381 = vld [vmem:[%s1 + $0x508] sm:$0xff]
      %v382 = vld [vmem:[%s1 + $0x510] sm:$0xff]
      %v383 = vld [vmem:[%s1 + $0x518] sm:$0xff]
      %v384 = vld [vmem:[%s1 + $0x520] sm:$0xff]
      %v385 = vld [vmem:[%s1 + $0x528] sm:$0xff]
      %v386 = vld [vmem:[%s1 + $0x530] sm:$0xff]
      %v387 = vld [vmem:[%s1 + $0x538] sm:$0xff]
      %v388 = vld [vmem:[%s1 + $0x540] sm:$0xff]
      %v389 = vld [vmem:[%s1 + $0x548] sm:$0xff]
      %v390 = vld [vmem:[%s1 + $0x550] sm:$0xff]
      %v391 = vld [vmem:[%s1 + $0x558] sm:$0xff]
      %v392 = vld [vmem:[%s1 + $0x560] sm:$0xff]
      %v393 = vld [vmem:[%s1 + $0x568] sm:$0xff]
      %v394 = vld [vmem:[%s1 + $0x570] sm:$0xff]
      %v395 = vld [vmem:[%s1 + $0x578] sm:$0xff]
      %v396 = vld [vmem:[%s1 + $0x580] sm:$0xff]
      %v397 = vld [vmem:[%s1 + $0x588] sm:$0xff]
      %v398 = vld [vmem:[%s1 + $0x590] sm:$0xff]
      %v399 = vld [vmem:[%s1 + $0x598] sm:$0xff]
      %v400 = vld [vmem:[%s1 + $0x5a0] sm:$0xff]
      %v401 = vld [vmem:[%s1 + $0x5a8] sm:$0xff]
      %v402 = vld [vmem:[%s1 + $0x5b0] sm:$0xff]
      %v403 = vld [vmem:[%s1 + $0x5b8] sm:$0xff]
      %v404 = vld [vmem:[%s1 + $0x5c0] sm:$0xff]
      %v405 = vld [vmem:[%s1 + $0x5c8] sm:$0xff]
      %v406 = vld [vmem:[%s1 + $0x5d0] sm:$0xff]
      %v407 = vld [vmem:[%s1 + $0x5d8] sm:$0xff]
      %v408 = vld [vmem:[%s1 + $0x5e0] sm:$0xff]
      %v409 = vld [vmem:[%s1 + $0x5e8] sm:$0xff]
      %v410 = vld [vmem:[%s1 + $0x5f0] sm:$0xff]
      %v411 = vld [vmem:[%s1 + $0x5f8] sm:$0xff]
      %v412 = vld [vmem:[%s1 + $0x600] sm:$0xff]
      %v413 = vld [vmem:[%s1 + $0x608] sm:$0xff]
      %v414 = vld [vmem:[%s1 + $0x610] sm:$0xff]
      %v415 = vld [vmem:[%s1 + $0x618] sm:$0xff]
      %v416 = vld [vmem:[%s1 + $0x620] sm:$0xff]
      %v417 = vld [vmem:[%s1 + $0x628] sm:$0xff]
      %v418 = vld [vmem:[%s1 + $0x630] sm:$0xff]
      %v419 = vld [vmem:[%s1 + $0x638] sm:$0xff]
      %v420 = vld [vmem:[%s1 + $0x640] sm:$0xff]
      %v421 = vld [vmem:[%s1 + $0x648] sm:$0xff]
      %v422 = vld [vmem:[%s1 + $0x650] sm:$0xff]
      %v423 = vld [vmem:[%s1 + $0x658] sm:$0xff]
      %v424 = vld [vmem:[%s1 + $0x660] sm:$0xff]
      %v425 = vld [vmem:[%s1 + $0x668] sm:$0xff]
      %v426 = vld [vmem:[%s1 + $0x670] sm:$0xff]
      %v427 = vld [vmem:[%s1 + $0x678] sm:$0xff]
      %v428 = vld [vmem:[%s1 + $0x680] sm:$0xff]
      %v429 = vld [vmem:[%s1 + $0x688] sm:$0xff]
      %v430 = vld [vmem:[%s1 + $0x690] sm:$0xff]
      %v431 = vld [vmem:[%s1 + $0x698] sm:$0xff]
      %v432 = vld [vmem:[%s1 + $0x6a0] sm:$0xff]
      %v433 = vld [vmem:[%s1 + $0x6a8] sm:$0xff]
      %v434 = vld [vmem:[%s1 + $0x6b0] sm:$0xff]
      %v435 = vld [vmem:[%s1 + $0x6b8] sm:$0xff]
      %v436 = vld [vmem:[%s1 + $0x6c0] sm:$0xff]
      %v437 = vld [vmem:[%s1 + $0x6c8] sm:$0xff]
      %v438 = vld [vmem:[%s1 + $0x6d0] sm:$0xff]
      %v439 = vld [vmem:[%s1 + $0x6d8] sm:$0xff]
      %v440 = vld [vmem:[%s1 + $0x6e0] sm:$0xff]
      %v441 = vld [vmem:[%s1 + $0x6e8] sm:$0xff]
      %v442 = vld [vmem:[%s1 + $0x6f0] sm:$0xff]
      %v443 = vld [vmem:[%s1 + $0x6f8] sm:$0xff]
      %v444 = vld [vmem:[%s1 + $0x700] sm:$0xff]
      %v445 = vld [vmem:[%s1 + $0x708] sm:$0xff]
      %v446 = vld [vmem:[%s1 + $0x710] sm:$0xff]
      %v447 = vld [vmem:[%s1 + $0x718] sm:$0xff]
      %v448 = vld [vmem:[%s1 + $0x720] sm:$0xff]
      %v449 = vld [vmem:[%s1 + $0x728] sm:$0xff]
      %v450 = vld [vmem:[%s1 + $0x730] sm:$0xff]
      %v451 = vld [vmem:[%s1 + $0x738] sm:$0xff]
      %v452 = vld [vmem:[%s1 + $0x740] sm:$0xff]
      %v453 = vld [vmem:[%s1 + $0x748] sm:$0xff]
      %v454 = vld [vmem:[%s1 + $0x750] sm:$0xff]
      %v455 = vld [vmem:[%s1 + $0x758] sm:$0xff]
      %v456 = vld [vmem:[%s1 + $0x760] sm:$0xff]
      %v457 = vld [vmem:[%s1 + $0x768] sm:$0xff]
      %v458 = vld [vmem:[%s1 + $0x770] sm:$0xff]
      %v459 = vld [vmem:[%s1 + $0x778] sm:$0xff]
      %v460 = vld [vmem:[%s1 + $0x780] sm:$0xff]
      %v461 = vld [vmem:[%s1 + $0x788] sm:$0xff]
      %v462 = vld [vmem:[%s1 + $0x790] sm:$0xff]
      %v463 = vld [vmem:[%s1 + $0x798] sm:$0xff]
      %v464 = vld [vmem:[%s1 + $0x7a0] sm:$0xff]
      %v465 = vld [vmem:[%s1 + $0x7a8] sm:$0xff]
      %v466 = vld [vmem:[%s1 + $0x7b0] sm:$0xff]
      %v467 = vld [vmem:[%s1 + $0x7b8] sm:$0xff]
      %v468 = vld [vmem:[%s1 + $0x7c0] sm:$0xff]
      %v469 = vld [vmem:[%s1 + $0x7c8] sm:$0xff]
      %v470 = vld [vmem:[%s1 + $0x7d0] sm:$0xff]
      %v471 = vld [vmem:[%s1 + $0x7d8] sm:$0xff]
      %v472 = vld [vmem:[%s1 + $0x7e0] sm:$0xff]
      %v473 = vld [vmem:[%s1 + $0x7e8] sm:$0xff]
      %v474 = vld [vmem:[%s1 + $0x7f0] sm:$0xff]
      %v475 = vld [vmem:[%s1 + $0x7f8] sm:$0xff]
      %v476 = vld [vmem:[%s1 + $0x800] sm:$0xff]
      %v477 = vld [vmem:[%s1 + $0x808] sm:$0xff]
      %v478 = vld [vmem:[%s1 + $0x810] sm:$0xff]
      %v479 = vld [vmem:[%s1 + $0x818] sm:$0xff]
      %v480 = vld [vmem:[%s1 + $0x820] sm:$0xff]
      %v481 = vld [vmem:[%s1 + $0x828] sm:$0xff]
      %v482 = vld [vmem:[%s1 + $0x830] sm:$0xff]
      %v483 = vld [vmem:[%s1 + $0x838] sm:$0xff]
      %v484 = vld [vmem:[%s1 + $0x840] sm:$0xff]
      %v485 = vld [vmem:[%s1 + $0x848] sm:$0xff]
      %v486 = vld [vmem:[%s1 + $0x850] sm:$0xff]
      %v487 = vld [vmem:[%s1 + $0x858] sm:$0xff]
      %v488 = vld [vmem:[%s1 + $0x860] sm:$0xff]
      %v489 = vld [vmem:[%s1 + $0x868] sm:$0xff]
      %v490 = vld [vmem:[%s1 + $0x870] sm:$0xff]
      %v491 = vld [vmem:[%s1 + $0x878] sm:$0xff]
      %v492 = vld [vmem:[%s1 + $0x880] sm:$0xff]
      %v493 = vld [vmem:[%s1 + $0x888] sm:$0xff]
      %v494 = vld [vmem:[%s1 + $0x890] sm:$0xff]
      %v495 = vld [vmem:[%s1 + $0x898] sm:$0xff]
      %v496 = vld [vmem:[%s1 + $0x8a0] sm:$0xff]
      %v497 = vld [vmem:[%s1 + $0x8a8] sm:$0xff]
      %v498 = vld [vmem:[%s1 + $0x8b0] sm:$0xff]
      %v499 = vld [vmem:[%s1 + $0x8b8] sm:$0xff]
      %v500 = vld [vmem:[%s1 + $0x8c0] sm:$0xff]
      %v501 = vld [vmem:[%s1 + $0x8c8] sm:$0xff]
      %v502 = vld [vmem:[%s1 + $0x8d0] sm:$0xff]
      %v503 = vld [vmem:[%s1 + $0x8d8] sm:$0xff]
      %v504 = vld [vmem:[%s1 + $0x8e0] sm:$0xff]
      %v505 = vld [vmem:[%s1 + $0x8e8] sm:$0xff]
      %v506 = vld [vmem:[%s1 + $0x8f0] sm:$0xff]
      %v507 = vld [vmem:[%s1 + $0x8f8] sm:$0xff]
      %v508 = vld [vmem:[%s1 + $0x900] sm:$0xff]
      %v509 = vld [vmem:[%s1 + $0x908] sm:$0xff]
      %v510 = vld [vmem:[%s1 + $0x910] sm:$0xff]
      %v511 = vld [vmem:[%s1 + $0x918] sm:$0xff]
      %v512 = vld [vmem:[%s1 + $0x920] sm:$0xff]
      %v513 = vld [vmem:[%s1 + $0x928] sm:$0xff]
      %v514 = vld [vmem:[%s1 + $0x930] sm:$0xff]
      %v515 = vld [vmem:[%s1 + $0x938] sm:$0xff]
      %v516 = vld [vmem:[%s1 + $0x940] sm:$0xff]
      %v517 = vld [vmem:[%s1 + $0x948] sm:$0xff]
      %v518 = vld [vmem:[%s1 + $0x950] sm:$0xff]
      %v519 = vld [vmem:[%s1 + $0x958] sm:$0xff]
      %v520 = vld [vmem:[%s1 + $0x960] sm:$0xff]
      %v521 = vld [vmem:[%s1 + $0x968] sm:$0xff]
      %v522 = vld [vmem:[%s1 + $0x970] sm:$0xff]
      %v523 = vld [vmem:[%s1 + $0x978] sm:$0xff]
      %v524 = vld [vmem:[%s1 + $0x980] sm:$0xff]
      %v525 = vld [vmem:[%s1 + $0x988] sm:$0xff]
      %v526 = vld [vmem:[%s1 + $0x990] sm:$0xff]
      %v527 = vld [vmem:[%s1 + $0x998] sm:$0xff]
      %v528 = vld [vmem:[%s1 + $0x9a0] sm:$0xff]
      %v529 = vld [vmem:[%s1 + $0x9a8] sm:$0xff]
      %v530 = vld [vmem:[%s1 + $0x9b0] sm:$0xff]
      %v531 = vld [vmem:[%s1 + $0x9b8] sm:$0xff]
      %v532 = vld [vmem:[%s1 + $0x9c0] sm:$0xff]
      %v533 = vld [vmem:[%s1 + $0x9c8] sm:$0xff]
      %v534 = vld [vmem:[%s1 + $0x9d0] sm:$0xff]
      %v535 = vld [vmem:[%s1 + $0x9d8] sm:$0xff]
      %v536 = vld [vmem:[%s1 + $0x9e0] sm:$0xff]
      %v537 = vld [vmem:[%s1 + $0x9e8] sm:$0xff]
      %v538 = vld [vmem:[%s1 + $0x9f0] sm:$0xff]
      %v539 = vld [vmem:[%s1 + $0x9f8] sm:$0xff]
      %v540 = vld [vmem:[%s1 + $0xa00] sm:$0xff]
      %v541 = vld [vmem:[%s1 + $0xa08] sm:$0xff]
      %v542 = vld [vmem:[%s1 + $0xa10] sm:$0xff]
      %v543 = vld [vmem:[%s1 + $0xa18] sm:$0xff]
      %v544 = vld [vmem:[%s1 + $0xa20] sm:$0xff]
      %v545 = vld [vmem:[%s1 + $0xa28] sm:$0xff]
      %v546 = vld [vmem:[%s1 + $0xa30] sm:$0xff]
      %v547 = vld [vmem:[%s1 + $0xa38] sm:$0xff]
      %v548 = vld [vmem:[%s1 + $0xa40] sm:$0xff]
      %v549 = vld [vmem:[%s1 + $0xa48] sm:$0xff]
      %v550 = vld [vmem:[%s1 + $0xa50] sm:$0xff]
      %v551 = vld [vmem:[%s1 + $0xa58] sm:$0xff]
      %v552 = vld [vmem:[%s1 + $0xa60] sm:$0xff]
      %v553 = vld [vmem:[%s1 + $0xa68] sm:$0xff]
      %v554 = vld [vmem:[%s1 + $0xa70] sm:$0xff]
      %v555 = vld [vmem:[%s1 + $0xa78] sm:$0xff]
      %v556 = vld [vmem:[%s1 + $0xa80] sm:$0xff]
      %v557 = vld [vmem:[%s1 + $0xa88] sm:$0xff]
      %v558 = vld [vmem:[%s1 + $0xa90] sm:$0xff]
      %v559 = vld [vmem:[%s1 + $0xa98] sm:$0xff]
      %v560 = vld [vmem:[%s1 + $0xaa0] sm:$0xff]
      %v561 = vld [vmem:[%s1 + $0xaa8] sm:$0xff]
      %v562 = vld [vmem:[%s1 + $0xab0] sm:$0xff]
      %v563 = vld [vmem:[%s1 + $0xab8] sm:$0xff]
      %v564 = vld [vmem:[%s1 + $0xac0] sm:$0xff]
      %v565 = vld [vmem:[%s1 + $0xac8] sm:$0xff]
      %v566 = vld [vmem:[%s1 + $0xad0] sm:$0xff]
      %v567 = vld [vmem:[%s1 + $0xad8] sm:$0xff]
      %v568 = vld [vmem:[%s1 + $0xae0] sm:$0xff]
      %v569 = vld [vmem:[%s1 + $0xae8] sm:$0xff]
      %v570 = vld [vmem:[%s1 + $0xaf0] sm:$0xff]
      %v571 = vld [vmem:[%s1 + $0xaf8] sm:$0xff]
      %v572 = vld [vmem:[%s1 + $0xb00] sm:$0xff]
      %v573 = vld [vmem:[%s1 + $0xb08] sm:$0xff]
      %v574 = vld [vmem:[%s1 + $0xb10] sm:$0xff]
      %v575 = vld [vmem:[%s1 + $0xb18] sm:$0xff]
      %v576 = vld [vmem:[%s1 + $0xb20] sm:$0xff]
      %v577 = vld [vmem:[%s1 + $0xb28] sm:$0xff]
      %v578 = vld [vmem:[%s1 + $0xb30] sm:$0xff]
      %v579 = vld [vmem:[%s1 + $0xb38] sm:$0xff]
      %v580 = vld [vmem:[%s1 + $0xb40] sm:$0xff]
      %v581 = vld [vmem:[%s1 + $0xb48] sm:$0xff]
      %v582 = vld [vmem:[%s1 + $0xb50] sm:$0xff]
      %v583 = vld [vmem:[%s1 + $0xb58] sm:$0xff]
      %v584 = vld [vmem:[%s1 + $0xb60] sm:$0xff]
      %v585 = vld [vmem:[%s1 + $0xb68] sm:$0xff]
      %v586 = vld [vmem:[%s1 + $0xb70] sm:$0xff]
      %v587 = vld [vmem:[%s1 + $0xb78] sm:$0xff]
      %v588 = vld [vmem:[%s1 + $0xb80] sm:$0xff]
      %v589 = vld [vmem:[%s1 + $0xb88] sm:$0xff]
      %v590 = vld [vmem:[%s1 + $0xb90] sm:$0xff]
      %v591 = vld [vmem:[%s1 + $0xb98] sm:$0xff]
      %v592 = vld [vmem:[%s1 + $0xba0] sm:$0xff]
      %v593 = vld [vmem:[%s1 + $0xba8] sm:$0xff]
      %v594 = vld [vmem:[%s1 + $0xbb0] sm:$0xff]
      %v595 = vld [vmem:[%s1 + $0xbb8] sm:$0xff]
      %v596 = vld [vmem:[%s1 + $0xbc0] sm:$0xff]
      %v597 = vld [vmem:[%s1 + $0xbc8] sm:$0xff]
      %v598 = vld [vmem:[%s1 + $0xbd0] sm:$0xff]
      %v599 = vld [vmem:[%s1 + $0xbd8] sm:$0xff]
      %v600 = vld [vmem:[%s1 + $0xbe0] sm:$0xff]
      %v601 = vld [vmem:[%s1 + $0xbe8] sm:$0xff]
      %v602 = vld [vmem:[%s1 + $0xbf0] sm:$0xff]
      %v603 = vld [vmem:[%s1 + $0xbf8] sm:$0xff]
      %v604 = vld [vmem:[%s1 + $0xc00] sm:$0xff]
      %v605 = vld [vmem:[%s1 + $0xc08] sm:$0xff]
      %v606 = vld [vmem:[%s1 + $0xc10] sm:$0xff]
      %v607 = vld [vmem:[%s1 + $0xc18] sm:$0xff]
      %v608 = vld [vmem:[%s1 + $0xc20] sm:$0xff]
      %v609 = vld [vmem:[%s1 + $0xc28] sm:$0xff]
      %v610 = vld [vmem:[%s1 + $0xc30] sm:$0xff]
      %v611 = vld [vmem:[%s1 + $0xc38] sm:$0xff]
      %v612 = vld [vmem:[%s1 + $0xc40] sm:$0xff]
      %v613 = vld [vmem:[%s1 + $0xc48] sm:$0xff]
      %v614 = vld [vmem:[%s1 + $0xc50] sm:$0xff]
      %v615 = vld [vmem:[%s1 + $0xc58] sm:$0xff]
      %v616 = vld [vmem:[%s1 + $0xc60] sm:$0xff]
      %v617 = vld [vmem:[%s1 + $0xc68] sm:$0xff]
      %v618 = vld [vmem:[%s1 + $0xc70] sm:$0xff]
      %v619 = vld [vmem:[%s1 + $0xc78] sm:$0xff]
      %v620 = vld [vmem:[%s1 + $0xc80] sm:$0xff]
      %v621 = vld [vmem:[%s1 + $0xc88] sm:$0xff]
      %v622 = vld [vmem:[%s1 + $0xc90] sm:$0xff]
      %v623 = vld [vmem:[%s1 + $0xc98] sm:$0xff]
      %v624 = vld [vmem:[%s1 + $0xca0] sm:$0xff]
      %v625 = vld [vmem:[%s1 + $0xca8] sm:$0xff]
      %v626 = vld [vmem:[%s1 + $0xcb0] sm:$0xff]
      %v627 = vld [vmem:[%s1 + $0xcb8] sm:$0xff]
      %v628 = vld [vmem:[%s1 + $0xcc0] sm:$0xff]
      %v629 = vld [vmem:[%s1 + $0xcc8] sm:$0xff]
      %v630 = vld [vmem:[%s1 + $0xcd0] sm:$0xff]
      %v631 = vld [vmem:[%s1 + $0xcd8] sm:$0xff]
      %v632 = vld [vmem:[%s1 + $0xce0] sm:$0xff]
      %v633 = vld [vmem:[%s1 + $0xce8] sm:$0xff]
      %v634 = vld [vmem:[%s1 + $0xcf0] sm:$0xff]
      %v635 = vld [vmem:[%s1 + $0xcf8] sm:$0xff]
      %v636 = vld [vmem:[%s1 + $0xd00] sm:$0xff]
      %v637 = vld [vmem:[%s1 + $0xd08] sm:$0xff]
      %v638 = vld [vmem:[%s1 + $0xd10] sm:$0xff]
      %v639 = vld [vmem:[%s1 + $0xd18] sm:$0xff]
      %v640 = vld [vmem:[%s1 + $0xd20] sm:$0xff]
      %v641 = vld [vmem:[%s1 + $0xd28] sm:$0xff]
      %v642 = vld [vmem:[%s1 + $0xd30] sm:$0xff]
      %v643 = vld [vmem:[%s1 + $0xd38] sm:$0xff]
      %v644 = vld [vmem:[%s1 + $0xd40] sm:$0xff]
      %v645 = vld [vmem:[%s1 + $0xd48] sm:$0xff]
      %v646 = vld [vmem:[%s1 + $0xd50] sm:$0xff]
      %v647 = vld [vmem:[%s1 + $0xd58] sm:$0xff]
      %v648 = vld [vmem:[%s1 + $0xd60] sm:$0xff]
      %v649 = vld [vmem:[%s1 + $0xd68] sm:$0xff]
      %v650 = vld [vmem:[%s1 + $0xd70] sm:$0xff]
      %v651 = vld [vmem:[%s1 + $0xd78] sm:$0xff]
      %v652 = vld [vmem:[%s1 + $0xd80] sm:$0xff]
      %v653 = vld [vmem:[%s1 + $0xd88] sm:$0xff]
      %v654 = vld [vmem:[%s1 + $0xd90] sm:$0xff]
      %v655 = vld [vmem:[%s1 + $0xd98] sm:$0xff]
      %v656 = vld [vmem:[%s1 + $0xda0] sm:$0xff]
      %v657 = vld [vmem:[%s1 + $0xda8] sm:$0xff]
      %v658 = vld [vmem:[%s1 + $0xdb0] sm:$0xff]
      %v659 = vld [vmem:[%s1 + $0xdb8] sm:$0xff]
      %v660 = vld [vmem:[%s1 + $0xdc0] sm:$0xff]
      %v661 = vld [vmem:[%s1 + $0xdc8] sm:$0xff]
      %v662 = vld [vmem:[%s1 + $0xdd0] sm:$0xff]
      %v663 = vld [vmem:[%s1 + $0xdd8] sm:$0xff]
      %v664 = vld [vmem:[%s1 + $0xde0] sm:$0xff]
      %v665 = vld [vmem:[%s1 + $0xde8] sm:$0xff]
      %v666 = vld [vmem:[%s1 + $0xdf0] sm:$0xff]
      %v667 = vld [vmem:[%s1 + $0xdf8] sm:$0xff]
      %v668 = vld [vmem:[%s1 + $0xe00] sm:$0xff]
      %v669 = vld [vmem:[%s1 + $0xe08] sm:$0xff]
      %v670 = vld [vmem:[%s1 + $0xe10] sm:$0xff]
      %v671 = vld [vmem:[%s1 + $0xe18] sm:$0xff]
      %v672 = vld [vmem:[%s1 + $0xe20] sm:$0xff]
      %v673 = vld [vmem:[%s1 + $0xe28] sm:$0xff]
      %v674 = vld [vmem:[%s1 + $0xe30] sm:$0xff]
      %v675 = vld [vmem:[%s1 + $0xe38] sm:$0xff]
      %v676 = vld [vmem:[%s1 + $0xe40] sm:$0xff]
      %v677 = vld [vmem:[%s1 + $0xe48] sm:$0xff]
      %v678 = vld [vmem:[%s1 + $0xe50] sm:$0xff]
      %v679 = vld [vmem:[%s1 + $0xe58] sm:$0xff]
      %v680 = vld [vmem:[%s1 + $0xe60] sm:$0xff]
      %v681 = vld [vmem:[%s1 + $0xe68] sm:$0xff]
      %v682 = vld [vmem:[%s1 + $0xe70] sm:$0xff]
      %v683 = vld [vmem:[%s1 + $0xe78] sm:$0xff]
      %v684 = vld [vmem:[%s1 + $0xe80] sm:$0xff]
      %v685 = vld [vmem:[%s1 + $0xe88] sm:$0xff]
      %v686 = vld [vmem:[%s1 + $0xe90] sm:$0xff]
      %v687 = vld [vmem:[%s1 + $0xe98] sm:$0xff]
      %v688 = vld [vmem:[%s1 + $0xea0] sm:$0xff]
      %v689 = vld [vmem:[%s1 + $0xea8] sm:$0xff]
      %v690 = vld [vmem:[%s1 + $0xeb0] sm:$0xff]
      %v691 = vld [vmem:[%s1 + $0xeb8] sm:$0xff]
      %v692 = vld [vmem:[%s1 + $0xec0] sm:$0xff]
      %v693 = vld [vmem:[%s1 + $0xec8] sm:$0xff]
      %v694 = vld [vmem:[%s1 + $0xed0] sm:$0xff]
      %v695 = vld [vmem:[%s1 + $0xed8] sm:$0xff]
      %v696 = vld [vmem:[%s1 + $0xee0] sm:$0xff]
      %v697 = vld [vmem:[%s1 + $0xee8] sm:$0xff]
      %v698 = vld [vmem:[%s1 + $0xef0] sm:$0xff]
      %v699 = vld [vmem:[%s1 + $0xef8] sm:$0xff]
      %v700 = vld [vmem:[%s1 + $0xf00] sm:$0xff]
      %v701 = vld [vmem:[%s1 + $0xf08] sm:$0xff]
      %v702 = vld [vmem:[%s1 + $0xf10] sm:$0xff]
      %v703 = vld [vmem:[%s1 + $0xf18] sm:$0xff]
      %v704 = vld [vmem:[%s1 + $0xf20] sm:$0xff]
      %v705 = vld [vmem:[%s1 + $0xf28] sm:$0xff]
      %v706 = vld [vmem:[%s1 + $0xf30] sm:$0xff]
      %v707 = vld [vmem:[%s1 + $0xf38] sm:$0xff]
      %v708 = vld [vmem:[%s1 + $0xf40] sm:$0xff]
      %v709 = vld [vmem:[%s1 + $0xf48] sm:$0xff]
      %v710 = vld [vmem:[%s1 + $0xf50] sm:$0xff]
      %v711 = vld [vmem:[%s1 + $0xf58] sm:$0xff]
      %v712 = vld [vmem:[%s1 + $0xf60] sm:$0xff]
      %v713 = vld [vmem:[%s1 + $0xf68] sm:$0xff]
      %v714 = vld [vmem:[%s1 + $0xf70] sm:$0xff]
      %v715 = vld [vmem:[%s1 + $0xf78] sm:$0xff]
      %v716 = vld [vmem:[%s1 + $0xf80] sm:$0xff]
      %v717 = vld [vmem:[%s1 + $0xf88] sm:$0xff]
      %v718 = vld [vmem:[%s1 + $0xf90] sm:$0xff]
      %v719 = vld [vmem:[%s1 + $0xf98] sm:$0xff]
      %v720 = vld [vmem:[%s1 + $0xfa0] sm:$0xff]
      %v721 = vld [vmem:[%s1 + $0xfa8] sm:$0xff]
      %v722 = vld [vmem:[%s1 + $0xfb0] sm:$0xff]
      %v723 = vld [vmem:[%s1 + $0xfb8] sm:$0xff]
      %v724 = vld [vmem:[%s1 + $0xfc0] sm:$0xff]
      %v725 = vld [vmem:[%s1 + $0xfc8] sm:$0xff]
      %v726 = vld [vmem:[%s1 + $0xfd0] sm:$0xff]
      %v727 = vld [vmem:[%s1 + $0xfd8] sm:$0xff]
      %v728 = vld [vmem:[%s1 + $0xfe0] sm:$0xff]
      %v729 = vld [vmem:[%s1 + $0xfe8] sm:$0xff]
      %v730 = vld [vmem:[%s1 + $0xff0] sm:$0xff]
      %v731 = vld [vmem:[%s1 + $0xff8] sm:$0xff]
      %v732 = vld [vmem:[%s1 + $0x1000] sm:$0xff]
      %v733 = vld [vmem:[%s1 + $0x1008] sm:$0xff]
      %v734 = vld [vmem:[%s1 + $0x1010] sm:$0xff]
      %v735 = vld [vmem:[%s1 + $0x1018] sm:$0xff]
      %v736 = vld [vmem:[%s1 + $0x1020] sm:$0xff]
      %v737 = vld [vmem:[%s1 + $0x1028] sm:$0xff]
      %v738 = vld [vmem:[%s1 + $0x1030] sm:$0xff]
      %v739 = vld [vmem:[%s1 + $0x1038] sm:$0xff]
      %v740 = vld [vmem:[%s1 + $0x1040] sm:$0xff]
      %v741 = vld [vmem:[%s1 + $0x1048] sm:$0xff]
      %v742 = vld [vmem:[%s1 + $0x1050] sm:$0xff]
      %v743 = vld [vmem:[%s1 + $0x1058] sm:$0xff]
      %v744 = vld [vmem:[%s1 + $0x1060] sm:$0xff]
      %v745 = vld [vmem:[%s1 + $0x1068] sm:$0xff]
      %v746 = vld [vmem:[%s1 + $0x1070] sm:$0xff]
      %v747 = vld [vmem:[%s1 + $0x1078] sm:$0xff]
      %v748 = vld [vmem:[%s1 + $0x1080] sm:$0xff]
      %v749 = vld [vmem:[%s1 + $0x1088] sm:$0xff]
      %v750 = vld [vmem:[%s1 + $0x1090] sm:$0xff]
      %v751 = vld [vmem:[%s1 + $0x1098] sm:$0xff]
      %v752 = vld [vmem:[%s1 + $0x10a0] sm:$0xff]
      %v753 = vld [vmem:[%s1 + $0x10a8] sm:$0xff]
      %v754 = vld [vmem:[%s1 + $0x10b0] sm:$0xff]
      %v755 = vld [vmem:[%s1 + $0x10b8] sm:$0xff]
      %v756 = vld [vmem:[%s1 + $0x10c0] sm:$0xff]
      %v757 = vld [vmem:[%s1 + $0x10c8] sm:$0xff]
      %v758 = vld [vmem:[%s1 + $0x10d0] sm:$0xff]
      %v759 = vld [vmem:[%s1 + $0x10d8] sm:$0xff]
      %v760 = vld [vmem:[%s1 + $0x10e0] sm:$0xff]
      %v761 = vld [vmem:[%s1 + $0x10e8] sm:$0xff]
      %v762 = vld [vmem:[%s1 + $0x10f0] sm:$0xff]
      %v763 = vld [vmem:[%s1 + $0x10f8] sm:$0xff]
      %v764 = vld [vmem:[%s1 + $0x1100] sm:$0xff]
      %v765 = vld [vmem:[%s1 + $0x1108] sm:$0xff]
      %v766 = vld [vmem:[%s1 + $0x1110] sm:$0xff]
      %v767 = vld [vmem:[%s1 + $0x1118] sm:$0xff]
      %v768 = vld [vmem:[%s1 + $0x1120] sm:$0xff]
      %v769 = vld [vmem:[%s1 + $0x1128] sm:$0xff]
      %v770 = vld [vmem:[%s1 + $0x1130] sm:$0xff]
      %v771 = vld [vmem:[%s1 + $0x1138] sm:$0xff]
      %v772 = vld [vmem:[%s1 + $0x1140] sm:$0xff]
      %v773 = vld [vmem:[%s1 + $0x1148] sm:$0xff]
      %v774 = vld [vmem:[%s1 + $0x1150] sm:$0xff]
      %v775 = vld [vmem:[%s1 + $0x1158] sm:$0xff]
      %v776 = vld [vmem:[%s1 + $0x1160] sm:$0xff]
      %v777 = vld [vmem:[%s1 + $0x1168] sm:$0xff]
      %v778 = vld [vmem:[%s1 + $0x1170] sm:$0xff]
      %v779 = vld [vmem:[%s1 + $0x1178] sm:$0xff]
      %v780 = vld [vmem:[%s1 + $0x1180] sm:$0xff]
      %v781 = vld [vmem:[%s1 + $0x1188] sm:$0xff]
      %v782 = vld [vmem:[%s1 + $0x1190] sm:$0xff]
      %v783 = vld [vmem:[%s1 + $0x1198] sm:$0xff]
      %v784 = vld [vmem:[%s1 + $0x11a0] sm:$0xff]
      %v785 = vld [vmem:[%s1 + $0x11a8] sm:$0xff]
      %v786 = vld [vmem:[%s1 + $0x11b0] sm:$0xff]
      %v787 = vld [vmem:[%s1 + $0x11b8] sm:$0xff]
      %v788 = vld [vmem:[%s1 + $0x11c0] sm:$0xff]
      %v789 = vld [vmem:[%s1 + $0x11c8] sm:$0xff]
      %v790 = vld [vmem:[%s1 + $0x11d0] sm:$0xff]
      %v791 = vld [vmem:[%s1 + $0x11d8] sm:$0xff]
      %v792 = vld [vmem:[%s1 + $0x11e0] sm:$0xff]
      %v793 = vld [vmem:[%s1 + $0x11e8] sm:$0xff]
      %v794 = vld [vmem:[%s1 + $0x11f0] sm:$0xff]
      %v795 = vld [vmem:[%s1 + $0x11f8] sm:$0xff]
      %v796 = vld [vmem:[%s1 + $0x1200] sm:$0xff]
      %v797 = vld [vmem:[%s1 + $0x1208] sm:$0xff]
      %v798 = vld [vmem:[%s1 + $0x1210] sm:$0xff]
      %v799 = vld [vmem:[%s1 + $0x1218] sm:$0xff]
      %v800 = vld [vmem:[%s1 + $0x1220] sm:$0xff]
      %v801 = vld [vmem:[%s1 + $0x1228] sm:$0xff]
      %v802 = vld [vmem:[%s1 + $0x1230] sm:$0xff]
      %v803 = vld [vmem:[%s1 + $0x1238] sm:$0xff]
      %v804 = vld [vmem:[%s1 + $0x1240] sm:$0xff]
      %v805 = vld [vmem:[%s1 + $0x1248] sm:$0xff]
      %v806 = vld [vmem:[%s1 + $0x1250] sm:$0xff]
      %v807 = vld [vmem:[%s1 + $0x1258] sm:$0xff]
      %v808 = vld [vmem:[%s1 + $0x1260] sm:$0xff]
      %v809 = vld [vmem:[%s1 + $0x1268] sm:$0xff]
      %v810 = vld [vmem:[%s1 + $0x1270] sm:$0xff]
      %v811 = vld [vmem:[%s1 + $0x1278] sm:$0xff]
      %v812 = vld [vmem:[%s1 + $0x1280] sm:$0xff]
      %v813 = vld [vmem:[%s1 + $0x1288] sm:$0xff]
      %v814 = vld [vmem:[%s1 + $0x1290] sm:$0xff]
      %v815 = vld [vmem:[%s1 + $0x1298] sm:$0xff]
      %v816 = vld [vmem:[%s1 + $0x12a0] sm:$0xff]
      %v817 = vld [vmem:[%s1 + $0x12a8] sm:$0xff]
      %v818 = vld [vmem:[%s1 + $0x12b0] sm:$0xff]
      %v819 = vld [vmem:[%s1 + $0x12b8] sm:$0xff]
      %v820 = vld [vmem:[%s1 + $0x12c0] sm:$0xff]
      %v821 = vld [vmem:[%s1 + $0x12c8] sm:$0xff]
      %v822 = vld [vmem:[%s1 + $0x12d0] sm:$0xff]
      %v823 = vld [vmem:[%s1 + $0x12d8] sm:$0xff]
      %v824 = vld [vmem:[%s1 + $0x12e0] sm:$0xff]
      %v825 = vld [vmem:[%s1 + $0x12e8] sm:$0xff]
      %v826 = vld [vmem:[%s1 + $0x12f0] sm:$0xff]
      %v827 = vld [vmem:[%s1 + $0x12f8] sm:$0xff]
      %v828 = vld [vmem:[%s1 + $0x1300] sm:$0xff]
      %v829 = vld [vmem:[%s1 + $0x1308] sm:$0xff]
      %v830 = vld [vmem:[%s1 + $0x1310] sm:$0xff]
      %v831 = vld [vmem:[%s1 + $0x1318] sm:$0xff]
      %v832 = vld [vmem:[%s1 + $0x1320] sm:$0xff]
      %v833 = vld [vmem:[%s1 + $0x1328] sm:$0xff]
      %v834 = vld [vmem:[%s1 + $0x1330] sm:$0xff]
      %v835 = vld [vmem:[%s1 + $0x1338] sm:$0xff]
      %v836 = vld [vmem:[%s1 + $0x1340] sm:$0xff]
      %v837 = vld [vmem:[%s1 + $0x1348] sm:$0xff]
      %v838 = vld [vmem:[%s1 + $0x1350] sm:$0xff]
      %v839 = vld [vmem:[%s1 + $0x1358] sm:$0xff]
      %v840 = vld [vmem:[%s1 + $0x1360] sm:$0xff]
      %v841 = vld [vmem:[%s1 + $0x1368] sm:$0xff]
      %v842 = vld [vmem:[%s1 + $0x1370] sm:$0xff]
      %v843 = vld [vmem:[%s1 + $0x1378] sm:$0xff]
      %v844 = vld [vmem:[%s1 + $0x1380] sm:$0xff]
      %v845 = vld [vmem:[%s1 + $0x1388] sm:$0xff]
      %v846 = vld [vmem:[%s1 + $0x1390] sm:$0xff]
      %v847 = vld [vmem:[%s1 + $0x1398] sm:$0xff]
      %v848 = vld [vmem:[%s1 + $0x13a0] sm:$0xff]
      %v849 = vld [vmem:[%s1 + $0x13a8] sm:$0xff]
      %v850 = vld [vmem:[%s1 + $0x13b0] sm:$0xff]
      %v851 = vld [vmem:[%s1 + $0x13b8] sm:$0xff]
      %v852 = vld [vmem:[%s1 + $0x13c0] sm:$0xff]
      %v853 = vld [vmem:[%s1 + $0x13c8] sm:$0xff]
      %v854 = vld [vmem:[%s1 + $0x13d0] sm:$0xff]
      %v855 = vld [vmem:[%s1 + $0x13d8] sm:$0xff]
      %v856 = vld [vmem:[%s1 + $0x13e0] sm:$0xff]
      %v857 = vld [vmem:[%s1 + $0x13e8] sm:$0xff]
      %v858 = vld [vmem:[%s1 + $0x13f0] sm:$0xff]
      %v859 = vld [vmem:[%s1 + $0x13f8] sm:$0xff]
      %v860 = vld [vmem:[%s1 + $0x1400] sm:$0xff]
      %v861 = vld [vmem:[%s1 + $0x1408] sm:$0xff]
      %v862 = vld [vmem:[%s1 + $0x1410] sm:$0xff]
      %v863 = vld [vmem:[%s1 + $0x1418] sm:$0xff]
      %v864 = vld [vmem:[%s1 + $0x1420] sm:$0xff]
      %v865 = vld [vmem:[%s1 + $0x1428] sm:$0xff]
      %v866 = vld [vmem:[%s1 + $0x1430] sm:$0xff]
      %v867 = vld [vmem:[%s1 + $0x1438] sm:$0xff]
      %v868 = vld [vmem:[%s1 + $0x1440] sm:$0xff]
      %v869 = vld [vmem:[%s1 + $0x1448] sm:$0xff]
      %v870 = vld [vmem:[%s1 + $0x1450] sm:$0xff]
      %v871 = vld [vmem:[%s1 + $0x1458] sm:$0xff]
      %v872 = vld [vmem:[%s1 + $0x1460] sm:$0xff]
      %v873 = vld [vmem:[%s1 + $0x1468] sm:$0xff]
      %v874 = vld [vmem:[%s1 + $0x1470] sm:$0xff]
      %v875 = vld [vmem:[%s1 + $0x1478] sm:$0xff]
      %v876 = vld [vmem:[%s1 + $0x1480] sm:$0xff]
      %v877 = vld [vmem:[%s1 + $0x1488] sm:$0xff]
      %v878 = vld [vmem:[%s1 + $0x1490] sm:$0xff]
      %v879 = vld [vmem:[%s1 + $0x1498] sm:$0xff]
      %v880 = vld [vmem:[%s1 + $0x14a0] sm:$0xff]
      %v881 = vld [vmem:[%s1 + $0x14a8] sm:$0xff]
      %v882 = vld [vmem:[%s1 + $0x14b0] sm:$0xff]
      %v883 = vld [vmem:[%s1 + $0x14b8] sm:$0xff]
      %v884 = vld [vmem:[%s1 + $0x14c0] sm:$0xff]
      %v885 = vld [vmem:[%s1 + $0x14c8] sm:$0xff]
      %v886 = vld [vmem:[%s1 + $0x14d0] sm:$0xff]
      %v887 = vld [vmem:[%s1 + $0x14d8] sm:$0xff]
      %v888 = vld [vmem:[%s1 + $0x14e0] sm:$0xff]
      %v889 = vld [vmem:[%s1 + $0x14e8] sm:$0xff]
      %v890 = vld [vmem:[%s1 + $0x14f0] sm:$0xff]
      %v891 = vld [vmem:[%s1 + $0x14f8] sm:$0xff]
      %v892 = vld [vmem:[%s1 + $0x1500] sm:$0xff]
      %v893 = vld [vmem:[%s1 + $0x1508] sm:$0xff]
      %v894 = vld [vmem:[%s1 + $0x1510] sm:$0xff]
      %v895 = vld [vmem:[%s1 + $0x1518] sm:$0xff]
      %v896 = vld [vmem:[%s1 + $0x1520] sm:$0xff]
      %v897 = vld [vmem:[%s1 + $0x1528] sm:$0xff]
      %v898 = vld [vmem:[%s1 + $0x1530] sm:$0xff]
      %v899 = vld [vmem:[%s1 + $0x1538] sm:$0xff]
      %v900 = vld [vmem:[%s1 + $0x1540] sm:$0xff]
      %v901 = vld [vmem:[%s1 + $0x1548] sm:$0xff]
      %v902 = vld [vmem:[%s1 + $0x1550] sm:$0xff]
      %v903 = vld [vmem:[%s1 + $0x1558] sm:$0xff]
      %v904 = vld [vmem:[%s1 + $0x1560] sm:$0xff]
      %v905 = vld [vmem:[%s1 + $0x1568] sm:$0xff]
      %v906 = vld [vmem:[%s1 + $0x1570] sm:$0xff]
      %v907 = vld [vmem:[%s1 + $0x1578] sm:$0xff]
      %v908 = vld [vmem:[%s1 + $0x1580] sm:$0xff]
      %v909 = vld [vmem:[%s1 + $0x1588] sm:$0xff]
      %v910 = vld [vmem:[%s1 + $0x1590] sm:$0xff]
      %v911 = vld [vmem:[%s1 + $0x1598] sm:$0xff]
      %v912 = vld [vmem:[%s1 + $0x15a0] sm:$0xff]
      %v913 = vld [vmem:[%s1 + $0x15a8] sm:$0xff]
      %v914 = vld [vmem:[%s1 + $0x15b0] sm:$0xff]
      %v915 = vld [vmem:[%s1 + $0x15b8] sm:$0xff]
      %v916 = vld [vmem:[%s1 + $0x15c0] sm:$0xff]
      %v917 = vld [vmem:[%s1 + $0x15c8] sm:$0xff]
      %v918 = vld [vmem:[%s1 + $0x15d0] sm:$0xff]
      %v919 = vld [vmem:[%s1 + $0x15d8] sm:$0xff]
      %v920 = vld [vmem:[%s1 + $0x15e0] sm:$0xff]
      %v921 = vld [vmem:[%s1 + $0x15e8] sm:$0xff]
      %v922 = vld [vmem:[%s1 + $0x15f0] sm:$0xff]
      %v923 = vld [vmem:[%s1 + $0x15f8] sm:$0xff]
      %v924 = vld [vmem:[%s1 + $0x1600] sm:$0xff]
      %v925 = vld [vmem:[%s1 + $0x1608] sm:$0xff]
      %v926 = vld [vmem:[%s1 + $0x1610] sm:$0xff]
      %v927 = vld [vmem:[%s1 + $0x1618] sm:$0xff]
      %v928 = vld [vmem:[%s1 + $0x1620] sm:$0xff]
      %v929 = vld [vmem:[%s1 + $0x1628] sm:$0xff]
      %v930 = vld [vmem:[%s1 + $0x1630] sm:$0xff]
      %v931 = vld [vmem:[%s1 + $0x1638] sm:$0xff]
      %v932 = vld [vmem:[%s1 + $0x1640] sm:$0xff]
      %v933 = vld [vmem:[%s1 + $0x1648] sm:$0xff]
      %v934 = vld [vmem:[%s1 + $0x1650] sm:$0xff]
      %v935 = vld [vmem:[%s1 + $0x1658] sm:$0xff]
      %v936 = vld [vmem:[%s1 + $0x1660] sm:$0xff]
      %v937 = vld [vmem:[%s1 + $0x1668] sm:$0xff]
      %v938 = vld [vmem:[%s1 + $0x1670] sm:$0xff]
      %v939 = vld [vmem:[%s1 + $0x1678] sm:$0xff]
      %v940 = vld [vmem:[%s1 + $0x1680] sm:$0xff]
      %v941 = vld [vmem:[%s1 + $0x1688] sm:$0xff]
      %v942 = vld [vmem:[%s1 + $0x1690] sm:$0xff]
      %v943 = vld [vmem:[%s1 + $0x1698] sm:$0xff]
      %v944 = vld [vmem:[%s1 + $0x16a0] sm:$0xff]
      %v945 = vld [vmem:[%s1 + $0x16a8] sm:$0xff]
      %v946 = vld [vmem:[%s1 + $0x16b0] sm:$0xff]
      %v947 = vld [vmem:[%s1 + $0x16b8] sm:$0xff]
      %v948 = vld [vmem:[%s1 + $0x16c0] sm:$0xff]
      %v949 = vld [vmem:[%s1 + $0x16c8] sm:$0xff]
      %v950 = vld [vmem:[%s1 + $0x16d0] sm:$0xff]
      %v951 = vld [vmem:[%s1 + $0x16d8] sm:$0xff]
      %v952 = vld [vmem:[%s1 + $0x16e0] sm:$0xff]
      %v953 = vld [vmem:[%s1 + $0x16e8] sm:$0xff]
      %v954 = vld [vmem:[%s1 + $0x16f0] sm:$0xff]
      %v955 = vld [vmem:[%s1 + $0x16f8] sm:$0xff]
      %v956 = vld [vmem:[%s1 + $0x1700] sm:$0xff]
      %v957 = vld [vmem:[%s1 + $0x1708] sm:$0xff]
      %v958 = vld [vmem:[%s1 + $0x1710] sm:$0xff]
      %v959 = vld [vmem:[%s1 + $0x1718] sm:$0xff]
      %v960 = vld [vmem:[%s1 + $0x1720] sm:$0xff]
      %v961 = vld [vmem:[%s1 + $0x1728] sm:$0xff]
      %v962 = vld [vmem:[%s1 + $0x1730] sm:$0xff]
      %v963 = vld [vmem:[%s1 + $0x1738] sm:$0xff]
      %v964 = vld [vmem:[%s1 + $0x1740] sm:$0xff]
      %v965 = vld [vmem:[%s1 + $0x1748] sm:$0xff]
      %v966 = vld [vmem:[%s1 + $0x1750] sm:$0xff]
      %v967 = vld [vmem:[%s1 + $0x1758] sm:$0xff]
      %v968 = vld [vmem:[%s1 + $0x1760] sm:$0xff]
      %v969 = vld [vmem:[%s1 + $0x1768] sm:$0xff]
      %v970 = vld [vmem:[%s1 + $0x1770] sm:$0xff]
      %v971 = vld [vmem:[%s1 + $0x1778] sm:$0xff]
      %v972 = vld [vmem:[%s1 + $0x1780] sm:$0xff]
      %v973 = vld [vmem:[%s1 + $0x1788] sm:$0xff]
      %v974 = vld [vmem:[%s1 + $0x1790] sm:$0xff]
      %v975 = vld [vmem:[%s1 + $0x1798] sm:$0xff]
      %v976 = vld [vmem:[%s1 + $0x17a0] sm:$0xff]
      %v977 = vld [vmem:[%s1 + $0x17a8] sm:$0xff]
      %v978 = vld [vmem:[%s1 + $0x17b0] sm:$0xff]
      %v979 = vld [vmem:[%s1 + $0x17b8] sm:$0xff]
      %v980 = vld [vmem:[%s1 + $0x17c0] sm:$0xff]
      %v981 = vld [vmem:[%s1 + $0x17c8] sm:$0xff]
      %v982 = vld [vmem:[%s1 + $0x17d0] sm:$0xff]
      %v983 = vld [vmem:[%s1 + $0x17d8] sm:$0xff]
      %v984 = vld [vmem:[%s1 + $0x17e0] sm:$0xff]
      %v985 = vld [vmem:[%s1 + $0x17e8] sm:$0xff]
      %v986 = vld [vmem:[%s1 + $0x17f0] sm:$0xff]
      %v987 = vld [vmem:[%s1 + $0x17f8] sm:$0xff]
      %v988 = vld [vmem:[%s1 + $0x1800] sm:$0xff]
      %v989 = vld [vmem:[%s1 + $0x1808] sm:$0xff]
      %v990 = vld [vmem:[%s1 + $0x1810] sm:$0xff]
      %v991 = vld [vmem:[%s1 + $0x1818] sm:$0xff]
      %v992 = vld [vmem:[%s1 + $0x1820] sm:$0xff]
      %v993 = vld [vmem:[%s1 + $0x1828] sm:$0xff]
      %v994 = vld [vmem:[%s1 + $0x1830] sm:$0xff]
      %v995 = vld [vmem:[%s1 + $0x1838] sm:$0xff]
      %v996 = vld [vmem:[%s1 + $0x1840] sm:$0xff]
      %v997 = vld [vmem:[%s1 + $0x1848] sm:$0xff]
      %v998 = vld [vmem:[%s1 + $0x1850] sm:$0xff]
      %v999 = vld [vmem:[%s1 + $0x1858] sm:$0xff]
      %v1000 = vld [vmem:[%s1 + $0x1860] sm:$0xff]
      %v1001 = vld [vmem:[%s1 + $0x1868] sm:$0xff]
      %v1002 = vld [vmem:[%s1 + $0x1870] sm:$0xff]
      %v1003 = vld [vmem:[%s1 + $0x1878] sm:$0xff]
      %v1004 = vld [vmem:[%s1 + $0x1880] sm:$0xff]
      %v1005 = vld [vmem:[%s1 + $0x1888] sm:$0xff]
      %v1006 = vld [vmem:[%s1 + $0x1890] sm:$0xff]
      %v1007 = vld [vmem:[%s1 + $0x1898] sm:$0xff]
      %v1008 = vld [vmem:[%s1 + $0x18a0] sm:$0xff]
      %v1009 = vld [vmem:[%s1 + $0x18a8] sm:$0xff]
      %v1010 = vld [vmem:[%s1 + $0x18b0] sm:$0xff]
      %v1011 = vld [vmem:[%s1 + $0x18b8] sm:$0xff]
      %v1012 = vld [vmem:[%s1 + $0x18c0] sm:$0xff]
      %v1013 = vld [vmem:[%s1 + $0x18c8] sm:$0xff]
      %v1014 = vld [vmem:[%s1 + $0x18d0] sm:$0xff]
      %v1015 = vld [vmem:[%s1 + $0x18d8] sm:$0xff]
      %v1016 = vld [vmem:[%s1 + $0x18e0] sm:$0xff]
      %v1017 = vld [vmem:[%s1 + $0x18e8] sm:$0xff]
      %v1018 = vld [vmem:[%s1 + $0x18f0] sm:$0xff]
      %v1019 = vld [vmem:[%s1 + $0x18f8] sm:$0xff]
      %v1020 = vld [vmem:[%s1 + $0x1900] sm:$0xff]
      %v1021 = vld [vmem:[%s1 + $0x1908] sm:$0xff]
      %v1022 = vld [vmem:[%s1 + $0x1910] sm:$0xff]
      %v1023 = vld [vmem:[%s1 + $0x1918] sm:$0xff]
      %v1024 = vld [vmem:[%s1 + $0x1920] sm:$0xff]
      %v1025 = vld [vmem:[%s1 + $0x1928] sm:$0xff]
      %v1026 = vld [vmem:[%s1 + $0x1930] sm:$0xff]
      %v1027 = vld [vmem:[%s1 + $0x1938] sm:$0xff]
      %v1028 = vld [vmem:[%s1 + $0x1940] sm:$0xff]
      %v1029 = vld [vmem:[%s1 + $0x1948] sm:$0xff]
      %v1030 = vld [vmem:[%s1 + $0x1950] sm:$0xff]
      %v1031 = vld [vmem:[%s1 + $0x1958] sm:$0xff]
      %v1032 = vld [vmem:[%s1 + $0x1960] sm:$0xff]
      %v1033 = vld [vmem:[%s1 + $0x1968] sm:$0xff]
      %v1034 = vld [vmem:[%s1 + $0x1970] sm:$0xff]
      %v1035 = vld [vmem:[%s1 + $0x1978] sm:$0xff]
      %v1036 = vld [vmem:[%s1 + $0x1980] sm:$0xff]
      %v1037 = vld [vmem:[%s1 + $0x1988] sm:$0xff]
      %v1038 = vld [vmem:[%s1 + $0x1990] sm:$0xff]
      %v1039 = vld [vmem:[%s1 + $0x1998] sm:$0xff]
      %v1040 = vld [vmem:[%s1 + $0x19a0] sm:$0xff]
      %v1041 = vld [vmem:[%s1 + $0x19a8] sm:$0xff]
      %v1042 = vld [vmem:[%s1 + $0x19b0] sm:$0xff]
      %v1043 = vld [vmem:[%s1 + $0x19b8] sm:$0xff]
      %v1044 = vld [vmem:[%s1 + $0x19c0] sm:$0xff]
      %v1045 = vld [vmem:[%s1 + $0x19c8] sm:$0xff]
      %v1046 = vld [vmem:[%s1 + $0x19d0] sm:$0xff]
      %v1047 = vld [vmem:[%s1 + $0x19d8] sm:$0xff]
      %v1048 = vld [vmem:[%s1 + $0x19e0] sm:$0xff]
      %v1049 = vld [vmem:[%s1 + $0x19e8] sm:$0xff]
      %v1050 = vld [vmem:[%s1 + $0x19f0] sm:$0xff]
      %v1051 = vld [vmem:[%s1 + $0x19f8] sm:$0xff]
      %v1052 = vld [vmem:[%s1 + $0x1a00] sm:$0xff]
      %v1053 = vld [vmem:[%s1 + $0x1a08] sm:$0xff]
      %v1054 = vld [vmem:[%s1 + $0x1a10] sm:$0xff]
      %v1055 = vld [vmem:[%s1 + $0x1a18] sm:$0xff]
      %v1056 = vld [vmem:[%s1 + $0x1a20] sm:$0xff]
      %v1057 = vld [vmem:[%s1 + $0x1a28] sm:$0xff]
      %v1058 = vld [vmem:[%s1 + $0x1a30] sm:$0xff]
      %v1059 = vld [vmem:[%s1 + $0x1a38] sm:$0xff]
      %v1060 = vld [vmem:[%s1 + $0x1a40] sm:$0xff]
      %v1061 = vld [vmem:[%s1 + $0x1a48] sm:$0xff]
      %v1062 = vld [vmem:[%s1 + $0x1a50] sm:$0xff]
      %v1063 = vld [vmem:[%s1 + $0x1a58] sm:$0xff]
      %v1064 = vld [vmem:[%s1 + $0x1a60] sm:$0xff]
      %v1065 = vld [vmem:[%s1 + $0x1a68] sm:$0xff]
      %v1066 = vld [vmem:[%s1 + $0x1a70] sm:$0xff]
      %v1067 = vld [vmem:[%s1 + $0x1a78] sm:$0xff]
      %v1068 = vld [vmem:[%s1 + $0x1a80] sm:$0xff]
      %v1069 = vld [vmem:[%s1 + $0x1a88] sm:$0xff]
      %v1070 = vld [vmem:[%s1 + $0x1a90] sm:$0xff]
      %v1071 = vld [vmem:[%s1 + $0x1a98] sm:$0xff]
      %v1072 = vld [vmem:[%s1 + $0x1aa0] sm:$0xff]
      %v1073 = vld [vmem:[%s1 + $0x1aa8] sm:$0xff]
      %v1074 = vld [vmem:[%s1 + $0x1ab0] sm:$0xff]
      %v1075 = vld [vmem:[%s1 + $0x1ab8] sm:$0xff]
      %v1076 = vld [vmem:[%s1 + $0x1ac0] sm:$0xff]
      %v1077 = vld [vmem:[%s1 + $0x1ac8] sm:$0xff]
      %v1078 = vld [vmem:[%s1 + $0x1ad0] sm:$0xff]
      %v1079 = vld [vmem:[%s1 + $0x1ad8] sm:$0xff]
      %v1080 = vld [vmem:[%s1 + $0x1ae0] sm:$0xff]
      %v1081 = vld [vmem:[%s1 + $0x1ae8] sm:$0xff]
      %v1082 = vld [vmem:[%s1 + $0x1af0] sm:$0xff]
      %v1083 = vld [vmem:[%s1 + $0x1af8] sm:$0xff]
      %v1084 = vld [vmem:[%s1 + $0x1b00] sm:$0xff]
      %v1085 = vld [vmem:[%s1 + $0x1b08] sm:$0xff]
      %v1086 = vld [vmem:[%s1 + $0x1b10] sm:$0xff]
      %v1087 = vld [vmem:[%s1 + $0x1b18] sm:$0xff]
      %v1088 = vld [vmem:[%s1 + $0x1b20] sm:$0xff]
      %v1089 = vld [vmem:[%s1 + $0x1b28] sm:$0xff]
      %v1090 = vld [vmem:[%s1 + $0x1b30] sm:$0xff]
      %v1091 = vld [vmem:[%s1 + $0x1b38] sm:$0xff]
      %v1092 = vld [vmem:[%s1 + $0x1b40] sm:$0xff]
      %v1093 = vld [vmem:[%s1 + $0x1b48] sm:$0xff]
      %v1094 = vld [vmem:[%s1 + $0x1b50] sm:$0xff]
      %v1095 = vld [vmem:[%s1 + $0x1b58] sm:$0xff]
      %v1096 = vld [vmem:[%s1 + $0x1b60] sm:$0xff]
      %v1097 = vld [vmem:[%s1 + $0x1b68] sm:$0xff]
      %v1098 = vld [vmem:[%s1 + $0x1b70] sm:$0xff]
      %v1099 = vld [vmem:[%s1 + $0x1b78] sm:$0xff]
      %v1100 = vld [vmem:[%s1 + $0x1b80] sm:$0xff]
      %v1101 = vld [vmem:[%s1 + $0x1b88] sm:$0xff]
      %v1102 = vld [vmem:[%s1 + $0x1b90] sm:$0xff]
      %v1103 = vld [vmem:[%s1 + $0x1b98] sm:$0xff]
      %v1104 = vld [vmem:[%s1 + $0x1ba0] sm:$0xff]
      %v1105 = vld [vmem:[%s1 + $0x1ba8] sm:$0xff]
      %v1106 = vld [vmem:[%s1 + $0x1bb0] sm:$0xff]
      %v1107 = vld [vmem:[%s1 + $0x1bb8] sm:$0xff]
      %v1108 = vld [vmem:[%s1 + $0x1bc0] sm:$0xff]
      %v1109 = vld [vmem:[%s1 + $0x1bc8] sm:$0xff]
      %v1110 = vld [vmem:[%s1 + $0x1bd0] sm:$0xff]
      %v1111 = vld [vmem:[%s1 + $0x1bd8] sm:$0xff]
      %v1112 = vld [vmem:[%s1 + $0x1be0] sm:$0xff]
      %v1113 = vld [vmem:[%s1 + $0x1be8] sm:$0xff]
      %v1114 = vld [vmem:[%s1 + $0x1bf0] sm:$0xff]
      %v1115 = vld [vmem:[%s1 + $0x1bf8] sm:$0xff]
      %v1116 = vld [vmem:[%s1 + $0x1c00] sm:$0xff]
      %v1117 = vld [vmem:[%s1 + $0x1c08] sm:$0xff]
      %v1118 = vld [vmem:[%s1 + $0x1c10] sm:$0xff]
      %v1119 = vld [vmem:[%s1 + $0x1c18] sm:$0xff]
      %v1120 = vld [vmem:[%s1 + $0x1c20] sm:$0xff]
      %v1121 = vld [vmem:[%s1 + $0x1c28] sm:$0xff]
      %v1122 = vld [vmem:[%s1 + $0x1c30] sm:$0xff]
      %v1123 = vld [vmem:[%s1 + $0x1c38] sm:$0xff]
      %v1124 = vld [vmem:[%s1 + $0x1c40] sm:$0xff]
      %v1125 = vld [vmem:[%s1 + $0x1c48] sm:$0xff]
      %v1126 = vld [vmem:[%s1 + $0x1c50] sm:$0xff]
      %v1127 = vld [vmem:[%s1 + $0x1c58] sm:$0xff]
      %v1128 = vld [vmem:[%s1 + $0x1c60] sm:$0xff]
      %v1129 = vld [vmem:[%s1 + $0x1c68] sm:$0xff]
      %v1130 = vld [vmem:[%s1 + $0x1c70] sm:$0xff]
      %v1131 = vld [vmem:[%s1 + $0x1c78] sm:$0xff]
      %v1132 = vld [vmem:[%s1 + $0x1c80] sm:$0xff]
      %v1133 = vld [vmem:[%s1 + $0x1c88] sm:$0xff]
      %v1134 = vld [vmem:[%s1 + $0x1c90] sm:$0xff]
      %v1135 = vld [vmem:[%s1 + $0x1c98] sm:$0xff]
      %v1136 = vld [vmem:[%s1 + $0x1ca0] sm:$0xff]
      %v1137 = vld [vmem:[%s1 + $0x1ca8] sm:$0xff]
      %v1138 = vld [vmem:[%s1 + $0x1cb0] sm:$0xff]
      %v1139 = vld [vmem:[%s1 + $0x1cb8] sm:$0xff]
      %v1140 = vld [vmem:[%s1 + $0x1cc0] sm:$0xff]
      %v1141 = vld [vmem:[%s1 + $0x1cc8] sm:$0xff]
      %v1142 = vld [vmem:[%s1 + $0x1cd0] sm:$0xff]
      %v1143 = vld [vmem:[%s1 + $0x1cd8] sm:$0xff]
      %v1144 = vld [vmem:[%s1 + $0x1ce0] sm:$0xff]
      %v1145 = vld [vmem:[%s1 + $0x1ce8] sm:$0xff]
      %v1146 = vld [vmem:[%s1 + $0x1cf0] sm:$0xff]
      %v1147 = vld [vmem:[%s1 + $0x1cf8] sm:$0xff]
      %v1148 = vld [vmem:[%s1 + $0x1d00] sm:$0xff]
      %v1149 = vld [vmem:[%s1 + $0x1d08] sm:$0xff]
      %v1150 = vld [vmem:[%s1 + $0x1d10] sm:$0xff]
      %v1151 = vld [vmem:[%s1 + $0x1d18] sm:$0xff]
      %v1152 = vld [vmem:[%s1 + $0x1d20] sm:$0xff]
      %v1153 = vld [vmem:[%s1 + $0x1d28] sm:$0xff]
      %v1154 = vld [vmem:[%s1 + $0x1d30] sm:$0xff]
      %v1155 = vld [vmem:[%s1 + $0x1d38] sm:$0xff]
      %v1156 = vld [vmem:[%s1 + $0x1d40] sm:$0xff]
      %v1157 = vld [vmem:[%s1 + $0x1d48] sm:$0xff]
      %v1158 = vld [vmem:[%s1 + $0x1d50] sm:$0xff]
      %v1159 = vld [vmem:[%s1 + $0x1d58] sm:$0xff]
      %v1160 = vld [vmem:[%s1 + $0x1d60] sm:$0xff]
      %v1161 = vld [vmem:[%s1 + $0x1d68] sm:$0xff]
      %v1162 = vld [vmem:[%s1 + $0x1d70] sm:$0xff]
      %v1163 = vld [vmem:[%s1 + $0x1d78] sm:$0xff]
      %v1164 = vld [vmem:[%s1 + $0x1d80] sm:$0xff]
      %v1165 = vld [vmem:[%s1 + $0x1d88] sm:$0xff]
      %v1166 = vld [vmem:[%s1 + $0x1d90] sm:$0xff]
      %v1167 = vld [vmem:[%s1 + $0x1d98] sm:$0xff]
      %v1168 = vld [vmem:[%s1 + $0x1da0] sm:$0xff]
      %v1169 = vld [vmem:[%s1 + $0x1da8] sm:$0xff]
      %v1170 = vld [vmem:[%s1 + $0x1db0] sm:$0xff]
      %v1171 = vld [vmem:[%s1 + $0x1db8] sm:$0xff]
      %v1172 = vld [vmem:[%s1 + $0x1dc0] sm:$0xff]
      %v1173 = vld [vmem:[%s1 + $0x1dc8] sm:$0xff]
      %v1174 = vld [vmem:[%s1 + $0x1dd0] sm:$0xff]
      %v1175 = vld [vmem:[%s1 + $0x1dd8] sm:$0xff]
      %v1176 = vld [vmem:[%s1 + $0x1de0] sm:$0xff]
      %v1177 = vld [vmem:[%s1 + $0x1de8] sm:$0xff]
      %v1178 = vld [vmem:[%s1 + $0x1df0] sm:$0xff]
      %v1179 = vld [vmem:[%s1 + $0x1df8] sm:$0xff]
      %v1180 = vld [vmem:[%s1 + $0x1e00] sm:$0xff]
      %v1181 = vld [vmem:[%s1 + $0x1e08] sm:$0xff]
      %v1182 = vld [vmem:[%s1 + $0x1e10] sm:$0xff]
      %v1183 = vld [vmem:[%s1 + $0x1e18] sm:$0xff]
      %v1184 = vld [vmem:[%s1 + $0x1e20] sm:$0xff]
      %v1185 = vld [vmem:[%s1 + $0x1e28] sm:$0xff]
      %v1186 = vld [vmem:[%s1 + $0x1e30] sm:$0xff]
      %v1187 = vld [vmem:[%s1 + $0x1e38] sm:$0xff]
      %v1188 = vld [vmem:[%s1 + $0x1e40] sm:$0xff]
      %v1189 = vld [vmem:[%s1 + $0x1e48] sm:$0xff]
      %v1190 = vld [vmem:[%s1 + $0x1e50] sm:$0xff]
      %v1191 = vld [vmem:[%s1 + $0x1e58] sm:$0xff]
      %v1192 = vld [vmem:[%s1 + $0x1e60] sm:$0xff]
      %v1193 = vld [vmem:[%s1 + $0x1e68] sm:$0xff]
      %v1194 = vld [vmem:[%s1 + $0x1e70] sm:$0xff]
      %v1195 = vld [vmem:[%s1 + $0x1e78] sm:$0xff]
      %v1196 = vld [vmem:[%s1 + $0x1e80] sm:$0xff]
      %v1197 = vld [vmem:[%s1 + $0x1e88] sm:$0xff]
      %v1198 = vld [vmem:[%s1 + $0x1e90] sm:$0xff]
      %v1199 = vld [vmem:[%s1 + $0x1e98] sm:$0xff]
      %v1200 = vld [vmem:[%s1 + $0x1ea0] sm:$0xff]
      %v1201 = vld [vmem:[%s1 + $0x1ea8] sm:$0xff]
      %v1202 = vld [vmem:[%s1 + $0x1eb0] sm:$0xff]
      %v1203 = vld [vmem:[%s1 + $0x1eb8] sm:$0xff]
      %v1204 = vld [vmem:[%s1 + $0x1ec0] sm:$0xff]
      %v1205 = vld [vmem:[%s1 + $0x1ec8] sm:$0xff]
      %v1206 = vld [vmem:[%s1 + $0x1ed0] sm:$0xff]
      %v1207 = vld [vmem:[%s1 + $0x1ed8] sm:$0xff]
      %v1208 = vld [vmem:[%s1 + $0x1ee0] sm:$0xff]
      %v1209 = vld [vmem:[%s1 + $0x1ee8] sm:$0xff]
      %v1210 = vld [vmem:[%s1 + $0x1ef0] sm:$0xff]
      %v1211 = vld [vmem:[%s1 + $0x1ef8] sm:$0xff]
      %v1212 = vld [vmem:[%s1 + $0x1f00] sm:$0xff]
      %v1213 = vld [vmem:[%s1 + $0x1f08] sm:$0xff]
      %v1214 = vld [vmem:[%s1 + $0x1f10] sm:$0xff]
      %v1215 = vld [vmem:[%s1 + $0x1f18] sm:$0xff]
      %v1216 = vld [vmem:[%s1 + $0x1f20] sm:$0xff]
      %v1217 = vld [vmem:[%s1 + $0x1f28] sm:$0xff]
      %v1218 = vld [vmem:[%s1 + $0x1f30] sm:$0xff]
      %v1219 = vld [vmem:[%s1 + $0x1f38] sm:$0xff]
      %v1220 = vld [vmem:[%s1 + $0x1f40] sm:$0xff]
      %v1221 = vld [vmem:[%s1 + $0x1f48] sm:$0xff]
      %v1222 = vld [vmem:[%s1 + $0x1f50] sm:$0xff]
      %v1223 = vld [vmem:[%s1 + $0x1f58] sm:$0xff]
      %v1224 = vld [vmem:[%s1 + $0x1f60] sm:$0xff]
      %v1225 = vld [vmem:[%s1 + $0x1f68] sm:$0xff]
      %v1226 = vld [vmem:[%s1 + $0x1f70] sm:$0xff]
      %v1227 = vld [vmem:[%s1 + $0x1f78] sm:$0xff]
      %v1228 = vld [vmem:[%s1 + $0x1f80] sm:$0xff]
      %v1229 = vld [vmem:[%s1 + $0x1f88] sm:$0xff]
      %v1230 = vld [vmem:[%s1 + $0x1f90] sm:$0xff]
      %v1231 = vld [vmem:[%s1 + $0x1f98] sm:$0xff]
      %v1232 = vld [vmem:[%s1 + $0x1fa0] sm:$0xff]
      %v1233 = vld [vmem:[%s1 + $0x1fa8] sm:$0xff]
      %v1234 = vld [vmem:[%s1 + $0x1fb0] sm:$0xff]
      %v1235 = vld [vmem:[%s1 + $0x1fb8] sm:$0xff]
      %v1236 = vld [vmem:[%s1 + $0x1fc0] sm:$0xff]
      %v1237 = vld [vmem:[%s1 + $0x1fc8] sm:$0xff]
      %v1238 = vld [vmem:[%s1 + $0x1fd0] sm:$0xff]
      %v1239 = vld [vmem:[%s1 + $0x1fd8] sm:$0xff]
      %v1240 = vld [vmem:[%s1 + $0x1fe0] sm:$0xff]
      %v1241 = vld [vmem:[%s1 + $0x1fe8] sm:$0xff]
      %v1242 = vld [vmem:[%s1 + $0x1ff0] sm:$0xff]
      %v1243 = vld [vmem:[%s1 + $0x1ff8] sm:$0xff]
      %v1244 = vld [vmem:[%s2] sm:$0xff]
      %v1245 = vld [vmem:[%s2 + $0x8] sm:$0xff]
      %v1247 = vcombine.high %v219, %v219
      %v1249 = vunpack.c.l.s4 1966171168
      %v1250 = vunpack.c.0.s8 %v1249
      %v1251 = vlaneseq
      %v1252 = vshrl.u32 %v1251, 7
      %v1253 = vsub.s32 %v1250, %v1252
      %v1254 = vrot.slane %v219, %v1253
      %v1256 = vunpack.c.l.s4 1966171168
      %v1257 = vunpack.c.0.s8 %v1256
      %v1258 = vlaneseq
      %v1259 = vshrl.u32 %v1258, 7
      %v1260 = vsub.s32 %v1257, %v1259
      %v1261 = vrot.slane %v1247, %v1260
      %v1262 = vcombine.high %v1254, %v1254
      %v1263 = vcombine.high %v1261, %v1261
      %v1265 = vunpack.c.l.s4 1966171168
      %v1266 = vunpack.c.0.s8 %v1265
      %v1267 = vlaneseq
      %v1268 = vshrl.u32 %v1267, 7
      %v1269 = vsub.s32 %v1266, %v1268
      %v1270 = vrot.slane %v1254, %v1269
      %v1272 = vunpack.c.l.s4 1966171168
      %v1273 = vunpack.c.0.s8 %v1272
      %v1274 = vlaneseq
      %v1275 = vshrl.u32 %v1274, 7
      %v1276 = vsub.s32 %v1273, %v1275
      %v1277 = vrot.slane %v1261, %v1276
      %v1279 = vunpack.c.l.s4 1966171168
      %v1280 = vunpack.c.0.s8 %v1279
      %v1281 = vlaneseq
      %v1282 = vshrl.u32 %v1281, 7
      %v1283 = vsub.s32 %v1280, %v1282
      %v1284 = vrot.slane %v1262, %v1283
      %v1286 = vunpack.c.l.s4 1966171168
      %v1287 = vunpack.c.0.s8 %v1286
      %v1288 = vlaneseq
      %v1289 = vshrl.u32 %v1288, 7
      %v1290 = vsub.s32 %v1287, %v1289
      %v1291 = vrot.slane %v1263, %v1290
      %v1292 = vcombine.high %v1270, %v1270
      %v1293 = vcombine.high %v1277, %v1277
      %v1294 = vcombine.high %v1284, %v1284
      %v1295 = vcombine.high %v1291, %v1291
      %v2328 = vunpack.c.l.b16 %v220
      %v2329 = vunpack.c.h.b16 %v220
      %v2330 = vunpack.c.l.b16 %v221
      %v2331 = vunpack.c.h.b16 %v221
      %v2332 = vunpack.c.l.b16 %v222
      %v2333 = vunpack.c.h.b16 %v222
      %v2334 = vunpack.c.l.b16 %v223
      %v2335 = vunpack.c.h.b16 %v223
      %v2336 = vunpack.c.l.b16 %v224
      %v2337 = vunpack.c.h.b16 %v224
      %v2338 = vunpack.c.l.b16 %v225
      %v2339 = vunpack.c.h.b16 %v225
      %v2340 = vunpack.c.l.b16 %v226
      %v2341 = vunpack.c.h.b16 %v226
      %v2342 = vunpack.c.l.b16 %v227
      %v2343 = vunpack.c.h.b16 %v227
      %v2344 = vunpack.c.l.b16 %v228
      %v2345 = vunpack.c.h.b16 %v228
      %v2346 = vunpack.c.l.b16 %v229
      %v2347 = vunpack.c.h.b16 %v229
      %v2348 = vunpack.c.l.b16 %v230
      %v2349 = vunpack.c.h.b16 %v230
      %v2350 = vunpack.c.l.b16 %v231
      %v2351 = vunpack.c.h.b16 %v231
      %v2352 = vunpack.c.l.b16 %v232
      %v2353 = vunpack.c.h.b16 %v232
      %v2354 = vunpack.c.l.b16 %v233
      %v2355 = vunpack.c.h.b16 %v233
      %v2356 = vunpack.c.l.b16 %v234
      %v2357 = vunpack.c.h.b16 %v234
      %v2358 = vunpack.c.l.b16 %v235
      %v2359 = vunpack.c.h.b16 %v235
      %v2360 = vunpack.c.l.b16 %v236
      %v2361 = vunpack.c.h.b16 %v236
      %v2362 = vunpack.c.l.b16 %v237
      %v2363 = vunpack.c.h.b16 %v237
      %v2364 = vunpack.c.l.b16 %v238
      %v2365 = vunpack.c.h.b16 %v238
      %v2366 = vunpack.c.l.b16 %v239
      %v2367 = vunpack.c.h.b16 %v239
      %v2368 = vunpack.c.l.b16 %v240
      %v2369 = vunpack.c.h.b16 %v240
      %v2370 = vunpack.c.l.b16 %v241
      %v2371 = vunpack.c.h.b16 %v241
      %v2372 = vunpack.c.l.b16 %v242
      %v2373 = vunpack.c.h.b16 %v242
      %v2374 = vunpack.c.l.b16 %v243
      %v2375 = vunpack.c.h.b16 %v243
      %v2376 = vunpack.c.l.b16 %v244
      %v2377 = vunpack.c.h.b16 %v244
      %v2378 = vunpack.c.l.b16 %v245
      %v2379 = vunpack.c.h.b16 %v245
      %v2380 = vunpack.c.l.b16 %v246
      %v2381 = vunpack.c.h.b16 %v246
      %v2382 = vunpack.c.l.b16 %v247
      %v2383 = vunpack.c.h.b16 %v247
      %v2384 = vunpack.c.l.b16 %v248
      %v2385 = vunpack.c.h.b16 %v248
      %v2386 = vunpack.c.l.b16 %v249
      %v2387 = vunpack.c.h.b16 %v249
      %v2388 = vunpack.c.l.b16 %v250
      %v2389 = vunpack.c.h.b16 %v250
      %v2390 = vunpack.c.l.b16 %v251
      %v2391 = vunpack.c.h.b16 %v251
      %v2392 = vunpack.c.l.b16 %v252
      %v2393 = vunpack.c.h.b16 %v252
      %v2394 = vunpack.c.l.b16 %v253
      %v2395 = vunpack.c.h.b16 %v253
      %v2396 = vunpack.c.l.b16 %v254
      %v2397 = vunpack.c.h.b16 %v254
      %v2398 = vunpack.c.l.b16 %v255
      %v2399 = vunpack.c.h.b16 %v255
      %v2400 = vunpack.c.l.b16 %v256
      %v2401 = vunpack.c.h.b16 %v256
      %v2402 = vunpack.c.l.b16 %v257
      %v2403 = vunpack.c.h.b16 %v257
      %v2404 = vunpack.c.l.b16 %v258
      %v2405 = vunpack.c.h.b16 %v258
      %v2406 = vunpack.c.l.b16 %v259
      %v2407 = vunpack.c.h.b16 %v259
      %v2408 = vunpack.c.l.b16 %v260
      %v2409 = vunpack.c.h.b16 %v260
      %v2410 = vunpack.c.l.b16 %v261
      %v2411 = vunpack.c.h.b16 %v261
      %v2412 = vunpack.c.l.b16 %v262
      %v2413 = vunpack.c.h.b16 %v262
      %v2414 = vunpack.c.l.b16 %v263
      %v2415 = vunpack.c.h.b16 %v263
      %v2416 = vunpack.c.l.b16 %v264
      %v2417 = vunpack.c.h.b16 %v264
      %v2418 = vunpack.c.l.b16 %v265
      %v2419 = vunpack.c.h.b16 %v265
      %v2420 = vunpack.c.l.b16 %v266
      %v2421 = vunpack.c.h.b16 %v266
      %v2422 = vunpack.c.l.b16 %v267
      %v2423 = vunpack.c.h.b16 %v267
      %v2424 = vunpack.c.l.b16 %v268
      %v2425 = vunpack.c.h.b16 %v268
      %v2426 = vunpack.c.l.b16 %v269
      %v2427 = vunpack.c.h.b16 %v269
      %v2428 = vunpack.c.l.b16 %v270
      %v2429 = vunpack.c.h.b16 %v270
      %v2430 = vunpack.c.l.b16 %v271
      %v2431 = vunpack.c.h.b16 %v271
      %v2432 = vunpack.c.l.b16 %v272
      %v2433 = vunpack.c.h.b16 %v272
      %v2434 = vunpack.c.l.b16 %v273
      %v2435 = vunpack.c.h.b16 %v273
      %v2436 = vunpack.c.l.b16 %v274
      %v2437 = vunpack.c.h.b16 %v274
      %v2438 = vunpack.c.l.b16 %v275
      %v2439 = vunpack.c.h.b16 %v275
      %v2440 = vunpack.c.l.b16 %v276
      %v2441 = vunpack.c.h.b16 %v276
      %v2442 = vunpack.c.l.b16 %v277
      %v2443 = vunpack.c.h.b16 %v277
      %v2444 = vunpack.c.l.b16 %v278
      %v2445 = vunpack.c.h.b16 %v278
      %v2446 = vunpack.c.l.b16 %v279
      %v2447 = vunpack.c.h.b16 %v279
      %v2448 = vunpack.c.l.b16 %v280
      %v2449 = vunpack.c.h.b16 %v280
      %v2450 = vunpack.c.l.b16 %v281
      %v2451 = vunpack.c.h.b16 %v281
      %v2452 = vunpack.c.l.b16 %v282
      %v2453 = vunpack.c.h.b16 %v282
      %v2454 = vunpack.c.l.b16 %v283
      %v2455 = vunpack.c.h.b16 %v283
      %v2456 = vunpack.c.l.b16 %v284
      %v2457 = vunpack.c.h.b16 %v284
      %v2458 = vunpack.c.l.b16 %v285
      %v2459 = vunpack.c.h.b16 %v285
      %v2460 = vunpack.c.l.b16 %v286
      %v2461 = vunpack.c.h.b16 %v286
      %v2462 = vunpack.c.l.b16 %v287
      %v2463 = vunpack.c.h.b16 %v287
      %v2464 = vunpack.c.l.b16 %v288
      %v2465 = vunpack.c.h.b16 %v288
      %v2466 = vunpack.c.l.b16 %v289
      %v2467 = vunpack.c.h.b16 %v289
      %v2468 = vunpack.c.l.b16 %v290
      %v2469 = vunpack.c.h.b16 %v290
      %v2470 = vunpack.c.l.b16 %v291
      %v2471 = vunpack.c.h.b16 %v291
      %v2472 = vunpack.c.l.b16 %v292
      %v2473 = vunpack.c.h.b16 %v292
      %v2474 = vunpack.c.l.b16 %v293
      %v2475 = vunpack.c.h.b16 %v293
      %v2476 = vunpack.c.l.b16 %v294
      %v2477 = vunpack.c.h.b16 %v294
      %v2478 = vunpack.c.l.b16 %v295
      %v2479 = vunpack.c.h.b16 %v295
      %v2480 = vunpack.c.l.b16 %v296
      %v2481 = vunpack.c.h.b16 %v296
      %v2482 = vunpack.c.l.b16 %v297
      %v2483 = vunpack.c.h.b16 %v297
      %v2484 = vunpack.c.l.b16 %v298
      %v2485 = vunpack.c.h.b16 %v298
      %v2486 = vunpack.c.l.b16 %v299
      %v2487 = vunpack.c.h.b16 %v299
      %v2488 = vunpack.c.l.b16 %v300
      %v2489 = vunpack.c.h.b16 %v300
      %v2490 = vunpack.c.l.b16 %v301
      %v2491 = vunpack.c.h.b16 %v301
      %v2492 = vunpack.c.l.b16 %v302
      %v2493 = vunpack.c.h.b16 %v302
      %v2494 = vunpack.c.l.b16 %v303
      %v2495 = vunpack.c.h.b16 %v303
      %v2496 = vunpack.c.l.b16 %v304
      %v2497 = vunpack.c.h.b16 %v304
      %v2498 = vunpack.c.l.b16 %v305
      %v2499 = vunpack.c.h.b16 %v305
      %v2500 = vunpack.c.l.b16 %v306
      %v2501 = vunpack.c.h.b16 %v306
      %v2502 = vunpack.c.l.b16 %v307
      %v2503 = vunpack.c.h.b16 %v307
      %v2504 = vunpack.c.l.b16 %v308
      %v2505 = vunpack.c.h.b16 %v308
      %v2506 = vunpack.c.l.b16 %v309
      %v2507 = vunpack.c.h.b16 %v309
      %v2508 = vunpack.c.l.b16 %v310
      %v2509 = vunpack.c.h.b16 %v310
      %v2510 = vunpack.c.l.b16 %v311
      %v2511 = vunpack.c.h.b16 %v311
      %v2512 = vunpack.c.l.b16 %v312
      %v2513 = vunpack.c.h.b16 %v312
      %v2514 = vunpack.c.l.b16 %v313
      %v2515 = vunpack.c.h.b16 %v313
      %v2516 = vunpack.c.l.b16 %v314
      %v2517 = vunpack.c.h.b16 %v314
      %v2518 = vunpack.c.l.b16 %v315
      %v2519 = vunpack.c.h.b16 %v315
      %v2520 = vunpack.c.l.b16 %v316
      %v2521 = vunpack.c.h.b16 %v316
      %v2522 = vunpack.c.l.b16 %v317
      %v2523 = vunpack.c.h.b16 %v317
      %v2524 = vunpack.c.l.b16 %v318
      %v2525 = vunpack.c.h.b16 %v318
      %v2526 = vunpack.c.l.b16 %v319
      %v2527 = vunpack.c.h.b16 %v319
      %v2528 = vunpack.c.l.b16 %v320
      %v2529 = vunpack.c.h.b16 %v320
      %v2530 = vunpack.c.l.b16 %v321
      %v2531 = vunpack.c.h.b16 %v321
      %v2532 = vunpack.c.l.b16 %v322
      %v2533 = vunpack.c.h.b16 %v322
      %v2534 = vunpack.c.l.b16 %v323
      %v2535 = vunpack.c.h.b16 %v323
      %v2536 = vunpack.c.l.b16 %v324
      %v2537 = vunpack.c.h.b16 %v324
      %v2538 = vunpack.c.l.b16 %v325
      %v2539 = vunpack.c.h.b16 %v325
      %v2540 = vunpack.c.l.b16 %v326
      %v2541 = vunpack.c.h.b16 %v326
      %v2542 = vunpack.c.l.b16 %v327
      %v2543 = vunpack.c.h.b16 %v327
      %v2544 = vunpack.c.l.b16 %v328
      %v2545 = vunpack.c.h.b16 %v328
      %v2546 = vunpack.c.l.b16 %v329
      %v2547 = vunpack.c.h.b16 %v329
      %v2548 = vunpack.c.l.b16 %v330
      %v2549 = vunpack.c.h.b16 %v330
      %v2550 = vunpack.c.l.b16 %v331
      %v2551 = vunpack.c.h.b16 %v331
      %v2552 = vunpack.c.l.b16 %v332
      %v2553 = vunpack.c.h.b16 %v332
      %v2554 = vunpack.c.l.b16 %v333
      %v2555 = vunpack.c.h.b16 %v333
      %v2556 = vunpack.c.l.b16 %v334
      %v2557 = vunpack.c.h.b16 %v334
      %v2558 = vunpack.c.l.b16 %v335
      %v2559 = vunpack.c.h.b16 %v335
      %v2560 = vunpack.c.l.b16 %v336
      %v2561 = vunpack.c.h.b16 %v336
      %v2562 = vunpack.c.l.b16 %v337
      %v2563 = vunpack.c.h.b16 %v337
      %v2564 = vunpack.c.l.b16 %v338
      %v2565 = vunpack.c.h.b16 %v338
      %v2566 = vunpack.c.l.b16 %v339
      %v2567 = vunpack.c.h.b16 %v339
      %v2568 = vunpack.c.l.b16 %v340
      %v2569 = vunpack.c.h.b16 %v340
      %v2570 = vunpack.c.l.b16 %v341
      %v2571 = vunpack.c.h.b16 %v341
      %v2572 = vunpack.c.l.b16 %v342
      %v2573 = vunpack.c.h.b16 %v342
      %v2574 = vunpack.c.l.b16 %v343
      %v2575 = vunpack.c.h.b16 %v343
      %v2576 = vunpack.c.l.b16 %v344
      %v2577 = vunpack.c.h.b16 %v344
      %v2578 = vunpack.c.l.b16 %v345
      %v2579 = vunpack.c.h.b16 %v345
      %v2580 = vunpack.c.l.b16 %v346
      %v2581 = vunpack.c.h.b16 %v346
      %v2582 = vunpack.c.l.b16 %v347
      %v2583 = vunpack.c.h.b16 %v347
      %v2584 = vunpack.c.l.b16 %v348
      %v2585 = vunpack.c.h.b16 %v348
      %v2586 = vunpack.c.l.b16 %v349
      %v2587 = vunpack.c.h.b16 %v349
      %v2588 = vunpack.c.l.b16 %v350
      %v2589 = vunpack.c.h.b16 %v350
      %v2590 = vunpack.c.l.b16 %v351
      %v2591 = vunpack.c.h.b16 %v351
      %v2592 = vunpack.c.l.b16 %v352
      %v2593 = vunpack.c.h.b16 %v352
      %v2594 = vunpack.c.l.b16 %v353
      %v2595 = vunpack.c.h.b16 %v353
      %v2596 = vunpack.c.l.b16 %v354
      %v2597 = vunpack.c.h.b16 %v354
      %v2598 = vunpack.c.l.b16 %v355
      %v2599 = vunpack.c.h.b16 %v355
      %v2600 = vunpack.c.l.b16 %v356
      %v2601 = vunpack.c.h.b16 %v356
      %v2602 = vunpack.c.l.b16 %v357
      %v2603 = vunpack.c.h.b16 %v357
      %v2604 = vunpack.c.l.b16 %v358
      %v2605 = vunpack.c.h.b16 %v358
      %v2606 = vunpack.c.l.b16 %v359
      %v2607 = vunpack.c.h.b16 %v359
      %v2608 = vunpack.c.l.b16 %v360
      %v2609 = vunpack.c.h.b16 %v360
      %v2610 = vunpack.c.l.b16 %v361
      %v2611 = vunpack.c.h.b16 %v361
      %v2612 = vunpack.c.l.b16 %v362
      %v2613 = vunpack.c.h.b16 %v362
      %v2614 = vunpack.c.l.b16 %v363
      %v2615 = vunpack.c.h.b16 %v363
      %v2616 = vunpack.c.l.b16 %v364
      %v2617 = vunpack.c.h.b16 %v364
      %v2618 = vunpack.c.l.b16 %v365
      %v2619 = vunpack.c.h.b16 %v365
      %v2620 = vunpack.c.l.b16 %v366
      %v2621 = vunpack.c.h.b16 %v366
      %v2622 = vunpack.c.l.b16 %v367
      %v2623 = vunpack.c.h.b16 %v367
      %v2624 = vunpack.c.l.b16 %v368
      %v2625 = vunpack.c.h.b16 %v368
      %v2626 = vunpack.c.l.b16 %v369
      %v2627 = vunpack.c.h.b16 %v369
      %v2628 = vunpack.c.l.b16 %v370
      %v2629 = vunpack.c.h.b16 %v370
      %v2630 = vunpack.c.l.b16 %v371
      %v2631 = vunpack.c.h.b16 %v371
      %v2632 = vunpack.c.l.b16 %v372
      %v2633 = vunpack.c.h.b16 %v372
      %v2634 = vunpack.c.l.b16 %v373
      %v2635 = vunpack.c.h.b16 %v373
      %v2636 = vunpack.c.l.b16 %v374
      %v2637 = vunpack.c.h.b16 %v374
      %v2638 = vunpack.c.l.b16 %v375
      %v2639 = vunpack.c.h.b16 %v375
      %v2640 = vunpack.c.l.b16 %v376
      %v2641 = vunpack.c.h.b16 %v376
      %v2642 = vunpack.c.l.b16 %v377
      %v2643 = vunpack.c.h.b16 %v377
      %v2644 = vunpack.c.l.b16 %v378
      %v2645 = vunpack.c.h.b16 %v378
      %v2646 = vunpack.c.l.b16 %v379
      %v2647 = vunpack.c.h.b16 %v379
      %v2648 = vunpack.c.l.b16 %v380
      %v2649 = vunpack.c.h.b16 %v380
      %v2650 = vunpack.c.l.b16 %v381
      %v2651 = vunpack.c.h.b16 %v381
      %v2652 = vunpack.c.l.b16 %v382
      %v2653 = vunpack.c.h.b16 %v382
      %v2654 = vunpack.c.l.b16 %v383
      %v2655 = vunpack.c.h.b16 %v383
      %v2656 = vunpack.c.l.b16 %v384
      %v2657 = vunpack.c.h.b16 %v384
      %v2658 = vunpack.c.l.b16 %v385
      %v2659 = vunpack.c.h.b16 %v385
      %v2660 = vunpack.c.l.b16 %v386
      %v2661 = vunpack.c.h.b16 %v386
      %v2662 = vunpack.c.l.b16 %v387
      %v2663 = vunpack.c.h.b16 %v387
      %v2664 = vunpack.c.l.b16 %v388
      %v2665 = vunpack.c.h.b16 %v388
      %v2666 = vunpack.c.l.b16 %v389
      %v2667 = vunpack.c.h.b16 %v389
      %v2668 = vunpack.c.l.b16 %v390
      %v2669 = vunpack.c.h.b16 %v390
      %v2670 = vunpack.c.l.b16 %v391
      %v2671 = vunpack.c.h.b16 %v391
      %v2672 = vunpack.c.l.b16 %v392
      %v2673 = vunpack.c.h.b16 %v392
      %v2674 = vunpack.c.l.b16 %v393
      %v2675 = vunpack.c.h.b16 %v393
      %v2676 = vunpack.c.l.b16 %v394
      %v2677 = vunpack.c.h.b16 %v394
      %v2678 = vunpack.c.l.b16 %v395
      %v2679 = vunpack.c.h.b16 %v395
      %v2680 = vunpack.c.l.b16 %v396
      %v2681 = vunpack.c.h.b16 %v396
      %v2682 = vunpack.c.l.b16 %v397
      %v2683 = vunpack.c.h.b16 %v397
      %v2684 = vunpack.c.l.b16 %v398
      %v2685 = vunpack.c.h.b16 %v398
      %v2686 = vunpack.c.l.b16 %v399
      %v2687 = vunpack.c.h.b16 %v399
      %v2688 = vunpack.c.l.b16 %v400
      %v2689 = vunpack.c.h.b16 %v400
      %v2690 = vunpack.c.l.b16 %v401
      %v2691 = vunpack.c.h.b16 %v401
      %v2692 = vunpack.c.l.b16 %v402
      %v2693 = vunpack.c.h.b16 %v402
      %v2694 = vunpack.c.l.b16 %v403
      %v2695 = vunpack.c.h.b16 %v403
      %v2696 = vunpack.c.l.b16 %v404
      %v2697 = vunpack.c.h.b16 %v404
      %v2698 = vunpack.c.l.b16 %v405
      %v2699 = vunpack.c.h.b16 %v405
      %v2700 = vunpack.c.l.b16 %v406
      %v2701 = vunpack.c.h.b16 %v406
      %v2702 = vunpack.c.l.b16 %v407
      %v2703 = vunpack.c.h.b16 %v407
      %v2704 = vunpack.c.l.b16 %v408
      %v2705 = vunpack.c.h.b16 %v408
      %v2706 = vunpack.c.l.b16 %v409
      %v2707 = vunpack.c.h.b16 %v409
      %v2708 = vunpack.c.l.b16 %v410
      %v2709 = vunpack.c.h.b16 %v410
      %v2710 = vunpack.c.l.b16 %v411
      %v2711 = vunpack.c.h.b16 %v411
      %v2712 = vunpack.c.l.b16 %v412
      %v2713 = vunpack.c.h.b16 %v412
      %v2714 = vunpack.c.l.b16 %v413
      %v2715 = vunpack.c.h.b16 %v413
      %v2716 = vunpack.c.l.b16 %v414
      %v2717 = vunpack.c.h.b16 %v414
      %v2718 = vunpack.c.l.b16 %v415
      %v2719 = vunpack.c.h.b16 %v415
      %v2720 = vunpack.c.l.b16 %v416
      %v2721 = vunpack.c.h.b16 %v416
      %v2722 = vunpack.c.l.b16 %v417
      %v2723 = vunpack.c.h.b16 %v417
      %v2724 = vunpack.c.l.b16 %v418
      %v2725 = vunpack.c.h.b16 %v418
      %v2726 = vunpack.c.l.b16 %v419
      %v2727 = vunpack.c.h.b16 %v419
      %v2728 = vunpack.c.l.b16 %v420
      %v2729 = vunpack.c.h.b16 %v420
      %v2730 = vunpack.c.l.b16 %v421
      %v2731 = vunpack.c.h.b16 %v421
      %v2732 = vunpack.c.l.b16 %v422
      %v2733 = vunpack.c.h.b16 %v422
      %v2734 = vunpack.c.l.b16 %v423
      %v2735 = vunpack.c.h.b16 %v423
      %v2736 = vunpack.c.l.b16 %v424
      %v2737 = vunpack.c.h.b16 %v424
      %v2738 = vunpack.c.l.b16 %v425
      %v2739 = vunpack.c.h.b16 %v425
      %v2740 = vunpack.c.l.b16 %v426
      %v2741 = vunpack.c.h.b16 %v426
      %v2742 = vunpack.c.l.b16 %v427
      %v2743 = vunpack.c.h.b16 %v427
      %v2744 = vunpack.c.l.b16 %v428
      %v2745 = vunpack.c.h.b16 %v428
      %v2746 = vunpack.c.l.b16 %v429
      %v2747 = vunpack.c.h.b16 %v429
      %v2748 = vunpack.c.l.b16 %v430
      %v2749 = vunpack.c.h.b16 %v430
      %v2750 = vunpack.c.l.b16 %v431
      %v2751 = vunpack.c.h.b16 %v431
      %v2752 = vunpack.c.l.b16 %v432
      %v2753 = vunpack.c.h.b16 %v432
      %v2754 = vunpack.c.l.b16 %v433
      %v2755 = vunpack.c.h.b16 %v433
      %v2756 = vunpack.c.l.b16 %v434
      %v2757 = vunpack.c.h.b16 %v434
      %v2758 = vunpack.c.l.b16 %v435
      %v2759 = vunpack.c.h.b16 %v435
      %v2760 = vunpack.c.l.b16 %v436
      %v2761 = vunpack.c.h.b16 %v436
      %v2762 = vunpack.c.l.b16 %v437
      %v2763 = vunpack.c.h.b16 %v437
      %v2764 = vunpack.c.l.b16 %v438
      %v2765 = vunpack.c.h.b16 %v438
      %v2766 = vunpack.c.l.b16 %v439
      %v2767 = vunpack.c.h.b16 %v439
      %v2768 = vunpack.c.l.b16 %v440
      %v2769 = vunpack.c.h.b16 %v440
      %v2770 = vunpack.c.l.b16 %v441
      %v2771 = vunpack.c.h.b16 %v441
      %v2772 = vunpack.c.l.b16 %v442
      %v2773 = vunpack.c.h.b16 %v442
      %v2774 = vunpack.c.l.b16 %v443
      %v2775 = vunpack.c.h.b16 %v443
      %v2776 = vunpack.c.l.b16 %v444
      %v2777 = vunpack.c.h.b16 %v444
      %v2778 = vunpack.c.l.b16 %v445
      %v2779 = vunpack.c.h.b16 %v445
      %v2780 = vunpack.c.l.b16 %v446
      %v2781 = vunpack.c.h.b16 %v446
      %v2782 = vunpack.c.l.b16 %v447
      %v2783 = vunpack.c.h.b16 %v447
      %v2784 = vunpack.c.l.b16 %v448
      %v2785 = vunpack.c.h.b16 %v448
      %v2786 = vunpack.c.l.b16 %v449
      %v2787 = vunpack.c.h.b16 %v449
      %v2788 = vunpack.c.l.b16 %v450
      %v2789 = vunpack.c.h.b16 %v450
      %v2790 = vunpack.c.l.b16 %v451
      %v2791 = vunpack.c.h.b16 %v451
      %v2792 = vunpack.c.l.b16 %v452
      %v2793 = vunpack.c.h.b16 %v452
      %v2794 = vunpack.c.l.b16 %v453
      %v2795 = vunpack.c.h.b16 %v453
      %v2796 = vunpack.c.l.b16 %v454
      %v2797 = vunpack.c.h.b16 %v454
      %v2798 = vunpack.c.l.b16 %v455
      %v2799 = vunpack.c.h.b16 %v455
      %v2800 = vunpack.c.l.b16 %v456
      %v2801 = vunpack.c.h.b16 %v456
      %v2802 = vunpack.c.l.b16 %v457
      %v2803 = vunpack.c.h.b16 %v457
      %v2804 = vunpack.c.l.b16 %v458
      %v2805 = vunpack.c.h.b16 %v458
      %v2806 = vunpack.c.l.b16 %v459
      %v2807 = vunpack.c.h.b16 %v459
      %v2808 = vunpack.c.l.b16 %v460
      %v2809 = vunpack.c.h.b16 %v460
      %v2810 = vunpack.c.l.b16 %v461
      %v2811 = vunpack.c.h.b16 %v461
      %v2812 = vunpack.c.l.b16 %v462
      %v2813 = vunpack.c.h.b16 %v462
      %v2814 = vunpack.c.l.b16 %v463
      %v2815 = vunpack.c.h.b16 %v463
      %v2816 = vunpack.c.l.b16 %v464
      %v2817 = vunpack.c.h.b16 %v464
      %v2818 = vunpack.c.l.b16 %v465
      %v2819 = vunpack.c.h.b16 %v465
      %v2820 = vunpack.c.l.b16 %v466
      %v2821 = vunpack.c.h.b16 %v466
      %v2822 = vunpack.c.l.b16 %v467
      %v2823 = vunpack.c.h.b16 %v467
      %v2824 = vunpack.c.l.b16 %v468
      %v2825 = vunpack.c.h.b16 %v468
      %v2826 = vunpack.c.l.b16 %v469
      %v2827 = vunpack.c.h.b16 %v469
      %v2828 = vunpack.c.l.b16 %v470
      %v2829 = vunpack.c.h.b16 %v470
      %v2830 = vunpack.c.l.b16 %v471
      %v2831 = vunpack.c.h.b16 %v471
      %v2832 = vunpack.c.l.b16 %v472
      %v2833 = vunpack.c.h.b16 %v472
      %v2834 = vunpack.c.l.b16 %v473
      %v2835 = vunpack.c.h.b16 %v473
      %v2836 = vunpack.c.l.b16 %v474
      %v2837 = vunpack.c.h.b16 %v474
      %v2838 = vunpack.c.l.b16 %v475
      %v2839 = vunpack.c.h.b16 %v475
      %v2840 = vunpack.c.l.b16 %v476
      %v2841 = vunpack.c.h.b16 %v476
      %v2842 = vunpack.c.l.b16 %v477
      %v2843 = vunpack.c.h.b16 %v477
      %v2844 = vunpack.c.l.b16 %v478
      %v2845 = vunpack.c.h.b16 %v478
      %v2846 = vunpack.c.l.b16 %v479
      %v2847 = vunpack.c.h.b16 %v479
      %v2848 = vunpack.c.l.b16 %v480
      %v2849 = vunpack.c.h.b16 %v480
      %v2850 = vunpack.c.l.b16 %v481
      %v2851 = vunpack.c.h.b16 %v481
      %v2852 = vunpack.c.l.b16 %v482
      %v2853 = vunpack.c.h.b16 %v482
      %v2854 = vunpack.c.l.b16 %v483
      %v2855 = vunpack.c.h.b16 %v483
      %v2856 = vunpack.c.l.b16 %v484
      %v2857 = vunpack.c.h.b16 %v484
      %v2858 = vunpack.c.l.b16 %v485
      %v2859 = vunpack.c.h.b16 %v485
      %v2860 = vunpack.c.l.b16 %v486
      %v2861 = vunpack.c.h.b16 %v486
      %v2862 = vunpack.c.l.b16 %v487
      %v2863 = vunpack.c.h.b16 %v487
      %v2864 = vunpack.c.l.b16 %v488
      %v2865 = vunpack.c.h.b16 %v488
      %v2866 = vunpack.c.l.b16 %v489
      %v2867 = vunpack.c.h.b16 %v489
      %v2868 = vunpack.c.l.b16 %v490
      %v2869 = vunpack.c.h.b16 %v490
      %v2870 = vunpack.c.l.b16 %v491
      %v2871 = vunpack.c.h.b16 %v491
      %v2872 = vunpack.c.l.b16 %v492
      %v2873 = vunpack.c.h.b16 %v492
      %v2874 = vunpack.c.l.b16 %v493
      %v2875 = vunpack.c.h.b16 %v493
      %v2876 = vunpack.c.l.b16 %v494
      %v2877 = vunpack.c.h.b16 %v494
      %v2878 = vunpack.c.l.b16 %v495
      %v2879 = vunpack.c.h.b16 %v495
      %v2880 = vunpack.c.l.b16 %v496
      %v2881 = vunpack.c.h.b16 %v496
      %v2882 = vunpack.c.l.b16 %v497
      %v2883 = vunpack.c.h.b16 %v497
      %v2884 = vunpack.c.l.b16 %v498
      %v2885 = vunpack.c.h.b16 %v498
      %v2886 = vunpack.c.l.b16 %v499
      %v2887 = vunpack.c.h.b16 %v499
      %v2888 = vunpack.c.l.b16 %v500
      %v2889 = vunpack.c.h.b16 %v500
      %v2890 = vunpack.c.l.b16 %v501
      %v2891 = vunpack.c.h.b16 %v501
      %v2892 = vunpack.c.l.b16 %v502
      %v2893 = vunpack.c.h.b16 %v502
      %v2894 = vunpack.c.l.b16 %v503
      %v2895 = vunpack.c.h.b16 %v503
      %v2896 = vunpack.c.l.b16 %v504
      %v2897 = vunpack.c.h.b16 %v504
      %v2898 = vunpack.c.l.b16 %v505
      %v2899 = vunpack.c.h.b16 %v505
      %v2900 = vunpack.c.l.b16 %v506
      %v2901 = vunpack.c.h.b16 %v506
      %v2902 = vunpack.c.l.b16 %v507
      %v2903 = vunpack.c.h.b16 %v507
      %v2904 = vunpack.c.l.b16 %v508
      %v2905 = vunpack.c.h.b16 %v508
      %v2906 = vunpack.c.l.b16 %v509
      %v2907 = vunpack.c.h.b16 %v509
      %v2908 = vunpack.c.l.b16 %v510
      %v2909 = vunpack.c.h.b16 %v510
      %v2910 = vunpack.c.l.b16 %v511
      %v2911 = vunpack.c.h.b16 %v511
      %v2912 = vunpack.c.l.b16 %v512
      %v2913 = vunpack.c.h.b16 %v512
      %v2914 = vunpack.c.l.b16 %v513
      %v2915 = vunpack.c.h.b16 %v513
      %v2916 = vunpack.c.l.b16 %v514
      %v2917 = vunpack.c.h.b16 %v514
      %v2918 = vunpack.c.l.b16 %v515
      %v2919 = vunpack.c.h.b16 %v515
      %v2920 = vunpack.c.l.b16 %v516
      %v2921 = vunpack.c.h.b16 %v516
      %v2922 = vunpack.c.l.b16 %v517
      %v2923 = vunpack.c.h.b16 %v517
      %v2924 = vunpack.c.l.b16 %v518
      %v2925 = vunpack.c.h.b16 %v518
      %v2926 = vunpack.c.l.b16 %v519
      %v2927 = vunpack.c.h.b16 %v519
      %v2928 = vunpack.c.l.b16 %v520
      %v2929 = vunpack.c.h.b16 %v520
      %v2930 = vunpack.c.l.b16 %v521
      %v2931 = vunpack.c.h.b16 %v521
      %v2932 = vunpack.c.l.b16 %v522
      %v2933 = vunpack.c.h.b16 %v522
      %v2934 = vunpack.c.l.b16 %v523
      %v2935 = vunpack.c.h.b16 %v523
      %v2936 = vunpack.c.l.b16 %v524
      %v2937 = vunpack.c.h.b16 %v524
      %v2938 = vunpack.c.l.b16 %v525
      %v2939 = vunpack.c.h.b16 %v525
      %v2940 = vunpack.c.l.b16 %v526
      %v2941 = vunpack.c.h.b16 %v526
      %v2942 = vunpack.c.l.b16 %v527
      %v2943 = vunpack.c.h.b16 %v527
      %v2944 = vunpack.c.l.b16 %v528
      %v2945 = vunpack.c.h.b16 %v528
      %v2946 = vunpack.c.l.b16 %v529
      %v2947 = vunpack.c.h.b16 %v529
      %v2948 = vunpack.c.l.b16 %v530
      %v2949 = vunpack.c.h.b16 %v530
      %v2950 = vunpack.c.l.b16 %v531
      %v2951 = vunpack.c.h.b16 %v531
      %v2952 = vunpack.c.l.b16 %v532
      %v2953 = vunpack.c.h.b16 %v532
      %v2954 = vunpack.c.l.b16 %v533
      %v2955 = vunpack.c.h.b16 %v533
      %v2956 = vunpack.c.l.b16 %v534
      %v2957 = vunpack.c.h.b16 %v534
      %v2958 = vunpack.c.l.b16 %v535
      %v2959 = vunpack.c.h.b16 %v535
      %v2960 = vunpack.c.l.b16 %v536
      %v2961 = vunpack.c.h.b16 %v536
      %v2962 = vunpack.c.l.b16 %v537
      %v2963 = vunpack.c.h.b16 %v537
      %v2964 = vunpack.c.l.b16 %v538
      %v2965 = vunpack.c.h.b16 %v538
      %v2966 = vunpack.c.l.b16 %v539
      %v2967 = vunpack.c.h.b16 %v539
      %v2968 = vunpack.c.l.b16 %v540
      %v2969 = vunpack.c.h.b16 %v540
      %v2970 = vunpack.c.l.b16 %v541
      %v2971 = vunpack.c.h.b16 %v541
      %v2972 = vunpack.c.l.b16 %v542
      %v2973 = vunpack.c.h.b16 %v542
      %v2974 = vunpack.c.l.b16 %v543
      %v2975 = vunpack.c.h.b16 %v543
      %v2976 = vunpack.c.l.b16 %v544
      %v2977 = vunpack.c.h.b16 %v544
      %v2978 = vunpack.c.l.b16 %v545
      %v2979 = vunpack.c.h.b16 %v545
      %v2980 = vunpack.c.l.b16 %v546
      %v2981 = vunpack.c.h.b16 %v546
      %v2982 = vunpack.c.l.b16 %v547
      %v2983 = vunpack.c.h.b16 %v547
      %v2984 = vunpack.c.l.b16 %v548
      %v2985 = vunpack.c.h.b16 %v548
      %v2986 = vunpack.c.l.b16 %v549
      %v2987 = vunpack.c.h.b16 %v549
      %v2988 = vunpack.c.l.b16 %v550
      %v2989 = vunpack.c.h.b16 %v550
      %v2990 = vunpack.c.l.b16 %v551
      %v2991 = vunpack.c.h.b16 %v551
      %v2992 = vunpack.c.l.b16 %v552
      %v2993 = vunpack.c.h.b16 %v552
      %v2994 = vunpack.c.l.b16 %v553
      %v2995 = vunpack.c.h.b16 %v553
      %v2996 = vunpack.c.l.b16 %v554
      %v2997 = vunpack.c.h.b16 %v554
      %v2998 = vunpack.c.l.b16 %v555
      %v2999 = vunpack.c.h.b16 %v555
      %v3000 = vunpack.c.l.b16 %v556
      %v3001 = vunpack.c.h.b16 %v556
      %v3002 = vunpack.c.l.b16 %v557
      %v3003 = vunpack.c.h.b16 %v557
      %v3004 = vunpack.c.l.b16 %v558
      %v3005 = vunpack.c.h.b16 %v558
      %v3006 = vunpack.c.l.b16 %v559
      %v3007 = vunpack.c.h.b16 %v559
      %v3008 = vunpack.c.l.b16 %v560
      %v3009 = vunpack.c.h.b16 %v560
      %v3010 = vunpack.c.l.b16 %v561
      %v3011 = vunpack.c.h.b16 %v561
      %v3012 = vunpack.c.l.b16 %v562
      %v3013 = vunpack.c.h.b16 %v562
      %v3014 = vunpack.c.l.b16 %v563
      %v3015 = vunpack.c.h.b16 %v563
      %v3016 = vunpack.c.l.b16 %v564
      %v3017 = vunpack.c.h.b16 %v564
      %v3018 = vunpack.c.l.b16 %v565
      %v3019 = vunpack.c.h.b16 %v565
      %v3020 = vunpack.c.l.b16 %v566
      %v3021 = vunpack.c.h.b16 %v566
      %v3022 = vunpack.c.l.b16 %v567
      %v3023 = vunpack.c.h.b16 %v567
      %v3024 = vunpack.c.l.b16 %v568
      %v3025 = vunpack.c.h.b16 %v568
      %v3026 = vunpack.c.l.b16 %v569
      %v3027 = vunpack.c.h.b16 %v569
      %v3028 = vunpack.c.l.b16 %v570
      %v3029 = vunpack.c.h.b16 %v570
      %v3030 = vunpack.c.l.b16 %v571
      %v3031 = vunpack.c.h.b16 %v571
      %v3032 = vunpack.c.l.b16 %v572
      %v3033 = vunpack.c.h.b16 %v572
      %v3034 = vunpack.c.l.b16 %v573
      %v3035 = vunpack.c.h.b16 %v573
      %v3036 = vunpack.c.l.b16 %v574
      %v3037 = vunpack.c.h.b16 %v574
      %v3038 = vunpack.c.l.b16 %v575
      %v3039 = vunpack.c.h.b16 %v575
      %v3040 = vunpack.c.l.b16 %v576
      %v3041 = vunpack.c.h.b16 %v576
      %v3042 = vunpack.c.l.b16 %v577
      %v3043 = vunpack.c.h.b16 %v577
      %v3044 = vunpack.c.l.b16 %v578
      %v3045 = vunpack.c.h.b16 %v578
      %v3046 = vunpack.c.l.b16 %v579
      %v3047 = vunpack.c.h.b16 %v579
      %v3048 = vunpack.c.l.b16 %v580
      %v3049 = vunpack.c.h.b16 %v580
      %v3050 = vunpack.c.l.b16 %v581
      %v3051 = vunpack.c.h.b16 %v581
      %v3052 = vunpack.c.l.b16 %v582
      %v3053 = vunpack.c.h.b16 %v582
      %v3054 = vunpack.c.l.b16 %v583
      %v3055 = vunpack.c.h.b16 %v583
      %v3056 = vunpack.c.l.b16 %v584
      %v3057 = vunpack.c.h.b16 %v584
      %v3058 = vunpack.c.l.b16 %v585
      %v3059 = vunpack.c.h.b16 %v585
      %v3060 = vunpack.c.l.b16 %v586
      %v3061 = vunpack.c.h.b16 %v586
      %v3062 = vunpack.c.l.b16 %v587
      %v3063 = vunpack.c.h.b16 %v587
      %v3064 = vunpack.c.l.b16 %v588
      %v3065 = vunpack.c.h.b16 %v588
      %v3066 = vunpack.c.l.b16 %v589
      %v3067 = vunpack.c.h.b16 %v589
      %v3068 = vunpack.c.l.b16 %v590
      %v3069 = vunpack.c.h.b16 %v590
      %v3070 = vunpack.c.l.b16 %v591
      %v3071 = vunpack.c.h.b16 %v591
      %v3072 = vunpack.c.l.b16 %v592
      %v3073 = vunpack.c.h.b16 %v592
      %v3074 = vunpack.c.l.b16 %v593
      %v3075 = vunpack.c.h.b16 %v593
      %v3076 = vunpack.c.l.b16 %v594
      %v3077 = vunpack.c.h.b16 %v594
      %v3078 = vunpack.c.l.b16 %v595
      %v3079 = vunpack.c.h.b16 %v595
      %v3080 = vunpack.c.l.b16 %v596
      %v3081 = vunpack.c.h.b16 %v596
      %v3082 = vunpack.c.l.b16 %v597
      %v3083 = vunpack.c.h.b16 %v597
      %v3084 = vunpack.c.l.b16 %v598
      %v3085 = vunpack.c.h.b16 %v598
      %v3086 = vunpack.c.l.b16 %v599
      %v3087 = vunpack.c.h.b16 %v599
      %v3088 = vunpack.c.l.b16 %v600
      %v3089 = vunpack.c.h.b16 %v600
      %v3090 = vunpack.c.l.b16 %v601
      %v3091 = vunpack.c.h.b16 %v601
      %v3092 = vunpack.c.l.b16 %v602
      %v3093 = vunpack.c.h.b16 %v602
      %v3094 = vunpack.c.l.b16 %v603
      %v3095 = vunpack.c.h.b16 %v603
      %v3096 = vunpack.c.l.b16 %v604
      %v3097 = vunpack.c.h.b16 %v604
      %v3098 = vunpack.c.l.b16 %v605
      %v3099 = vunpack.c.h.b16 %v605
      %v3100 = vunpack.c.l.b16 %v606
      %v3101 = vunpack.c.h.b16 %v606
      %v3102 = vunpack.c.l.b16 %v607
      %v3103 = vunpack.c.h.b16 %v607
      %v3104 = vunpack.c.l.b16 %v608
      %v3105 = vunpack.c.h.b16 %v608
      %v3106 = vunpack.c.l.b16 %v609
      %v3107 = vunpack.c.h.b16 %v609
      %v3108 = vunpack.c.l.b16 %v610
      %v3109 = vunpack.c.h.b16 %v610
      %v3110 = vunpack.c.l.b16 %v611
      %v3111 = vunpack.c.h.b16 %v611
      %v3112 = vunpack.c.l.b16 %v612
      %v3113 = vunpack.c.h.b16 %v612
      %v3114 = vunpack.c.l.b16 %v613
      %v3115 = vunpack.c.h.b16 %v613
      %v3116 = vunpack.c.l.b16 %v614
      %v3117 = vunpack.c.h.b16 %v614
      %v3118 = vunpack.c.l.b16 %v615
      %v3119 = vunpack.c.h.b16 %v615
      %v3120 = vunpack.c.l.b16 %v616
      %v3121 = vunpack.c.h.b16 %v616
      %v3122 = vunpack.c.l.b16 %v617
      %v3123 = vunpack.c.h.b16 %v617
      %v3124 = vunpack.c.l.b16 %v618
      %v3125 = vunpack.c.h.b16 %v618
      %v3126 = vunpack.c.l.b16 %v619
      %v3127 = vunpack.c.h.b16 %v619
      %v3128 = vunpack.c.l.b16 %v620
      %v3129 = vunpack.c.h.b16 %v620
      %v3130 = vunpack.c.l.b16 %v621
      %v3131 = vunpack.c.h.b16 %v621
      %v3132 = vunpack.c.l.b16 %v622
      %v3133 = vunpack.c.h.b16 %v622
      %v3134 = vunpack.c.l.b16 %v623
      %v3135 = vunpack.c.h.b16 %v623
      %v3136 = vunpack.c.l.b16 %v624
      %v3137 = vunpack.c.h.b16 %v624
      %v3138 = vunpack.c.l.b16 %v625
      %v3139 = vunpack.c.h.b16 %v625
      %v3140 = vunpack.c.l.b16 %v626
      %v3141 = vunpack.c.h.b16 %v626
      %v3142 = vunpack.c.l.b16 %v627
      %v3143 = vunpack.c.h.b16 %v627
      %v3144 = vunpack.c.l.b16 %v628
      %v3145 = vunpack.c.h.b16 %v628
      %v3146 = vunpack.c.l.b16 %v629
      %v3147 = vunpack.c.h.b16 %v629
      %v3148 = vunpack.c.l.b16 %v630
      %v3149 = vunpack.c.h.b16 %v630
      %v3150 = vunpack.c.l.b16 %v631
      %v3151 = vunpack.c.h.b16 %v631
      %v3152 = vunpack.c.l.b16 %v632
      %v3153 = vunpack.c.h.b16 %v632
      %v3154 = vunpack.c.l.b16 %v633
      %v3155 = vunpack.c.h.b16 %v633
      %v3156 = vunpack.c.l.b16 %v634
      %v3157 = vunpack.c.h.b16 %v634
      %v3158 = vunpack.c.l.b16 %v635
      %v3159 = vunpack.c.h.b16 %v635
      %v3160 = vunpack.c.l.b16 %v636
      %v3161 = vunpack.c.h.b16 %v636
      %v3162 = vunpack.c.l.b16 %v637
      %v3163 = vunpack.c.h.b16 %v637
      %v3164 = vunpack.c.l.b16 %v638
      %v3165 = vunpack.c.h.b16 %v638
      %v3166 = vunpack.c.l.b16 %v639
      %v3167 = vunpack.c.h.b16 %v639
      %v3168 = vunpack.c.l.b16 %v640
      %v3169 = vunpack.c.h.b16 %v640
      %v3170 = vunpack.c.l.b16 %v641
      %v3171 = vunpack.c.h.b16 %v641
      %v3172 = vunpack.c.l.b16 %v642
      %v3173 = vunpack.c.h.b16 %v642
      %v3174 = vunpack.c.l.b16 %v643
      %v3175 = vunpack.c.h.b16 %v643
      %v3176 = vunpack.c.l.b16 %v644
      %v3177 = vunpack.c.h.b16 %v644
      %v3178 = vunpack.c.l.b16 %v645
      %v3179 = vunpack.c.h.b16 %v645
      %v3180 = vunpack.c.l.b16 %v646
      %v3181 = vunpack.c.h.b16 %v646
      %v3182 = vunpack.c.l.b16 %v647
      %v3183 = vunpack.c.h.b16 %v647
      %v3184 = vunpack.c.l.b16 %v648
      %v3185 = vunpack.c.h.b16 %v648
      %v3186 = vunpack.c.l.b16 %v649
      %v3187 = vunpack.c.h.b16 %v649
      %v3188 = vunpack.c.l.b16 %v650
      %v3189 = vunpack.c.h.b16 %v650
      %v3190 = vunpack.c.l.b16 %v651
      %v3191 = vunpack.c.h.b16 %v651
      %v3192 = vunpack.c.l.b16 %v652
      %v3193 = vunpack.c.h.b16 %v652
      %v3194 = vunpack.c.l.b16 %v653
      %v3195 = vunpack.c.h.b16 %v653
      %v3196 = vunpack.c.l.b16 %v654
      %v3197 = vunpack.c.h.b16 %v654
      %v3198 = vunpack.c.l.b16 %v655
      %v3199 = vunpack.c.h.b16 %v655
      %v3200 = vunpack.c.l.b16 %v656
      %v3201 = vunpack.c.h.b16 %v656
      %v3202 = vunpack.c.l.b16 %v657
      %v3203 = vunpack.c.h.b16 %v657
      %v3204 = vunpack.c.l.b16 %v658
      %v3205 = vunpack.c.h.b16 %v658
      %v3206 = vunpack.c.l.b16 %v659
      %v3207 = vunpack.c.h.b16 %v659
      %v3208 = vunpack.c.l.b16 %v660
      %v3209 = vunpack.c.h.b16 %v660
      %v3210 = vunpack.c.l.b16 %v661
      %v3211 = vunpack.c.h.b16 %v661
      %v3212 = vunpack.c.l.b16 %v662
      %v3213 = vunpack.c.h.b16 %v662
      %v3214 = vunpack.c.l.b16 %v663
      %v3215 = vunpack.c.h.b16 %v663
      %v3216 = vunpack.c.l.b16 %v664
      %v3217 = vunpack.c.h.b16 %v664
      %v3218 = vunpack.c.l.b16 %v665
      %v3219 = vunpack.c.h.b16 %v665
      %v3220 = vunpack.c.l.b16 %v666
      %v3221 = vunpack.c.h.b16 %v666
      %v3222 = vunpack.c.l.b16 %v667
      %v3223 = vunpack.c.h.b16 %v667
      %v3224 = vunpack.c.l.b16 %v668
      %v3225 = vunpack.c.h.b16 %v668
      %v3226 = vunpack.c.l.b16 %v669
      %v3227 = vunpack.c.h.b16 %v669
      %v3228 = vunpack.c.l.b16 %v670
      %v3229 = vunpack.c.h.b16 %v670
      %v3230 = vunpack.c.l.b16 %v671
      %v3231 = vunpack.c.h.b16 %v671
      %v3232 = vunpack.c.l.b16 %v672
      %v3233 = vunpack.c.h.b16 %v672
      %v3234 = vunpack.c.l.b16 %v673
      %v3235 = vunpack.c.h.b16 %v673
      %v3236 = vunpack.c.l.b16 %v674
      %v3237 = vunpack.c.h.b16 %v674
      %v3238 = vunpack.c.l.b16 %v675
      %v3239 = vunpack.c.h.b16 %v675
      %v3240 = vunpack.c.l.b16 %v676
      %v3241 = vunpack.c.h.b16 %v676
      %v3242 = vunpack.c.l.b16 %v677
      %v3243 = vunpack.c.h.b16 %v677
      %v3244 = vunpack.c.l.b16 %v678
      %v3245 = vunpack.c.h.b16 %v678
      %v3246 = vunpack.c.l.b16 %v679
      %v3247 = vunpack.c.h.b16 %v679
      %v3248 = vunpack.c.l.b16 %v680
      %v3249 = vunpack.c.h.b16 %v680
      %v3250 = vunpack.c.l.b16 %v681
      %v3251 = vunpack.c.h.b16 %v681
      %v3252 = vunpack.c.l.b16 %v682
      %v3253 = vunpack.c.h.b16 %v682
      %v3254 = vunpack.c.l.b16 %v683
      %v3255 = vunpack.c.h.b16 %v683
      %v3256 = vunpack.c.l.b16 %v684
      %v3257 = vunpack.c.h.b16 %v684
      %v3258 = vunpack.c.l.b16 %v685
      %v3259 = vunpack.c.h.b16 %v685
      %v3260 = vunpack.c.l.b16 %v686
      %v3261 = vunpack.c.h.b16 %v686
      %v3262 = vunpack.c.l.b16 %v687
      %v3263 = vunpack.c.h.b16 %v687
      %v3264 = vunpack.c.l.b16 %v688
      %v3265 = vunpack.c.h.b16 %v688
      %v3266 = vunpack.c.l.b16 %v689
      %v3267 = vunpack.c.h.b16 %v689
      %v3268 = vunpack.c.l.b16 %v690
      %v3269 = vunpack.c.h.b16 %v690
      %v3270 = vunpack.c.l.b16 %v691
      %v3271 = vunpack.c.h.b16 %v691
      %v3272 = vunpack.c.l.b16 %v692
      %v3273 = vunpack.c.h.b16 %v692
      %v3274 = vunpack.c.l.b16 %v693
      %v3275 = vunpack.c.h.b16 %v693
      %v3276 = vunpack.c.l.b16 %v694
      %v3277 = vunpack.c.h.b16 %v694
      %v3278 = vunpack.c.l.b16 %v695
      %v3279 = vunpack.c.h.b16 %v695
      %v3280 = vunpack.c.l.b16 %v696
      %v3281 = vunpack.c.h.b16 %v696
      %v3282 = vunpack.c.l.b16 %v697
      %v3283 = vunpack.c.h.b16 %v697
      %v3284 = vunpack.c.l.b16 %v698
      %v3285 = vunpack.c.h.b16 %v698
      %v3286 = vunpack.c.l.b16 %v699
      %v3287 = vunpack.c.h.b16 %v699
      %v3288 = vunpack.c.l.b16 %v700
      %v3289 = vunpack.c.h.b16 %v700
      %v3290 = vunpack.c.l.b16 %v701
      %v3291 = vunpack.c.h.b16 %v701
      %v3292 = vunpack.c.l.b16 %v702
      %v3293 = vunpack.c.h.b16 %v702
      %v3294 = vunpack.c.l.b16 %v703
      %v3295 = vunpack.c.h.b16 %v703
      %v3296 = vunpack.c.l.b16 %v704
      %v3297 = vunpack.c.h.b16 %v704
      %v3298 = vunpack.c.l.b16 %v705
      %v3299 = vunpack.c.h.b16 %v705
      %v3300 = vunpack.c.l.b16 %v706
      %v3301 = vunpack.c.h.b16 %v706
      %v3302 = vunpack.c.l.b16 %v707
      %v3303 = vunpack.c.h.b16 %v707
      %v3304 = vunpack.c.l.b16 %v708
      %v3305 = vunpack.c.h.b16 %v708
      %v3306 = vunpack.c.l.b16 %v709
      %v3307 = vunpack.c.h.b16 %v709
      %v3308 = vunpack.c.l.b16 %v710
      %v3309 = vunpack.c.h.b16 %v710
      %v3310 = vunpack.c.l.b16 %v711
      %v3311 = vunpack.c.h.b16 %v711
      %v3312 = vunpack.c.l.b16 %v712
      %v3313 = vunpack.c.h.b16 %v712
      %v3314 = vunpack.c.l.b16 %v713
      %v3315 = vunpack.c.h.b16 %v713
      %v3316 = vunpack.c.l.b16 %v714
      %v3317 = vunpack.c.h.b16 %v714
      %v3318 = vunpack.c.l.b16 %v715
      %v3319 = vunpack.c.h.b16 %v715
      %v3320 = vunpack.c.l.b16 %v716
      %v3321 = vunpack.c.h.b16 %v716
      %v3322 = vunpack.c.l.b16 %v717
      %v3323 = vunpack.c.h.b16 %v717
      %v3324 = vunpack.c.l.b16 %v718
      %v3325 = vunpack.c.h.b16 %v718
      %v3326 = vunpack.c.l.b16 %v719
      %v3327 = vunpack.c.h.b16 %v719
      %v3328 = vunpack.c.l.b16 %v720
      %v3329 = vunpack.c.h.b16 %v720
      %v3330 = vunpack.c.l.b16 %v721
      %v3331 = vunpack.c.h.b16 %v721
      %v3332 = vunpack.c.l.b16 %v722
      %v3333 = vunpack.c.h.b16 %v722
      %v3334 = vunpack.c.l.b16 %v723
      %v3335 = vunpack.c.h.b16 %v723
      %v3336 = vunpack.c.l.b16 %v724
      %v3337 = vunpack.c.h.b16 %v724
      %v3338 = vunpack.c.l.b16 %v725
      %v3339 = vunpack.c.h.b16 %v725
      %v3340 = vunpack.c.l.b16 %v726
      %v3341 = vunpack.c.h.b16 %v726
      %v3342 = vunpack.c.l.b16 %v727
      %v3343 = vunpack.c.h.b16 %v727
      %v3344 = vunpack.c.l.b16 %v728
      %v3345 = vunpack.c.h.b16 %v728
      %v3346 = vunpack.c.l.b16 %v729
      %v3347 = vunpack.c.h.b16 %v729
      %v3348 = vunpack.c.l.b16 %v730
      %v3349 = vunpack.c.h.b16 %v730
      %v3350 = vunpack.c.l.b16 %v731
      %v3351 = vunpack.c.h.b16 %v731
      %v3352 = vunpack.c.l.b16 %v732
      %v3353 = vunpack.c.h.b16 %v732
      %v3354 = vunpack.c.l.b16 %v733
      %v3355 = vunpack.c.h.b16 %v733
      %v3356 = vunpack.c.l.b16 %v734
      %v3357 = vunpack.c.h.b16 %v734
      %v3358 = vunpack.c.l.b16 %v735
      %v3359 = vunpack.c.h.b16 %v735
      %v3360 = vunpack.c.l.b16 %v736
      %v3361 = vunpack.c.h.b16 %v736
      %v3362 = vunpack.c.l.b16 %v737
      %v3363 = vunpack.c.h.b16 %v737
      %v3364 = vunpack.c.l.b16 %v738
      %v3365 = vunpack.c.h.b16 %v738
      %v3366 = vunpack.c.l.b16 %v739
      %v3367 = vunpack.c.h.b16 %v739
      %v3368 = vunpack.c.l.b16 %v740
      %v3369 = vunpack.c.h.b16 %v740
      %v3370 = vunpack.c.l.b16 %v741
      %v3371 = vunpack.c.h.b16 %v741
      %v3372 = vunpack.c.l.b16 %v742
      %v3373 = vunpack.c.h.b16 %v742
      %v3374 = vunpack.c.l.b16 %v743
      %v3375 = vunpack.c.h.b16 %v743
      %v3376 = vunpack.c.l.b16 %v744
      %v3377 = vunpack.c.h.b16 %v744
      %v3378 = vunpack.c.l.b16 %v745
      %v3379 = vunpack.c.h.b16 %v745
      %v3380 = vunpack.c.l.b16 %v746
      %v3381 = vunpack.c.h.b16 %v746
      %v3382 = vunpack.c.l.b16 %v747
      %v3383 = vunpack.c.h.b16 %v747
      %v3384 = vunpack.c.l.b16 %v748
      %v3385 = vunpack.c.h.b16 %v748
      %v3386 = vunpack.c.l.b16 %v749
      %v3387 = vunpack.c.h.b16 %v749
      %v3388 = vunpack.c.l.b16 %v750
      %v3389 = vunpack.c.h.b16 %v750
      %v3390 = vunpack.c.l.b16 %v751
      %v3391 = vunpack.c.h.b16 %v751
      %v3392 = vunpack.c.l.b16 %v752
      %v3393 = vunpack.c.h.b16 %v752
      %v3394 = vunpack.c.l.b16 %v753
      %v3395 = vunpack.c.h.b16 %v753
      %v3396 = vunpack.c.l.b16 %v754
      %v3397 = vunpack.c.h.b16 %v754
      %v3398 = vunpack.c.l.b16 %v755
      %v3399 = vunpack.c.h.b16 %v755
      %v3400 = vunpack.c.l.b16 %v756
      %v3401 = vunpack.c.h.b16 %v756
      %v3402 = vunpack.c.l.b16 %v757
      %v3403 = vunpack.c.h.b16 %v757
      %v3404 = vunpack.c.l.b16 %v758
      %v3405 = vunpack.c.h.b16 %v758
      %v3406 = vunpack.c.l.b16 %v759
      %v3407 = vunpack.c.h.b16 %v759
      %v3408 = vunpack.c.l.b16 %v760
      %v3409 = vunpack.c.h.b16 %v760
      %v3410 = vunpack.c.l.b16 %v761
      %v3411 = vunpack.c.h.b16 %v761
      %v3412 = vunpack.c.l.b16 %v762
      %v3413 = vunpack.c.h.b16 %v762
      %v3414 = vunpack.c.l.b16 %v763
      %v3415 = vunpack.c.h.b16 %v763
      %v3416 = vunpack.c.l.b16 %v764
      %v3417 = vunpack.c.h.b16 %v764
      %v3418 = vunpack.c.l.b16 %v765
      %v3419 = vunpack.c.h.b16 %v765
      %v3420 = vunpack.c.l.b16 %v766
      %v3421 = vunpack.c.h.b16 %v766
      %v3422 = vunpack.c.l.b16 %v767
      %v3423 = vunpack.c.h.b16 %v767
      %v3424 = vunpack.c.l.b16 %v768
      %v3425 = vunpack.c.h.b16 %v768
      %v3426 = vunpack.c.l.b16 %v769
      %v3427 = vunpack.c.h.b16 %v769
      %v3428 = vunpack.c.l.b16 %v770
      %v3429 = vunpack.c.h.b16 %v770
      %v3430 = vunpack.c.l.b16 %v771
      %v3431 = vunpack.c.h.b16 %v771
      %v3432 = vunpack.c.l.b16 %v772
      %v3433 = vunpack.c.h.b16 %v772
      %v3434 = vunpack.c.l.b16 %v773
      %v3435 = vunpack.c.h.b16 %v773
      %v3436 = vunpack.c.l.b16 %v774
      %v3437 = vunpack.c.h.b16 %v774
      %v3438 = vunpack.c.l.b16 %v775
      %v3439 = vunpack.c.h.b16 %v775
      %v3440 = vunpack.c.l.b16 %v776
      %v3441 = vunpack.c.h.b16 %v776
      %v3442 = vunpack.c.l.b16 %v777
      %v3443 = vunpack.c.h.b16 %v777
      %v3444 = vunpack.c.l.b16 %v778
      %v3445 = vunpack.c.h.b16 %v778
      %v3446 = vunpack.c.l.b16 %v779
      %v3447 = vunpack.c.h.b16 %v779
      %v3448 = vunpack.c.l.b16 %v780
      %v3449 = vunpack.c.h.b16 %v780
      %v3450 = vunpack.c.l.b16 %v781
      %v3451 = vunpack.c.h.b16 %v781
      %v3452 = vunpack.c.l.b16 %v782
      %v3453 = vunpack.c.h.b16 %v782
      %v3454 = vunpack.c.l.b16 %v783
      %v3455 = vunpack.c.h.b16 %v783
      %v3456 = vunpack.c.l.b16 %v784
      %v3457 = vunpack.c.h.b16 %v784
      %v3458 = vunpack.c.l.b16 %v785
      %v3459 = vunpack.c.h.b16 %v785
      %v3460 = vunpack.c.l.b16 %v786
      %v3461 = vunpack.c.h.b16 %v786
      %v3462 = vunpack.c.l.b16 %v787
      %v3463 = vunpack.c.h.b16 %v787
      %v3464 = vunpack.c.l.b16 %v788
      %v3465 = vunpack.c.h.b16 %v788
      %v3466 = vunpack.c.l.b16 %v789
      %v3467 = vunpack.c.h.b16 %v789
      %v3468 = vunpack.c.l.b16 %v790
      %v3469 = vunpack.c.h.b16 %v790
      %v3470 = vunpack.c.l.b16 %v791
      %v3471 = vunpack.c.h.b16 %v791
      %v3472 = vunpack.c.l.b16 %v792
      %v3473 = vunpack.c.h.b16 %v792
      %v3474 = vunpack.c.l.b16 %v793
      %v3475 = vunpack.c.h.b16 %v793
      %v3476 = vunpack.c.l.b16 %v794
      %v3477 = vunpack.c.h.b16 %v794
      %v3478 = vunpack.c.l.b16 %v795
      %v3479 = vunpack.c.h.b16 %v795
      %v3480 = vunpack.c.l.b16 %v796
      %v3481 = vunpack.c.h.b16 %v796
      %v3482 = vunpack.c.l.b16 %v797
      %v3483 = vunpack.c.h.b16 %v797
      %v3484 = vunpack.c.l.b16 %v798
      %v3485 = vunpack.c.h.b16 %v798
      %v3486 = vunpack.c.l.b16 %v799
      %v3487 = vunpack.c.h.b16 %v799
      %v3488 = vunpack.c.l.b16 %v800
      %v3489 = vunpack.c.h.b16 %v800
      %v3490 = vunpack.c.l.b16 %v801
      %v3491 = vunpack.c.h.b16 %v801
      %v3492 = vunpack.c.l.b16 %v802
      %v3493 = vunpack.c.h.b16 %v802
      %v3494 = vunpack.c.l.b16 %v803
      %v3495 = vunpack.c.h.b16 %v803
      %v3496 = vunpack.c.l.b16 %v804
      %v3497 = vunpack.c.h.b16 %v804
      %v3498 = vunpack.c.l.b16 %v805
      %v3499 = vunpack.c.h.b16 %v805
      %v3500 = vunpack.c.l.b16 %v806
      %v3501 = vunpack.c.h.b16 %v806
      %v3502 = vunpack.c.l.b16 %v807
      %v3503 = vunpack.c.h.b16 %v807
      %v3504 = vunpack.c.l.b16 %v808
      %v3505 = vunpack.c.h.b16 %v808
      %v3506 = vunpack.c.l.b16 %v809
      %v3507 = vunpack.c.h.b16 %v809
      %v3508 = vunpack.c.l.b16 %v810
      %v3509 = vunpack.c.h.b16 %v810
      %v3510 = vunpack.c.l.b16 %v811
      %v3511 = vunpack.c.h.b16 %v811
      %v3512 = vunpack.c.l.b16 %v812
      %v3513 = vunpack.c.h.b16 %v812
      %v3514 = vunpack.c.l.b16 %v813
      %v3515 = vunpack.c.h.b16 %v813
      %v3516 = vunpack.c.l.b16 %v814
      %v3517 = vunpack.c.h.b16 %v814
      %v3518 = vunpack.c.l.b16 %v815
      %v3519 = vunpack.c.h.b16 %v815
      %v3520 = vunpack.c.l.b16 %v816
      %v3521 = vunpack.c.h.b16 %v816
      %v3522 = vunpack.c.l.b16 %v817
      %v3523 = vunpack.c.h.b16 %v817
      %v3524 = vunpack.c.l.b16 %v818
      %v3525 = vunpack.c.h.b16 %v818
      %v3526 = vunpack.c.l.b16 %v819
      %v3527 = vunpack.c.h.b16 %v819
      %v3528 = vunpack.c.l.b16 %v820
      %v3529 = vunpack.c.h.b16 %v820
      %v3530 = vunpack.c.l.b16 %v821
      %v3531 = vunpack.c.h.b16 %v821
      %v3532 = vunpack.c.l.b16 %v822
      %v3533 = vunpack.c.h.b16 %v822
      %v3534 = vunpack.c.l.b16 %v823
      %v3535 = vunpack.c.h.b16 %v823
      %v3536 = vunpack.c.l.b16 %v824
      %v3537 = vunpack.c.h.b16 %v824
      %v3538 = vunpack.c.l.b16 %v825
      %v3539 = vunpack.c.h.b16 %v825
      %v3540 = vunpack.c.l.b16 %v826
      %v3541 = vunpack.c.h.b16 %v826
      %v3542 = vunpack.c.l.b16 %v827
      %v3543 = vunpack.c.h.b16 %v827
      %v3544 = vunpack.c.l.b16 %v828
      %v3545 = vunpack.c.h.b16 %v828
      %v3546 = vunpack.c.l.b16 %v829
      %v3547 = vunpack.c.h.b16 %v829
      %v3548 = vunpack.c.l.b16 %v830
      %v3549 = vunpack.c.h.b16 %v830
      %v3550 = vunpack.c.l.b16 %v831
      %v3551 = vunpack.c.h.b16 %v831
      %v3552 = vunpack.c.l.b16 %v832
      %v3553 = vunpack.c.h.b16 %v832
      %v3554 = vunpack.c.l.b16 %v833
      %v3555 = vunpack.c.h.b16 %v833
      %v3556 = vunpack.c.l.b16 %v834
      %v3557 = vunpack.c.h.b16 %v834
      %v3558 = vunpack.c.l.b16 %v835
      %v3559 = vunpack.c.h.b16 %v835
      %v3560 = vunpack.c.l.b16 %v836
      %v3561 = vunpack.c.h.b16 %v836
      %v3562 = vunpack.c.l.b16 %v837
      %v3563 = vunpack.c.h.b16 %v837
      %v3564 = vunpack.c.l.b16 %v838
      %v3565 = vunpack.c.h.b16 %v838
      %v3566 = vunpack.c.l.b16 %v839
      %v3567 = vunpack.c.h.b16 %v839
      %v3568 = vunpack.c.l.b16 %v840
      %v3569 = vunpack.c.h.b16 %v840
      %v3570 = vunpack.c.l.b16 %v841
      %v3571 = vunpack.c.h.b16 %v841
      %v3572 = vunpack.c.l.b16 %v842
      %v3573 = vunpack.c.h.b16 %v842
      %v3574 = vunpack.c.l.b16 %v843
      %v3575 = vunpack.c.h.b16 %v843
      %v3576 = vunpack.c.l.b16 %v844
      %v3577 = vunpack.c.h.b16 %v844
      %v3578 = vunpack.c.l.b16 %v845
      %v3579 = vunpack.c.h.b16 %v845
      %v3580 = vunpack.c.l.b16 %v846
      %v3581 = vunpack.c.h.b16 %v846
      %v3582 = vunpack.c.l.b16 %v847
      %v3583 = vunpack.c.h.b16 %v847
      %v3584 = vunpack.c.l.b16 %v848
      %v3585 = vunpack.c.h.b16 %v848
      %v3586 = vunpack.c.l.b16 %v849
      %v3587 = vunpack.c.h.b16 %v849
      %v3588 = vunpack.c.l.b16 %v850
      %v3589 = vunpack.c.h.b16 %v850
      %v3590 = vunpack.c.l.b16 %v851
      %v3591 = vunpack.c.h.b16 %v851
      %v3592 = vunpack.c.l.b16 %v852
      %v3593 = vunpack.c.h.b16 %v852
      %v3594 = vunpack.c.l.b16 %v853
      %v3595 = vunpack.c.h.b16 %v853
      %v3596 = vunpack.c.l.b16 %v854
      %v3597 = vunpack.c.h.b16 %v854
      %v3598 = vunpack.c.l.b16 %v855
      %v3599 = vunpack.c.h.b16 %v855
      %v3600 = vunpack.c.l.b16 %v856
      %v3601 = vunpack.c.h.b16 %v856
      %v3602 = vunpack.c.l.b16 %v857
      %v3603 = vunpack.c.h.b16 %v857
      %v3604 = vunpack.c.l.b16 %v858
      %v3605 = vunpack.c.h.b16 %v858
      %v3606 = vunpack.c.l.b16 %v859
      %v3607 = vunpack.c.h.b16 %v859
      %v3608 = vunpack.c.l.b16 %v860
      %v3609 = vunpack.c.h.b16 %v860
      %v3610 = vunpack.c.l.b16 %v861
      %v3611 = vunpack.c.h.b16 %v861
      %v3612 = vunpack.c.l.b16 %v862
      %v3613 = vunpack.c.h.b16 %v862
      %v3614 = vunpack.c.l.b16 %v863
      %v3615 = vunpack.c.h.b16 %v863
      %v3616 = vunpack.c.l.b16 %v864
      %v3617 = vunpack.c.h.b16 %v864
      %v3618 = vunpack.c.l.b16 %v865
      %v3619 = vunpack.c.h.b16 %v865
      %v3620 = vunpack.c.l.b16 %v866
      %v3621 = vunpack.c.h.b16 %v866
      %v3622 = vunpack.c.l.b16 %v867
      %v3623 = vunpack.c.h.b16 %v867
      %v3624 = vunpack.c.l.b16 %v868
      %v3625 = vunpack.c.h.b16 %v868
      %v3626 = vunpack.c.l.b16 %v869
      %v3627 = vunpack.c.h.b16 %v869
      %v3628 = vunpack.c.l.b16 %v870
      %v3629 = vunpack.c.h.b16 %v870
      %v3630 = vunpack.c.l.b16 %v871
      %v3631 = vunpack.c.h.b16 %v871
      %v3632 = vunpack.c.l.b16 %v872
      %v3633 = vunpack.c.h.b16 %v872
      %v3634 = vunpack.c.l.b16 %v873
      %v3635 = vunpack.c.h.b16 %v873
      %v3636 = vunpack.c.l.b16 %v874
      %v3637 = vunpack.c.h.b16 %v874
      %v3638 = vunpack.c.l.b16 %v875
      %v3639 = vunpack.c.h.b16 %v875
      %v3640 = vunpack.c.l.b16 %v876
      %v3641 = vunpack.c.h.b16 %v876
      %v3642 = vunpack.c.l.b16 %v877
      %v3643 = vunpack.c.h.b16 %v877
      %v3644 = vunpack.c.l.b16 %v878
      %v3645 = vunpack.c.h.b16 %v878
      %v3646 = vunpack.c.l.b16 %v879
      %v3647 = vunpack.c.h.b16 %v879
      %v3648 = vunpack.c.l.b16 %v880
      %v3649 = vunpack.c.h.b16 %v880
      %v3650 = vunpack.c.l.b16 %v881
      %v3651 = vunpack.c.h.b16 %v881
      %v3652 = vunpack.c.l.b16 %v882
      %v3653 = vunpack.c.h.b16 %v882
      %v3654 = vunpack.c.l.b16 %v883
      %v3655 = vunpack.c.h.b16 %v883
      %v3656 = vunpack.c.l.b16 %v884
      %v3657 = vunpack.c.h.b16 %v884
      %v3658 = vunpack.c.l.b16 %v885
      %v3659 = vunpack.c.h.b16 %v885
      %v3660 = vunpack.c.l.b16 %v886
      %v3661 = vunpack.c.h.b16 %v886
      %v3662 = vunpack.c.l.b16 %v887
      %v3663 = vunpack.c.h.b16 %v887
      %v3664 = vunpack.c.l.b16 %v888
      %v3665 = vunpack.c.h.b16 %v888
      %v3666 = vunpack.c.l.b16 %v889
      %v3667 = vunpack.c.h.b16 %v889
      %v3668 = vunpack.c.l.b16 %v890
      %v3669 = vunpack.c.h.b16 %v890
      %v3670 = vunpack.c.l.b16 %v891
      %v3671 = vunpack.c.h.b16 %v891
      %v3672 = vunpack.c.l.b16 %v892
      %v3673 = vunpack.c.h.b16 %v892
      %v3674 = vunpack.c.l.b16 %v893
      %v3675 = vunpack.c.h.b16 %v893
      %v3676 = vunpack.c.l.b16 %v894
      %v3677 = vunpack.c.h.b16 %v894
      %v3678 = vunpack.c.l.b16 %v895
      %v3679 = vunpack.c.h.b16 %v895
      %v3680 = vunpack.c.l.b16 %v896
      %v3681 = vunpack.c.h.b16 %v896
      %v3682 = vunpack.c.l.b16 %v897
      %v3683 = vunpack.c.h.b16 %v897
      %v3684 = vunpack.c.l.b16 %v898
      %v3685 = vunpack.c.h.b16 %v898
      %v3686 = vunpack.c.l.b16 %v899
      %v3687 = vunpack.c.h.b16 %v899
      %v3688 = vunpack.c.l.b16 %v900
      %v3689 = vunpack.c.h.b16 %v900
      %v3690 = vunpack.c.l.b16 %v901
      %v3691 = vunpack.c.h.b16 %v901
      %v3692 = vunpack.c.l.b16 %v902
      %v3693 = vunpack.c.h.b16 %v902
      %v3694 = vunpack.c.l.b16 %v903
      %v3695 = vunpack.c.h.b16 %v903
      %v3696 = vunpack.c.l.b16 %v904
      %v3697 = vunpack.c.h.b16 %v904
      %v3698 = vunpack.c.l.b16 %v905
      %v3699 = vunpack.c.h.b16 %v905
      %v3700 = vunpack.c.l.b16 %v906
      %v3701 = vunpack.c.h.b16 %v906
      %v3702 = vunpack.c.l.b16 %v907
      %v3703 = vunpack.c.h.b16 %v907
      %v3704 = vunpack.c.l.b16 %v908
      %v3705 = vunpack.c.h.b16 %v908
      %v3706 = vunpack.c.l.b16 %v909
      %v3707 = vunpack.c.h.b16 %v909
      %v3708 = vunpack.c.l.b16 %v910
      %v3709 = vunpack.c.h.b16 %v910
      %v3710 = vunpack.c.l.b16 %v911
      %v3711 = vunpack.c.h.b16 %v911
      %v3712 = vunpack.c.l.b16 %v912
      %v3713 = vunpack.c.h.b16 %v912
      %v3714 = vunpack.c.l.b16 %v913
      %v3715 = vunpack.c.h.b16 %v913
      %v3716 = vunpack.c.l.b16 %v914
      %v3717 = vunpack.c.h.b16 %v914
      %v3718 = vunpack.c.l.b16 %v915
      %v3719 = vunpack.c.h.b16 %v915
      %v3720 = vunpack.c.l.b16 %v916
      %v3721 = vunpack.c.h.b16 %v916
      %v3722 = vunpack.c.l.b16 %v917
      %v3723 = vunpack.c.h.b16 %v917
      %v3724 = vunpack.c.l.b16 %v918
      %v3725 = vunpack.c.h.b16 %v918
      %v3726 = vunpack.c.l.b16 %v919
      %v3727 = vunpack.c.h.b16 %v919
      %v3728 = vunpack.c.l.b16 %v920
      %v3729 = vunpack.c.h.b16 %v920
      %v3730 = vunpack.c.l.b16 %v921
      %v3731 = vunpack.c.h.b16 %v921
      %v3732 = vunpack.c.l.b16 %v922
      %v3733 = vunpack.c.h.b16 %v922
      %v3734 = vunpack.c.l.b16 %v923
      %v3735 = vunpack.c.h.b16 %v923
      %v3736 = vunpack.c.l.b16 %v924
      %v3737 = vunpack.c.h.b16 %v924
      %v3738 = vunpack.c.l.b16 %v925
      %v3739 = vunpack.c.h.b16 %v925
      %v3740 = vunpack.c.l.b16 %v926
      %v3741 = vunpack.c.h.b16 %v926
      %v3742 = vunpack.c.l.b16 %v927
      %v3743 = vunpack.c.h.b16 %v927
      %v3744 = vunpack.c.l.b16 %v928
      %v3745 = vunpack.c.h.b16 %v928
      %v3746 = vunpack.c.l.b16 %v929
      %v3747 = vunpack.c.h.b16 %v929
      %v3748 = vunpack.c.l.b16 %v930
      %v3749 = vunpack.c.h.b16 %v930
      %v3750 = vunpack.c.l.b16 %v931
      %v3751 = vunpack.c.h.b16 %v931
      %v3752 = vunpack.c.l.b16 %v932
      %v3753 = vunpack.c.h.b16 %v932
      %v3754 = vunpack.c.l.b16 %v933
      %v3755 = vunpack.c.h.b16 %v933
      %v3756 = vunpack.c.l.b16 %v934
      %v3757 = vunpack.c.h.b16 %v934
      %v3758 = vunpack.c.l.b16 %v935
      %v3759 = vunpack.c.h.b16 %v935
      %v3760 = vunpack.c.l.b16 %v936
      %v3761 = vunpack.c.h.b16 %v936
      %v3762 = vunpack.c.l.b16 %v937
      %v3763 = vunpack.c.h.b16 %v937
      %v3764 = vunpack.c.l.b16 %v938
      %v3765 = vunpack.c.h.b16 %v938
      %v3766 = vunpack.c.l.b16 %v939
      %v3767 = vunpack.c.h.b16 %v939
      %v3768 = vunpack.c.l.b16 %v940
      %v3769 = vunpack.c.h.b16 %v940
      %v3770 = vunpack.c.l.b16 %v941
      %v3771 = vunpack.c.h.b16 %v941
      %v3772 = vunpack.c.l.b16 %v942
      %v3773 = vunpack.c.h.b16 %v942
      %v3774 = vunpack.c.l.b16 %v943
      %v3775 = vunpack.c.h.b16 %v943
      %v3776 = vunpack.c.l.b16 %v944
      %v3777 = vunpack.c.h.b16 %v944
      %v3778 = vunpack.c.l.b16 %v945
      %v3779 = vunpack.c.h.b16 %v945
      %v3780 = vunpack.c.l.b16 %v946
      %v3781 = vunpack.c.h.b16 %v946
      %v3782 = vunpack.c.l.b16 %v947
      %v3783 = vunpack.c.h.b16 %v947
      %v3784 = vunpack.c.l.b16 %v948
      %v3785 = vunpack.c.h.b16 %v948
      %v3786 = vunpack.c.l.b16 %v949
      %v3787 = vunpack.c.h.b16 %v949
      %v3788 = vunpack.c.l.b16 %v950
      %v3789 = vunpack.c.h.b16 %v950
      %v3790 = vunpack.c.l.b16 %v951
      %v3791 = vunpack.c.h.b16 %v951
      %v3792 = vunpack.c.l.b16 %v952
      %v3793 = vunpack.c.h.b16 %v952
      %v3794 = vunpack.c.l.b16 %v953
      %v3795 = vunpack.c.h.b16 %v953
      %v3796 = vunpack.c.l.b16 %v954
      %v3797 = vunpack.c.h.b16 %v954
      %v3798 = vunpack.c.l.b16 %v955
      %v3799 = vunpack.c.h.b16 %v955
      %v3800 = vunpack.c.l.b16 %v956
      %v3801 = vunpack.c.h.b16 %v956
      %v3802 = vunpack.c.l.b16 %v957
      %v3803 = vunpack.c.h.b16 %v957
      %v3804 = vunpack.c.l.b16 %v958
      %v3805 = vunpack.c.h.b16 %v958
      %v3806 = vunpack.c.l.b16 %v959
      %v3807 = vunpack.c.h.b16 %v959
      %v3808 = vunpack.c.l.b16 %v960
      %v3809 = vunpack.c.h.b16 %v960
      %v3810 = vunpack.c.l.b16 %v961
      %v3811 = vunpack.c.h.b16 %v961
      %v3812 = vunpack.c.l.b16 %v962
      %v3813 = vunpack.c.h.b16 %v962
      %v3814 = vunpack.c.l.b16 %v963
      %v3815 = vunpack.c.h.b16 %v963
      %v3816 = vunpack.c.l.b16 %v964
      %v3817 = vunpack.c.h.b16 %v964
      %v3818 = vunpack.c.l.b16 %v965
      %v3819 = vunpack.c.h.b16 %v965
      %v3820 = vunpack.c.l.b16 %v966
      %v3821 = vunpack.c.h.b16 %v966
      %v3822 = vunpack.c.l.b16 %v967
      %v3823 = vunpack.c.h.b16 %v967
      %v3824 = vunpack.c.l.b16 %v968
      %v3825 = vunpack.c.h.b16 %v968
      %v3826 = vunpack.c.l.b16 %v969
      %v3827 = vunpack.c.h.b16 %v969
      %v3828 = vunpack.c.l.b16 %v970
      %v3829 = vunpack.c.h.b16 %v970
      %v3830 = vunpack.c.l.b16 %v971
      %v3831 = vunpack.c.h.b16 %v971
      %v3832 = vunpack.c.l.b16 %v972
      %v3833 = vunpack.c.h.b16 %v972
      %v3834 = vunpack.c.l.b16 %v973
      %v3835 = vunpack.c.h.b16 %v973
      %v3836 = vunpack.c.l.b16 %v974
      %v3837 = vunpack.c.h.b16 %v974
      %v3838 = vunpack.c.l.b16 %v975
      %v3839 = vunpack.c.h.b16 %v975
      %v3840 = vunpack.c.l.b16 %v976
      %v3841 = vunpack.c.h.b16 %v976
      %v3842 = vunpack.c.l.b16 %v977
      %v3843 = vunpack.c.h.b16 %v977
      %v3844 = vunpack.c.l.b16 %v978
      %v3845 = vunpack.c.h.b16 %v978
      %v3846 = vunpack.c.l.b16 %v979
      %v3847 = vunpack.c.h.b16 %v979
      %v3848 = vunpack.c.l.b16 %v980
      %v3849 = vunpack.c.h.b16 %v980
      %v3850 = vunpack.c.l.b16 %v981
      %v3851 = vunpack.c.h.b16 %v981
      %v3852 = vunpack.c.l.b16 %v982
      %v3853 = vunpack.c.h.b16 %v982
      %v3854 = vunpack.c.l.b16 %v983
      %v3855 = vunpack.c.h.b16 %v983
      %v3856 = vunpack.c.l.b16 %v984
      %v3857 = vunpack.c.h.b16 %v984
      %v3858 = vunpack.c.l.b16 %v985
      %v3859 = vunpack.c.h.b16 %v985
      %v3860 = vunpack.c.l.b16 %v986
      %v3861 = vunpack.c.h.b16 %v986
      %v3862 = vunpack.c.l.b16 %v987
      %v3863 = vunpack.c.h.b16 %v987
      %v3864 = vunpack.c.l.b16 %v988
      %v3865 = vunpack.c.h.b16 %v988
      %v3866 = vunpack.c.l.b16 %v989
      %v3867 = vunpack.c.h.b16 %v989
      %v3868 = vunpack.c.l.b16 %v990
      %v3869 = vunpack.c.h.b16 %v990
      %v3870 = vunpack.c.l.b16 %v991
      %v3871 = vunpack.c.h.b16 %v991
      %v3872 = vunpack.c.l.b16 %v992
      %v3873 = vunpack.c.h.b16 %v992
      %v3874 = vunpack.c.l.b16 %v993
      %v3875 = vunpack.c.h.b16 %v993
      %v3876 = vunpack.c.l.b16 %v994
      %v3877 = vunpack.c.h.b16 %v994
      %v3878 = vunpack.c.l.b16 %v995
      %v3879 = vunpack.c.h.b16 %v995
      %v3880 = vunpack.c.l.b16 %v996
      %v3881 = vunpack.c.h.b16 %v996
      %v3882 = vunpack.c.l.b16 %v997
      %v3883 = vunpack.c.h.b16 %v997
      %v3884 = vunpack.c.l.b16 %v998
      %v3885 = vunpack.c.h.b16 %v998
      %v3886 = vunpack.c.l.b16 %v999
      %v3887 = vunpack.c.h.b16 %v999
      %v3888 = vunpack.c.l.b16 %v1000
      %v3889 = vunpack.c.h.b16 %v1000
      %v3890 = vunpack.c.l.b16 %v1001
      %v3891 = vunpack.c.h.b16 %v1001
      %v3892 = vunpack.c.l.b16 %v1002
      %v3893 = vunpack.c.h.b16 %v1002
      %v3894 = vunpack.c.l.b16 %v1003
      %v3895 = vunpack.c.h.b16 %v1003
      %v3896 = vunpack.c.l.b16 %v1004
      %v3897 = vunpack.c.h.b16 %v1004
      %v3898 = vunpack.c.l.b16 %v1005
      %v3899 = vunpack.c.h.b16 %v1005
      %v3900 = vunpack.c.l.b16 %v1006
      %v3901 = vunpack.c.h.b16 %v1006
      %v3902 = vunpack.c.l.b16 %v1007
      %v3903 = vunpack.c.h.b16 %v1007
      %v3904 = vunpack.c.l.b16 %v1008
      %v3905 = vunpack.c.h.b16 %v1008
      %v3906 = vunpack.c.l.b16 %v1009
      %v3907 = vunpack.c.h.b16 %v1009
      %v3908 = vunpack.c.l.b16 %v1010
      %v3909 = vunpack.c.h.b16 %v1010
      %v3910 = vunpack.c.l.b16 %v1011
      %v3911 = vunpack.c.h.b16 %v1011
      %v3912 = vunpack.c.l.b16 %v1012
      %v3913 = vunpack.c.h.b16 %v1012
      %v3914 = vunpack.c.l.b16 %v1013
      %v3915 = vunpack.c.h.b16 %v1013
      %v3916 = vunpack.c.l.b16 %v1014
      %v3917 = vunpack.c.h.b16 %v1014
      %v3918 = vunpack.c.l.b16 %v1015
      %v3919 = vunpack.c.h.b16 %v1015
      %v3920 = vunpack.c.l.b16 %v1016
      %v3921 = vunpack.c.h.b16 %v1016
      %v3922 = vunpack.c.l.b16 %v1017
      %v3923 = vunpack.c.h.b16 %v1017
      %v3924 = vunpack.c.l.b16 %v1018
      %v3925 = vunpack.c.h.b16 %v1018
      %v3926 = vunpack.c.l.b16 %v1019
      %v3927 = vunpack.c.h.b16 %v1019
      %v3928 = vunpack.c.l.b16 %v1020
      %v3929 = vunpack.c.h.b16 %v1020
      %v3930 = vunpack.c.l.b16 %v1021
      %v3931 = vunpack.c.h.b16 %v1021
      %v3932 = vunpack.c.l.b16 %v1022
      %v3933 = vunpack.c.h.b16 %v1022
      %v3934 = vunpack.c.l.b16 %v1023
      %v3935 = vunpack.c.h.b16 %v1023
      %v3936 = vunpack.c.l.b16 %v1024
      %v3937 = vunpack.c.h.b16 %v1024
      %v3938 = vunpack.c.l.b16 %v1025
      %v3939 = vunpack.c.h.b16 %v1025
      %v3940 = vunpack.c.l.b16 %v1026
      %v3941 = vunpack.c.h.b16 %v1026
      %v3942 = vunpack.c.l.b16 %v1027
      %v3943 = vunpack.c.h.b16 %v1027
      %v3944 = vunpack.c.l.b16 %v1028
      %v3945 = vunpack.c.h.b16 %v1028
      %v3946 = vunpack.c.l.b16 %v1029
      %v3947 = vunpack.c.h.b16 %v1029
      %v3948 = vunpack.c.l.b16 %v1030
      %v3949 = vunpack.c.h.b16 %v1030
      %v3950 = vunpack.c.l.b16 %v1031
      %v3951 = vunpack.c.h.b16 %v1031
      %v3952 = vunpack.c.l.b16 %v1032
      %v3953 = vunpack.c.h.b16 %v1032
      %v3954 = vunpack.c.l.b16 %v1033
      %v3955 = vunpack.c.h.b16 %v1033
      %v3956 = vunpack.c.l.b16 %v1034
      %v3957 = vunpack.c.h.b16 %v1034
      %v3958 = vunpack.c.l.b16 %v1035
      %v3959 = vunpack.c.h.b16 %v1035
      %v3960 = vunpack.c.l.b16 %v1036
      %v3961 = vunpack.c.h.b16 %v1036
      %v3962 = vunpack.c.l.b16 %v1037
      %v3963 = vunpack.c.h.b16 %v1037
      %v3964 = vunpack.c.l.b16 %v1038
      %v3965 = vunpack.c.h.b16 %v1038
      %v3966 = vunpack.c.l.b16 %v1039
      %v3967 = vunpack.c.h.b16 %v1039
      %v3968 = vunpack.c.l.b16 %v1040
      %v3969 = vunpack.c.h.b16 %v1040
      %v3970 = vunpack.c.l.b16 %v1041
      %v3971 = vunpack.c.h.b16 %v1041
      %v3972 = vunpack.c.l.b16 %v1042
      %v3973 = vunpack.c.h.b16 %v1042
      %v3974 = vunpack.c.l.b16 %v1043
      %v3975 = vunpack.c.h.b16 %v1043
      %v3976 = vunpack.c.l.b16 %v1044
      %v3977 = vunpack.c.h.b16 %v1044
      %v3978 = vunpack.c.l.b16 %v1045
      %v3979 = vunpack.c.h.b16 %v1045
      %v3980 = vunpack.c.l.b16 %v1046
      %v3981 = vunpack.c.h.b16 %v1046
      %v3982 = vunpack.c.l.b16 %v1047
      %v3983 = vunpack.c.h.b16 %v1047
      %v3984 = vunpack.c.l.b16 %v1048
      %v3985 = vunpack.c.h.b16 %v1048
      %v3986 = vunpack.c.l.b16 %v1049
      %v3987 = vunpack.c.h.b16 %v1049
      %v3988 = vunpack.c.l.b16 %v1050
      %v3989 = vunpack.c.h.b16 %v1050
      %v3990 = vunpack.c.l.b16 %v1051
      %v3991 = vunpack.c.h.b16 %v1051
      %v3992 = vunpack.c.l.b16 %v1052
      %v3993 = vunpack.c.h.b16 %v1052
      %v3994 = vunpack.c.l.b16 %v1053
      %v3995 = vunpack.c.h.b16 %v1053
      %v3996 = vunpack.c.l.b16 %v1054
      %v3997 = vunpack.c.h.b16 %v1054
      %v3998 = vunpack.c.l.b16 %v1055
      %v3999 = vunpack.c.h.b16 %v1055
      %v4000 = vunpack.c.l.b16 %v1056
      %v4001 = vunpack.c.h.b16 %v1056
      %v4002 = vunpack.c.l.b16 %v1057
      %v4003 = vunpack.c.h.b16 %v1057
      %v4004 = vunpack.c.l.b16 %v1058
      %v4005 = vunpack.c.h.b16 %v1058
      %v4006 = vunpack.c.l.b16 %v1059
      %v4007 = vunpack.c.h.b16 %v1059
      %v4008 = vunpack.c.l.b16 %v1060
      %v4009 = vunpack.c.h.b16 %v1060
      %v4010 = vunpack.c.l.b16 %v1061
      %v4011 = vunpack.c.h.b16 %v1061
      %v4012 = vunpack.c.l.b16 %v1062
      %v4013 = vunpack.c.h.b16 %v1062
      %v4014 = vunpack.c.l.b16 %v1063
      %v4015 = vunpack.c.h.b16 %v1063
      %v4016 = vunpack.c.l.b16 %v1064
      %v4017 = vunpack.c.h.b16 %v1064
      %v4018 = vunpack.c.l.b16 %v1065
      %v4019 = vunpack.c.h.b16 %v1065
      %v4020 = vunpack.c.l.b16 %v1066
      %v4021 = vunpack.c.h.b16 %v1066
      %v4022 = vunpack.c.l.b16 %v1067
      %v4023 = vunpack.c.h.b16 %v1067
      %v4024 = vunpack.c.l.b16 %v1068
      %v4025 = vunpack.c.h.b16 %v1068
      %v4026 = vunpack.c.l.b16 %v1069
      %v4027 = vunpack.c.h.b16 %v1069
      %v4028 = vunpack.c.l.b16 %v1070
      %v4029 = vunpack.c.h.b16 %v1070
      %v4030 = vunpack.c.l.b16 %v1071
      %v4031 = vunpack.c.h.b16 %v1071
      %v4032 = vunpack.c.l.b16 %v1072
      %v4033 = vunpack.c.h.b16 %v1072
      %v4034 = vunpack.c.l.b16 %v1073
      %v4035 = vunpack.c.h.b16 %v1073
      %v4036 = vunpack.c.l.b16 %v1074
      %v4037 = vunpack.c.h.b16 %v1074
      %v4038 = vunpack.c.l.b16 %v1075
      %v4039 = vunpack.c.h.b16 %v1075
      %v4040 = vunpack.c.l.b16 %v1076
      %v4041 = vunpack.c.h.b16 %v1076
      %v4042 = vunpack.c.l.b16 %v1077
      %v4043 = vunpack.c.h.b16 %v1077
      %v4044 = vunpack.c.l.b16 %v1078
      %v4045 = vunpack.c.h.b16 %v1078
      %v4046 = vunpack.c.l.b16 %v1079
      %v4047 = vunpack.c.h.b16 %v1079
      %v4048 = vunpack.c.l.b16 %v1080
      %v4049 = vunpack.c.h.b16 %v1080
      %v4050 = vunpack.c.l.b16 %v1081
      %v4051 = vunpack.c.h.b16 %v1081
      %v4052 = vunpack.c.l.b16 %v1082
      %v4053 = vunpack.c.h.b16 %v1082
      %v4054 = vunpack.c.l.b16 %v1083
      %v4055 = vunpack.c.h.b16 %v1083
      %v4056 = vunpack.c.l.b16 %v1084
      %v4057 = vunpack.c.h.b16 %v1084
      %v4058 = vunpack.c.l.b16 %v1085
      %v4059 = vunpack.c.h.b16 %v1085
      %v4060 = vunpack.c.l.b16 %v1086
      %v4061 = vunpack.c.h.b16 %v1086
      %v4062 = vunpack.c.l.b16 %v1087
      %v4063 = vunpack.c.h.b16 %v1087
      %v4064 = vunpack.c.l.b16 %v1088
      %v4065 = vunpack.c.h.b16 %v1088
      %v4066 = vunpack.c.l.b16 %v1089
      %v4067 = vunpack.c.h.b16 %v1089
      %v4068 = vunpack.c.l.b16 %v1090
      %v4069 = vunpack.c.h.b16 %v1090
      %v4070 = vunpack.c.l.b16 %v1091
      %v4071 = vunpack.c.h.b16 %v1091
      %v4072 = vunpack.c.l.b16 %v1092
      %v4073 = vunpack.c.h.b16 %v1092
      %v4074 = vunpack.c.l.b16 %v1093
      %v4075 = vunpack.c.h.b16 %v1093
      %v4076 = vunpack.c.l.b16 %v1094
      %v4077 = vunpack.c.h.b16 %v1094
      %v4078 = vunpack.c.l.b16 %v1095
      %v4079 = vunpack.c.h.b16 %v1095
      %v4080 = vunpack.c.l.b16 %v1096
      %v4081 = vunpack.c.h.b16 %v1096
      %v4082 = vunpack.c.l.b16 %v1097
      %v4083 = vunpack.c.h.b16 %v1097
      %v4084 = vunpack.c.l.b16 %v1098
      %v4085 = vunpack.c.h.b16 %v1098
      %v4086 = vunpack.c.l.b16 %v1099
      %v4087 = vunpack.c.h.b16 %v1099
      %v4088 = vunpack.c.l.b16 %v1100
      %v4089 = vunpack.c.h.b16 %v1100
      %v4090 = vunpack.c.l.b16 %v1101
      %v4091 = vunpack.c.h.b16 %v1101
      %v4092 = vunpack.c.l.b16 %v1102
      %v4093 = vunpack.c.h.b16 %v1102
      %v4094 = vunpack.c.l.b16 %v1103
      %v4095 = vunpack.c.h.b16 %v1103
      %v4096 = vunpack.c.l.b16 %v1104
      %v4097 = vunpack.c.h.b16 %v1104
      %v4098 = vunpack.c.l.b16 %v1105
      %v4099 = vunpack.c.h.b16 %v1105
      %v4100 = vunpack.c.l.b16 %v1106
      %v4101 = vunpack.c.h.b16 %v1106
      %v4102 = vunpack.c.l.b16 %v1107
      %v4103 = vunpack.c.h.b16 %v1107
      %v4104 = vunpack.c.l.b16 %v1108
      %v4105 = vunpack.c.h.b16 %v1108
      %v4106 = vunpack.c.l.b16 %v1109
      %v4107 = vunpack.c.h.b16 %v1109
      %v4108 = vunpack.c.l.b16 %v1110
      %v4109 = vunpack.c.h.b16 %v1110
      %v4110 = vunpack.c.l.b16 %v1111
      %v4111 = vunpack.c.h.b16 %v1111
      %v4112 = vunpack.c.l.b16 %v1112
      %v4113 = vunpack.c.h.b16 %v1112
      %v4114 = vunpack.c.l.b16 %v1113
      %v4115 = vunpack.c.h.b16 %v1113
      %v4116 = vunpack.c.l.b16 %v1114
      %v4117 = vunpack.c.h.b16 %v1114
      %v4118 = vunpack.c.l.b16 %v1115
      %v4119 = vunpack.c.h.b16 %v1115
      %v4120 = vunpack.c.l.b16 %v1116
      %v4121 = vunpack.c.h.b16 %v1116
      %v4122 = vunpack.c.l.b16 %v1117
      %v4123 = vunpack.c.h.b16 %v1117
      %v4124 = vunpack.c.l.b16 %v1118
      %v4125 = vunpack.c.h.b16 %v1118
      %v4126 = vunpack.c.l.b16 %v1119
      %v4127 = vunpack.c.h.b16 %v1119
      %v4128 = vunpack.c.l.b16 %v1120
      %v4129 = vunpack.c.h.b16 %v1120
      %v4130 = vunpack.c.l.b16 %v1121
      %v4131 = vunpack.c.h.b16 %v1121
      %v4132 = vunpack.c.l.b16 %v1122
      %v4133 = vunpack.c.h.b16 %v1122
      %v4134 = vunpack.c.l.b16 %v1123
      %v4135 = vunpack.c.h.b16 %v1123
      %v4136 = vunpack.c.l.b16 %v1124
      %v4137 = vunpack.c.h.b16 %v1124
      %v4138 = vunpack.c.l.b16 %v1125
      %v4139 = vunpack.c.h.b16 %v1125
      %v4140 = vunpack.c.l.b16 %v1126
      %v4141 = vunpack.c.h.b16 %v1126
      %v4142 = vunpack.c.l.b16 %v1127
      %v4143 = vunpack.c.h.b16 %v1127
      %v4144 = vunpack.c.l.b16 %v1128
      %v4145 = vunpack.c.h.b16 %v1128
      %v4146 = vunpack.c.l.b16 %v1129
      %v4147 = vunpack.c.h.b16 %v1129
      %v4148 = vunpack.c.l.b16 %v1130
      %v4149 = vunpack.c.h.b16 %v1130
      %v4150 = vunpack.c.l.b16 %v1131
      %v4151 = vunpack.c.h.b16 %v1131
      %v4152 = vunpack.c.l.b16 %v1132
      %v4153 = vunpack.c.h.b16 %v1132
      %v4154 = vunpack.c.l.b16 %v1133
      %v4155 = vunpack.c.h.b16 %v1133
      %v4156 = vunpack.c.l.b16 %v1134
      %v4157 = vunpack.c.h.b16 %v1134
      %v4158 = vunpack.c.l.b16 %v1135
      %v4159 = vunpack.c.h.b16 %v1135
      %v4160 = vunpack.c.l.b16 %v1136
      %v4161 = vunpack.c.h.b16 %v1136
      %v4162 = vunpack.c.l.b16 %v1137
      %v4163 = vunpack.c.h.b16 %v1137
      %v4164 = vunpack.c.l.b16 %v1138
      %v4165 = vunpack.c.h.b16 %v1138
      %v4166 = vunpack.c.l.b16 %v1139
      %v4167 = vunpack.c.h.b16 %v1139
      %v4168 = vunpack.c.l.b16 %v1140
      %v4169 = vunpack.c.h.b16 %v1140
      %v4170 = vunpack.c.l.b16 %v1141
      %v4171 = vunpack.c.h.b16 %v1141
      %v4172 = vunpack.c.l.b16 %v1142
      %v4173 = vunpack.c.h.b16 %v1142
      %v4174 = vunpack.c.l.b16 %v1143
      %v4175 = vunpack.c.h.b16 %v1143
      %v4176 = vunpack.c.l.b16 %v1144
      %v4177 = vunpack.c.h.b16 %v1144
      %v4178 = vunpack.c.l.b16 %v1145
      %v4179 = vunpack.c.h.b16 %v1145
      %v4180 = vunpack.c.l.b16 %v1146
      %v4181 = vunpack.c.h.b16 %v1146
      %v4182 = vunpack.c.l.b16 %v1147
      %v4183 = vunpack.c.h.b16 %v1147
      %v4184 = vunpack.c.l.b16 %v1148
      %v4185 = vunpack.c.h.b16 %v1148
      %v4186 = vunpack.c.l.b16 %v1149
      %v4187 = vunpack.c.h.b16 %v1149
      %v4188 = vunpack.c.l.b16 %v1150
      %v4189 = vunpack.c.h.b16 %v1150
      %v4190 = vunpack.c.l.b16 %v1151
      %v4191 = vunpack.c.h.b16 %v1151
      %v4192 = vunpack.c.l.b16 %v1152
      %v4193 = vunpack.c.h.b16 %v1152
      %v4194 = vunpack.c.l.b16 %v1153
      %v4195 = vunpack.c.h.b16 %v1153
      %v4196 = vunpack.c.l.b16 %v1154
      %v4197 = vunpack.c.h.b16 %v1154
      %v4198 = vunpack.c.l.b16 %v1155
      %v4199 = vunpack.c.h.b16 %v1155
      %v4200 = vunpack.c.l.b16 %v1156
      %v4201 = vunpack.c.h.b16 %v1156
      %v4202 = vunpack.c.l.b16 %v1157
      %v4203 = vunpack.c.h.b16 %v1157
      %v4204 = vunpack.c.l.b16 %v1158
      %v4205 = vunpack.c.h.b16 %v1158
      %v4206 = vunpack.c.l.b16 %v1159
      %v4207 = vunpack.c.h.b16 %v1159
      %v4208 = vunpack.c.l.b16 %v1160
      %v4209 = vunpack.c.h.b16 %v1160
      %v4210 = vunpack.c.l.b16 %v1161
      %v4211 = vunpack.c.h.b16 %v1161
      %v4212 = vunpack.c.l.b16 %v1162
      %v4213 = vunpack.c.h.b16 %v1162
      %v4214 = vunpack.c.l.b16 %v1163
      %v4215 = vunpack.c.h.b16 %v1163
      %v4216 = vunpack.c.l.b16 %v1164
      %v4217 = vunpack.c.h.b16 %v1164
      %v4218 = vunpack.c.l.b16 %v1165
      %v4219 = vunpack.c.h.b16 %v1165
      %v4220 = vunpack.c.l.b16 %v1166
      %v4221 = vunpack.c.h.b16 %v1166
      %v4222 = vunpack.c.l.b16 %v1167
      %v4223 = vunpack.c.h.b16 %v1167
      %v4224 = vunpack.c.l.b16 %v1168
      %v4225 = vunpack.c.h.b16 %v1168
      %v4226 = vunpack.c.l.b16 %v1169
      %v4227 = vunpack.c.h.b16 %v1169
      %v4228 = vunpack.c.l.b16 %v1170
      %v4229 = vunpack.c.h.b16 %v1170
      %v4230 = vunpack.c.l.b16 %v1171
      %v4231 = vunpack.c.h.b16 %v1171
      %v4232 = vunpack.c.l.b16 %v1172
      %v4233 = vunpack.c.h.b16 %v1172
      %v4234 = vunpack.c.l.b16 %v1173
      %v4235 = vunpack.c.h.b16 %v1173
      %v4236 = vunpack.c.l.b16 %v1174
      %v4237 = vunpack.c.h.b16 %v1174
      %v4238 = vunpack.c.l.b16 %v1175
      %v4239 = vunpack.c.h.b16 %v1175
      %v4240 = vunpack.c.l.b16 %v1176
      %v4241 = vunpack.c.h.b16 %v1176
      %v4242 = vunpack.c.l.b16 %v1177
      %v4243 = vunpack.c.h.b16 %v1177
      %v4244 = vunpack.c.l.b16 %v1178
      %v4245 = vunpack.c.h.b16 %v1178
      %v4246 = vunpack.c.l.b16 %v1179
      %v4247 = vunpack.c.h.b16 %v1179
      %v4248 = vunpack.c.l.b16 %v1180
      %v4249 = vunpack.c.h.b16 %v1180
      %v4250 = vunpack.c.l.b16 %v1181
      %v4251 = vunpack.c.h.b16 %v1181
      %v4252 = vunpack.c.l.b16 %v1182
      %v4253 = vunpack.c.h.b16 %v1182
      %v4254 = vunpack.c.l.b16 %v1183
      %v4255 = vunpack.c.h.b16 %v1183
      %v4256 = vunpack.c.l.b16 %v1184
      %v4257 = vunpack.c.h.b16 %v1184
      %v4258 = vunpack.c.l.b16 %v1185
      %v4259 = vunpack.c.h.b16 %v1185
      %v4260 = vunpack.c.l.b16 %v1186
      %v4261 = vunpack.c.h.b16 %v1186
      %v4262 = vunpack.c.l.b16 %v1187
      %v4263 = vunpack.c.h.b16 %v1187
      %v4264 = vunpack.c.l.b16 %v1188
      %v4265 = vunpack.c.h.b16 %v1188
      %v4266 = vunpack.c.l.b16 %v1189
      %v4267 = vunpack.c.h.b16 %v1189
      %v4268 = vunpack.c.l.b16 %v1190
      %v4269 = vunpack.c.h.b16 %v1190
      %v4270 = vunpack.c.l.b16 %v1191
      %v4271 = vunpack.c.h.b16 %v1191
      %v4272 = vunpack.c.l.b16 %v1192
      %v4273 = vunpack.c.h.b16 %v1192
      %v4274 = vunpack.c.l.b16 %v1193
      %v4275 = vunpack.c.h.b16 %v1193
      %v4276 = vunpack.c.l.b16 %v1194
      %v4277 = vunpack.c.h.b16 %v1194
      %v4278 = vunpack.c.l.b16 %v1195
      %v4279 = vunpack.c.h.b16 %v1195
      %v4280 = vunpack.c.l.b16 %v1196
      %v4281 = vunpack.c.h.b16 %v1196
      %v4282 = vunpack.c.l.b16 %v1197
      %v4283 = vunpack.c.h.b16 %v1197
      %v4284 = vunpack.c.l.b16 %v1198
      %v4285 = vunpack.c.h.b16 %v1198
      %v4286 = vunpack.c.l.b16 %v1199
      %v4287 = vunpack.c.h.b16 %v1199
      %v4288 = vunpack.c.l.b16 %v1200
      %v4289 = vunpack.c.h.b16 %v1200
      %v4290 = vunpack.c.l.b16 %v1201
      %v4291 = vunpack.c.h.b16 %v1201
      %v4292 = vunpack.c.l.b16 %v1202
      %v4293 = vunpack.c.h.b16 %v1202
      %v4294 = vunpack.c.l.b16 %v1203
      %v4295 = vunpack.c.h.b16 %v1203
      %v4296 = vunpack.c.l.b16 %v1204
      %v4297 = vunpack.c.h.b16 %v1204
      %v4298 = vunpack.c.l.b16 %v1205
      %v4299 = vunpack.c.h.b16 %v1205
      %v4300 = vunpack.c.l.b16 %v1206
      %v4301 = vunpack.c.h.b16 %v1206
      %v4302 = vunpack.c.l.b16 %v1207
      %v4303 = vunpack.c.h.b16 %v1207
      %v4304 = vunpack.c.l.b16 %v1208
      %v4305 = vunpack.c.h.b16 %v1208
      %v4306 = vunpack.c.l.b16 %v1209
      %v4307 = vunpack.c.h.b16 %v1209
      %v4308 = vunpack.c.l.b16 %v1210
      %v4309 = vunpack.c.h.b16 %v1210
      %v4310 = vunpack.c.l.b16 %v1211
      %v4311 = vunpack.c.h.b16 %v1211
      %v4312 = vunpack.c.l.b16 %v1212
      %v4313 = vunpack.c.h.b16 %v1212
      %v4314 = vunpack.c.l.b16 %v1213
      %v4315 = vunpack.c.h.b16 %v1213
      %v4316 = vunpack.c.l.b16 %v1214
      %v4317 = vunpack.c.h.b16 %v1214
      %v4318 = vunpack.c.l.b16 %v1215
      %v4319 = vunpack.c.h.b16 %v1215
      %v4320 = vunpack.c.l.b16 %v1216
      %v4321 = vunpack.c.h.b16 %v1216
      %v4322 = vunpack.c.l.b16 %v1217
      %v4323 = vunpack.c.h.b16 %v1217
      %v4324 = vunpack.c.l.b16 %v1218
      %v4325 = vunpack.c.h.b16 %v1218
      %v4326 = vunpack.c.l.b16 %v1219
      %v4327 = vunpack.c.h.b16 %v1219
      %v4328 = vunpack.c.l.b16 %v1220
      %v4329 = vunpack.c.h.b16 %v1220
      %v4330 = vunpack.c.l.b16 %v1221
      %v4331 = vunpack.c.h.b16 %v1221
      %v4332 = vunpack.c.l.b16 %v1222
      %v4333 = vunpack.c.h.b16 %v1222
      %v4334 = vunpack.c.l.b16 %v1223
      %v4335 = vunpack.c.h.b16 %v1223
      %v4336 = vunpack.c.l.b16 %v1224
      %v4337 = vunpack.c.h.b16 %v1224
      %v4338 = vunpack.c.l.b16 %v1225
      %v4339 = vunpack.c.h.b16 %v1225
      %v4340 = vunpack.c.l.b16 %v1226
      %v4341 = vunpack.c.h.b16 %v1226
      %v4342 = vunpack.c.l.b16 %v1227
      %v4343 = vunpack.c.h.b16 %v1227
      %v4344 = vunpack.c.l.b16 %v1228
      %v4345 = vunpack.c.h.b16 %v1228
      %v4346 = vunpack.c.l.b16 %v1229
      %v4347 = vunpack.c.h.b16 %v1229
      %v4348 = vunpack.c.l.b16 %v1230
      %v4349 = vunpack.c.h.b16 %v1230
      %v4350 = vunpack.c.l.b16 %v1231
      %v4351 = vunpack.c.h.b16 %v1231
      %v4352 = vunpack.c.l.b16 %v1232
      %v4353 = vunpack.c.h.b16 %v1232
      %v4354 = vunpack.c.l.b16 %v1233
      %v4355 = vunpack.c.h.b16 %v1233
      %v4356 = vunpack.c.l.b16 %v1234
      %v4357 = vunpack.c.h.b16 %v1234
      %v4358 = vunpack.c.l.b16 %v1235
      %v4359 = vunpack.c.h.b16 %v1235
      %v4360 = vunpack.c.l.b16 %v1236
      %v4361 = vunpack.c.h.b16 %v1236
      %v4362 = vunpack.c.l.b16 %v1237
      %v4363 = vunpack.c.h.b16 %v1237
      %v4364 = vunpack.c.l.b16 %v1238
      %v4365 = vunpack.c.h.b16 %v1238
      %v4366 = vunpack.c.l.b16 %v1239
      %v4367 = vunpack.c.h.b16 %v1239
      %v4368 = vunpack.c.l.b16 %v1240
      %v4369 = vunpack.c.h.b16 %v1240
      %v4370 = vunpack.c.l.b16 %v1241
      %v4371 = vunpack.c.h.b16 %v1241
      %v4372 = vunpack.c.l.b16 %v1242
      %v4373 = vunpack.c.h.b16 %v1242
      %v4374 = vunpack.c.l.b16 %v1243
      %v4375 = vunpack.c.h.b16 %v1243
      %v4376 = vpack.c.b16 %v2344, %v2328
      %v4377 = vpack.c.b16 %v2345, %v2329
      %v4378 = vpack.c.b16 %v2346, %v2330
      %v4379 = vpack.c.b16 %v2347, %v2331
      %v4380 = vpack.c.b16 %v2348, %v2332
      %v4381 = vpack.c.b16 %v2349, %v2333
      %v4382 = vpack.c.b16 %v2350, %v2334
      %v4383 = vpack.c.b16 %v2351, %v2335
      %v4384 = vpack.c.b16 %v2352, %v2336
      %v4385 = vpack.c.b16 %v2353, %v2337
      %v4386 = vpack.c.b16 %v2354, %v2338
      %v4387 = vpack.c.b16 %v2355, %v2339
      %v4388 = vpack.c.b16 %v2356, %v2340
      %v4389 = vpack.c.b16 %v2357, %v2341
      %v4390 = vpack.c.b16 %v2358, %v2342
      %v4391 = vpack.c.b16 %v2359, %v2343
      %v4392 = vpack.c.b16 %v2376, %v2360
      %v4393 = vpack.c.b16 %v2377, %v2361
      %v4394 = vpack.c.b16 %v2378, %v2362
      %v4395 = vpack.c.b16 %v2379, %v2363
      %v4396 = vpack.c.b16 %v2380, %v2364
      %v4397 = vpack.c.b16 %v2381, %v2365
      %v4398 = vpack.c.b16 %v2382, %v2366
      %v4399 = vpack.c.b16 %v2383, %v2367
      %v4400 = vpack.c.b16 %v2384, %v2368
      %v4401 = vpack.c.b16 %v2385, %v2369
      %v4402 = vpack.c.b16 %v2386, %v2370
      %v4403 = vpack.c.b16 %v2387, %v2371
      %v4404 = vpack.c.b16 %v2388, %v2372
      %v4405 = vpack.c.b16 %v2389, %v2373
      %v4406 = vpack.c.b16 %v2390, %v2374
      %v4407 = vpack.c.b16 %v2391, %v2375
      %v4408 = vpack.c.b16 %v2408, %v2392
      %v4409 = vpack.c.b16 %v2409, %v2393
      %v4410 = vpack.c.b16 %v2410, %v2394
      %v4411 = vpack.c.b16 %v2411, %v2395
      %v4412 = vpack.c.b16 %v2412, %v2396
      %v4413 = vpack.c.b16 %v2413, %v2397
      %v4414 = vpack.c.b16 %v2414, %v2398
      %v4415 = vpack.c.b16 %v2415, %v2399
      %v4416 = vpack.c.b16 %v2416, %v2400
      %v4417 = vpack.c.b16 %v2417, %v2401
      %v4418 = vpack.c.b16 %v2418, %v2402
      %v4419 = vpack.c.b16 %v2419, %v2403
      %v4420 = vpack.c.b16 %v2420, %v2404
      %v4421 = vpack.c.b16 %v2421, %v2405
      %v4422 = vpack.c.b16 %v2422, %v2406
      %v4423 = vpack.c.b16 %v2423, %v2407
      %v4424 = vpack.c.b16 %v2440, %v2424
      %v4425 = vpack.c.b16 %v2441, %v2425
      %v4426 = vpack.c.b16 %v2442, %v2426
      %v4427 = vpack.c.b16 %v2443, %v2427
      %v4428 = vpack.c.b16 %v2444, %v2428
      %v4429 = vpack.c.b16 %v2445, %v2429
      %v4430 = vpack.c.b16 %v2446, %v2430
      %v4431 = vpack.c.b16 %v2447, %v2431
      %v4432 = vpack.c.b16 %v2448, %v2432
      %v4433 = vpack.c.b16 %v2449, %v2433
      %v4434 = vpack.c.b16 %v2450, %v2434
      %v4435 = vpack.c.b16 %v2451, %v2435
      %v4436 = vpack.c.b16 %v2452, %v2436
      %v4437 = vpack.c.b16 %v2453, %v2437
      %v4438 = vpack.c.b16 %v2454, %v2438
      %v4439 = vpack.c.b16 %v2455, %v2439
      %v4440 = vpack.c.b16 %v2472, %v2456
      %v4441 = vpack.c.b16 %v2473, %v2457
      %v4442 = vpack.c.b16 %v2474, %v2458
      %v4443 = vpack.c.b16 %v2475, %v2459
      %v4444 = vpack.c.b16 %v2476, %v2460
      %v4445 = vpack.c.b16 %v2477, %v2461
      %v4446 = vpack.c.b16 %v2478, %v2462
      %v4447 = vpack.c.b16 %v2479, %v2463
      %v4448 = vpack.c.b16 %v2480, %v2464
      %v4449 = vpack.c.b16 %v2481, %v2465
      %v4450 = vpack.c.b16 %v2482, %v2466
      %v4451 = vpack.c.b16 %v2483, %v2467
      %v4452 = vpack.c.b16 %v2484, %v2468
      %v4453 = vpack.c.b16 %v2485, %v2469
      %v4454 = vpack.c.b16 %v2486, %v2470
      %v4455 = vpack.c.b16 %v2487, %v2471
      %v4456 = vpack.c.b16 %v2504, %v2488
      %v4457 = vpack.c.b16 %v2505, %v2489
      %v4458 = vpack.c.b16 %v2506, %v2490
      %v4459 = vpack.c.b16 %v2507, %v2491
      %v4460 = vpack.c.b16 %v2508, %v2492
      %v4461 = vpack.c.b16 %v2509, %v2493
      %v4462 = vpack.c.b16 %v2510, %v2494
      %v4463 = vpack.c.b16 %v2511, %v2495
      %v4464 = vpack.c.b16 %v2512, %v2496
      %v4465 = vpack.c.b16 %v2513, %v2497
      %v4466 = vpack.c.b16 %v2514, %v2498
      %v4467 = vpack.c.b16 %v2515, %v2499
      %v4468 = vpack.c.b16 %v2516, %v2500
      %v4469 = vpack.c.b16 %v2517, %v2501
      %v4470 = vpack.c.b16 %v2518, %v2502
      %v4471 = vpack.c.b16 %v2519, %v2503
      %v4472 = vpack.c.b16 %v2536, %v2520
      %v4473 = vpack.c.b16 %v2537, %v2521
      %v4474 = vpack.c.b16 %v2538, %v2522
      %v4475 = vpack.c.b16 %v2539, %v2523
      %v4476 = vpack.c.b16 %v2540, %v2524
      %v4477 = vpack.c.b16 %v2541, %v2525
      %v4478 = vpack.c.b16 %v2542, %v2526
      %v4479 = vpack.c.b16 %v2543, %v2527
      %v4480 = vpack.c.b16 %v2544, %v2528
      %v4481 = vpack.c.b16 %v2545, %v2529
      %v4482 = vpack.c.b16 %v2546, %v2530
      %v4483 = vpack.c.b16 %v2547, %v2531
      %v4484 = vpack.c.b16 %v2548, %v2532
      %v4485 = vpack.c.b16 %v2549, %v2533
      %v4486 = vpack.c.b16 %v2550, %v2534
      %v4487 = vpack.c.b16 %v2551, %v2535
      %v4488 = vpack.c.b16 %v2568, %v2552
      %v4489 = vpack.c.b16 %v2569, %v2553
      %v4490 = vpack.c.b16 %v2570, %v2554
      %v4491 = vpack.c.b16 %v2571, %v2555
      %v4492 = vpack.c.b16 %v2572, %v2556
      %v4493 = vpack.c.b16 %v2573, %v2557
      %v4494 = vpack.c.b16 %v2574, %v2558
      %v4495 = vpack.c.b16 %v2575, %v2559
      %v4496 = vpack.c.b16 %v2576, %v2560
      %v4497 = vpack.c.b16 %v2577, %v2561
      %v4498 = vpack.c.b16 %v2578, %v2562
      %v4499 = vpack.c.b16 %v2579, %v2563
      %v4500 = vpack.c.b16 %v2580, %v2564
      %v4501 = vpack.c.b16 %v2581, %v2565
      %v4502 = vpack.c.b16 %v2582, %v2566
      %v4503 = vpack.c.b16 %v2583, %v2567
      %v4504 = vpack.c.b16 %v2600, %v2584
      %v4505 = vpack.c.b16 %v2601, %v2585
      %v4506 = vpack.c.b16 %v2602, %v2586
      %v4507 = vpack.c.b16 %v2603, %v2587
      %v4508 = vpack.c.b16 %v2604, %v2588
      %v4509 = vpack.c.b16 %v2605, %v2589
      %v4510 = vpack.c.b16 %v2606, %v2590
      %v4511 = vpack.c.b16 %v2607, %v2591
      %v4512 = vpack.c.b16 %v2608, %v2592
      %v4513 = vpack.c.b16 %v2609, %v2593
      %v4514 = vpack.c.b16 %v2610, %v2594
      %v4515 = vpack.c.b16 %v2611, %v2595
      %v4516 = vpack.c.b16 %v2612, %v2596
      %v4517 = vpack.c.b16 %v2613, %v2597
      %v4518 = vpack.c.b16 %v2614, %v2598
      %v4519 = vpack.c.b16 %v2615, %v2599
      %v4520 = vpack.c.b16 %v2632, %v2616
      %v4521 = vpack.c.b16 %v2633, %v2617
      %v4522 = vpack.c.b16 %v2634, %v2618
      %v4523 = vpack.c.b16 %v2635, %v2619
      %v4524 = vpack.c.b16 %v2636, %v2620
      %v4525 = vpack.c.b16 %v2637, %v2621
      %v4526 = vpack.c.b16 %v2638, %v2622
      %v4527 = vpack.c.b16 %v2639, %v2623
      %v4528 = vpack.c.b16 %v2640, %v2624
      %v4529 = vpack.c.b16 %v2641, %v2625
      %v4530 = vpack.c.b16 %v2642, %v2626
      %v4531 = vpack.c.b16 %v2643, %v2627
      %v4532 = vpack.c.b16 %v2644, %v2628
      %v4533 = vpack.c.b16 %v2645, %v2629
      %v4534 = vpack.c.b16 %v2646, %v2630
      %v4535 = vpack.c.b16 %v2647, %v2631
      %v4536 = vpack.c.b16 %v2664, %v2648
      %v4537 = vpack.c.b16 %v2665, %v2649
      %v4538 = vpack.c.b16 %v2666, %v2650
      %v4539 = vpack.c.b16 %v2667, %v2651
      %v4540 = vpack.c.b16 %v2668, %v2652
      %v4541 = vpack.c.b16 %v2669, %v2653
      %v4542 = vpack.c.b16 %v2670, %v2654
      %v4543 = vpack.c.b16 %v2671, %v2655
      %v4544 = vpack.c.b16 %v2672, %v2656
      %v4545 = vpack.c.b16 %v2673, %v2657
      %v4546 = vpack.c.b16 %v2674, %v2658
      %v4547 = vpack.c.b16 %v2675, %v2659
      %v4548 = vpack.c.b16 %v2676, %v2660
      %v4549 = vpack.c.b16 %v2677, %v2661
      %v4550 = vpack.c.b16 %v2678, %v2662
      %v4551 = vpack.c.b16 %v2679, %v2663
      %v4552 = vpack.c.b16 %v2696, %v2680
      %v4553 = vpack.c.b16 %v2697, %v2681
      %v4554 = vpack.c.b16 %v2698, %v2682
      %v4555 = vpack.c.b16 %v2699, %v2683
      %v4556 = vpack.c.b16 %v2700, %v2684
      %v4557 = vpack.c.b16 %v2701, %v2685
      %v4558 = vpack.c.b16 %v2702, %v2686
      %v4559 = vpack.c.b16 %v2703, %v2687
      %v4560 = vpack.c.b16 %v2704, %v2688
      %v4561 = vpack.c.b16 %v2705, %v2689
      %v4562 = vpack.c.b16 %v2706, %v2690
      %v4563 = vpack.c.b16 %v2707, %v2691
      %v4564 = vpack.c.b16 %v2708, %v2692
      %v4565 = vpack.c.b16 %v2709, %v2693
      %v4566 = vpack.c.b16 %v2710, %v2694
      %v4567 = vpack.c.b16 %v2711, %v2695
      %v4568 = vpack.c.b16 %v2728, %v2712
      %v4569 = vpack.c.b16 %v2729, %v2713
      %v4570 = vpack.c.b16 %v2730, %v2714
      %v4571 = vpack.c.b16 %v2731, %v2715
      %v4572 = vpack.c.b16 %v2732, %v2716
      %v4573 = vpack.c.b16 %v2733, %v2717
      %v4574 = vpack.c.b16 %v2734, %v2718
      %v4575 = vpack.c.b16 %v2735, %v2719
      %v4576 = vpack.c.b16 %v2736, %v2720
      %v4577 = vpack.c.b16 %v2737, %v2721
      %v4578 = vpack.c.b16 %v2738, %v2722
      %v4579 = vpack.c.b16 %v2739, %v2723
      %v4580 = vpack.c.b16 %v2740, %v2724
      %v4581 = vpack.c.b16 %v2741, %v2725
      %v4582 = vpack.c.b16 %v2742, %v2726
      %v4583 = vpack.c.b16 %v2743, %v2727
      %v4584 = vpack.c.b16 %v2760, %v2744
      %v4585 = vpack.c.b16 %v2761, %v2745
      %v4586 = vpack.c.b16 %v2762, %v2746
      %v4587 = vpack.c.b16 %v2763, %v2747
      %v4588 = vpack.c.b16 %v2764, %v2748
      %v4589 = vpack.c.b16 %v2765, %v2749
      %v4590 = vpack.c.b16 %v2766, %v2750
      %v4591 = vpack.c.b16 %v2767, %v2751
      %v4592 = vpack.c.b16 %v2768, %v2752
      %v4593 = vpack.c.b16 %v2769, %v2753
      %v4594 = vpack.c.b16 %v2770, %v2754
      %v4595 = vpack.c.b16 %v2771, %v2755
      %v4596 = vpack.c.b16 %v2772, %v2756
      %v4597 = vpack.c.b16 %v2773, %v2757
      %v4598 = vpack.c.b16 %v2774, %v2758
      %v4599 = vpack.c.b16 %v2775, %v2759
      %v4600 = vpack.c.b16 %v2792, %v2776
      %v4601 = vpack.c.b16 %v2793, %v2777
      %v4602 = vpack.c.b16 %v2794, %v2778
      %v4603 = vpack.c.b16 %v2795, %v2779
      %v4604 = vpack.c.b16 %v2796, %v2780
      %v4605 = vpack.c.b16 %v2797, %v2781
      %v4606 = vpack.c.b16 %v2798, %v2782
      %v4607 = vpack.c.b16 %v2799, %v2783
      %v4608 = vpack.c.b16 %v2800, %v2784
      %v4609 = vpack.c.b16 %v2801, %v2785
      %v4610 = vpack.c.b16 %v2802, %v2786
      %v4611 = vpack.c.b16 %v2803, %v2787
      %v4612 = vpack.c.b16 %v2804, %v2788
      %v4613 = vpack.c.b16 %v2805, %v2789
      %v4614 = vpack.c.b16 %v2806, %v2790
      %v4615 = vpack.c.b16 %v2807, %v2791
      %v4616 = vpack.c.b16 %v2824, %v2808
      %v4617 = vpack.c.b16 %v2825, %v2809
      %v4618 = vpack.c.b16 %v2826, %v2810
      %v4619 = vpack.c.b16 %v2827, %v2811
      %v4620 = vpack.c.b16 %v2828, %v2812
      %v4621 = vpack.c.b16 %v2829, %v2813
      %v4622 = vpack.c.b16 %v2830, %v2814
      %v4623 = vpack.c.b16 %v2831, %v2815
      %v4624 = vpack.c.b16 %v2832, %v2816
      %v4625 = vpack.c.b16 %v2833, %v2817
      %v4626 = vpack.c.b16 %v2834, %v2818
      %v4627 = vpack.c.b16 %v2835, %v2819
      %v4628 = vpack.c.b16 %v2836, %v2820
      %v4629 = vpack.c.b16 %v2837, %v2821
      %v4630 = vpack.c.b16 %v2838, %v2822
      %v4631 = vpack.c.b16 %v2839, %v2823
      %v4632 = vpack.c.b16 %v2856, %v2840
      %v4633 = vpack.c.b16 %v2857, %v2841
      %v4634 = vpack.c.b16 %v2858, %v2842
      %v4635 = vpack.c.b16 %v2859, %v2843
      %v4636 = vpack.c.b16 %v2860, %v2844
      %v4637 = vpack.c.b16 %v2861, %v2845
      %v4638 = vpack.c.b16 %v2862, %v2846
      %v4639 = vpack.c.b16 %v2863, %v2847
      %v4640 = vpack.c.b16 %v2864, %v2848
      %v4641 = vpack.c.b16 %v2865, %v2849
      %v4642 = vpack.c.b16 %v2866, %v2850
      %v4643 = vpack.c.b16 %v2867, %v2851
      %v4644 = vpack.c.b16 %v2868, %v2852
      %v4645 = vpack.c.b16 %v2869, %v2853
      %v4646 = vpack.c.b16 %v2870, %v2854
      %v4647 = vpack.c.b16 %v2871, %v2855
      %v4648 = vpack.c.b16 %v2888, %v2872
      %v4649 = vpack.c.b16 %v2889, %v2873
      %v4650 = vpack.c.b16 %v2890, %v2874
      %v4651 = vpack.c.b16 %v2891, %v2875
      %v4652 = vpack.c.b16 %v2892, %v2876
      %v4653 = vpack.c.b16 %v2893, %v2877
      %v4654 = vpack.c.b16 %v2894, %v2878
      %v4655 = vpack.c.b16 %v2895, %v2879
      %v4656 = vpack.c.b16 %v2896, %v2880
      %v4657 = vpack.c.b16 %v2897, %v2881
      %v4658 = vpack.c.b16 %v2898, %v2882
      %v4659 = vpack.c.b16 %v2899, %v2883
      %v4660 = vpack.c.b16 %v2900, %v2884
      %v4661 = vpack.c.b16 %v2901, %v2885
      %v4662 = vpack.c.b16 %v2902, %v2886
      %v4663 = vpack.c.b16 %v2903, %v2887
      %v4664 = vpack.c.b16 %v2920, %v2904
      %v4665 = vpack.c.b16 %v2921, %v2905
      %v4666 = vpack.c.b16 %v2922, %v2906
      %v4667 = vpack.c.b16 %v2923, %v2907
      %v4668 = vpack.c.b16 %v2924, %v2908
      %v4669 = vpack.c.b16 %v2925, %v2909
      %v4670 = vpack.c.b16 %v2926, %v2910
      %v4671 = vpack.c.b16 %v2927, %v2911
      %v4672 = vpack.c.b16 %v2928, %v2912
      %v4673 = vpack.c.b16 %v2929, %v2913
      %v4674 = vpack.c.b16 %v2930, %v2914
      %v4675 = vpack.c.b16 %v2931, %v2915
      %v4676 = vpack.c.b16 %v2932, %v2916
      %v4677 = vpack.c.b16 %v2933, %v2917
      %v4678 = vpack.c.b16 %v2934, %v2918
      %v4679 = vpack.c.b16 %v2935, %v2919
      %v4680 = vpack.c.b16 %v2952, %v2936
      %v4681 = vpack.c.b16 %v2953, %v2937
      %v4682 = vpack.c.b16 %v2954, %v2938
      %v4683 = vpack.c.b16 %v2955, %v2939
      %v4684 = vpack.c.b16 %v2956, %v2940
      %v4685 = vpack.c.b16 %v2957, %v2941
      %v4686 = vpack.c.b16 %v2958, %v2942
      %v4687 = vpack.c.b16 %v2959, %v2943
      %v4688 = vpack.c.b16 %v2960, %v2944
      %v4689 = vpack.c.b16 %v2961, %v2945
      %v4690 = vpack.c.b16 %v2962, %v2946
      %v4691 = vpack.c.b16 %v2963, %v2947
      %v4692 = vpack.c.b16 %v2964, %v2948
      %v4693 = vpack.c.b16 %v2965, %v2949
      %v4694 = vpack.c.b16 %v2966, %v2950
      %v4695 = vpack.c.b16 %v2967, %v2951
      %v4696 = vpack.c.b16 %v2984, %v2968
      %v4697 = vpack.c.b16 %v2985, %v2969
      %v4698 = vpack.c.b16 %v2986, %v2970
      %v4699 = vpack.c.b16 %v2987, %v2971
      %v4700 = vpack.c.b16 %v2988, %v2972
      %v4701 = vpack.c.b16 %v2989, %v2973
      %v4702 = vpack.c.b16 %v2990, %v2974
      %v4703 = vpack.c.b16 %v2991, %v2975
      %v4704 = vpack.c.b16 %v2992, %v2976
      %v4705 = vpack.c.b16 %v2993, %v2977
      %v4706 = vpack.c.b16 %v2994, %v2978
      %v4707 = vpack.c.b16 %v2995, %v2979
      %v4708 = vpack.c.b16 %v2996, %v2980
      %v4709 = vpack.c.b16 %v2997, %v2981
      %v4710 = vpack.c.b16 %v2998, %v2982
      %v4711 = vpack.c.b16 %v2999, %v2983
      %v4712 = vpack.c.b16 %v3016, %v3000
      %v4713 = vpack.c.b16 %v3017, %v3001
      %v4714 = vpack.c.b16 %v3018, %v3002
      %v4715 = vpack.c.b16 %v3019, %v3003
      %v4716 = vpack.c.b16 %v3020, %v3004
      %v4717 = vpack.c.b16 %v3021, %v3005
      %v4718 = vpack.c.b16 %v3022, %v3006
      %v4719 = vpack.c.b16 %v3023, %v3007
      %v4720 = vpack.c.b16 %v3024, %v3008
      %v4721 = vpack.c.b16 %v3025, %v3009
      %v4722 = vpack.c.b16 %v3026, %v3010
      %v4723 = vpack.c.b16 %v3027, %v3011
      %v4724 = vpack.c.b16 %v3028, %v3012
      %v4725 = vpack.c.b16 %v3029, %v3013
      %v4726 = vpack.c.b16 %v3030, %v3014
      %v4727 = vpack.c.b16 %v3031, %v3015
      %v4728 = vpack.c.b16 %v3048, %v3032
      %v4729 = vpack.c.b16 %v3049, %v3033
      %v4730 = vpack.c.b16 %v3050, %v3034
      %v4731 = vpack.c.b16 %v3051, %v3035
      %v4732 = vpack.c.b16 %v3052, %v3036
      %v4733 = vpack.c.b16 %v3053, %v3037
      %v4734 = vpack.c.b16 %v3054, %v3038
      %v4735 = vpack.c.b16 %v3055, %v3039
      %v4736 = vpack.c.b16 %v3056, %v3040
      %v4737 = vpack.c.b16 %v3057, %v3041
      %v4738 = vpack.c.b16 %v3058, %v3042
      %v4739 = vpack.c.b16 %v3059, %v3043
      %v4740 = vpack.c.b16 %v3060, %v3044
      %v4741 = vpack.c.b16 %v3061, %v3045
      %v4742 = vpack.c.b16 %v3062, %v3046
      %v4743 = vpack.c.b16 %v3063, %v3047
      %v4744 = vpack.c.b16 %v3080, %v3064
      %v4745 = vpack.c.b16 %v3081, %v3065
      %v4746 = vpack.c.b16 %v3082, %v3066
      %v4747 = vpack.c.b16 %v3083, %v3067
      %v4748 = vpack.c.b16 %v3084, %v3068
      %v4749 = vpack.c.b16 %v3085, %v3069
      %v4750 = vpack.c.b16 %v3086, %v3070
      %v4751 = vpack.c.b16 %v3087, %v3071
      %v4752 = vpack.c.b16 %v3088, %v3072
      %v4753 = vpack.c.b16 %v3089, %v3073
      %v4754 = vpack.c.b16 %v3090, %v3074
      %v4755 = vpack.c.b16 %v3091, %v3075
      %v4756 = vpack.c.b16 %v3092, %v3076
      %v4757 = vpack.c.b16 %v3093, %v3077
      %v4758 = vpack.c.b16 %v3094, %v3078
      %v4759 = vpack.c.b16 %v3095, %v3079
      %v4760 = vpack.c.b16 %v3112, %v3096
      %v4761 = vpack.c.b16 %v3113, %v3097
      %v4762 = vpack.c.b16 %v3114, %v3098
      %v4763 = vpack.c.b16 %v3115, %v3099
      %v4764 = vpack.c.b16 %v3116, %v3100
      %v4765 = vpack.c.b16 %v3117, %v3101
      %v4766 = vpack.c.b16 %v3118, %v3102
      %v4767 = vpack.c.b16 %v3119, %v3103
      %v4768 = vpack.c.b16 %v3120, %v3104
      %v4769 = vpack.c.b16 %v3121, %v3105
      %v4770 = vpack.c.b16 %v3122, %v3106
      %v4771 = vpack.c.b16 %v3123, %v3107
      %v4772 = vpack.c.b16 %v3124, %v3108
      %v4773 = vpack.c.b16 %v3125, %v3109
      %v4774 = vpack.c.b16 %v3126, %v3110
      %v4775 = vpack.c.b16 %v3127, %v3111
      %v4776 = vpack.c.b16 %v3144, %v3128
      %v4777 = vpack.c.b16 %v3145, %v3129
      %v4778 = vpack.c.b16 %v3146, %v3130
      %v4779 = vpack.c.b16 %v3147, %v3131
      %v4780 = vpack.c.b16 %v3148, %v3132
      %v4781 = vpack.c.b16 %v3149, %v3133
      %v4782 = vpack.c.b16 %v3150, %v3134
      %v4783 = vpack.c.b16 %v3151, %v3135
      %v4784 = vpack.c.b16 %v3152, %v3136
      %v4785 = vpack.c.b16 %v3153, %v3137
      %v4786 = vpack.c.b16 %v3154, %v3138
      %v4787 = vpack.c.b16 %v3155, %v3139
      %v4788 = vpack.c.b16 %v3156, %v3140
      %v4789 = vpack.c.b16 %v3157, %v3141
      %v4790 = vpack.c.b16 %v3158, %v3142
      %v4791 = vpack.c.b16 %v3159, %v3143
      %v4792 = vpack.c.b16 %v3176, %v3160
      %v4793 = vpack.c.b16 %v3177, %v3161
      %v4794 = vpack.c.b16 %v3178, %v3162
      %v4795 = vpack.c.b16 %v3179, %v3163
      %v4796 = vpack.c.b16 %v3180, %v3164
      %v4797 = vpack.c.b16 %v3181, %v3165
      %v4798 = vpack.c.b16 %v3182, %v3166
      %v4799 = vpack.c.b16 %v3183, %v3167
      %v4800 = vpack.c.b16 %v3184, %v3168
      %v4801 = vpack.c.b16 %v3185, %v3169
      %v4802 = vpack.c.b16 %v3186, %v3170
      %v4803 = vpack.c.b16 %v3187, %v3171
      %v4804 = vpack.c.b16 %v3188, %v3172
      %v4805 = vpack.c.b16 %v3189, %v3173
      %v4806 = vpack.c.b16 %v3190, %v3174
      %v4807 = vpack.c.b16 %v3191, %v3175
      %v4808 = vpack.c.b16 %v3208, %v3192
      %v4809 = vpack.c.b16 %v3209, %v3193
      %v4810 = vpack.c.b16 %v3210, %v3194
      %v4811 = vpack.c.b16 %v3211, %v3195
      %v4812 = vpack.c.b16 %v3212, %v3196
      %v4813 = vpack.c.b16 %v3213, %v3197
      %v4814 = vpack.c.b16 %v3214, %v3198
      %v4815 = vpack.c.b16 %v3215, %v3199
      %v4816 = vpack.c.b16 %v3216, %v3200
      %v4817 = vpack.c.b16 %v3217, %v3201
      %v4818 = vpack.c.b16 %v3218, %v3202
      %v4819 = vpack.c.b16 %v3219, %v3203
      %v4820 = vpack.c.b16 %v3220, %v3204
      %v4821 = vpack.c.b16 %v3221, %v3205
      %v4822 = vpack.c.b16 %v3222, %v3206
      %v4823 = vpack.c.b16 %v3223, %v3207
      %v4824 = vpack.c.b16 %v3240, %v3224
      %v4825 = vpack.c.b16 %v3241, %v3225
      %v4826 = vpack.c.b16 %v3242, %v3226
      %v4827 = vpack.c.b16 %v3243, %v3227
      %v4828 = vpack.c.b16 %v3244, %v3228
      %v4829 = vpack.c.b16 %v3245, %v3229
      %v4830 = vpack.c.b16 %v3246, %v3230
      %v4831 = vpack.c.b16 %v3247, %v3231
      %v4832 = vpack.c.b16 %v3248, %v3232
      %v4833 = vpack.c.b16 %v3249, %v3233
      %v4834 = vpack.c.b16 %v3250, %v3234
      %v4835 = vpack.c.b16 %v3251, %v3235
      %v4836 = vpack.c.b16 %v3252, %v3236
      %v4837 = vpack.c.b16 %v3253, %v3237
      %v4838 = vpack.c.b16 %v3254, %v3238
      %v4839 = vpack.c.b16 %v3255, %v3239
      %v4840 = vpack.c.b16 %v3272, %v3256
      %v4841 = vpack.c.b16 %v3273, %v3257
      %v4842 = vpack.c.b16 %v3274, %v3258
      %v4843 = vpack.c.b16 %v3275, %v3259
      %v4844 = vpack.c.b16 %v3276, %v3260
      %v4845 = vpack.c.b16 %v3277, %v3261
      %v4846 = vpack.c.b16 %v3278, %v3262
      %v4847 = vpack.c.b16 %v3279, %v3263
      %v4848 = vpack.c.b16 %v3280, %v3264
      %v4849 = vpack.c.b16 %v3281, %v3265
      %v4850 = vpack.c.b16 %v3282, %v3266
      %v4851 = vpack.c.b16 %v3283, %v3267
      %v4852 = vpack.c.b16 %v3284, %v3268
      %v4853 = vpack.c.b16 %v3285, %v3269
      %v4854 = vpack.c.b16 %v3286, %v3270
      %v4855 = vpack.c.b16 %v3287, %v3271
      %v4856 = vpack.c.b16 %v3304, %v3288
      %v4857 = vpack.c.b16 %v3305, %v3289
      %v4858 = vpack.c.b16 %v3306, %v3290
      %v4859 = vpack.c.b16 %v3307, %v3291
      %v4860 = vpack.c.b16 %v3308, %v3292
      %v4861 = vpack.c.b16 %v3309, %v3293
      %v4862 = vpack.c.b16 %v3310, %v3294
      %v4863 = vpack.c.b16 %v3311, %v3295
      %v4864 = vpack.c.b16 %v3312, %v3296
      %v4865 = vpack.c.b16 %v3313, %v3297
      %v4866 = vpack.c.b16 %v3314, %v3298
      %v4867 = vpack.c.b16 %v3315, %v3299
      %v4868 = vpack.c.b16 %v3316, %v3300
      %v4869 = vpack.c.b16 %v3317, %v3301
      %v4870 = vpack.c.b16 %v3318, %v3302
      %v4871 = vpack.c.b16 %v3319, %v3303
      %v4872 = vpack.c.b16 %v3336, %v3320
      %v4873 = vpack.c.b16 %v3337, %v3321
      %v4874 = vpack.c.b16 %v3338, %v3322
      %v4875 = vpack.c.b16 %v3339, %v3323
      %v4876 = vpack.c.b16 %v3340, %v3324
      %v4877 = vpack.c.b16 %v3341, %v3325
      %v4878 = vpack.c.b16 %v3342, %v3326
      %v4879 = vpack.c.b16 %v3343, %v3327
      %v4880 = vpack.c.b16 %v3344, %v3328
      %v4881 = vpack.c.b16 %v3345, %v3329
      %v4882 = vpack.c.b16 %v3346, %v3330
      %v4883 = vpack.c.b16 %v3347, %v3331
      %v4884 = vpack.c.b16 %v3348, %v3332
      %v4885 = vpack.c.b16 %v3349, %v3333
      %v4886 = vpack.c.b16 %v3350, %v3334
      %v4887 = vpack.c.b16 %v3351, %v3335
      %v4888 = vpack.c.b16 %v3368, %v3352
      %v4889 = vpack.c.b16 %v3369, %v3353
      %v4890 = vpack.c.b16 %v3370, %v3354
      %v4891 = vpack.c.b16 %v3371, %v3355
      %v4892 = vpack.c.b16 %v3372, %v3356
      %v4893 = vpack.c.b16 %v3373, %v3357
      %v4894 = vpack.c.b16 %v3374, %v3358
      %v4895 = vpack.c.b16 %v3375, %v3359
      %v4896 = vpack.c.b16 %v3376, %v3360
      %v4897 = vpack.c.b16 %v3377, %v3361
      %v4898 = vpack.c.b16 %v3378, %v3362
      %v4899 = vpack.c.b16 %v3379, %v3363
      %v4900 = vpack.c.b16 %v3380, %v3364
      %v4901 = vpack.c.b16 %v3381, %v3365
      %v4902 = vpack.c.b16 %v3382, %v3366
      %v4903 = vpack.c.b16 %v3383, %v3367
      %v4904 = vpack.c.b16 %v3400, %v3384
      %v4905 = vpack.c.b16 %v3401, %v3385
      %v4906 = vpack.c.b16 %v3402, %v3386
      %v4907 = vpack.c.b16 %v3403, %v3387
      %v4908 = vpack.c.b16 %v3404, %v3388
      %v4909 = vpack.c.b16 %v3405, %v3389
      %v4910 = vpack.c.b16 %v3406, %v3390
      %v4911 = vpack.c.b16 %v3407, %v3391
      %v4912 = vpack.c.b16 %v3408, %v3392
      %v4913 = vpack.c.b16 %v3409, %v3393
      %v4914 = vpack.c.b16 %v3410, %v3394
      %v4915 = vpack.c.b16 %v3411, %v3395
      %v4916 = vpack.c.b16 %v3412, %v3396
      %v4917 = vpack.c.b16 %v3413, %v3397
      %v4918 = vpack.c.b16 %v3414, %v3398
      %v4919 = vpack.c.b16 %v3415, %v3399
      %v4920 = vpack.c.b16 %v3432, %v3416
      %v4921 = vpack.c.b16 %v3433, %v3417
      %v4922 = vpack.c.b16 %v3434, %v3418
      %v4923 = vpack.c.b16 %v3435, %v3419
      %v4924 = vpack.c.b16 %v3436, %v3420
      %v4925 = vpack.c.b16 %v3437, %v3421
      %v4926 = vpack.c.b16 %v3438, %v3422
      %v4927 = vpack.c.b16 %v3439, %v3423
      %v4928 = vpack.c.b16 %v3440, %v3424
      %v4929 = vpack.c.b16 %v3441, %v3425
      %v4930 = vpack.c.b16 %v3442, %v3426
      %v4931 = vpack.c.b16 %v3443, %v3427
      %v4932 = vpack.c.b16 %v3444, %v3428
      %v4933 = vpack.c.b16 %v3445, %v3429
      %v4934 = vpack.c.b16 %v3446, %v3430
      %v4935 = vpack.c.b16 %v3447, %v3431
      %v4936 = vpack.c.b16 %v3464, %v3448
      %v4937 = vpack.c.b16 %v3465, %v3449
      %v4938 = vpack.c.b16 %v3466, %v3450
      %v4939 = vpack.c.b16 %v3467, %v3451
      %v4940 = vpack.c.b16 %v3468, %v3452
      %v4941 = vpack.c.b16 %v3469, %v3453
      %v4942 = vpack.c.b16 %v3470, %v3454
      %v4943 = vpack.c.b16 %v3471, %v3455
      %v4944 = vpack.c.b16 %v3472, %v3456
      %v4945 = vpack.c.b16 %v3473, %v3457
      %v4946 = vpack.c.b16 %v3474, %v3458
      %v4947 = vpack.c.b16 %v3475, %v3459
      %v4948 = vpack.c.b16 %v3476, %v3460
      %v4949 = vpack.c.b16 %v3477, %v3461
      %v4950 = vpack.c.b16 %v3478, %v3462
      %v4951 = vpack.c.b16 %v3479, %v3463
      %v4952 = vpack.c.b16 %v3496, %v3480
      %v4953 = vpack.c.b16 %v3497, %v3481
      %v4954 = vpack.c.b16 %v3498, %v3482
      %v4955 = vpack.c.b16 %v3499, %v3483
      %v4956 = vpack.c.b16 %v3500, %v3484
      %v4957 = vpack.c.b16 %v3501, %v3485
      %v4958 = vpack.c.b16 %v3502, %v3486
      %v4959 = vpack.c.b16 %v3503, %v3487
      %v4960 = vpack.c.b16 %v3504, %v3488
      %v4961 = vpack.c.b16 %v3505, %v3489
      %v4962 = vpack.c.b16 %v3506, %v3490
      %v4963 = vpack.c.b16 %v3507, %v3491
      %v4964 = vpack.c.b16 %v3508, %v3492
      %v4965 = vpack.c.b16 %v3509, %v3493
      %v4966 = vpack.c.b16 %v3510, %v3494
      %v4967 = vpack.c.b16 %v3511, %v3495
      %v4968 = vpack.c.b16 %v3528, %v3512
      %v4969 = vpack.c.b16 %v3529, %v3513
      %v4970 = vpack.c.b16 %v3530, %v3514
      %v4971 = vpack.c.b16 %v3531, %v3515
      %v4972 = vpack.c.b16 %v3532, %v3516
      %v4973 = vpack.c.b16 %v3533, %v3517
      %v4974 = vpack.c.b16 %v3534, %v3518
      %v4975 = vpack.c.b16 %v3535, %v3519
      %v4976 = vpack.c.b16 %v3536, %v3520
      %v4977 = vpack.c.b16 %v3537, %v3521
      %v4978 = vpack.c.b16 %v3538, %v3522
      %v4979 = vpack.c.b16 %v3539, %v3523
      %v4980 = vpack.c.b16 %v3540, %v3524
      %v4981 = vpack.c.b16 %v3541, %v3525
      %v4982 = vpack.c.b16 %v3542, %v3526
      %v4983 = vpack.c.b16 %v3543, %v3527
      %v4984 = vpack.c.b16 %v3560, %v3544
      %v4985 = vpack.c.b16 %v3561, %v3545
      %v4986 = vpack.c.b16 %v3562, %v3546
      %v4987 = vpack.c.b16 %v3563, %v3547
      %v4988 = vpack.c.b16 %v3564, %v3548
      %v4989 = vpack.c.b16 %v3565, %v3549
      %v4990 = vpack.c.b16 %v3566, %v3550
      %v4991 = vpack.c.b16 %v3567, %v3551
      %v4992 = vpack.c.b16 %v3568, %v3552
      %v4993 = vpack.c.b16 %v3569, %v3553
      %v4994 = vpack.c.b16 %v3570, %v3554
      %v4995 = vpack.c.b16 %v3571, %v3555
      %v4996 = vpack.c.b16 %v3572, %v3556
      %v4997 = vpack.c.b16 %v3573, %v3557
      %v4998 = vpack.c.b16 %v3574, %v3558
      %v4999 = vpack.c.b16 %v3575, %v3559
      %v5000 = vpack.c.b16 %v3592, %v3576
      %v5001 = vpack.c.b16 %v3593, %v3577
      %v5002 = vpack.c.b16 %v3594, %v3578
      %v5003 = vpack.c.b16 %v3595, %v3579
      %v5004 = vpack.c.b16 %v3596, %v3580
      %v5005 = vpack.c.b16 %v3597, %v3581
      %v5006 = vpack.c.b16 %v3598, %v3582
      %v5007 = vpack.c.b16 %v3599, %v3583
      %v5008 = vpack.c.b16 %v3600, %v3584
      %v5009 = vpack.c.b16 %v3601, %v3585
      %v5010 = vpack.c.b16 %v3602, %v3586
      %v5011 = vpack.c.b16 %v3603, %v3587
      %v5012 = vpack.c.b16 %v3604, %v3588
      %v5013 = vpack.c.b16 %v3605, %v3589
      %v5014 = vpack.c.b16 %v3606, %v3590
      %v5015 = vpack.c.b16 %v3607, %v3591
      %v5016 = vpack.c.b16 %v3624, %v3608
      %v5017 = vpack.c.b16 %v3625, %v3609
      %v5018 = vpack.c.b16 %v3626, %v3610
      %v5019 = vpack.c.b16 %v3627, %v3611
      %v5020 = vpack.c.b16 %v3628, %v3612
      %v5021 = vpack.c.b16 %v3629, %v3613
      %v5022 = vpack.c.b16 %v3630, %v3614
      %v5023 = vpack.c.b16 %v3631, %v3615
      %v5024 = vpack.c.b16 %v3632, %v3616
      %v5025 = vpack.c.b16 %v3633, %v3617
      %v5026 = vpack.c.b16 %v3634, %v3618
      %v5027 = vpack.c.b16 %v3635, %v3619
      %v5028 = vpack.c.b16 %v3636, %v3620
      %v5029 = vpack.c.b16 %v3637, %v3621
      %v5030 = vpack.c.b16 %v3638, %v3622
      %v5031 = vpack.c.b16 %v3639, %v3623
      %v5032 = vpack.c.b16 %v3656, %v3640
      %v5033 = vpack.c.b16 %v3657, %v3641
      %v5034 = vpack.c.b16 %v3658, %v3642
      %v5035 = vpack.c.b16 %v3659, %v3643
      %v5036 = vpack.c.b16 %v3660, %v3644
      %v5037 = vpack.c.b16 %v3661, %v3645
      %v5038 = vpack.c.b16 %v3662, %v3646
      %v5039 = vpack.c.b16 %v3663, %v3647
      %v5040 = vpack.c.b16 %v3664, %v3648
      %v5041 = vpack.c.b16 %v3665, %v3649
      %v5042 = vpack.c.b16 %v3666, %v3650
      %v5043 = vpack.c.b16 %v3667, %v3651
      %v5044 = vpack.c.b16 %v3668, %v3652
      %v5045 = vpack.c.b16 %v3669, %v3653
      %v5046 = vpack.c.b16 %v3670, %v3654
      %v5047 = vpack.c.b16 %v3671, %v3655
      %v5048 = vpack.c.b16 %v3688, %v3672
      %v5049 = vpack.c.b16 %v3689, %v3673
      %v5050 = vpack.c.b16 %v3690, %v3674
      %v5051 = vpack.c.b16 %v3691, %v3675
      %v5052 = vpack.c.b16 %v3692, %v3676
      %v5053 = vpack.c.b16 %v3693, %v3677
      %v5054 = vpack.c.b16 %v3694, %v3678
      %v5055 = vpack.c.b16 %v3695, %v3679
      %v5056 = vpack.c.b16 %v3696, %v3680
      %v5057 = vpack.c.b16 %v3697, %v3681
      %v5058 = vpack.c.b16 %v3698, %v3682
      %v5059 = vpack.c.b16 %v3699, %v3683
      %v5060 = vpack.c.b16 %v3700, %v3684
      %v5061 = vpack.c.b16 %v3701, %v3685
      %v5062 = vpack.c.b16 %v3702, %v3686
      %v5063 = vpack.c.b16 %v3703, %v3687
      %v5064 = vpack.c.b16 %v3720, %v3704
      %v5065 = vpack.c.b16 %v3721, %v3705
      %v5066 = vpack.c.b16 %v3722, %v3706
      %v5067 = vpack.c.b16 %v3723, %v3707
      %v5068 = vpack.c.b16 %v3724, %v3708
      %v5069 = vpack.c.b16 %v3725, %v3709
      %v5070 = vpack.c.b16 %v3726, %v3710
      %v5071 = vpack.c.b16 %v3727, %v3711
      %v5072 = vpack.c.b16 %v3728, %v3712
      %v5073 = vpack.c.b16 %v3729, %v3713
      %v5074 = vpack.c.b16 %v3730, %v3714
      %v5075 = vpack.c.b16 %v3731, %v3715
      %v5076 = vpack.c.b16 %v3732, %v3716
      %v5077 = vpack.c.b16 %v3733, %v3717
      %v5078 = vpack.c.b16 %v3734, %v3718
      %v5079 = vpack.c.b16 %v3735, %v3719
      %v5080 = vpack.c.b16 %v3752, %v3736
      %v5081 = vpack.c.b16 %v3753, %v3737
      %v5082 = vpack.c.b16 %v3754, %v3738
      %v5083 = vpack.c.b16 %v3755, %v3739
      %v5084 = vpack.c.b16 %v3756, %v3740
      %v5085 = vpack.c.b16 %v3757, %v3741
      %v5086 = vpack.c.b16 %v3758, %v3742
      %v5087 = vpack.c.b16 %v3759, %v3743
      %v5088 = vpack.c.b16 %v3760, %v3744
      %v5089 = vpack.c.b16 %v3761, %v3745
      %v5090 = vpack.c.b16 %v3762, %v3746
      %v5091 = vpack.c.b16 %v3763, %v3747
      %v5092 = vpack.c.b16 %v3764, %v3748
      %v5093 = vpack.c.b16 %v3765, %v3749
      %v5094 = vpack.c.b16 %v3766, %v3750
      %v5095 = vpack.c.b16 %v3767, %v3751
      %v5096 = vpack.c.b16 %v3784, %v3768
      %v5097 = vpack.c.b16 %v3785, %v3769
      %v5098 = vpack.c.b16 %v3786, %v3770
      %v5099 = vpack.c.b16 %v3787, %v3771
      %v5100 = vpack.c.b16 %v3788, %v3772
      %v5101 = vpack.c.b16 %v3789, %v3773
      %v5102 = vpack.c.b16 %v3790, %v3774
      %v5103 = vpack.c.b16 %v3791, %v3775
      %v5104 = vpack.c.b16 %v3792, %v3776
      %v5105 = vpack.c.b16 %v3793, %v3777
      %v5106 = vpack.c.b16 %v3794, %v3778
      %v5107 = vpack.c.b16 %v3795, %v3779
      %v5108 = vpack.c.b16 %v3796, %v3780
      %v5109 = vpack.c.b16 %v3797, %v3781
      %v5110 = vpack.c.b16 %v3798, %v3782
      %v5111 = vpack.c.b16 %v3799, %v3783
      %v5112 = vpack.c.b16 %v3816, %v3800
      %v5113 = vpack.c.b16 %v3817, %v3801
      %v5114 = vpack.c.b16 %v3818, %v3802
      %v5115 = vpack.c.b16 %v3819, %v3803
      %v5116 = vpack.c.b16 %v3820, %v3804
      %v5117 = vpack.c.b16 %v3821, %v3805
      %v5118 = vpack.c.b16 %v3822, %v3806
      %v5119 = vpack.c.b16 %v3823, %v3807
      %v5120 = vpack.c.b16 %v3824, %v3808
      %v5121 = vpack.c.b16 %v3825, %v3809
      %v5122 = vpack.c.b16 %v3826, %v3810
      %v5123 = vpack.c.b16 %v3827, %v3811
      %v5124 = vpack.c.b16 %v3828, %v3812
      %v5125 = vpack.c.b16 %v3829, %v3813
      %v5126 = vpack.c.b16 %v3830, %v3814
      %v5127 = vpack.c.b16 %v3831, %v3815
      %v5128 = vpack.c.b16 %v3848, %v3832
      %v5129 = vpack.c.b16 %v3849, %v3833
      %v5130 = vpack.c.b16 %v3850, %v3834
      %v5131 = vpack.c.b16 %v3851, %v3835
      %v5132 = vpack.c.b16 %v3852, %v3836
      %v5133 = vpack.c.b16 %v3853, %v3837
      %v5134 = vpack.c.b16 %v3854, %v3838
      %v5135 = vpack.c.b16 %v3855, %v3839
      %v5136 = vpack.c.b16 %v3856, %v3840
      %v5137 = vpack.c.b16 %v3857, %v3841
      %v5138 = vpack.c.b16 %v3858, %v3842
      %v5139 = vpack.c.b16 %v3859, %v3843
      %v5140 = vpack.c.b16 %v3860, %v3844
      %v5141 = vpack.c.b16 %v3861, %v3845
      %v5142 = vpack.c.b16 %v3862, %v3846
      %v5143 = vpack.c.b16 %v3863, %v3847
      %v5144 = vpack.c.b16 %v3880, %v3864
      %v5145 = vpack.c.b16 %v3881, %v3865
      %v5146 = vpack.c.b16 %v3882, %v3866
      %v5147 = vpack.c.b16 %v3883, %v3867
      %v5148 = vpack.c.b16 %v3884, %v3868
      %v5149 = vpack.c.b16 %v3885, %v3869
      %v5150 = vpack.c.b16 %v3886, %v3870
      %v5151 = vpack.c.b16 %v3887, %v3871
      %v5152 = vpack.c.b16 %v3888, %v3872
      %v5153 = vpack.c.b16 %v3889, %v3873
      %v5154 = vpack.c.b16 %v3890, %v3874
      %v5155 = vpack.c.b16 %v3891, %v3875
      %v5156 = vpack.c.b16 %v3892, %v3876
      %v5157 = vpack.c.b16 %v3893, %v3877
      %v5158 = vpack.c.b16 %v3894, %v3878
      %v5159 = vpack.c.b16 %v3895, %v3879
      %v5160 = vpack.c.b16 %v3912, %v3896
      %v5161 = vpack.c.b16 %v3913, %v3897
      %v5162 = vpack.c.b16 %v3914, %v3898
      %v5163 = vpack.c.b16 %v3915, %v3899
      %v5164 = vpack.c.b16 %v3916, %v3900
      %v5165 = vpack.c.b16 %v3917, %v3901
      %v5166 = vpack.c.b16 %v3918, %v3902
      %v5167 = vpack.c.b16 %v3919, %v3903
      %v5168 = vpack.c.b16 %v3920, %v3904
      %v5169 = vpack.c.b16 %v3921, %v3905
      %v5170 = vpack.c.b16 %v3922, %v3906
      %v5171 = vpack.c.b16 %v3923, %v3907
      %v5172 = vpack.c.b16 %v3924, %v3908
      %v5173 = vpack.c.b16 %v3925, %v3909
      %v5174 = vpack.c.b16 %v3926, %v3910
      %v5175 = vpack.c.b16 %v3927, %v3911
      %v5176 = vpack.c.b16 %v3944, %v3928
      %v5177 = vpack.c.b16 %v3945, %v3929
      %v5178 = vpack.c.b16 %v3946, %v3930
      %v5179 = vpack.c.b16 %v3947, %v3931
      %v5180 = vpack.c.b16 %v3948, %v3932
      %v5181 = vpack.c.b16 %v3949, %v3933
      %v5182 = vpack.c.b16 %v3950, %v3934
      %v5183 = vpack.c.b16 %v3951, %v3935
      %v5184 = vpack.c.b16 %v3952, %v3936
      %v5185 = vpack.c.b16 %v3953, %v3937
      %v5186 = vpack.c.b16 %v3954, %v3938
      %v5187 = vpack.c.b16 %v3955, %v3939
      %v5188 = vpack.c.b16 %v3956, %v3940
      %v5189 = vpack.c.b16 %v3957, %v3941
      %v5190 = vpack.c.b16 %v3958, %v3942
      %v5191 = vpack.c.b16 %v3959, %v3943
      %v5192 = vpack.c.b16 %v3976, %v3960
      %v5193 = vpack.c.b16 %v3977, %v3961
      %v5194 = vpack.c.b16 %v3978, %v3962
      %v5195 = vpack.c.b16 %v3979, %v3963
      %v5196 = vpack.c.b16 %v3980, %v3964
      %v5197 = vpack.c.b16 %v3981, %v3965
      %v5198 = vpack.c.b16 %v3982, %v3966
      %v5199 = vpack.c.b16 %v3983, %v3967
      %v5200 = vpack.c.b16 %v3984, %v3968
      %v5201 = vpack.c.b16 %v3985, %v3969
      %v5202 = vpack.c.b16 %v3986, %v3970
      %v5203 = vpack.c.b16 %v3987, %v3971
      %v5204 = vpack.c.b16 %v3988, %v3972
      %v5205 = vpack.c.b16 %v3989, %v3973
      %v5206 = vpack.c.b16 %v3990, %v3974
      %v5207 = vpack.c.b16 %v3991, %v3975
      %v5208 = vpack.c.b16 %v4008, %v3992
      %v5209 = vpack.c.b16 %v4009, %v3993
      %v5210 = vpack.c.b16 %v4010, %v3994
      %v5211 = vpack.c.b16 %v4011, %v3995
      %v5212 = vpack.c.b16 %v4012, %v3996
      %v5213 = vpack.c.b16 %v4013, %v3997
      %v5214 = vpack.c.b16 %v4014, %v3998
      %v5215 = vpack.c.b16 %v4015, %v3999
      %v5216 = vpack.c.b16 %v4016, %v4000
      %v5217 = vpack.c.b16 %v4017, %v4001
      %v5218 = vpack.c.b16 %v4018, %v4002
      %v5219 = vpack.c.b16 %v4019, %v4003
      %v5220 = vpack.c.b16 %v4020, %v4004
      %v5221 = vpack.c.b16 %v4021, %v4005
      %v5222 = vpack.c.b16 %v4022, %v4006
      %v5223 = vpack.c.b16 %v4023, %v4007
      %v5224 = vpack.c.b16 %v4040, %v4024
      %v5225 = vpack.c.b16 %v4041, %v4025
      %v5226 = vpack.c.b16 %v4042, %v4026
      %v5227 = vpack.c.b16 %v4043, %v4027
      %v5228 = vpack.c.b16 %v4044, %v4028
      %v5229 = vpack.c.b16 %v4045, %v4029
      %v5230 = vpack.c.b16 %v4046, %v4030
      %v5231 = vpack.c.b16 %v4047, %v4031
      %v5232 = vpack.c.b16 %v4048, %v4032
      %v5233 = vpack.c.b16 %v4049, %v4033
      %v5234 = vpack.c.b16 %v4050, %v4034
      %v5235 = vpack.c.b16 %v4051, %v4035
      %v5236 = vpack.c.b16 %v4052, %v4036
      %v5237 = vpack.c.b16 %v4053, %v4037
      %v5238 = vpack.c.b16 %v4054, %v4038
      %v5239 = vpack.c.b16 %v4055, %v4039
      %v5240 = vpack.c.b16 %v4072, %v4056
      %v5241 = vpack.c.b16 %v4073, %v4057
      %v5242 = vpack.c.b16 %v4074, %v4058
      %v5243 = vpack.c.b16 %v4075, %v4059
      %v5244 = vpack.c.b16 %v4076, %v4060
      %v5245 = vpack.c.b16 %v4077, %v4061
      %v5246 = vpack.c.b16 %v4078, %v4062
      %v5247 = vpack.c.b16 %v4079, %v4063
      %v5248 = vpack.c.b16 %v4080, %v4064
      %v5249 = vpack.c.b16 %v4081, %v4065
      %v5250 = vpack.c.b16 %v4082, %v4066
      %v5251 = vpack.c.b16 %v4083, %v4067
      %v5252 = vpack.c.b16 %v4084, %v4068
      %v5253 = vpack.c.b16 %v4085, %v4069
      %v5254 = vpack.c.b16 %v4086, %v4070
      %v5255 = vpack.c.b16 %v4087, %v4071
      %v5256 = vpack.c.b16 %v4104, %v4088
      %v5257 = vpack.c.b16 %v4105, %v4089
      %v5258 = vpack.c.b16 %v4106, %v4090
      %v5259 = vpack.c.b16 %v4107, %v4091
      %v5260 = vpack.c.b16 %v4108, %v4092
      %v5261 = vpack.c.b16 %v4109, %v4093
      %v5262 = vpack.c.b16 %v4110, %v4094
      %v5263 = vpack.c.b16 %v4111, %v4095
      %v5264 = vpack.c.b16 %v4112, %v4096
      %v5265 = vpack.c.b16 %v4113, %v4097
      %v5266 = vpack.c.b16 %v4114, %v4098
      %v5267 = vpack.c.b16 %v4115, %v4099
      %v5268 = vpack.c.b16 %v4116, %v4100
      %v5269 = vpack.c.b16 %v4117, %v4101
      %v5270 = vpack.c.b16 %v4118, %v4102
      %v5271 = vpack.c.b16 %v4119, %v4103
      %v5272 = vpack.c.b16 %v4136, %v4120
      %v5273 = vpack.c.b16 %v4137, %v4121
      %v5274 = vpack.c.b16 %v4138, %v4122
      %v5275 = vpack.c.b16 %v4139, %v4123
      %v5276 = vpack.c.b16 %v4140, %v4124
      %v5277 = vpack.c.b16 %v4141, %v4125
      %v5278 = vpack.c.b16 %v4142, %v4126
      %v5279 = vpack.c.b16 %v4143, %v4127
      %v5280 = vpack.c.b16 %v4144, %v4128
      %v5281 = vpack.c.b16 %v4145, %v4129
      %v5282 = vpack.c.b16 %v4146, %v4130
      %v5283 = vpack.c.b16 %v4147, %v4131
      %v5284 = vpack.c.b16 %v4148, %v4132
      %v5285 = vpack.c.b16 %v4149, %v4133
      %v5286 = vpack.c.b16 %v4150, %v4134
      %v5287 = vpack.c.b16 %v4151, %v4135
      %v5288 = vpack.c.b16 %v4168, %v4152
      %v5289 = vpack.c.b16 %v4169, %v4153
      %v5290 = vpack.c.b16 %v4170, %v4154
      %v5291 = vpack.c.b16 %v4171, %v4155
      %v5292 = vpack.c.b16 %v4172, %v4156
      %v5293 = vpack.c.b16 %v4173, %v4157
      %v5294 = vpack.c.b16 %v4174, %v4158
      %v5295 = vpack.c.b16 %v4175, %v4159
      %v5296 = vpack.c.b16 %v4176, %v4160
      %v5297 = vpack.c.b16 %v4177, %v4161
      %v5298 = vpack.c.b16 %v4178, %v4162
      %v5299 = vpack.c.b16 %v4179, %v4163
      %v5300 = vpack.c.b16 %v4180, %v4164
      %v5301 = vpack.c.b16 %v4181, %v4165
      %v5302 = vpack.c.b16 %v4182, %v4166
      %v5303 = vpack.c.b16 %v4183, %v4167
      %v5304 = vpack.c.b16 %v4200, %v4184
      %v5305 = vpack.c.b16 %v4201, %v4185
      %v5306 = vpack.c.b16 %v4202, %v4186
      %v5307 = vpack.c.b16 %v4203, %v4187
      %v5308 = vpack.c.b16 %v4204, %v4188
      %v5309 = vpack.c.b16 %v4205, %v4189
      %v5310 = vpack.c.b16 %v4206, %v4190
      %v5311 = vpack.c.b16 %v4207, %v4191
      %v5312 = vpack.c.b16 %v4208, %v4192
      %v5313 = vpack.c.b16 %v4209, %v4193
      %v5314 = vpack.c.b16 %v4210, %v4194
      %v5315 = vpack.c.b16 %v4211, %v4195
      %v5316 = vpack.c.b16 %v4212, %v4196
      %v5317 = vpack.c.b16 %v4213, %v4197
      %v5318 = vpack.c.b16 %v4214, %v4198
      %v5319 = vpack.c.b16 %v4215, %v4199
      %v5320 = vpack.c.b16 %v4232, %v4216
      %v5321 = vpack.c.b16 %v4233, %v4217
      %v5322 = vpack.c.b16 %v4234, %v4218
      %v5323 = vpack.c.b16 %v4235, %v4219
      %v5324 = vpack.c.b16 %v4236, %v4220
      %v5325 = vpack.c.b16 %v4237, %v4221
      %v5326 = vpack.c.b16 %v4238, %v4222
      %v5327 = vpack.c.b16 %v4239, %v4223
      %v5328 = vpack.c.b16 %v4240, %v4224
      %v5329 = vpack.c.b16 %v4241, %v4225
      %v5330 = vpack.c.b16 %v4242, %v4226
      %v5331 = vpack.c.b16 %v4243, %v4227
      %v5332 = vpack.c.b16 %v4244, %v4228
      %v5333 = vpack.c.b16 %v4245, %v4229
      %v5334 = vpack.c.b16 %v4246, %v4230
      %v5335 = vpack.c.b16 %v4247, %v4231
      %v5336 = vpack.c.b16 %v4264, %v4248
      %v5337 = vpack.c.b16 %v4265, %v4249
      %v5338 = vpack.c.b16 %v4266, %v4250
      %v5339 = vpack.c.b16 %v4267, %v4251
      %v5340 = vpack.c.b16 %v4268, %v4252
      %v5341 = vpack.c.b16 %v4269, %v4253
      %v5342 = vpack.c.b16 %v4270, %v4254
      %v5343 = vpack.c.b16 %v4271, %v4255
      %v5344 = vpack.c.b16 %v4272, %v4256
      %v5345 = vpack.c.b16 %v4273, %v4257
      %v5346 = vpack.c.b16 %v4274, %v4258
      %v5347 = vpack.c.b16 %v4275, %v4259
      %v5348 = vpack.c.b16 %v4276, %v4260
      %v5349 = vpack.c.b16 %v4277, %v4261
      %v5350 = vpack.c.b16 %v4278, %v4262
      %v5351 = vpack.c.b16 %v4279, %v4263
      %v5352 = vpack.c.b16 %v4296, %v4280
      %v5353 = vpack.c.b16 %v4297, %v4281
      %v5354 = vpack.c.b16 %v4298, %v4282
      %v5355 = vpack.c.b16 %v4299, %v4283
      %v5356 = vpack.c.b16 %v4300, %v4284
      %v5357 = vpack.c.b16 %v4301, %v4285
      %v5358 = vpack.c.b16 %v4302, %v4286
      %v5359 = vpack.c.b16 %v4303, %v4287
      %v5360 = vpack.c.b16 %v4304, %v4288
      %v5361 = vpack.c.b16 %v4305, %v4289
      %v5362 = vpack.c.b16 %v4306, %v4290
      %v5363 = vpack.c.b16 %v4307, %v4291
      %v5364 = vpack.c.b16 %v4308, %v4292
      %v5365 = vpack.c.b16 %v4309, %v4293
      %v5366 = vpack.c.b16 %v4310, %v4294
      %v5367 = vpack.c.b16 %v4311, %v4295
      %v5368 = vpack.c.b16 %v4328, %v4312
      %v5369 = vpack.c.b16 %v4329, %v4313
      %v5370 = vpack.c.b16 %v4330, %v4314
      %v5371 = vpack.c.b16 %v4331, %v4315
      %v5372 = vpack.c.b16 %v4332, %v4316
      %v5373 = vpack.c.b16 %v4333, %v4317
      %v5374 = vpack.c.b16 %v4334, %v4318
      %v5375 = vpack.c.b16 %v4335, %v4319
      %v5376 = vpack.c.b16 %v4336, %v4320
      %v5377 = vpack.c.b16 %v4337, %v4321
      %v5378 = vpack.c.b16 %v4338, %v4322
      %v5379 = vpack.c.b16 %v4339, %v4323
      %v5380 = vpack.c.b16 %v4340, %v4324
      %v5381 = vpack.c.b16 %v4341, %v4325
      %v5382 = vpack.c.b16 %v4342, %v4326
      %v5383 = vpack.c.b16 %v4343, %v4327
      %v5384 = vpack.c.b16 %v4360, %v4344
      %v5385 = vpack.c.b16 %v4361, %v4345
      %v5386 = vpack.c.b16 %v4362, %v4346
      %v5387 = vpack.c.b16 %v4363, %v4347
      %v5388 = vpack.c.b16 %v4364, %v4348
      %v5389 = vpack.c.b16 %v4365, %v4349
      %v5390 = vpack.c.b16 %v4366, %v4350
      %v5391 = vpack.c.b16 %v4367, %v4351
      %v5392 = vpack.c.b16 %v4368, %v4352
      %v5393 = vpack.c.b16 %v4369, %v4353
      %v5394 = vpack.c.b16 %v4370, %v4354
      %v5395 = vpack.c.b16 %v4371, %v4355
      %v5396 = vpack.c.b16 %v4372, %v4356
      %v5397 = vpack.c.b16 %v4373, %v4357
      %v5398 = vpack.c.b16 %v4374, %v4358
      %v5399 = vpack.c.b16 %v4375, %v4359
      %v6426 = vlaneseq
      %v6427 = vshrl.u32 %v6426, 7
      %v6428 = vsub.s32 0, %v6427
      %v6429 = vrot.slane %v1244, %v6428
      %v6430 = vlaneseq
      %v6431 = vshrl.u32 %v6430, 7
      %v6432 = vsub.s32 1, %v6431
      %v6433 = vrot.slane %v1244, %v6432
      %v6434 = vlaneseq
      %v6435 = vshrl.u32 %v6434, 7
      %v6436 = vsub.s32 2, %v6435
      %v6437 = vrot.slane %v1244, %v6436
      %v6438 = vlaneseq
      %v6439 = vshrl.u32 %v6438, 7
      %v6440 = vsub.s32 3, %v6439
      %v6441 = vrot.slane %v1244, %v6440
      %v6442 = vlaneseq
      %v6443 = vshrl.u32 %v6442, 7
      %v6444 = vsub.s32 4, %v6443
      %v6445 = vrot.slane %v1244, %v6444
      %v6446 = vlaneseq
      %v6447 = vshrl.u32 %v6446, 7
      %v6448 = vsub.s32 5, %v6447
      %v6449 = vrot.slane %v1244, %v6448
      %v6450 = vlaneseq
      %v6451 = vshrl.u32 %v6450, 7
      %v6452 = vsub.s32 6, %v6451
      %v6453 = vrot.slane %v1244, %v6452
      %v6454 = vlaneseq
      %v6455 = vshrl.u32 %v6454, 7
      %v6456 = vsub.s32 7, %v6455
      %v6457 = vrot.slane %v1244, %v6456
      %v6458 = vlaneseq
      %v6459 = vshrl.u32 %v6458, 7
      %v6460 = vsub.s32 0, %v6459
      %v6461 = vrot.slane %v1245, %v6460
      %v6462 = vlaneseq
      %v6463 = vshrl.u32 %v6462, 7
      %v6464 = vsub.s32 1, %v6463
      %v6465 = vrot.slane %v1245, %v6464
      %v6466 = vlaneseq
      %v6467 = vshrl.u32 %v6466, 7
      %v6468 = vsub.s32 2, %v6467
      %v6469 = vrot.slane %v1245, %v6468
      %v6470 = vlaneseq
      %v6471 = vshrl.u32 %v6470, 7
      %v6472 = vsub.s32 3, %v6471
      %v6473 = vrot.slane %v1245, %v6472
      %v6474 = vlaneseq
      %v6475 = vshrl.u32 %v6474, 7
      %v6476 = vsub.s32 4, %v6475
      %v6477 = vrot.slane %v1245, %v6476
      %v6478 = vlaneseq
      %v6479 = vshrl.u32 %v6478, 7
      %v6480 = vsub.s32 5, %v6479
      %v6481 = vrot.slane %v1245, %v6480
      %v6482 = vlaneseq
      %v6483 = vshrl.u32 %v6482, 7
      %v6484 = vsub.s32 6, %v6483
      %v6485 = vrot.slane %v1245, %v6484
      %v6486 = vlaneseq
      %v6487 = vshrl.u32 %v6486, 7
      %v6488 = vsub.s32 7, %v6487
      %v6489 = vrot.slane %v1245, %v6488
      %6506 = vmatprep.subr.bf16.mxu0 %v4489
      %6507 = vmatpush1.bf16.msra.mxu0 %v4488
      %6508 = vmatprep.subr.bf16.mxu0 %v4473
      %6509 = vmatpush1.bf16.msra.mxu0 %v4472
      %6510 = vmatprep.subr.bf16.mxu0 %v4457
      %6511 = vmatpush1.bf16.msra.mxu0 %v4456
      %6512 = vmatprep.subr.bf16.mxu0 %v4441
      %6513 = vmatpush1.bf16.msra.mxu0 %v4440
      %6514 = vmatprep.subr.bf16.mxu0 %v4425
      %6515 = vmatpush1.bf16.msra.mxu0 %v4424
      %6516 = vmatprep.subr.bf16.mxu0 %v4409
      %6517 = vmatpush1.bf16.msra.mxu0 %v4408
      %6518 = vmatprep.subr.bf16.mxu0 %v4393
      %6519 = vmatpush1.bf16.msra.mxu0 %v4392
      %6520 = vmatprep.subr.bf16.mxu0 %v4377
      %6521 = vmatpush1.bf16.msra.mxu0 %v4376
      %6522 = vmatprep.subr.bf16.mxu0 %v4617
      %6523 = vmatpush2.bf16.msra.mxu0 %v4616
      %6524 = vmatprep.subr.bf16.mxu0 %v4601
      %6525 = vmatpush2.bf16.msra.mxu0 %v4600
      %6526 = vmatprep.subr.bf16.mxu0 %v4585
      %6527 = vmatpush2.bf16.msra.mxu0 %v4584
      %6528 = vmatprep.subr.bf16.mxu0 %v4569
      %6529 = vmatpush2.bf16.msra.mxu0 %v4568
      %6530 = vmatprep.subr.bf16.mxu0 %v4553
      %6531 = vmatpush2.bf16.msra.mxu0 %v4552
      %6532 = vmatprep.subr.bf16.mxu0 %v4537
      %6533 = vmatpush2.bf16.msra.mxu0 %v4536
      %6534 = vmatprep.subr.bf16.mxu0 %v4521
      %6535 = vmatpush2.bf16.msra.mxu0 %v4520
      %6536 = vmatprep.subr.bf16.mxu0 %v4505
      %6537 = vmatpush2.bf16.msra.mxu0 %v4504
      %6538 = vmatprep.mubr.bf16.mxu0 %v1284
      %6539 = vmatmul.mubr.bf16.gmra.mxu0 %v1270
      %v6540 = vpop.f32.mrf.mxu0
      %v6541 = vadd.f32 %v6429, %v6540
      %v6542 = vpop.f32.mrf.mxu0
      %v6543 = vadd.f32 %v6433, %v6542
      %v6544 = vpop.f32.mrf.mxu0
      %v6545 = vpop.f32.mrf.mxu0
      %6546 = vdwg.mxu0
      %6547 = vmatprep.subr.bf16.mxu0 %v4745
      %6548 = vmatpush1.bf16.msra.mxu0 %v4744
      %6549 = vmatprep.subr.bf16.mxu0 %v4729
      %6550 = vmatpush1.bf16.msra.mxu0 %v4728
      %6551 = vmatprep.subr.bf16.mxu0 %v4713
      %6552 = vmatpush1.bf16.msra.mxu0 %v4712
      %6553 = vmatprep.subr.bf16.mxu0 %v4697
      %6554 = vmatpush1.bf16.msra.mxu0 %v4696
      %6555 = vmatprep.subr.bf16.mxu0 %v4681
      %6556 = vmatpush1.bf16.msra.mxu0 %v4680
      %6557 = vmatprep.subr.bf16.mxu0 %v4665
      %6558 = vmatpush1.bf16.msra.mxu0 %v4664
      %6559 = vmatprep.subr.bf16.mxu0 %v4649
      %6560 = vmatpush1.bf16.msra.mxu0 %v4648
      %6561 = vmatprep.subr.bf16.mxu0 %v4633
      %6562 = vmatpush1.bf16.msra.mxu0 %v4632
      %6563 = vmatprep.subr.bf16.mxu0 %v4873
      %6564 = vmatpush2.bf16.msra.mxu0 %v4872
      %6565 = vmatprep.subr.bf16.mxu0 %v4857
      %6566 = vmatpush2.bf16.msra.mxu0 %v4856
      %6567 = vmatprep.subr.bf16.mxu0 %v4841
      %6568 = vmatpush2.bf16.msra.mxu0 %v4840
      %6569 = vmatprep.subr.bf16.mxu0 %v4825
      %6570 = vmatpush2.bf16.msra.mxu0 %v4824
      %6571 = vmatprep.subr.bf16.mxu0 %v4809
      %6572 = vmatpush2.bf16.msra.mxu0 %v4808
      %6573 = vmatprep.subr.bf16.mxu0 %v4793
      %6574 = vmatpush2.bf16.msra.mxu0 %v4792
      %6575 = vmatprep.subr.bf16.mxu0 %v4777
      %6576 = vmatpush2.bf16.msra.mxu0 %v4776
      %6577 = vmatprep.subr.bf16.mxu0 %v4761
      %6578 = vmatpush2.bf16.msra.mxu0 %v4760
      %6579 = vmatprep.mubr.bf16.mxu0 %v1294
      %6580 = vmatmul.mubr.bf16.gmra.mxu0 %v1292
      %v6581 = vpop.f32.mrf.mxu0
      %v6582 = vadd.f32 %v6541, %v6581
      %v6583 = vpop.f32.mrf.mxu0
      %v6584 = vadd.f32 %v6543, %v6583
      %v6585 = vpop.f32.mrf.mxu0
      %v6586 = vpop.f32.mrf.mxu0
      %6587 = vdwg.mxu0
      %6588 = vmatprep.subr.bf16.mxu0 %v5001
      %6589 = vmatpush1.bf16.msra.mxu0 %v5000
      %6590 = vmatprep.subr.bf16.mxu0 %v4985
      %6591 = vmatpush1.bf16.msra.mxu0 %v4984
      %6592 = vmatprep.subr.bf16.mxu0 %v4969
      %6593 = vmatpush1.bf16.msra.mxu0 %v4968
      %6594 = vmatprep.subr.bf16.mxu0 %v4953
      %6595 = vmatpush1.bf16.msra.mxu0 %v4952
      %6596 = vmatprep.subr.bf16.mxu0 %v4937
      %6597 = vmatpush1.bf16.msra.mxu0 %v4936
      %6598 = vmatprep.subr.bf16.mxu0 %v4921
      %6599 = vmatpush1.bf16.msra.mxu0 %v4920
      %6600 = vmatprep.subr.bf16.mxu0 %v4905
      %6601 = vmatpush1.bf16.msra.mxu0 %v4904
      %6602 = vmatprep.subr.bf16.mxu0 %v4889
      %6603 = vmatpush1.bf16.msra.mxu0 %v4888
      %6604 = vmatprep.subr.bf16.mxu0 %v5129
      %6605 = vmatpush2.bf16.msra.mxu0 %v5128
      %6606 = vmatprep.subr.bf16.mxu0 %v5113
      %6607 = vmatpush2.bf16.msra.mxu0 %v5112
      %6608 = vmatprep.subr.bf16.mxu0 %v5097
      %6609 = vmatpush2.bf16.msra.mxu0 %v5096
      %6610 = vmatprep.subr.bf16.mxu0 %v5081
      %6611 = vmatpush2.bf16.msra.mxu0 %v5080
      %6612 = vmatprep.subr.bf16.mxu0 %v5065
      %6613 = vmatpush2.bf16.msra.mxu0 %v5064
      %6614 = vmatprep.subr.bf16.mxu0 %v5049
      %6615 = vmatpush2.bf16.msra.mxu0 %v5048
      %6616 = vmatprep.subr.bf16.mxu0 %v5033
      %6617 = vmatpush2.bf16.msra.mxu0 %v5032
      %6618 = vmatprep.subr.bf16.mxu0 %v5017
      %6619 = vmatpush2.bf16.msra.mxu0 %v5016
      %6620 = vmatprep.mubr.bf16.mxu0 %v1291
      %6621 = vmatmul.mubr.bf16.gmra.mxu0 %v1277
      %v6622 = vpop.f32.mrf.mxu0
      %v6623 = vadd.f32 %v6582, %v6622
      %v6624 = vpop.f32.mrf.mxu0
      %v6625 = vadd.f32 %v6584, %v6624
      %v6626 = vpop.f32.mrf.mxu0
      %v6627 = vpop.f32.mrf.mxu0
      %6628 = vdwg.mxu0
      %6629 = vmatprep.subr.bf16.mxu0 %v5257
      %6630 = vmatpush1.bf16.msra.mxu0 %v5256
      %6631 = vmatprep.subr.bf16.mxu0 %v5241
      %6632 = vmatpush1.bf16.msra.mxu0 %v5240
      %6633 = vmatprep.subr.bf16.mxu0 %v5225
      %6634 = vmatpush1.bf16.msra.mxu0 %v5224
      %6635 = vmatprep.subr.bf16.mxu0 %v5209
      %6636 = vmatpush1.bf16.msra.mxu0 %v5208
      %6637 = vmatprep.subr.bf16.mxu0 %v5193
      %6638 = vmatpush1.bf16.msra.mxu0 %v5192
      %6639 = vmatprep.subr.bf16.mxu0 %v5177
      %6640 = vmatpush1.bf16.msra.mxu0 %v5176
      %6641 = vmatprep.subr.bf16.mxu0 %v5161
      %6642 = vmatpush1.bf16.msra.mxu0 %v5160
      %6643 = vmatprep.subr.bf16.mxu0 %v5145
      %6644 = vmatpush1.bf16.msra.mxu0 %v5144
      %6645 = vmatprep.subr.bf16.mxu0 %v5385
      %6646 = vmatpush2.bf16.msra.mxu0 %v5384
      %6647 = vmatprep.subr.bf16.mxu0 %v5369
      %6648 = vmatpush2.bf16.msra.mxu0 %v5368
      %6649 = vmatprep.subr.bf16.mxu0 %v5353
      %6650 = vmatpush2.bf16.msra.mxu0 %v5352
      %6651 = vmatprep.subr.bf16.mxu0 %v5337
      %6652 = vmatpush2.bf16.msra.mxu0 %v5336
      %6653 = vmatprep.subr.bf16.mxu0 %v5321
      %6654 = vmatpush2.bf16.msra.mxu0 %v5320
      %6655 = vmatprep.subr.bf16.mxu0 %v5305
      %6656 = vmatpush2.bf16.msra.mxu0 %v5304
      %6657 = vmatprep.subr.bf16.mxu0 %v5289
      %6658 = vmatpush2.bf16.msra.mxu0 %v5288
      %6659 = vmatprep.subr.bf16.mxu0 %v5273
      %6660 = vmatpush2.bf16.msra.mxu0 %v5272
      %6661 = vmatprep.mubr.bf16.mxu0 %v1295
      %6662 = vmatmul.mubr.bf16.gmra.mxu0 %v1293
      %v6663 = vpop.f32.mrf.mxu0
      %v6664 = vadd.f32 %v6623, %v6663
      %v6665 = vpop.f32.mrf.mxu0
      %v6666 = vadd.f32 %v6625, %v6665
      %v6667 = vpop.f32.mrf.mxu0
      %v6668 = vpop.f32.mrf.mxu0
      %6669 = vdwg.mxu0
      %6670 = vmatprep.subr.bf16.mxu0 %v4491
      %6671 = vmatpush1.bf16.msra.mxu0 %v4490
      %6672 = vmatprep.subr.bf16.mxu0 %v4475
      %6673 = vmatpush1.bf16.msra.mxu0 %v4474
      %6674 = vmatprep.subr.bf16.mxu0 %v4459
      %6675 = vmatpush1.bf16.msra.mxu0 %v4458
      %6676 = vmatprep.subr.bf16.mxu0 %v4443
      %6677 = vmatpush1.bf16.msra.mxu0 %v4442
      %6678 = vmatprep.subr.bf16.mxu0 %v4427
      %6679 = vmatpush1.bf16.msra.mxu0 %v4426
      %6680 = vmatprep.subr.bf16.mxu0 %v4411
      %6681 = vmatpush1.bf16.msra.mxu0 %v4410
      %6682 = vmatprep.subr.bf16.mxu0 %v4395
      %6683 = vmatpush1.bf16.msra.mxu0 %v4394
      %6684 = vmatprep.subr.bf16.mxu0 %v4379
      %6685 = vmatpush1.bf16.msra.mxu0 %v4378
      %6686 = vmatprep.subr.bf16.mxu0 %v4619
      %6687 = vmatpush2.bf16.msra.mxu0 %v4618
      %6688 = vmatprep.subr.bf16.mxu0 %v4603
      %6689 = vmatpush2.bf16.msra.mxu0 %v4602
      %6690 = vmatprep.subr.bf16.mxu0 %v4587
      %6691 = vmatpush2.bf16.msra.mxu0 %v4586
      %6692 = vmatprep.subr.bf16.mxu0 %v4571
      %6693 = vmatpush2.bf16.msra.mxu0 %v4570
      %6694 = vmatprep.subr.bf16.mxu0 %v4555
      %6695 = vmatpush2.bf16.msra.mxu0 %v4554
      %6696 = vmatprep.subr.bf16.mxu0 %v4539
      %6697 = vmatpush2.bf16.msra.mxu0 %v4538
      %6698 = vmatprep.subr.bf16.mxu0 %v4523
      %6699 = vmatpush2.bf16.msra.mxu0 %v4522
      %6700 = vmatprep.subr.bf16.mxu0 %v4507
      %6701 = vmatpush2.bf16.msra.mxu0 %v4506
      %6702 = vmatprep.mubr.bf16.mxu0 %v1284
      %6703 = vmatmul.mubr.bf16.gmra.mxu0 %v1270
      %v6704 = vpop.f32.mrf.mxu0
      %v6705 = vadd.f32 %v6437, %v6704
      %v6706 = vpop.f32.mrf.mxu0
      %v6707 = vadd.f32 %v6441, %v6706
      %v6708 = vpop.f32.mrf.mxu0
      %v6709 = vpop.f32.mrf.mxu0
      %6710 = vdwg.mxu0
      %6711 = vmatprep.subr.bf16.mxu0 %v4747
      %6712 = vmatpush1.bf16.msra.mxu0 %v4746
      %6713 = vmatprep.subr.bf16.mxu0 %v4731
      %6714 = vmatpush1.bf16.msra.mxu0 %v4730
      %6715 = vmatprep.subr.bf16.mxu0 %v4715
      %6716 = vmatpush1.bf16.msra.mxu0 %v4714
      %6717 = vmatprep.subr.bf16.mxu0 %v4699
      %6718 = vmatpush1.bf16.msra.mxu0 %v4698
      %6719 = vmatprep.subr.bf16.mxu0 %v4683
      %6720 = vmatpush1.bf16.msra.mxu0 %v4682
      %6721 = vmatprep.subr.bf16.mxu0 %v4667
      %6722 = vmatpush1.bf16.msra.mxu0 %v4666
      %6723 = vmatprep.subr.bf16.mxu0 %v4651
      %6724 = vmatpush1.bf16.msra.mxu0 %v4650
      %6725 = vmatprep.subr.bf16.mxu0 %v4635
      %6726 = vmatpush1.bf16.msra.mxu0 %v4634
      %6727 = vmatprep.subr.bf16.mxu0 %v4875
      %6728 = vmatpush2.bf16.msra.mxu0 %v4874
      %6729 = vmatprep.subr.bf16.mxu0 %v4859
      %6730 = vmatpush2.bf16.msra.mxu0 %v4858
      %6731 = vmatprep.subr.bf16.mxu0 %v4843
      %6732 = vmatpush2.bf16.msra.mxu0 %v4842
      %6733 = vmatprep.subr.bf16.mxu0 %v4827
      %6734 = vmatpush2.bf16.msra.mxu0 %v4826
      %6735 = vmatprep.subr.bf16.mxu0 %v4811
      %6736 = vmatpush2.bf16.msra.mxu0 %v4810
      %6737 = vmatprep.subr.bf16.mxu0 %v4795
      %6738 = vmatpush2.bf16.msra.mxu0 %v4794
      %6739 = vmatprep.subr.bf16.mxu0 %v4779
      %6740 = vmatpush2.bf16.msra.mxu0 %v4778
      %6741 = vmatprep.subr.bf16.mxu0 %v4763
      %6742 = vmatpush2.bf16.msra.mxu0 %v4762
      %6743 = vmatprep.mubr.bf16.mxu0 %v1294
      %6744 = vmatmul.mubr.bf16.gmra.mxu0 %v1292
      %v6745 = vpop.f32.mrf.mxu0
      %v6746 = vadd.f32 %v6705, %v6745
      %v6747 = vpop.f32.mrf.mxu0
      %v6748 = vadd.f32 %v6707, %v6747
      %v6749 = vpop.f32.mrf.mxu0
      %v6750 = vpop.f32.mrf.mxu0
      %6751 = vdwg.mxu0
      %6752 = vmatprep.subr.bf16.mxu0 %v5003
      %6753 = vmatpush1.bf16.msra.mxu0 %v5002
      %6754 = vmatprep.subr.bf16.mxu0 %v4987
      %6755 = vmatpush1.bf16.msra.mxu0 %v4986
      %6756 = vmatprep.subr.bf16.mxu0 %v4971
      %6757 = vmatpush1.bf16.msra.mxu0 %v4970
      %6758 = vmatprep.subr.bf16.mxu0 %v4955
      %6759 = vmatpush1.bf16.msra.mxu0 %v4954
      %6760 = vmatprep.subr.bf16.mxu0 %v4939
      %6761 = vmatpush1.bf16.msra.mxu0 %v4938
      %6762 = vmatprep.subr.bf16.mxu0 %v4923
      %6763 = vmatpush1.bf16.msra.mxu0 %v4922
      %6764 = vmatprep.subr.bf16.mxu0 %v4907
      %6765 = vmatpush1.bf16.msra.mxu0 %v4906
      %6766 = vmatprep.subr.bf16.mxu0 %v4891
      %6767 = vmatpush1.bf16.msra.mxu0 %v4890
      %6768 = vmatprep.subr.bf16.mxu0 %v5131
      %6769 = vmatpush2.bf16.msra.mxu0 %v5130
      %6770 = vmatprep.subr.bf16.mxu0 %v5115
      %6771 = vmatpush2.bf16.msra.mxu0 %v5114
      %6772 = vmatprep.subr.bf16.mxu0 %v5099
      %6773 = vmatpush2.bf16.msra.mxu0 %v5098
      %6774 = vmatprep.subr.bf16.mxu0 %v5083
      %6775 = vmatpush2.bf16.msra.mxu0 %v5082
      %6776 = vmatprep.subr.bf16.mxu0 %v5067
      %6777 = vmatpush2.bf16.msra.mxu0 %v5066
      %6778 = vmatprep.subr.bf16.mxu0 %v5051
      %6779 = vmatpush2.bf16.msra.mxu0 %v5050
      %6780 = vmatprep.subr.bf16.mxu0 %v5035
      %6781 = vmatpush2.bf16.msra.mxu0 %v5034
      %6782 = vmatprep.subr.bf16.mxu0 %v5019
      %6783 = vmatpush2.bf16.msra.mxu0 %v5018
      %6784 = vmatprep.mubr.bf16.mxu0 %v1291
      %6785 = vmatmul.mubr.bf16.gmra.mxu0 %v1277
      %v6786 = vpop.f32.mrf.mxu0
      %v6787 = vadd.f32 %v6746, %v6786
      %v6788 = vpop.f32.mrf.mxu0
      %v6789 = vadd.f32 %v6748, %v6788
      %v6790 = vpop.f32.mrf.mxu0
      %v6791 = vpop.f32.mrf.mxu0
      %6792 = vdwg.mxu0
      %6793 = vmatprep.subr.bf16.mxu0 %v5259
      %6794 = vmatpush1.bf16.msra.mxu0 %v5258
      %6795 = vmatprep.subr.bf16.mxu0 %v5243
      %6796 = vmatpush1.bf16.msra.mxu0 %v5242
      %6797 = vmatprep.subr.bf16.mxu0 %v5227
      %6798 = vmatpush1.bf16.msra.mxu0 %v5226
      %6799 = vmatprep.subr.bf16.mxu0 %v5211
      %6800 = vmatpush1.bf16.msra.mxu0 %v5210
      %6801 = vmatprep.subr.bf16.mxu0 %v5195
      %6802 = vmatpush1.bf16.msra.mxu0 %v5194
      %6803 = vmatprep.subr.bf16.mxu0 %v5179
      %6804 = vmatpush1.bf16.msra.mxu0 %v5178
      %6805 = vmatprep.subr.bf16.mxu0 %v5163
      %6806 = vmatpush1.bf16.msra.mxu0 %v5162
      %6807 = vmatprep.subr.bf16.mxu0 %v5147
      %6808 = vmatpush1.bf16.msra.mxu0 %v5146
      %6809 = vmatprep.subr.bf16.mxu0 %v5387
      %6810 = vmatpush2.bf16.msra.mxu0 %v5386
      %6811 = vmatprep.subr.bf16.mxu0 %v5371
      %6812 = vmatpush2.bf16.msra.mxu0 %v5370
      %6813 = vmatprep.subr.bf16.mxu0 %v5355
      %6814 = vmatpush2.bf16.msra.mxu0 %v5354
      %6815 = vmatprep.subr.bf16.mxu0 %v5339
      %6816 = vmatpush2.bf16.msra.mxu0 %v5338
      %6817 = vmatprep.subr.bf16.mxu0 %v5323
      %6818 = vmatpush2.bf16.msra.mxu0 %v5322
      %6819 = vmatprep.subr.bf16.mxu0 %v5307
      %6820 = vmatpush2.bf16.msra.mxu0 %v5306
      %6821 = vmatprep.subr.bf16.mxu0 %v5291
      %6822 = vmatpush2.bf16.msra.mxu0 %v5290
      %6823 = vmatprep.subr.bf16.mxu0 %v5275
      %6824 = vmatpush2.bf16.msra.mxu0 %v5274
      %6825 = vmatprep.mubr.bf16.mxu0 %v1295
      %6826 = vmatmul.mubr.bf16.gmra.mxu0 %v1293
      %v6827 = vpop.f32.mrf.mxu0
      %v6828 = vadd.f32 %v6787, %v6827
      %v6829 = vpop.f32.mrf.mxu0
      %v6830 = vadd.f32 %v6789, %v6829
      %v6831 = vpop.f32.mrf.mxu0
      %v6832 = vpop.f32.mrf.mxu0
      %6833 = vdwg.mxu0
      %6834 = vmatprep.subr.bf16.mxu0 %v4493
      %6835 = vmatpush1.bf16.msra.mxu0 %v4492
      %6836 = vmatprep.subr.bf16.mxu0 %v4477
      %6837 = vmatpush1.bf16.msra.mxu0 %v4476
      %6838 = vmatprep.subr.bf16.mxu0 %v4461
      %6839 = vmatpush1.bf16.msra.mxu0 %v4460
      %6840 = vmatprep.subr.bf16.mxu0 %v4445
      %6841 = vmatpush1.bf16.msra.mxu0 %v4444
      %6842 = vmatprep.subr.bf16.mxu0 %v4429
      %6843 = vmatpush1.bf16.msra.mxu0 %v4428
      %6844 = vmatprep.subr.bf16.mxu0 %v4413
      %6845 = vmatpush1.bf16.msra.mxu0 %v4412
      %6846 = vmatprep.subr.bf16.mxu0 %v4397
      %6847 = vmatpush1.bf16.msra.mxu0 %v4396
      %6848 = vmatprep.subr.bf16.mxu0 %v4381
      %6849 = vmatpush1.bf16.msra.mxu0 %v4380
      %6850 = vmatprep.subr.bf16.mxu0 %v4621
      %6851 = vmatpush2.bf16.msra.mxu0 %v4620
      %6852 = vmatprep.subr.bf16.mxu0 %v4605
      %6853 = vmatpush2.bf16.msra.mxu0 %v4604
      %6854 = vmatprep.subr.bf16.mxu0 %v4589
      %6855 = vmatpush2.bf16.msra.mxu0 %v4588
      %6856 = vmatprep.subr.bf16.mxu0 %v4573
      %6857 = vmatpush2.bf16.msra.mxu0 %v4572
      %6858 = vmatprep.subr.bf16.mxu0 %v4557
      %6859 = vmatpush2.bf16.msra.mxu0 %v4556
      %6860 = vmatprep.subr.bf16.mxu0 %v4541
      %6861 = vmatpush2.bf16.msra.mxu0 %v4540
      %6862 = vmatprep.subr.bf16.mxu0 %v4525
      %6863 = vmatpush2.bf16.msra.mxu0 %v4524
      %6864 = vmatprep.subr.bf16.mxu0 %v4509
      %6865 = vmatpush2.bf16.msra.mxu0 %v4508
      %6866 = vmatprep.mubr.bf16.mxu0 %v1284
      %6867 = vmatmul.mubr.bf16.gmra.mxu0 %v1270
      %v6868 = vpop.f32.mrf.mxu0
      %v6869 = vadd.f32 %v6445, %v6868
      %v6870 = vpop.f32.mrf.mxu0
      %v6871 = vadd.f32 %v6449, %v6870
      %v6872 = vpop.f32.mrf.mxu0
      %v6873 = vpop.f32.mrf.mxu0
      %6874 = vdwg.mxu0
      %6875 = vmatprep.subr.bf16.mxu0 %v4749
      %6876 = vmatpush1.bf16.msra.mxu0 %v4748
      %6877 = vmatprep.subr.bf16.mxu0 %v4733
      %6878 = vmatpush1.bf16.msra.mxu0 %v4732
      %6879 = vmatprep.subr.bf16.mxu0 %v4717
      %6880 = vmatpush1.bf16.msra.mxu0 %v4716
      %6881 = vmatprep.subr.bf16.mxu0 %v4701
      %6882 = vmatpush1.bf16.msra.mxu0 %v4700
      %6883 = vmatprep.subr.bf16.mxu0 %v4685
      %6884 = vmatpush1.bf16.msra.mxu0 %v4684
      %6885 = vmatprep.subr.bf16.mxu0 %v4669
      %6886 = vmatpush1.bf16.msra.mxu0 %v4668
      %6887 = vmatprep.subr.bf16.mxu0 %v4653
      %6888 = vmatpush1.bf16.msra.mxu0 %v4652
      %6889 = vmatprep.subr.bf16.mxu0 %v4637
      %6890 = vmatpush1.bf16.msra.mxu0 %v4636
      %6891 = vmatprep.subr.bf16.mxu0 %v4877
      %6892 = vmatpush2.bf16.msra.mxu0 %v4876
      %6893 = vmatprep.subr.bf16.mxu0 %v4861
      %6894 = vmatpush2.bf16.msra.mxu0 %v4860
      %6895 = vmatprep.subr.bf16.mxu0 %v4845
      %6896 = vmatpush2.bf16.msra.mxu0 %v4844
      %6897 = vmatprep.subr.bf16.mxu0 %v4829
      %6898 = vmatpush2.bf16.msra.mxu0 %v4828
      %6899 = vmatprep.subr.bf16.mxu0 %v4813
      %6900 = vmatpush2.bf16.msra.mxu0 %v4812
      %6901 = vmatprep.subr.bf16.mxu0 %v4797
      %6902 = vmatpush2.bf16.msra.mxu0 %v4796
      %6903 = vmatprep.subr.bf16.mxu0 %v4781
      %6904 = vmatpush2.bf16.msra.mxu0 %v4780
      %6905 = vmatprep.subr.bf16.mxu0 %v4765
      %6906 = vmatpush2.bf16.msra.mxu0 %v4764
      %6907 = vmatprep.mubr.bf16.mxu0 %v1294
      %6908 = vmatmul.mubr.bf16.gmra.mxu0 %v1292
      %v6909 = vpop.f32.mrf.mxu0
      %v6910 = vadd.f32 %v6869, %v6909
      %v6911 = vpop.f32.mrf.mxu0
      %v6912 = vadd.f32 %v6871, %v6911
      %v6913 = vpop.f32.mrf.mxu0
      %v6914 = vpop.f32.mrf.mxu0
      %6915 = vdwg.mxu0
      %6916 = vmatprep.subr.bf16.mxu0 %v5005
      %6917 = vmatpush1.bf16.msra.mxu0 %v5004
      %6918 = vmatprep.subr.bf16.mxu0 %v4989
      %6919 = vmatpush1.bf16.msra.mxu0 %v4988
      %6920 = vmatprep.subr.bf16.mxu0 %v4973
      %6921 = vmatpush1.bf16.msra.mxu0 %v4972
      %6922 = vmatprep.subr.bf16.mxu0 %v4957
      %6923 = vmatpush1.bf16.msra.mxu0 %v4956
      %6924 = vmatprep.subr.bf16.mxu0 %v4941
      %6925 = vmatpush1.bf16.msra.mxu0 %v4940
      %6926 = vmatprep.subr.bf16.mxu0 %v4925
      %6927 = vmatpush1.bf16.msra.mxu0 %v4924
      %6928 = vmatprep.subr.bf16.mxu0 %v4909
      %6929 = vmatpush1.bf16.msra.mxu0 %v4908
      %6930 = vmatprep.subr.bf16.mxu0 %v4893
      %6931 = vmatpush1.bf16.msra.mxu0 %v4892
      %6932 = vmatprep.subr.bf16.mxu0 %v5133
      %6933 = vmatpush2.bf16.msra.mxu0 %v5132
      %6934 = vmatprep.subr.bf16.mxu0 %v5117
      %6935 = vmatpush2.bf16.msra.mxu0 %v5116
      %6936 = vmatprep.subr.bf16.mxu0 %v5101
      %6937 = vmatpush2.bf16.msra.mxu0 %v5100
      %6938 = vmatprep.subr.bf16.mxu0 %v5085
      %6939 = vmatpush2.bf16.msra.mxu0 %v5084
      %6940 = vmatprep.subr.bf16.mxu0 %v5069
      %6941 = vmatpush2.bf16.msra.mxu0 %v5068
      %6942 = vmatprep.subr.bf16.mxu0 %v5053
      %6943 = vmatpush2.bf16.msra.mxu0 %v5052
      %6944 = vmatprep.subr.bf16.mxu0 %v5037
      %6945 = vmatpush2.bf16.msra.mxu0 %v5036
      %6946 = vmatprep.subr.bf16.mxu0 %v5021
      %6947 = vmatpush2.bf16.msra.mxu0 %v5020
      %6948 = vmatprep.mubr.bf16.mxu0 %v1291
      %6949 = vmatmul.mubr.bf16.gmra.mxu0 %v1277
      %v6950 = vpop.f32.mrf.mxu0
      %v6951 = vadd.f32 %v6910, %v6950
      %v6952 = vpop.f32.mrf.mxu0
      %v6953 = vadd.f32 %v6912, %v6952
      %v6954 = vpop.f32.mrf.mxu0
      %v6955 = vpop.f32.mrf.mxu0
      %6956 = vdwg.mxu0
      %6957 = vmatprep.subr.bf16.mxu0 %v5261
      %6958 = vmatpush1.bf16.msra.mxu0 %v5260
      %6959 = vmatprep.subr.bf16.mxu0 %v5245
      %6960 = vmatpush1.bf16.msra.mxu0 %v5244
      %6961 = vmatprep.subr.bf16.mxu0 %v5229
      %6962 = vmatpush1.bf16.msra.mxu0 %v5228
      %6963 = vmatprep.subr.bf16.mxu0 %v5213
      %6964 = vmatpush1.bf16.msra.mxu0 %v5212
      %6965 = vmatprep.subr.bf16.mxu0 %v5197
      %6966 = vmatpush1.bf16.msra.mxu0 %v5196
      %6967 = vmatprep.subr.bf16.mxu0 %v5181
      %6968 = vmatpush1.bf16.msra.mxu0 %v5180
      %6969 = vmatprep.subr.bf16.mxu0 %v5165
      %6970 = vmatpush1.bf16.msra.mxu0 %v5164
      %6971 = vmatprep.subr.bf16.mxu0 %v5149
      %6972 = vmatpush1.bf16.msra.mxu0 %v5148
      %6973 = vmatprep.subr.bf16.mxu0 %v5389
      %6974 = vmatpush2.bf16.msra.mxu0 %v5388
      %6975 = vmatprep.subr.bf16.mxu0 %v5373
      %6976 = vmatpush2.bf16.msra.mxu0 %v5372
      %6977 = vmatprep.subr.bf16.mxu0 %v5357
      %6978 = vmatpush2.bf16.msra.mxu0 %v5356
      %6979 = vmatprep.subr.bf16.mxu0 %v5341
      %6980 = vmatpush2.bf16.msra.mxu0 %v5340
      %6981 = vmatprep.subr.bf16.mxu0 %v5325
      %6982 = vmatpush2.bf16.msra.mxu0 %v5324
      %6983 = vmatprep.subr.bf16.mxu0 %v5309
      %6984 = vmatpush2.bf16.msra.mxu0 %v5308
      %6985 = vmatprep.subr.bf16.mxu0 %v5293
      %6986 = vmatpush2.bf16.msra.mxu0 %v5292
      %6987 = vmatprep.subr.bf16.mxu0 %v5277
      %6988 = vmatpush2.bf16.msra.mxu0 %v5276
      %6989 = vmatprep.mubr.bf16.mxu0 %v1295
      %6990 = vmatmul.mubr.bf16.gmra.mxu0 %v1293
      %v6991 = vpop.f32.mrf.mxu0
      %v6992 = vadd.f32 %v6951, %v6991
      %v6993 = vpop.f32.mrf.mxu0
      %v6994 = vadd.f32 %v6953, %v6993
      %v6995 = vpop.f32.mrf.mxu0
      %v6996 = vpop.f32.mrf.mxu0
      %6997 = vdwg.mxu0
      %6998 = vmatprep.subr.bf16.mxu0 %v4495
      %6999 = vmatpush1.bf16.msra.mxu0 %v4494
      %7000 = vmatprep.subr.bf16.mxu0 %v4479
      %7001 = vmatpush1.bf16.msra.mxu0 %v4478
      %7002 = vmatprep.subr.bf16.mxu0 %v4463
      %7003 = vmatpush1.bf16.msra.mxu0 %v4462
      %7004 = vmatprep.subr.bf16.mxu0 %v4447
      %7005 = vmatpush1.bf16.msra.mxu0 %v4446
      %7006 = vmatprep.subr.bf16.mxu0 %v4431
      %7007 = vmatpush1.bf16.msra.mxu0 %v4430
      %7008 = vmatprep.subr.bf16.mxu0 %v4415
      %7009 = vmatpush1.bf16.msra.mxu0 %v4414
      %7010 = vmatprep.subr.bf16.mxu0 %v4399
      %7011 = vmatpush1.bf16.msra.mxu0 %v4398
      %7012 = vmatprep.subr.bf16.mxu0 %v4383
      %7013 = vmatpush1.bf16.msra.mxu0 %v4382
      %7014 = vmatprep.subr.bf16.mxu0 %v4623
      %7015 = vmatpush2.bf16.msra.mxu0 %v4622
      %7016 = vmatprep.subr.bf16.mxu0 %v4607
      %7017 = vmatpush2.bf16.msra.mxu0 %v4606
      %7018 = vmatprep.subr.bf16.mxu0 %v4591
      %7019 = vmatpush2.bf16.msra.mxu0 %v4590
      %7020 = vmatprep.subr.bf16.mxu0 %v4575
      %7021 = vmatpush2.bf16.msra.mxu0 %v4574
      %7022 = vmatprep.subr.bf16.mxu0 %v4559
      %7023 = vmatpush2.bf16.msra.mxu0 %v4558
      %7024 = vmatprep.subr.bf16.mxu0 %v4543
      %7025 = vmatpush2.bf16.msra.mxu0 %v4542
      %7026 = vmatprep.subr.bf16.mxu0 %v4527
      %7027 = vmatpush2.bf16.msra.mxu0 %v4526
      %7028 = vmatprep.subr.bf16.mxu0 %v4511
      %7029 = vmatpush2.bf16.msra.mxu0 %v4510
      %7030 = vmatprep.mubr.bf16.mxu0 %v1284
      %7031 = vmatmul.mubr.bf16.gmra.mxu0 %v1270
      %v7032 = vpop.f32.mrf.mxu0
      %v7033 = vadd.f32 %v6453, %v7032
      %v7034 = vpop.f32.mrf.mxu0
      %v7035 = vadd.f32 %v6457, %v7034
      %v7036 = vpop.f32.mrf.mxu0
      %v7037 = vpop.f32.mrf.mxu0
      %7038 = vdwg.mxu0
      %7039 = vmatprep.subr.bf16.mxu0 %v4751
      %7040 = vmatpush1.bf16.msra.mxu0 %v4750
      %7041 = vmatprep.subr.bf16.mxu0 %v4735
      %7042 = vmatpush1.bf16.msra.mxu0 %v4734
      %7043 = vmatprep.subr.bf16.mxu0 %v4719
      %7044 = vmatpush1.bf16.msra.mxu0 %v4718
      %7045 = vmatprep.subr.bf16.mxu0 %v4703
      %7046 = vmatpush1.bf16.msra.mxu0 %v4702
      %7047 = vmatprep.subr.bf16.mxu0 %v4687
      %7048 = vmatpush1.bf16.msra.mxu0 %v4686
      %7049 = vmatprep.subr.bf16.mxu0 %v4671
      %7050 = vmatpush1.bf16.msra.mxu0 %v4670
      %7051 = vmatprep.subr.bf16.mxu0 %v4655
      %7052 = vmatpush1.bf16.msra.mxu0 %v4654
      %7053 = vmatprep.subr.bf16.mxu0 %v4639
      %7054 = vmatpush1.bf16.msra.mxu0 %v4638
      %7055 = vmatprep.subr.bf16.mxu0 %v4879
      %7056 = vmatpush2.bf16.msra.mxu0 %v4878
      %7057 = vmatprep.subr.bf16.mxu0 %v4863
      %7058 = vmatpush2.bf16.msra.mxu0 %v4862
      %7059 = vmatprep.subr.bf16.mxu0 %v4847
      %7060 = vmatpush2.bf16.msra.mxu0 %v4846
      %7061 = vmatprep.subr.bf16.mxu0 %v4831
      %7062 = vmatpush2.bf16.msra.mxu0 %v4830
      %7063 = vmatprep.subr.bf16.mxu0 %v4815
      %7064 = vmatpush2.bf16.msra.mxu0 %v4814
      %7065 = vmatprep.subr.bf16.mxu0 %v4799
      %7066 = vmatpush2.bf16.msra.mxu0 %v4798
      %7067 = vmatprep.subr.bf16.mxu0 %v4783
      %7068 = vmatpush2.bf16.msra.mxu0 %v4782
      %7069 = vmatprep.subr.bf16.mxu0 %v4767
      %7070 = vmatpush2.bf16.msra.mxu0 %v4766
      %7071 = vmatprep.mubr.bf16.mxu0 %v1294
      %7072 = vmatmul.mubr.bf16.gmra.mxu0 %v1292
      %v7073 = vpop.f32.mrf.mxu0
      %v7074 = vadd.f32 %v7033, %v7073
      %v7075 = vpop.f32.mrf.mxu0
      %v7076 = vadd.f32 %v7035, %v7075
      %v7077 = vpop.f32.mrf.mxu0
      %v7078 = vpop.f32.mrf.mxu0
      %7079 = vdwg.mxu0
      %7080 = vmatprep.subr.bf16.mxu0 %v5007
      %7081 = vmatpush1.bf16.msra.mxu0 %v5006
      %7082 = vmatprep.subr.bf16.mxu0 %v4991
      %7083 = vmatpush1.bf16.msra.mxu0 %v4990
      %7084 = vmatprep.subr.bf16.mxu0 %v4975
      %7085 = vmatpush1.bf16.msra.mxu0 %v4974
      %7086 = vmatprep.subr.bf16.mxu0 %v4959
      %7087 = vmatpush1.bf16.msra.mxu0 %v4958
      %7088 = vmatprep.subr.bf16.mxu0 %v4943
      %7089 = vmatpush1.bf16.msra.mxu0 %v4942
      %7090 = vmatprep.subr.bf16.mxu0 %v4927
      %7091 = vmatpush1.bf16.msra.mxu0 %v4926
      %7092 = vmatprep.subr.bf16.mxu0 %v4911
      %7093 = vmatpush1.bf16.msra.mxu0 %v4910
      %7094 = vmatprep.subr.bf16.mxu0 %v4895
      %7095 = vmatpush1.bf16.msra.mxu0 %v4894
      %7096 = vmatprep.subr.bf16.mxu0 %v5135
      %7097 = vmatpush2.bf16.msra.mxu0 %v5134
      %7098 = vmatprep.subr.bf16.mxu0 %v5119
      %7099 = vmatpush2.bf16.msra.mxu0 %v5118
      %7100 = vmatprep.subr.bf16.mxu0 %v5103
      %7101 = vmatpush2.bf16.msra.mxu0 %v5102
      %7102 = vmatprep.subr.bf16.mxu0 %v5087
      %7103 = vmatpush2.bf16.msra.mxu0 %v5086
      %7104 = vmatprep.subr.bf16.mxu0 %v5071
      %7105 = vmatpush2.bf16.msra.mxu0 %v5070
      %7106 = vmatprep.subr.bf16.mxu0 %v5055
      %7107 = vmatpush2.bf16.msra.mxu0 %v5054
      %7108 = vmatprep.subr.bf16.mxu0 %v5039
      %7109 = vmatpush2.bf16.msra.mxu0 %v5038
      %7110 = vmatprep.subr.bf16.mxu0 %v5023
      %7111 = vmatpush2.bf16.msra.mxu0 %v5022
      %7112 = vmatprep.mubr.bf16.mxu0 %v1291
      %7113 = vmatmul.mubr.bf16.gmra.mxu0 %v1277
      %v7114 = vpop.f32.mrf.mxu0
      %v7115 = vadd.f32 %v7074, %v7114
      %v7116 = vpop.f32.mrf.mxu0
      %v7117 = vadd.f32 %v7076, %v7116
      %v7118 = vpop.f32.mrf.mxu0
      %v7119 = vpop.f32.mrf.mxu0
      %7120 = vdwg.mxu0
      %7121 = vmatprep.subr.bf16.mxu0 %v5263
      %7122 = vmatpush1.bf16.msra.mxu0 %v5262
      %7123 = vmatprep.subr.bf16.mxu0 %v5247
      %7124 = vmatpush1.bf16.msra.mxu0 %v5246
      %7125 = vmatprep.subr.bf16.mxu0 %v5231
      %7126 = vmatpush1.bf16.msra.mxu0 %v5230
      %7127 = vmatprep.subr.bf16.mxu0 %v5215
      %7128 = vmatpush1.bf16.msra.mxu0 %v5214
      %7129 = vmatprep.subr.bf16.mxu0 %v5199
      %7130 = vmatpush1.bf16.msra.mxu0 %v5198
      %7131 = vmatprep.subr.bf16.mxu0 %v5183
      %7132 = vmatpush1.bf16.msra.mxu0 %v5182
      %7133 = vmatprep.subr.bf16.mxu0 %v5167
      %7134 = vmatpush1.bf16.msra.mxu0 %v5166
      %7135 = vmatprep.subr.bf16.mxu0 %v5151
      %7136 = vmatpush1.bf16.msra.mxu0 %v5150
      %7137 = vmatprep.subr.bf16.mxu0 %v5391
      %7138 = vmatpush2.bf16.msra.mxu0 %v5390
      %7139 = vmatprep.subr.bf16.mxu0 %v5375
      %7140 = vmatpush2.bf16.msra.mxu0 %v5374
      %7141 = vmatprep.subr.bf16.mxu0 %v5359
      %7142 = vmatpush2.bf16.msra.mxu0 %v5358
      %7143 = vmatprep.subr.bf16.mxu0 %v5343
      %7144 = vmatpush2.bf16.msra.mxu0 %v5342
      %7145 = vmatprep.subr.bf16.mxu0 %v5327
      %7146 = vmatpush2.bf16.msra.mxu0 %v5326
      %7147 = vmatprep.subr.bf16.mxu0 %v5311
      %7148 = vmatpush2.bf16.msra.mxu0 %v5310
      %7149 = vmatprep.subr.bf16.mxu0 %v5295
      %7150 = vmatpush2.bf16.msra.mxu0 %v5294
      %7151 = vmatprep.subr.bf16.mxu0 %v5279
      %7152 = vmatpush2.bf16.msra.mxu0 %v5278
      %7153 = vmatprep.mubr.bf16.mxu0 %v1295
      %7154 = vmatmul.mubr.bf16.gmra.mxu0 %v1293
      %v7155 = vpop.f32.mrf.mxu0
      %v7156 = vadd.f32 %v7115, %v7155
      %v7157 = vpop.f32.mrf.mxu0
      %v7158 = vadd.f32 %v7117, %v7157
      %v7159 = vpop.f32.mrf.mxu0
      %v7160 = vpop.f32.mrf.mxu0
      %7161 = vdwg.mxu0
      %7162 = vmatprep.subr.bf16.mxu0 %v4497
      %7163 = vmatpush1.bf16.msra.mxu0 %v4496
      %7164 = vmatprep.subr.bf16.mxu0 %v4481
      %7165 = vmatpush1.bf16.msra.mxu0 %v4480
      %7166 = vmatprep.subr.bf16.mxu0 %v4465
      %7167 = vmatpush1.bf16.msra.mxu0 %v4464
      %7168 = vmatprep.subr.bf16.mxu0 %v4449
      %7169 = vmatpush1.bf16.msra.mxu0 %v4448
      %7170 = vmatprep.subr.bf16.mxu0 %v4433
      %7171 = vmatpush1.bf16.msra.mxu0 %v4432
      %7172 = vmatprep.subr.bf16.mxu0 %v4417
      %7173 = vmatpush1.bf16.msra.mxu0 %v4416
      %7174 = vmatprep.subr.bf16.mxu0 %v4401
      %7175 = vmatpush1.bf16.msra.mxu0 %v4400
      %7176 = vmatprep.subr.bf16.mxu0 %v4385
      %7177 = vmatpush1.bf16.msra.mxu0 %v4384
      %7178 = vmatprep.subr.bf16.mxu0 %v4625
      %7179 = vmatpush2.bf16.msra.mxu0 %v4624
      %7180 = vmatprep.subr.bf16.mxu0 %v4609
      %7181 = vmatpush2.bf16.msra.mxu0 %v4608
      %7182 = vmatprep.subr.bf16.mxu0 %v4593
      %7183 = vmatpush2.bf16.msra.mxu0 %v4592
      %7184 = vmatprep.subr.bf16.mxu0 %v4577
      %7185 = vmatpush2.bf16.msra.mxu0 %v4576
      %7186 = vmatprep.subr.bf16.mxu0 %v4561
      %7187 = vmatpush2.bf16.msra.mxu0 %v4560
      %7188 = vmatprep.subr.bf16.mxu0 %v4545
      %7189 = vmatpush2.bf16.msra.mxu0 %v4544
      %7190 = vmatprep.subr.bf16.mxu0 %v4529
      %7191 = vmatpush2.bf16.msra.mxu0 %v4528
      %7192 = vmatprep.subr.bf16.mxu0 %v4513
      %7193 = vmatpush2.bf16.msra.mxu0 %v4512
      %7194 = vmatprep.mubr.bf16.mxu0 %v1284
      %7195 = vmatmul.mubr.bf16.gmra.mxu0 %v1270
      %v7196 = vpop.f32.mrf.mxu0
      %v7197 = vadd.f32 %v6461, %v7196
      %v7198 = vpop.f32.mrf.mxu0
      %v7199 = vadd.f32 %v6465, %v7198
      %v7200 = vpop.f32.mrf.mxu0
      %v7201 = vpop.f32.mrf.mxu0
      %7202 = vdwg.mxu0
      %7203 = vmatprep.subr.bf16.mxu0 %v4753
      %7204 = vmatpush1.bf16.msra.mxu0 %v4752
      %7205 = vmatprep.subr.bf16.mxu0 %v4737
      %7206 = vmatpush1.bf16.msra.mxu0 %v4736
      %7207 = vmatprep.subr.bf16.mxu0 %v4721
      %7208 = vmatpush1.bf16.msra.mxu0 %v4720
      %7209 = vmatprep.subr.bf16.mxu0 %v4705
      %7210 = vmatpush1.bf16.msra.mxu0 %v4704
      %7211 = vmatprep.subr.bf16.mxu0 %v4689
      %7212 = vmatpush1.bf16.msra.mxu0 %v4688
      %7213 = vmatprep.subr.bf16.mxu0 %v4673
      %7214 = vmatpush1.bf16.msra.mxu0 %v4672
      %7215 = vmatprep.subr.bf16.mxu0 %v4657
      %7216 = vmatpush1.bf16.msra.mxu0 %v4656
      %7217 = vmatprep.subr.bf16.mxu0 %v4641
      %7218 = vmatpush1.bf16.msra.mxu0 %v4640
      %7219 = vmatprep.subr.bf16.mxu0 %v4881
      %7220 = vmatpush2.bf16.msra.mxu0 %v4880
      %7221 = vmatprep.subr.bf16.mxu0 %v4865
      %7222 = vmatpush2.bf16.msra.mxu0 %v4864
      %7223 = vmatprep.subr.bf16.mxu0 %v4849
      %7224 = vmatpush2.bf16.msra.mxu0 %v4848
      %7225 = vmatprep.subr.bf16.mxu0 %v4833
      %7226 = vmatpush2.bf16.msra.mxu0 %v4832
      %7227 = vmatprep.subr.bf16.mxu0 %v4817
      %7228 = vmatpush2.bf16.msra.mxu0 %v4816
      %7229 = vmatprep.subr.bf16.mxu0 %v4801
      %7230 = vmatpush2.bf16.msra.mxu0 %v4800
      %7231 = vmatprep.subr.bf16.mxu0 %v4785
      %7232 = vmatpush2.bf16.msra.mxu0 %v4784
      %7233 = vmatprep.subr.bf16.mxu0 %v4769
      %7234 = vmatpush2.bf16.msra.mxu0 %v4768
      %7235 = vmatprep.mubr.bf16.mxu0 %v1294
      %7236 = vmatmul.mubr.bf16.gmra.mxu0 %v1292
      %v7237 = vpop.f32.mrf.mxu0
      %v7238 = vadd.f32 %v7197, %v7237
      %v7239 = vpop.f32.mrf.mxu0
      %v7240 = vadd.f32 %v7199, %v7239
      %v7241 = vpop.f32.mrf.mxu0
      %v7242 = vpop.f32.mrf.mxu0
      %7243 = vdwg.mxu0
      %7244 = vmatprep.subr.bf16.mxu0 %v5009
      %7245 = vmatpush1.bf16.msra.mxu0 %v5008
      %7246 = vmatprep.subr.bf16.mxu0 %v4993
      %7247 = vmatpush1.bf16.msra.mxu0 %v4992
      %7248 = vmatprep.subr.bf16.mxu0 %v4977
      %7249 = vmatpush1.bf16.msra.mxu0 %v4976
      %7250 = vmatprep.subr.bf16.mxu0 %v4961
      %7251 = vmatpush1.bf16.msra.mxu0 %v4960
      %7252 = vmatprep.subr.bf16.mxu0 %v4945
      %7253 = vmatpush1.bf16.msra.mxu0 %v4944
      %7254 = vmatprep.subr.bf16.mxu0 %v4929
      %7255 = vmatpush1.bf16.msra.mxu0 %v4928
      %7256 = vmatprep.subr.bf16.mxu0 %v4913
      %7257 = vmatpush1.bf16.msra.mxu0 %v4912
      %7258 = vmatprep.subr.bf16.mxu0 %v4897
      %7259 = vmatpush1.bf16.msra.mxu0 %v4896
      %7260 = vmatprep.subr.bf16.mxu0 %v5137
      %7261 = vmatpush2.bf16.msra.mxu0 %v5136
      %7262 = vmatprep.subr.bf16.mxu0 %v5121
      %7263 = vmatpush2.bf16.msra.mxu0 %v5120
      %7264 = vmatprep.subr.bf16.mxu0 %v5105
      %7265 = vmatpush2.bf16.msra.mxu0 %v5104
      %7266 = vmatprep.subr.bf16.mxu0 %v5089
      %7267 = vmatpush2.bf16.msra.mxu0 %v5088
      %7268 = vmatprep.subr.bf16.mxu0 %v5073
      %7269 = vmatpush2.bf16.msra.mxu0 %v5072
      %7270 = vmatprep.subr.bf16.mxu0 %v5057
      %7271 = vmatpush2.bf16.msra.mxu0 %v5056
      %7272 = vmatprep.subr.bf16.mxu0 %v5041
      %7273 = vmatpush2.bf16.msra.mxu0 %v5040
      %7274 = vmatprep.subr.bf16.mxu0 %v5025
      %7275 = vmatpush2.bf16.msra.mxu0 %v5024
      %7276 = vmatprep.mubr.bf16.mxu0 %v1291
      %7277 = vmatmul.mubr.bf16.gmra.mxu0 %v1277
      %v7278 = vpop.f32.mrf.mxu0
      %v7279 = vadd.f32 %v7238, %v7278
      %v7280 = vpop.f32.mrf.mxu0
      %v7281 = vadd.f32 %v7240, %v7280
      %v7282 = vpop.f32.mrf.mxu0
      %v7283 = vpop.f32.mrf.mxu0
      %7284 = vdwg.mxu0
      %7285 = vmatprep.subr.bf16.mxu0 %v5265
      %7286 = vmatpush1.bf16.msra.mxu0 %v5264
      %7287 = vmatprep.subr.bf16.mxu0 %v5249
      %7288 = vmatpush1.bf16.msra.mxu0 %v5248
      %7289 = vmatprep.subr.bf16.mxu0 %v5233
      %7290 = vmatpush1.bf16.msra.mxu0 %v5232
      %7291 = vmatprep.subr.bf16.mxu0 %v5217
      %7292 = vmatpush1.bf16.msra.mxu0 %v5216
      %7293 = vmatprep.subr.bf16.mxu0 %v5201
      %7294 = vmatpush1.bf16.msra.mxu0 %v5200
      %7295 = vmatprep.subr.bf16.mxu0 %v5185
      %7296 = vmatpush1.bf16.msra.mxu0 %v5184
      %7297 = vmatprep.subr.bf16.mxu0 %v5169
      %7298 = vmatpush1.bf16.msra.mxu0 %v5168
      %7299 = vmatprep.subr.bf16.mxu0 %v5153
      %7300 = vmatpush1.bf16.msra.mxu0 %v5152
      %7301 = vmatprep.subr.bf16.mxu0 %v5393
      %7302 = vmatpush2.bf16.msra.mxu0 %v5392
      %7303 = vmatprep.subr.bf16.mxu0 %v5377
      %7304 = vmatpush2.bf16.msra.mxu0 %v5376
      %7305 = vmatprep.subr.bf16.mxu0 %v5361
      %7306 = vmatpush2.bf16.msra.mxu0 %v5360
      %7307 = vmatprep.subr.bf16.mxu0 %v5345
      %7308 = vmatpush2.bf16.msra.mxu0 %v5344
      %7309 = vmatprep.subr.bf16.mxu0 %v5329
      %7310 = vmatpush2.bf16.msra.mxu0 %v5328
      %7311 = vmatprep.subr.bf16.mxu0 %v5313
      %7312 = vmatpush2.bf16.msra.mxu0 %v5312
      %7313 = vmatprep.subr.bf16.mxu0 %v5297
      %7314 = vmatpush2.bf16.msra.mxu0 %v5296
      %7315 = vmatprep.subr.bf16.mxu0 %v5281
      %7316 = vmatpush2.bf16.msra.mxu0 %v5280
      %7317 = vmatprep.mubr.bf16.mxu0 %v1295
      %7318 = vmatmul.mubr.bf16.gmra.mxu0 %v1293
      %v7319 = vpop.f32.mrf.mxu0
      %v7320 = vadd.f32 %v7279, %v7319
      %v7321 = vpop.f32.mrf.mxu0
      %v7322 = vadd.f32 %v7281, %v7321
      %v7323 = vpop.f32.mrf.mxu0
      %v7324 = vpop.f32.mrf.mxu0
      %7325 = vdwg.mxu0
      %7326 = vmatprep.subr.bf16.mxu0 %v4499
      %7327 = vmatpush1.bf16.msra.mxu0 %v4498
      %7328 = vmatprep.subr.bf16.mxu0 %v4483
      %7329 = vmatpush1.bf16.msra.mxu0 %v4482
      %7330 = vmatprep.subr.bf16.mxu0 %v4467
      %7331 = vmatpush1.bf16.msra.mxu0 %v4466
      %7332 = vmatprep.subr.bf16.mxu0 %v4451
      %7333 = vmatpush1.bf16.msra.mxu0 %v4450
      %7334 = vmatprep.subr.bf16.mxu0 %v4435
      %7335 = vmatpush1.bf16.msra.mxu0 %v4434
      %7336 = vmatprep.subr.bf16.mxu0 %v4419
      %7337 = vmatpush1.bf16.msra.mxu0 %v4418
      %7338 = vmatprep.subr.bf16.mxu0 %v4403
      %7339 = vmatpush1.bf16.msra.mxu0 %v4402
      %7340 = vmatprep.subr.bf16.mxu0 %v4387
      %7341 = vmatpush1.bf16.msra.mxu0 %v4386
      %7342 = vmatprep.subr.bf16.mxu0 %v4627
      %7343 = vmatpush2.bf16.msra.mxu0 %v4626
      %7344 = vmatprep.subr.bf16.mxu0 %v4611
      %7345 = vmatpush2.bf16.msra.mxu0 %v4610
      %7346 = vmatprep.subr.bf16.mxu0 %v4595
      %7347 = vmatpush2.bf16.msra.mxu0 %v4594
      %7348 = vmatprep.subr.bf16.mxu0 %v4579
      %7349 = vmatpush2.bf16.msra.mxu0 %v4578
      %7350 = vmatprep.subr.bf16.mxu0 %v4563
      %7351 = vmatpush2.bf16.msra.mxu0 %v4562
      %7352 = vmatprep.subr.bf16.mxu0 %v4547
      %7353 = vmatpush2.bf16.msra.mxu0 %v4546
      %7354 = vmatprep.subr.bf16.mxu0 %v4531
      %7355 = vmatpush2.bf16.msra.mxu0 %v4530
      %7356 = vmatprep.subr.bf16.mxu0 %v4515
      %7357 = vmatpush2.bf16.msra.mxu0 %v4514
      %7358 = vmatprep.mubr.bf16.mxu0 %v1284
      %7359 = vmatmul.mubr.bf16.gmra.mxu0 %v1270
      %v7360 = vpop.f32.mrf.mxu0
      %v7361 = vadd.f32 %v6469, %v7360
      %v7362 = vpop.f32.mrf.mxu0
      %v7363 = vadd.f32 %v6473, %v7362
      %v7364 = vpop.f32.mrf.mxu0
      %v7365 = vpop.f32.mrf.mxu0
      %7366 = vdwg.mxu0
      %7367 = vmatprep.subr.bf16.mxu0 %v4755
      %7368 = vmatpush1.bf16.msra.mxu0 %v4754
      %7369 = vmatprep.subr.bf16.mxu0 %v4739
      %7370 = vmatpush1.bf16.msra.mxu0 %v4738
      %7371 = vmatprep.subr.bf16.mxu0 %v4723
      %7372 = vmatpush1.bf16.msra.mxu0 %v4722
      %7373 = vmatprep.subr.bf16.mxu0 %v4707
      %7374 = vmatpush1.bf16.msra.mxu0 %v4706
      %7375 = vmatprep.subr.bf16.mxu0 %v4691
      %7376 = vmatpush1.bf16.msra.mxu0 %v4690
      %7377 = vmatprep.subr.bf16.mxu0 %v4675
      %7378 = vmatpush1.bf16.msra.mxu0 %v4674
      %7379 = vmatprep.subr.bf16.mxu0 %v4659
      %7380 = vmatpush1.bf16.msra.mxu0 %v4658
      %7381 = vmatprep.subr.bf16.mxu0 %v4643
      %7382 = vmatpush1.bf16.msra.mxu0 %v4642
      %7383 = vmatprep.subr.bf16.mxu0 %v4883
      %7384 = vmatpush2.bf16.msra.mxu0 %v4882
      %7385 = vmatprep.subr.bf16.mxu0 %v4867
      %7386 = vmatpush2.bf16.msra.mxu0 %v4866
      %7387 = vmatprep.subr.bf16.mxu0 %v4851
      %7388 = vmatpush2.bf16.msra.mxu0 %v4850
      %7389 = vmatprep.subr.bf16.mxu0 %v4835
      %7390 = vmatpush2.bf16.msra.mxu0 %v4834
      %7391 = vmatprep.subr.bf16.mxu0 %v4819
      %7392 = vmatpush2.bf16.msra.mxu0 %v4818
      %7393 = vmatprep.subr.bf16.mxu0 %v4803
      %7394 = vmatpush2.bf16.msra.mxu0 %v4802
      %7395 = vmatprep.subr.bf16.mxu0 %v4787
      %7396 = vmatpush2.bf16.msra.mxu0 %v4786
      %7397 = vmatprep.subr.bf16.mxu0 %v4771
      %7398 = vmatpush2.bf16.msra.mxu0 %v4770
      %7399 = vmatprep.mubr.bf16.mxu0 %v1294
      %7400 = vmatmul.mubr.bf16.gmra.mxu0 %v1292
      %v7401 = vpop.f32.mrf.mxu0
      %v7402 = vadd.f32 %v7361, %v7401
      %v7403 = vpop.f32.mrf.mxu0
      %v7404 = vadd.f32 %v7363, %v7403
      %v7405 = vpop.f32.mrf.mxu0
      %v7406 = vpop.f32.mrf.mxu0
      %7407 = vdwg.mxu0
      %7408 = vmatprep.subr.bf16.mxu0 %v5011
      %7409 = vmatpush1.bf16.msra.mxu0 %v5010
      %7410 = vmatprep.subr.bf16.mxu0 %v4995
      %7411 = vmatpush1.bf16.msra.mxu0 %v4994
      %7412 = vmatprep.subr.bf16.mxu0 %v4979
      %7413 = vmatpush1.bf16.msra.mxu0 %v4978
      %7414 = vmatprep.subr.bf16.mxu0 %v4963
      %7415 = vmatpush1.bf16.msra.mxu0 %v4962
      %7416 = vmatprep.subr.bf16.mxu0 %v4947
      %7417 = vmatpush1.bf16.msra.mxu0 %v4946
      %7418 = vmatprep.subr.bf16.mxu0 %v4931
      %7419 = vmatpush1.bf16.msra.mxu0 %v4930
      %7420 = vmatprep.subr.bf16.mxu0 %v4915
      %7421 = vmatpush1.bf16.msra.mxu0 %v4914
      %7422 = vmatprep.subr.bf16.mxu0 %v4899
      %7423 = vmatpush1.bf16.msra.mxu0 %v4898
      %7424 = vmatprep.subr.bf16.mxu0 %v5139
      %7425 = vmatpush2.bf16.msra.mxu0 %v5138
      %7426 = vmatprep.subr.bf16.mxu0 %v5123
      %7427 = vmatpush2.bf16.msra.mxu0 %v5122
      %7428 = vmatprep.subr.bf16.mxu0 %v5107
      %7429 = vmatpush2.bf16.msra.mxu0 %v5106
      %7430 = vmatprep.subr.bf16.mxu0 %v5091
      %7431 = vmatpush2.bf16.msra.mxu0 %v5090
      %7432 = vmatprep.subr.bf16.mxu0 %v5075
      %7433 = vmatpush2.bf16.msra.mxu0 %v5074
      %7434 = vmatprep.subr.bf16.mxu0 %v5059
      %7435 = vmatpush2.bf16.msra.mxu0 %v5058
      %7436 = vmatprep.subr.bf16.mxu0 %v5043
      %7437 = vmatpush2.bf16.msra.mxu0 %v5042
      %7438 = vmatprep.subr.bf16.mxu0 %v5027
      %7439 = vmatpush2.bf16.msra.mxu0 %v5026
      %7440 = vmatprep.mubr.bf16.mxu0 %v1291
      %7441 = vmatmul.mubr.bf16.gmra.mxu0 %v1277
      %v7442 = vpop.f32.mrf.mxu0
      %v7443 = vadd.f32 %v7402, %v7442
      %v7444 = vpop.f32.mrf.mxu0
      %v7445 = vadd.f32 %v7404, %v7444
      %v7446 = vpop.f32.mrf.mxu0
      %v7447 = vpop.f32.mrf.mxu0
      %7448 = vdwg.mxu0
      %7449 = vmatprep.subr.bf16.mxu0 %v5267
      %7450 = vmatpush1.bf16.msra.mxu0 %v5266
      %7451 = vmatprep.subr.bf16.mxu0 %v5251
      %7452 = vmatpush1.bf16.msra.mxu0 %v5250
      %7453 = vmatprep.subr.bf16.mxu0 %v5235
      %7454 = vmatpush1.bf16.msra.mxu0 %v5234
      %7455 = vmatprep.subr.bf16.mxu0 %v5219
      %7456 = vmatpush1.bf16.msra.mxu0 %v5218
      %7457 = vmatprep.subr.bf16.mxu0 %v5203
      %7458 = vmatpush1.bf16.msra.mxu0 %v5202
      %7459 = vmatprep.subr.bf16.mxu0 %v5187
      %7460 = vmatpush1.bf16.msra.mxu0 %v5186
      %7461 = vmatprep.subr.bf16.mxu0 %v5171
      %7462 = vmatpush1.bf16.msra.mxu0 %v5170
      %7463 = vmatprep.subr.bf16.mxu0 %v5155
      %7464 = vmatpush1.bf16.msra.mxu0 %v5154
      %7465 = vmatprep.subr.bf16.mxu0 %v5395
      %7466 = vmatpush2.bf16.msra.mxu0 %v5394
      %7467 = vmatprep.subr.bf16.mxu0 %v5379
      %7468 = vmatpush2.bf16.msra.mxu0 %v5378
      %7469 = vmatprep.subr.bf16.mxu0 %v5363
      %7470 = vmatpush2.bf16.msra.mxu0 %v5362
      %7471 = vmatprep.subr.bf16.mxu0 %v5347
      %7472 = vmatpush2.bf16.msra.mxu0 %v5346
      %7473 = vmatprep.subr.bf16.mxu0 %v5331
      %7474 = vmatpush2.bf16.msra.mxu0 %v5330
      %7475 = vmatprep.subr.bf16.mxu0 %v5315
      %7476 = vmatpush2.bf16.msra.mxu0 %v5314
      %7477 = vmatprep.subr.bf16.mxu0 %v5299
      %7478 = vmatpush2.bf16.msra.mxu0 %v5298
      %7479 = vmatprep.subr.bf16.mxu0 %v5283
      %7480 = vmatpush2.bf16.msra.mxu0 %v5282
      %7481 = vmatprep.mubr.bf16.mxu0 %v1295
      %7482 = vmatmul.mubr.bf16.gmra.mxu0 %v1293
      %v7483 = vpop.f32.mrf.mxu0
      %v7484 = vadd.f32 %v7443, %v7483
      %v7485 = vpop.f32.mrf.mxu0
      %v7486 = vadd.f32 %v7445, %v7485
      %v7487 = vpop.f32.mrf.mxu0
      %v7488 = vpop.f32.mrf.mxu0
      %7489 = vdwg.mxu0
      %7490 = vmatprep.subr.bf16.mxu0 %v4501
      %7491 = vmatpush1.bf16.msra.mxu0 %v4500
      %7492 = vmatprep.subr.bf16.mxu0 %v4485
      %7493 = vmatpush1.bf16.msra.mxu0 %v4484
      %7494 = vmatprep.subr.bf16.mxu0 %v4469
      %7495 = vmatpush1.bf16.msra.mxu0 %v4468
      %7496 = vmatprep.subr.bf16.mxu0 %v4453
      %7497 = vmatpush1.bf16.msra.mxu0 %v4452
      %7498 = vmatprep.subr.bf16.mxu0 %v4437
      %7499 = vmatpush1.bf16.msra.mxu0 %v4436
      %7500 = vmatprep.subr.bf16.mxu0 %v4421
      %7501 = vmatpush1.bf16.msra.mxu0 %v4420
      %7502 = vmatprep.subr.bf16.mxu0 %v4405
      %7503 = vmatpush1.bf16.msra.mxu0 %v4404
      %7504 = vmatprep.subr.bf16.mxu0 %v4389
      %7505 = vmatpush1.bf16.msra.mxu0 %v4388
      %7506 = vmatprep.subr.bf16.mxu0 %v4629
      %7507 = vmatpush2.bf16.msra.mxu0 %v4628
      %7508 = vmatprep.subr.bf16.mxu0 %v4613
      %7509 = vmatpush2.bf16.msra.mxu0 %v4612
      %7510 = vmatprep.subr.bf16.mxu0 %v4597
      %7511 = vmatpush2.bf16.msra.mxu0 %v4596
      %7512 = vmatprep.subr.bf16.mxu0 %v4581
      %7513 = vmatpush2.bf16.msra.mxu0 %v4580
      %7514 = vmatprep.subr.bf16.mxu0 %v4565
      %7515 = vmatpush2.bf16.msra.mxu0 %v4564
      %7516 = vmatprep.subr.bf16.mxu0 %v4549
      %7517 = vmatpush2.bf16.msra.mxu0 %v4548
      %7518 = vmatprep.subr.bf16.mxu0 %v4533
      %7519 = vmatpush2.bf16.msra.mxu0 %v4532
      %7520 = vmatprep.subr.bf16.mxu0 %v4517
      %7521 = vmatpush2.bf16.msra.mxu0 %v4516
      %7522 = vmatprep.mubr.bf16.mxu0 %v1284
      %7523 = vmatmul.mubr.bf16.gmra.mxu0 %v1270
      %v7524 = vpop.f32.mrf.mxu0
      %v7525 = vadd.f32 %v6477, %v7524
      %v7526 = vpop.f32.mrf.mxu0
      %v7527 = vadd.f32 %v6481, %v7526
      %v7528 = vpop.f32.mrf.mxu0
      %v7529 = vpop.f32.mrf.mxu0
      %7530 = vdwg.mxu0
      %7531 = vmatprep.subr.bf16.mxu0 %v4757
      %7532 = vmatpush1.bf16.msra.mxu0 %v4756
      %7533 = vmatprep.subr.bf16.mxu0 %v4741
      %7534 = vmatpush1.bf16.msra.mxu0 %v4740
      %7535 = vmatprep.subr.bf16.mxu0 %v4725
      %7536 = vmatpush1.bf16.msra.mxu0 %v4724
      %7537 = vmatprep.subr.bf16.mxu0 %v4709
      %7538 = vmatpush1.bf16.msra.mxu0 %v4708
      %7539 = vmatprep.subr.bf16.mxu0 %v4693
      %7540 = vmatpush1.bf16.msra.mxu0 %v4692
      %7541 = vmatprep.subr.bf16.mxu0 %v4677
      %7542 = vmatpush1.bf16.msra.mxu0 %v4676
      %7543 = vmatprep.subr.bf16.mxu0 %v4661
      %7544 = vmatpush1.bf16.msra.mxu0 %v4660
      %7545 = vmatprep.subr.bf16.mxu0 %v4645
      %7546 = vmatpush1.bf16.msra.mxu0 %v4644
      %7547 = vmatprep.subr.bf16.mxu0 %v4885
      %7548 = vmatpush2.bf16.msra.mxu0 %v4884
      %7549 = vmatprep.subr.bf16.mxu0 %v4869
      %7550 = vmatpush2.bf16.msra.mxu0 %v4868
      %7551 = vmatprep.subr.bf16.mxu0 %v4853
      %7552 = vmatpush2.bf16.msra.mxu0 %v4852
      %7553 = vmatprep.subr.bf16.mxu0 %v4837
      %7554 = vmatpush2.bf16.msra.mxu0 %v4836
      %7555 = vmatprep.subr.bf16.mxu0 %v4821
      %7556 = vmatpush2.bf16.msra.mxu0 %v4820
      %7557 = vmatprep.subr.bf16.mxu0 %v4805
      %7558 = vmatpush2.bf16.msra.mxu0 %v4804
      %7559 = vmatprep.subr.bf16.mxu0 %v4789
      %7560 = vmatpush2.bf16.msra.mxu0 %v4788
      %7561 = vmatprep.subr.bf16.mxu0 %v4773
      %7562 = vmatpush2.bf16.msra.mxu0 %v4772
      %7563 = vmatprep.mubr.bf16.mxu0 %v1294
      %7564 = vmatmul.mubr.bf16.gmra.mxu0 %v1292
      %v7565 = vpop.f32.mrf.mxu0
      %v7566 = vadd.f32 %v7525, %v7565
      %v7567 = vpop.f32.mrf.mxu0
      %v7568 = vadd.f32 %v7527, %v7567
      %v7569 = vpop.f32.mrf.mxu0
      %v7570 = vpop.f32.mrf.mxu0
      %7571 = vdwg.mxu0
      %7572 = vmatprep.subr.bf16.mxu0 %v5013
      %7573 = vmatpush1.bf16.msra.mxu0 %v5012
      %7574 = vmatprep.subr.bf16.mxu0 %v4997
      %7575 = vmatpush1.bf16.msra.mxu0 %v4996
      %7576 = vmatprep.subr.bf16.mxu0 %v4981
      %7577 = vmatpush1.bf16.msra.mxu0 %v4980
      %7578 = vmatprep.subr.bf16.mxu0 %v4965
      %7579 = vmatpush1.bf16.msra.mxu0 %v4964
      %7580 = vmatprep.subr.bf16.mxu0 %v4949
      %7581 = vmatpush1.bf16.msra.mxu0 %v4948
      %7582 = vmatprep.subr.bf16.mxu0 %v4933
      %7583 = vmatpush1.bf16.msra.mxu0 %v4932
      %7584 = vmatprep.subr.bf16.mxu0 %v4917
      %7585 = vmatpush1.bf16.msra.mxu0 %v4916
      %7586 = vmatprep.subr.bf16.mxu0 %v4901
      %7587 = vmatpush1.bf16.msra.mxu0 %v4900
      %7588 = vmatprep.subr.bf16.mxu0 %v5141
      %7589 = vmatpush2.bf16.msra.mxu0 %v5140
      %7590 = vmatprep.subr.bf16.mxu0 %v5125
      %7591 = vmatpush2.bf16.msra.mxu0 %v5124
      %7592 = vmatprep.subr.bf16.mxu0 %v5109
      %7593 = vmatpush2.bf16.msra.mxu0 %v5108
      %7594 = vmatprep.subr.bf16.mxu0 %v5093
      %7595 = vmatpush2.bf16.msra.mxu0 %v5092
      %7596 = vmatprep.subr.bf16.mxu0 %v5077
      %7597 = vmatpush2.bf16.msra.mxu0 %v5076
      %7598 = vmatprep.subr.bf16.mxu0 %v5061
      %7599 = vmatpush2.bf16.msra.mxu0 %v5060
      %7600 = vmatprep.subr.bf16.mxu0 %v5045
      %7601 = vmatpush2.bf16.msra.mxu0 %v5044
      %7602 = vmatprep.subr.bf16.mxu0 %v5029
      %7603 = vmatpush2.bf16.msra.mxu0 %v5028
      %7604 = vmatprep.mubr.bf16.mxu0 %v1291
      %7605 = vmatmul.mubr.bf16.gmra.mxu0 %v1277
      %v7606 = vpop.f32.mrf.mxu0
      %v7607 = vadd.f32 %v7566, %v7606
      %v7608 = vpop.f32.mrf.mxu0
      %v7609 = vadd.f32 %v7568, %v7608
      %v7610 = vpop.f32.mrf.mxu0
      %v7611 = vpop.f32.mrf.mxu0
      %7612 = vdwg.mxu0
      %7613 = vmatprep.subr.bf16.mxu0 %v5269
      %7614 = vmatpush1.bf16.msra.mxu0 %v5268
      %7615 = vmatprep.subr.bf16.mxu0 %v5253
      %7616 = vmatpush1.bf16.msra.mxu0 %v5252
      %7617 = vmatprep.subr.bf16.mxu0 %v5237
      %7618 = vmatpush1.bf16.msra.mxu0 %v5236
      %7619 = vmatprep.subr.bf16.mxu0 %v5221
      %7620 = vmatpush1.bf16.msra.mxu0 %v5220
      %7621 = vmatprep.subr.bf16.mxu0 %v5205
      %7622 = vmatpush1.bf16.msra.mxu0 %v5204
      %7623 = vmatprep.subr.bf16.mxu0 %v5189
      %7624 = vmatpush1.bf16.msra.mxu0 %v5188
      %7625 = vmatprep.subr.bf16.mxu0 %v5173
      %7626 = vmatpush1.bf16.msra.mxu0 %v5172
      %7627 = vmatprep.subr.bf16.mxu0 %v5157
      %7628 = vmatpush1.bf16.msra.mxu0 %v5156
      %7629 = vmatprep.subr.bf16.mxu0 %v5397
      %7630 = vmatpush2.bf16.msra.mxu0 %v5396
      %7631 = vmatprep.subr.bf16.mxu0 %v5381
      %7632 = vmatpush2.bf16.msra.mxu0 %v5380
      %7633 = vmatprep.subr.bf16.mxu0 %v5365
      %7634 = vmatpush2.bf16.msra.mxu0 %v5364
      %7635 = vmatprep.subr.bf16.mxu0 %v5349
      %7636 = vmatpush2.bf16.msra.mxu0 %v5348
      %7637 = vmatprep.subr.bf16.mxu0 %v5333
      %7638 = vmatpush2.bf16.msra.mxu0 %v5332
      %7639 = vmatprep.subr.bf16.mxu0 %v5317
      %7640 = vmatpush2.bf16.msra.mxu0 %v5316
      %7641 = vmatprep.subr.bf16.mxu0 %v5301
      %7642 = vmatpush2.bf16.msra.mxu0 %v5300
      %7643 = vmatprep.subr.bf16.mxu0 %v5285
      %7644 = vmatpush2.bf16.msra.mxu0 %v5284
      %7645 = vmatprep.mubr.bf16.mxu0 %v1295
      %7646 = vmatmul.mubr.bf16.gmra.mxu0 %v1293
      %v7647 = vpop.f32.mrf.mxu0
      %v7648 = vadd.f32 %v7607, %v7647
      %v7649 = vpop.f32.mrf.mxu0
      %v7650 = vadd.f32 %v7609, %v7649
      %v7651 = vpop.f32.mrf.mxu0
      %v7652 = vpop.f32.mrf.mxu0
      %7653 = vdwg.mxu0
      %7654 = vmatprep.subr.bf16.mxu0 %v4503
      %7655 = vmatpush1.bf16.msra.mxu0 %v4502
      %7656 = vmatprep.subr.bf16.mxu0 %v4487
      %7657 = vmatpush1.bf16.msra.mxu0 %v4486
      %7658 = vmatprep.subr.bf16.mxu0 %v4471
      %7659 = vmatpush1.bf16.msra.mxu0 %v4470
      %7660 = vmatprep.subr.bf16.mxu0 %v4455
      %7661 = vmatpush1.bf16.msra.mxu0 %v4454
      %7662 = vmatprep.subr.bf16.mxu0 %v4439
      %7663 = vmatpush1.bf16.msra.mxu0 %v4438
      %7664 = vmatprep.subr.bf16.mxu0 %v4423
      %7665 = vmatpush1.bf16.msra.mxu0 %v4422
      %7666 = vmatprep.subr.bf16.mxu0 %v4407
      %7667 = vmatpush1.bf16.msra.mxu0 %v4406
      %7668 = vmatprep.subr.bf16.mxu0 %v4391
      %7669 = vmatpush1.bf16.msra.mxu0 %v4390
      %7670 = vmatprep.subr.bf16.mxu0 %v4631
      %7671 = vmatpush2.bf16.msra.mxu0 %v4630
      %7672 = vmatprep.subr.bf16.mxu0 %v4615
      %7673 = vmatpush2.bf16.msra.mxu0 %v4614
      %7674 = vmatprep.subr.bf16.mxu0 %v4599
      %7675 = vmatpush2.bf16.msra.mxu0 %v4598
      %7676 = vmatprep.subr.bf16.mxu0 %v4583
      %7677 = vmatpush2.bf16.msra.mxu0 %v4582
      %7678 = vmatprep.subr.bf16.mxu0 %v4567
      %7679 = vmatpush2.bf16.msra.mxu0 %v4566
      %7680 = vmatprep.subr.bf16.mxu0 %v4551
      %7681 = vmatpush2.bf16.msra.mxu0 %v4550
      %7682 = vmatprep.subr.bf16.mxu0 %v4535
      %7683 = vmatpush2.bf16.msra.mxu0 %v4534
      %7684 = vmatprep.subr.bf16.mxu0 %v4519
      %7685 = vmatpush2.bf16.msra.mxu0 %v4518
      %7686 = vmatprep.mubr.bf16.mxu0 %v1284
      %7687 = vmatmul.mubr.bf16.gmra.mxu0 %v1270
      %v7688 = vpop.f32.mrf.mxu0
      %v7689 = vadd.f32 %v6485, %v7688
      %v7690 = vpop.f32.mrf.mxu0
      %v7691 = vadd.f32 %v6489, %v7690
      %v7692 = vpop.f32.mrf.mxu0
      %v7693 = vpop.f32.mrf.mxu0
      %7694 = vdwg.mxu0
      %7695 = vmatprep.subr.bf16.mxu0 %v4759
      %7696 = vmatpush1.bf16.msra.mxu0 %v4758
      %7697 = vmatprep.subr.bf16.mxu0 %v4743
      %7698 = vmatpush1.bf16.msra.mxu0 %v4742
      %7699 = vmatprep.subr.bf16.mxu0 %v4727
      %7700 = vmatpush1.bf16.msra.mxu0 %v4726
      %7701 = vmatprep.subr.bf16.mxu0 %v4711
      %7702 = vmatpush1.bf16.msra.mxu0 %v4710
      %7703 = vmatprep.subr.bf16.mxu0 %v4695
      %7704 = vmatpush1.bf16.msra.mxu0 %v4694
      %7705 = vmatprep.subr.bf16.mxu0 %v4679
      %7706 = vmatpush1.bf16.msra.mxu0 %v4678
      %7707 = vmatprep.subr.bf16.mxu0 %v4663
      %7708 = vmatpush1.bf16.msra.mxu0 %v4662
      %7709 = vmatprep.subr.bf16.mxu0 %v4647
      %7710 = vmatpush1.bf16.msra.mxu0 %v4646
      %7711 = vmatprep.subr.bf16.mxu0 %v4887
      %7712 = vmatpush2.bf16.msra.mxu0 %v4886
      %7713 = vmatprep.subr.bf16.mxu0 %v4871
      %7714 = vmatpush2.bf16.msra.mxu0 %v4870
      %7715 = vmatprep.subr.bf16.mxu0 %v4855
      %7716 = vmatpush2.bf16.msra.mxu0 %v4854
      %7717 = vmatprep.subr.bf16.mxu0 %v4839
      %7718 = vmatpush2.bf16.msra.mxu0 %v4838
      %7719 = vmatprep.subr.bf16.mxu0 %v4823
      %7720 = vmatpush2.bf16.msra.mxu0 %v4822
      %7721 = vmatprep.subr.bf16.mxu0 %v4807
      %7722 = vmatpush2.bf16.msra.mxu0 %v4806
      %7723 = vmatprep.subr.bf16.mxu0 %v4791
      %7724 = vmatpush2.bf16.msra.mxu0 %v4790
      %7725 = vmatprep.subr.bf16.mxu0 %v4775
      %7726 = vmatpush2.bf16.msra.mxu0 %v4774
      %7727 = vmatprep.mubr.bf16.mxu0 %v1294
      %7728 = vmatmul.mubr.bf16.gmra.mxu0 %v1292
      %v7729 = vpop.f32.mrf.mxu0
      %v7730 = vadd.f32 %v7689, %v7729
      %v7731 = vpop.f32.mrf.mxu0
      %v7732 = vadd.f32 %v7691, %v7731
      %v7733 = vpop.f32.mrf.mxu0
      %v7734 = vpop.f32.mrf.mxu0
      %7735 = vdwg.mxu0
      %7736 = vmatprep.subr.bf16.mxu0 %v5015
      %7737 = vmatpush1.bf16.msra.mxu0 %v5014
      %7738 = vmatprep.subr.bf16.mxu0 %v4999
      %7739 = vmatpush1.bf16.msra.mxu0 %v4998
      %7740 = vmatprep.subr.bf16.mxu0 %v4983
      %7741 = vmatpush1.bf16.msra.mxu0 %v4982
      %7742 = vmatprep.subr.bf16.mxu0 %v4967
      %7743 = vmatpush1.bf16.msra.mxu0 %v4966
      %7744 = vmatprep.subr.bf16.mxu0 %v4951
      %7745 = vmatpush1.bf16.msra.mxu0 %v4950
      %7746 = vmatprep.subr.bf16.mxu0 %v4935
      %7747 = vmatpush1.bf16.msra.mxu0 %v4934
      %7748 = vmatprep.subr.bf16.mxu0 %v4919
      %7749 = vmatpush1.bf16.msra.mxu0 %v4918
      %7750 = vmatprep.subr.bf16.mxu0 %v4903
      %7751 = vmatpush1.bf16.msra.mxu0 %v4902
      %7752 = vmatprep.subr.bf16.mxu0 %v5143
      %7753 = vmatpush2.bf16.msra.mxu0 %v5142
      %7754 = vmatprep.subr.bf16.mxu0 %v5127
      %7755 = vmatpush2.bf16.msra.mxu0 %v5126
      %7756 = vmatprep.subr.bf16.mxu0 %v5111
      %7757 = vmatpush2.bf16.msra.mxu0 %v5110
      %7758 = vmatprep.subr.bf16.mxu0 %v5095
      %7759 = vmatpush2.bf16.msra.mxu0 %v5094
      %7760 = vmatprep.subr.bf16.mxu0 %v5079
      %7761 = vmatpush2.bf16.msra.mxu0 %v5078
      %7762 = vmatprep.subr.bf16.mxu0 %v5063
      %7763 = vmatpush2.bf16.msra.mxu0 %v5062
      %7764 = vmatprep.subr.bf16.mxu0 %v5047
      %7765 = vmatpush2.bf16.msra.mxu0 %v5046
      %7766 = vmatprep.subr.bf16.mxu0 %v5031
      %7767 = vmatpush2.bf16.msra.mxu0 %v5030
      %7768 = vmatprep.mubr.bf16.mxu0 %v1291
      %7769 = vmatmul.mubr.bf16.gmra.mxu0 %v1277
      %v7770 = vpop.f32.mrf.mxu0
      %v7771 = vadd.f32 %v7730, %v7770
      %v7772 = vpop.f32.mrf.mxu0
      %v7773 = vadd.f32 %v7732, %v7772
      %v7774 = vpop.f32.mrf.mxu0
      %v7775 = vpop.f32.mrf.mxu0
      %7776 = vdwg.mxu0
      %7777 = vmatprep.subr.bf16.mxu0 %v5271
      %7778 = vmatpush1.bf16.msra.mxu0 %v5270
      %7779 = vmatprep.subr.bf16.mxu0 %v5255
      %7780 = vmatpush1.bf16.msra.mxu0 %v5254
      %7781 = vmatprep.subr.bf16.mxu0 %v5239
      %7782 = vmatpush1.bf16.msra.mxu0 %v5238
      %7783 = vmatprep.subr.bf16.mxu0 %v5223
      %7784 = vmatpush1.bf16.msra.mxu0 %v5222
      %7785 = vmatprep.subr.bf16.mxu0 %v5207
      %7786 = vmatpush1.bf16.msra.mxu0 %v5206
      %7787 = vmatprep.subr.bf16.mxu0 %v5191
      %7788 = vmatpush1.bf16.msra.mxu0 %v5190
      %7789 = vmatprep.subr.bf16.mxu0 %v5175
      %7790 = vmatpush1.bf16.msra.mxu0 %v5174
      %7791 = vmatprep.subr.bf16.mxu0 %v5159
      %7792 = vmatpush1.bf16.msra.mxu0 %v5158
      %7793 = vmatprep.subr.bf16.mxu0 %v5399
      %7794 = vmatpush2.bf16.msra.mxu0 %v5398
      %7795 = vmatprep.subr.bf16.mxu0 %v5383
      %7796 = vmatpush2.bf16.msra.mxu0 %v5382
      %7797 = vmatprep.subr.bf16.mxu0 %v5367
      %7798 = vmatpush2.bf16.msra.mxu0 %v5366
      %7799 = vmatprep.subr.bf16.mxu0 %v5351
      %7800 = vmatpush2.bf16.msra.mxu0 %v5350
      %7801 = vmatprep.subr.bf16.mxu0 %v5335
      %7802 = vmatpush2.bf16.msra.mxu0 %v5334
      %7803 = vmatprep.subr.bf16.mxu0 %v5319
      %7804 = vmatpush2.bf16.msra.mxu0 %v5318
      %7805 = vmatprep.subr.bf16.mxu0 %v5303
      %7806 = vmatpush2.bf16.msra.mxu0 %v5302
      %7807 = vmatprep.subr.bf16.mxu0 %v5287
      %7808 = vmatpush2.bf16.msra.mxu0 %v5286
      %7809 = vmatprep.mubr.bf16.mxu0 %v1295
      %7810 = vmatmul.mubr.bf16.gmra.mxu0 %v1293
      %v7811 = vpop.f32.mrf.mxu0
      %v7812 = vadd.f32 %v7771, %v7811
      %v7813 = vpop.f32.mrf.mxu0
      %v7814 = vadd.f32 %v7773, %v7813
      %v7815 = vpop.f32.mrf.mxu0
      %v7816 = vpop.f32.mrf.mxu0
      %7817 = vdwg.mxu0
      %v7818 = vmax.f32 %v6664, 0.0
      %v7819 = vmax.f32 %v6666, 0.0
      %v7820 = vmax.f32 %v6828, 0.0
      %v7821 = vmax.f32 %v6830, 0.0
      %v7822 = vmax.f32 %v6992, 0.0
      %v7823 = vmax.f32 %v6994, 0.0
      %v7824 = vmax.f32 %v7156, 0.0
      %v7825 = vmax.f32 %v7158, 0.0
      %v7826 = vmax.f32 %v7320, 0.0
      %v7827 = vmax.f32 %v7322, 0.0
      %v7828 = vmax.f32 %v7484, 0.0
      %v7829 = vmax.f32 %v7486, 0.0
      %v7830 = vmax.f32 %v7648, 0.0
      %v7831 = vmax.f32 %v7650, 0.0
      %v7832 = vmax.f32 %v7812, 0.0
      %v7833 = vmax.f32 %v7814, 0.0
      %v7834 = vpack.c.bf16 %v7818, %v7818
      %v7835 = vpack.c.bf16 %v7819, %v7819
      %v7836 = vpack.c.bf16 %v7820, %v7820
      %v7837 = vpack.c.bf16 %v7821, %v7821
      %v7838 = vpack.c.bf16 %v7822, %v7822
      %v7839 = vpack.c.bf16 %v7823, %v7823
      %v7840 = vpack.c.bf16 %v7824, %v7824
      %v7841 = vpack.c.bf16 %v7825, %v7825
      %v7842 = vpack.c.bf16 %v7826, %v7826
      %v7843 = vpack.c.bf16 %v7827, %v7827
      %v7844 = vpack.c.bf16 %v7828, %v7828
      %v7845 = vpack.c.bf16 %v7829, %v7829
      %v7846 = vpack.c.bf16 %v7830, %v7830
      %v7847 = vpack.c.bf16 %v7831, %v7831
      %v7848 = vpack.c.bf16 %v7832, %v7832
      %v7849 = vpack.c.bf16 %v7833, %v7833
      %v7850 = vld [vmem:[%s3] sm:$0xf]
      %v7851 = vld [vmem:[%s3 + $0x4] sm:$0xf]
      %v7852 = vld [vmem:[%s3 + $0x8] sm:$0xf]
      %v7853 = vld [vmem:[%s3 + $0xc] sm:$0xf]
      %v7854 = vld [vmem:[%s3 + $0x10] sm:$0xf]
      %v7855 = vld [vmem:[%s3 + $0x14] sm:$0xf]
      %v7856 = vld [vmem:[%s3 + $0x18] sm:$0xf]
      %v7857 = vld [vmem:[%s3 + $0x1c] sm:$0xf]
      %v7858 = vld [vmem:[%s3 + $0x20] sm:$0xf]
      %v7859 = vld [vmem:[%s3 + $0x24] sm:$0xf]
      %v7860 = vld [vmem:[%s3 + $0x28] sm:$0xf]
      %v7861 = vld [vmem:[%s3 + $0x2c] sm:$0xf]
      %v7862 = vld [vmem:[%s3 + $0x30] sm:$0xf]
      %v7863 = vld [vmem:[%s3 + $0x34] sm:$0xf]
      %v7864 = vld [vmem:[%s3 + $0x38] sm:$0xf]
      %v7865 = vld [vmem:[%s3 + $0x3c] sm:$0xf]
      %v7866 = vld [vmem:[%s3 + $0x40] sm:$0xf]
      %v7867 = vld [vmem:[%s3 + $0x44] sm:$0xf]
      %v7868 = vld [vmem:[%s3 + $0x48] sm:$0xf]
      %v7869 = vld [vmem:[%s3 + $0x4c] sm:$0xf]
      %v7870 = vld [vmem:[%s3 + $0x50] sm:$0xf]
      %v7871 = vld [vmem:[%s3 + $0x54] sm:$0xf]
      %v7872 = vld [vmem:[%s3 + $0x58] sm:$0xf]
      %v7873 = vld [vmem:[%s3 + $0x5c] sm:$0xf]
      %v7874 = vld [vmem:[%s3 + $0x60] sm:$0xf]
      %v7875 = vld [vmem:[%s3 + $0x64] sm:$0xf]
      %v7876 = vld [vmem:[%s3 + $0x68] sm:$0xf]
      %v7877 = vld [vmem:[%s3 + $0x6c] sm:$0xf]
      %v7878 = vld [vmem:[%s3 + $0x70] sm:$0xf]
      %v7879 = vld [vmem:[%s3 + $0x74] sm:$0xf]
      %v7880 = vld [vmem:[%s3 + $0x78] sm:$0xf]
      %v7881 = vld [vmem:[%s3 + $0x7c] sm:$0xf]
      %v7882 = vld [vmem:[%s3 + $0x80] sm:$0xf]
      %v7883 = vld [vmem:[%s3 + $0x84] sm:$0xf]
      %v7884 = vld [vmem:[%s3 + $0x88] sm:$0xf]
      %v7885 = vld [vmem:[%s3 + $0x8c] sm:$0xf]
      %v7886 = vld [vmem:[%s3 + $0x90] sm:$0xf]
      %v7887 = vld [vmem:[%s3 + $0x94] sm:$0xf]
      %v7888 = vld [vmem:[%s3 + $0x98] sm:$0xf]
      %v7889 = vld [vmem:[%s3 + $0x9c] sm:$0xf]
      %v7890 = vld [vmem:[%s3 + $0xa0] sm:$0xf]
      %v7891 = vld [vmem:[%s3 + $0xa4] sm:$0xf]
      %v7892 = vld [vmem:[%s3 + $0xa8] sm:$0xf]
      %v7893 = vld [vmem:[%s3 + $0xac] sm:$0xf]
      %v7894 = vld [vmem:[%s3 + $0xb0] sm:$0xf]
      %v7895 = vld [vmem:[%s3 + $0xb4] sm:$0xf]
      %v7896 = vld [vmem:[%s3 + $0xb8] sm:$0xf]
      %v7897 = vld [vmem:[%s3 + $0xbc] sm:$0xf]
      %v7898 = vld [vmem:[%s3 + $0xc0] sm:$0xf]
      %v7899 = vld [vmem:[%s3 + $0xc4] sm:$0xf]
      %v7900 = vld [vmem:[%s3 + $0xc8] sm:$0xf]
      %v7901 = vld [vmem:[%s3 + $0xcc] sm:$0xf]
      %v7902 = vld [vmem:[%s3 + $0xd0] sm:$0xf]
      %v7903 = vld [vmem:[%s3 + $0xd4] sm:$0xf]
      %v7904 = vld [vmem:[%s3 + $0xd8] sm:$0xf]
      %v7905 = vld [vmem:[%s3 + $0xdc] sm:$0xf]
      %v7906 = vld [vmem:[%s3 + $0xe0] sm:$0xf]
      %v7907 = vld [vmem:[%s3 + $0xe4] sm:$0xf]
      %v7908 = vld [vmem:[%s3 + $0xe8] sm:$0xf]
      %v7909 = vld [vmem:[%s3 + $0xec] sm:$0xf]
      %v7910 = vld [vmem:[%s3 + $0xf0] sm:$0xf]
      %v7911 = vld [vmem:[%s3 + $0xf4] sm:$0xf]
      %v7912 = vld [vmem:[%s3 + $0xf8] sm:$0xf]
      %v7913 = vld [vmem:[%s3 + $0xfc] sm:$0xf]
      %v7914 = vld [vmem:[%s3 + $0x100] sm:$0xf]
      %v7915 = vld [vmem:[%s3 + $0x104] sm:$0xf]
      %v7916 = vld [vmem:[%s3 + $0x108] sm:$0xf]
      %v7917 = vld [vmem:[%s3 + $0x10c] sm:$0xf]
      %v7918 = vld [vmem:[%s3 + $0x110] sm:$0xf]
      %v7919 = vld [vmem:[%s3 + $0x114] sm:$0xf]
      %v7920 = vld [vmem:[%s3 + $0x118] sm:$0xf]
      %v7921 = vld [vmem:[%s3 + $0x11c] sm:$0xf]
      %v7922 = vld [vmem:[%s3 + $0x120] sm:$0xf]
      %v7923 = vld [vmem:[%s3 + $0x124] sm:$0xf]
      %v7924 = vld [vmem:[%s3 + $0x128] sm:$0xf]
      %v7925 = vld [vmem:[%s3 + $0x12c] sm:$0xf]
      %v7926 = vld [vmem:[%s3 + $0x130] sm:$0xf]
      %v7927 = vld [vmem:[%s3 + $0x134] sm:$0xf]
      %v7928 = vld [vmem:[%s3 + $0x138] sm:$0xf]
      %v7929 = vld [vmem:[%s3 + $0x13c] sm:$0xf]
      %v7930 = vld [vmem:[%s3 + $0x140] sm:$0xf]
      %v7931 = vld [vmem:[%s3 + $0x144] sm:$0xf]
      %v7932 = vld [vmem:[%s3 + $0x148] sm:$0xf]
      %v7933 = vld [vmem:[%s3 + $0x14c] sm:$0xf]
      %v7934 = vld [vmem:[%s3 + $0x150] sm:$0xf]
      %v7935 = vld [vmem:[%s3 + $0x154] sm:$0xf]
      %v7936 = vld [vmem:[%s3 + $0x158] sm:$0xf]
      %v7937 = vld [vmem:[%s3 + $0x15c] sm:$0xf]
      %v7938 = vld [vmem:[%s3 + $0x160] sm:$0xf]
      %v7939 = vld [vmem:[%s3 + $0x164] sm:$0xf]
      %v7940 = vld [vmem:[%s3 + $0x168] sm:$0xf]
      %v7941 = vld [vmem:[%s3 + $0x16c] sm:$0xf]
      %v7942 = vld [vmem:[%s3 + $0x170] sm:$0xf]
      %v7943 = vld [vmem:[%s3 + $0x174] sm:$0xf]
      %v7944 = vld [vmem:[%s3 + $0x178] sm:$0xf]
      %v7945 = vld [vmem:[%s3 + $0x17c] sm:$0xf]
      %v7946 = vld [vmem:[%s3 + $0x180] sm:$0xf]
      %v7947 = vld [vmem:[%s3 + $0x184] sm:$0xf]
      %v7948 = vld [vmem:[%s3 + $0x188] sm:$0xf]
      %v7949 = vld [vmem:[%s3 + $0x18c] sm:$0xf]
      %v7950 = vld [vmem:[%s3 + $0x190] sm:$0xf]
      %v7951 = vld [vmem:[%s3 + $0x194] sm:$0xf]
      %v7952 = vld [vmem:[%s3 + $0x198] sm:$0xf]
      %v7953 = vld [vmem:[%s3 + $0x19c] sm:$0xf]
      %v7954 = vld [vmem:[%s3 + $0x1a0] sm:$0xf]
      %v7955 = vld [vmem:[%s3 + $0x1a4] sm:$0xf]
      %v7956 = vld [vmem:[%s3 + $0x1a8] sm:$0xf]
      %v7957 = vld [vmem:[%s3 + $0x1ac] sm:$0xf]
      %v7958 = vld [vmem:[%s3 + $0x1b0] sm:$0xf]
      %v7959 = vld [vmem:[%s3 + $0x1b4] sm:$0xf]
      %v7960 = vld [vmem:[%s3 + $0x1b8] sm:$0xf]
      %v7961 = vld [vmem:[%s3 + $0x1bc] sm:$0xf]
      %v7962 = vld [vmem:[%s3 + $0x1c0] sm:$0xf]
      %v7963 = vld [vmem:[%s3 + $0x1c4] sm:$0xf]
      %v7964 = vld [vmem:[%s3 + $0x1c8] sm:$0xf]
      %v7965 = vld [vmem:[%s3 + $0x1cc] sm:$0xf]
      %v7966 = vld [vmem:[%s3 + $0x1d0] sm:$0xf]
      %v7967 = vld [vmem:[%s3 + $0x1d4] sm:$0xf]
      %v7968 = vld [vmem:[%s3 + $0x1d8] sm:$0xf]
      %v7969 = vld [vmem:[%s3 + $0x1dc] sm:$0xf]
      %v7970 = vld [vmem:[%s3 + $0x1e0] sm:$0xf]
      %v7971 = vld [vmem:[%s3 + $0x1e4] sm:$0xf]
      %v7972 = vld [vmem:[%s3 + $0x1e8] sm:$0xf]
      %v7973 = vld [vmem:[%s3 + $0x1ec] sm:$0xf]
      %v7974 = vld [vmem:[%s3 + $0x1f0] sm:$0xf]
      %v7975 = vld [vmem:[%s3 + $0x1f4] sm:$0xf]
      %v7976 = vld [vmem:[%s3 + $0x1f8] sm:$0xf]
      %v7977 = vld [vmem:[%s3 + $0x1fc] sm:$0xf]
      %v7978 = vld [vmem:[%s3 + $0x200] sm:$0xf]
      %v7979 = vld [vmem:[%s3 + $0x204] sm:$0xf]
      %v7980 = vld [vmem:[%s3 + $0x208] sm:$0xf]
      %v7981 = vld [vmem:[%s3 + $0x20c] sm:$0xf]
      %v7982 = vld [vmem:[%s3 + $0x210] sm:$0xf]
      %v7983 = vld [vmem:[%s3 + $0x214] sm:$0xf]
      %v7984 = vld [vmem:[%s3 + $0x218] sm:$0xf]
      %v7985 = vld [vmem:[%s3 + $0x21c] sm:$0xf]
      %v7986 = vld [vmem:[%s3 + $0x220] sm:$0xf]
      %v7987 = vld [vmem:[%s3 + $0x224] sm:$0xf]
      %v7988 = vld [vmem:[%s3 + $0x228] sm:$0xf]
      %v7989 = vld [vmem:[%s3 + $0x22c] sm:$0xf]
      %v7990 = vld [vmem:[%s3 + $0x230] sm:$0xf]
      %v7991 = vld [vmem:[%s3 + $0x234] sm:$0xf]
      %v7992 = vld [vmem:[%s3 + $0x238] sm:$0xf]
      %v7993 = vld [vmem:[%s3 + $0x23c] sm:$0xf]
      %v7994 = vld [vmem:[%s3 + $0x240] sm:$0xf]
      %v7995 = vld [vmem:[%s3 + $0x244] sm:$0xf]
      %v7996 = vld [vmem:[%s3 + $0x248] sm:$0xf]
      %v7997 = vld [vmem:[%s3 + $0x24c] sm:$0xf]
      %v7998 = vld [vmem:[%s3 + $0x250] sm:$0xf]
      %v7999 = vld [vmem:[%s3 + $0x254] sm:$0xf]
      %v8000 = vld [vmem:[%s3 + $0x258] sm:$0xf]
      %v8001 = vld [vmem:[%s3 + $0x25c] sm:$0xf]
      %v8002 = vld [vmem:[%s3 + $0x260] sm:$0xf]
      %v8003 = vld [vmem:[%s3 + $0x264] sm:$0xf]
      %v8004 = vld [vmem:[%s3 + $0x268] sm:$0xf]
      %v8005 = vld [vmem:[%s3 + $0x26c] sm:$0xf]
      %v8006 = vld [vmem:[%s3 + $0x270] sm:$0xf]
      %v8007 = vld [vmem:[%s3 + $0x274] sm:$0xf]
      %v8008 = vld [vmem:[%s3 + $0x278] sm:$0xf]
      %v8009 = vld [vmem:[%s3 + $0x27c] sm:$0xf]
      %v8010 = vld [vmem:[%s3 + $0x280] sm:$0xf]
      %v8011 = vld [vmem:[%s3 + $0x284] sm:$0xf]
      %v8012 = vld [vmem:[%s3 + $0x288] sm:$0xf]
      %v8013 = vld [vmem:[%s3 + $0x28c] sm:$0xf]
      %v8014 = vld [vmem:[%s3 + $0x290] sm:$0xf]
      %v8015 = vld [vmem:[%s3 + $0x294] sm:$0xf]
      %v8016 = vld [vmem:[%s3 + $0x298] sm:$0xf]
      %v8017 = vld [vmem:[%s3 + $0x29c] sm:$0xf]
      %v8018 = vld [vmem:[%s3 + $0x2a0] sm:$0xf]
      %v8019 = vld [vmem:[%s3 + $0x2a4] sm:$0xf]
      %v8020 = vld [vmem:[%s3 + $0x2a8] sm:$0xf]
      %v8021 = vld [vmem:[%s3 + $0x2ac] sm:$0xf]
      %v8022 = vld [vmem:[%s3 + $0x2b0] sm:$0xf]
      %v8023 = vld [vmem:[%s3 + $0x2b4] sm:$0xf]
      %v8024 = vld [vmem:[%s3 + $0x2b8] sm:$0xf]
      %v8025 = vld [vmem:[%s3 + $0x2bc] sm:$0xf]
      %v8026 = vld [vmem:[%s3 + $0x2c0] sm:$0xf]
      %v8027 = vld [vmem:[%s3 + $0x2c4] sm:$0xf]
      %v8028 = vld [vmem:[%s3 + $0x2c8] sm:$0xf]
      %v8029 = vld [vmem:[%s3 + $0x2cc] sm:$0xf]
      %v8030 = vld [vmem:[%s3 + $0x2d0] sm:$0xf]
      %v8031 = vld [vmem:[%s3 + $0x2d4] sm:$0xf]
      %v8032 = vld [vmem:[%s3 + $0x2d8] sm:$0xf]
      %v8033 = vld [vmem:[%s3 + $0x2dc] sm:$0xf]
      %v8034 = vld [vmem:[%s3 + $0x2e0] sm:$0xf]
      %v8035 = vld [vmem:[%s3 + $0x2e4] sm:$0xf]
      %v8036 = vld [vmem:[%s3 + $0x2e8] sm:$0xf]
      %v8037 = vld [vmem:[%s3 + $0x2ec] sm:$0xf]
      %v8038 = vld [vmem:[%s3 + $0x2f0] sm:$0xf]
      %v8039 = vld [vmem:[%s3 + $0x2f4] sm:$0xf]
      %v8040 = vld [vmem:[%s3 + $0x2f8] sm:$0xf]
      %v8041 = vld [vmem:[%s3 + $0x2fc] sm:$0xf]
      %v8042 = vld [vmem:[%s3 + $0x300] sm:$0xf]
      %v8043 = vld [vmem:[%s3 + $0x304] sm:$0xf]
      %v8044 = vld [vmem:[%s3 + $0x308] sm:$0xf]
      %v8045 = vld [vmem:[%s3 + $0x30c] sm:$0xf]
      %v8046 = vld [vmem:[%s3 + $0x310] sm:$0xf]
      %v8047 = vld [vmem:[%s3 + $0x314] sm:$0xf]
      %v8048 = vld [vmem:[%s3 + $0x318] sm:$0xf]
      %v8049 = vld [vmem:[%s3 + $0x31c] sm:$0xf]
      %v8050 = vld [vmem:[%s3 + $0x320] sm:$0xf]
      %v8051 = vld [vmem:[%s3 + $0x324] sm:$0xf]
      %v8052 = vld [vmem:[%s3 + $0x328] sm:$0xf]
      %v8053 = vld [vmem:[%s3 + $0x32c] sm:$0xf]
      %v8054 = vld [vmem:[%s3 + $0x330] sm:$0xf]
      %v8055 = vld [vmem:[%s3 + $0x334] sm:$0xf]
      %v8056 = vld [vmem:[%s3 + $0x338] sm:$0xf]
      %v8057 = vld [vmem:[%s3 + $0x33c] sm:$0xf]
      %v8058 = vld [vmem:[%s3 + $0x340] sm:$0xf]
      %v8059 = vld [vmem:[%s3 + $0x344] sm:$0xf]
      %v8060 = vld [vmem:[%s3 + $0x348] sm:$0xf]
      %v8061 = vld [vmem:[%s3 + $0x34c] sm:$0xf]
      %v8062 = vld [vmem:[%s3 + $0x350] sm:$0xf]
      %v8063 = vld [vmem:[%s3 + $0x354] sm:$0xf]
      %v8064 = vld [vmem:[%s3 + $0x358] sm:$0xf]
      %v8065 = vld [vmem:[%s3 + $0x35c] sm:$0xf]
      %v8066 = vld [vmem:[%s3 + $0x360] sm:$0xf]
      %v8067 = vld [vmem:[%s3 + $0x364] sm:$0xf]
      %v8068 = vld [vmem:[%s3 + $0x368] sm:$0xf]
      %v8069 = vld [vmem:[%s3 + $0x36c] sm:$0xf]
      %v8070 = vld [vmem:[%s3 + $0x370] sm:$0xf]
      %v8071 = vld [vmem:[%s3 + $0x374] sm:$0xf]
      %v8072 = vld [vmem:[%s3 + $0x378] sm:$0xf]
      %v8073 = vld [vmem:[%s3 + $0x37c] sm:$0xf]
      %v8074 = vld [vmem:[%s3 + $0x380] sm:$0xf]
      %v8075 = vld [vmem:[%s3 + $0x384] sm:$0xf]
      %v8076 = vld [vmem:[%s3 + $0x388] sm:$0xf]
      %v8077 = vld [vmem:[%s3 + $0x38c] sm:$0xf]
      %v8078 = vld [vmem:[%s3 + $0x390] sm:$0xf]
      %v8079 = vld [vmem:[%s3 + $0x394] sm:$0xf]
      %v8080 = vld [vmem:[%s3 + $0x398] sm:$0xf]
      %v8081 = vld [vmem:[%s3 + $0x39c] sm:$0xf]
      %v8082 = vld [vmem:[%s3 + $0x3a0] sm:$0xf]
      %v8083 = vld [vmem:[%s3 + $0x3a4] sm:$0xf]
      %v8084 = vld [vmem:[%s3 + $0x3a8] sm:$0xf]
      %v8085 = vld [vmem:[%s3 + $0x3ac] sm:$0xf]
      %v8086 = vld [vmem:[%s3 + $0x3b0] sm:$0xf]
      %v8087 = vld [vmem:[%s3 + $0x3b4] sm:$0xf]
      %v8088 = vld [vmem:[%s3 + $0x3b8] sm:$0xf]
      %v8089 = vld [vmem:[%s3 + $0x3bc] sm:$0xf]
      %v8090 = vld [vmem:[%s3 + $0x3c0] sm:$0xf]
      %v8091 = vld [vmem:[%s3 + $0x3c4] sm:$0xf]
      %v8092 = vld [vmem:[%s3 + $0x3c8] sm:$0xf]
      %v8093 = vld [vmem:[%s3 + $0x3cc] sm:$0xf]
      %v8094 = vld [vmem:[%s3 + $0x3d0] sm:$0xf]
      %v8095 = vld [vmem:[%s3 + $0x3d4] sm:$0xf]
      %v8096 = vld [vmem:[%s3 + $0x3d8] sm:$0xf]
      %v8097 = vld [vmem:[%s3 + $0x3dc] sm:$0xf]
      %v8098 = vld [vmem:[%s3 + $0x3e0] sm:$0xf]
      %v8099 = vld [vmem:[%s3 + $0x3e4] sm:$0xf]
      %v8100 = vld [vmem:[%s3 + $0x3e8] sm:$0xf]
      %v8101 = vld [vmem:[%s3 + $0x3ec] sm:$0xf]
      %v8102 = vld [vmem:[%s3 + $0x3f0] sm:$0xf]
      %v8103 = vld [vmem:[%s3 + $0x3f4] sm:$0xf]
      %v8104 = vld [vmem:[%s3 + $0x3f8] sm:$0xf]
      %v8105 = vld [vmem:[%s3 + $0x3fc] sm:$0xf]
      %v8106 = vld [vmem:[%s4] sm:$0x1]
      %v8363 = vunpack.c.l.b16 %v7850
      %v8364 = vunpack.c.l.b16 %v7851
      %v8365 = vunpack.c.l.b16 %v7852
      %v8366 = vunpack.c.l.b16 %v7853
      %v8367 = vunpack.c.l.b16 %v7854
      %v8368 = vunpack.c.l.b16 %v7855
      %v8369 = vunpack.c.l.b16 %v7856
      %v8370 = vunpack.c.l.b16 %v7857
      %v8371 = vunpack.c.l.b16 %v7858
      %v8372 = vunpack.c.l.b16 %v7859
      %v8373 = vunpack.c.l.b16 %v7860
      %v8374 = vunpack.c.l.b16 %v7861
      %v8375 = vunpack.c.l.b16 %v7862
      %v8376 = vunpack.c.l.b16 %v7863
      %v8377 = vunpack.c.l.b16 %v7864
      %v8378 = vunpack.c.l.b16 %v7865
      %v8379 = vunpack.c.l.b16 %v7866
      %v8380 = vunpack.c.l.b16 %v7867
      %v8381 = vunpack.c.l.b16 %v7868
      %v8382 = vunpack.c.l.b16 %v7869
      %v8383 = vunpack.c.l.b16 %v7870
      %v8384 = vunpack.c.l.b16 %v7871
      %v8385 = vunpack.c.l.b16 %v7872
      %v8386 = vunpack.c.l.b16 %v7873
      %v8387 = vunpack.c.l.b16 %v7874
      %v8388 = vunpack.c.l.b16 %v7875
      %v8389 = vunpack.c.l.b16 %v7876
      %v8390 = vunpack.c.l.b16 %v7877
      %v8391 = vunpack.c.l.b16 %v7878
      %v8392 = vunpack.c.l.b16 %v7879
      %v8393 = vunpack.c.l.b16 %v7880
      %v8394 = vunpack.c.l.b16 %v7881
      %v8395 = vunpack.c.l.b16 %v7882
      %v8396 = vunpack.c.l.b16 %v7883
      %v8397 = vunpack.c.l.b16 %v7884
      %v8398 = vunpack.c.l.b16 %v7885
      %v8399 = vunpack.c.l.b16 %v7886
      %v8400 = vunpack.c.l.b16 %v7887
      %v8401 = vunpack.c.l.b16 %v7888
      %v8402 = vunpack.c.l.b16 %v7889
      %v8403 = vunpack.c.l.b16 %v7890
      %v8404 = vunpack.c.l.b16 %v7891
      %v8405 = vunpack.c.l.b16 %v7892
      %v8406 = vunpack.c.l.b16 %v7893
      %v8407 = vunpack.c.l.b16 %v7894
      %v8408 = vunpack.c.l.b16 %v7895
      %v8409 = vunpack.c.l.b16 %v7896
      %v8410 = vunpack.c.l.b16 %v7897
      %v8411 = vunpack.c.l.b16 %v7898
      %v8412 = vunpack.c.l.b16 %v7899
      %v8413 = vunpack.c.l.b16 %v7900
      %v8414 = vunpack.c.l.b16 %v7901
      %v8415 = vunpack.c.l.b16 %v7902
      %v8416 = vunpack.c.l.b16 %v7903
      %v8417 = vunpack.c.l.b16 %v7904
      %v8418 = vunpack.c.l.b16 %v7905
      %v8419 = vunpack.c.l.b16 %v7906
      %v8420 = vunpack.c.l.b16 %v7907
      %v8421 = vunpack.c.l.b16 %v7908
      %v8422 = vunpack.c.l.b16 %v7909
      %v8423 = vunpack.c.l.b16 %v7910
      %v8424 = vunpack.c.l.b16 %v7911
      %v8425 = vunpack.c.l.b16 %v7912
      %v8426 = vunpack.c.l.b16 %v7913
      %v8427 = vunpack.c.l.b16 %v7914
      %v8428 = vunpack.c.l.b16 %v7915
      %v8429 = vunpack.c.l.b16 %v7916
      %v8430 = vunpack.c.l.b16 %v7917
      %v8431 = vunpack.c.l.b16 %v7918
      %v8432 = vunpack.c.l.b16 %v7919
      %v8433 = vunpack.c.l.b16 %v7920
      %v8434 = vunpack.c.l.b16 %v7921
      %v8435 = vunpack.c.l.b16 %v7922
      %v8436 = vunpack.c.l.b16 %v7923
      %v8437 = vunpack.c.l.b16 %v7924
      %v8438 = vunpack.c.l.b16 %v7925
      %v8439 = vunpack.c.l.b16 %v7926
      %v8440 = vunpack.c.l.b16 %v7927
      %v8441 = vunpack.c.l.b16 %v7928
      %v8442 = vunpack.c.l.b16 %v7929
      %v8443 = vunpack.c.l.b16 %v7930
      %v8444 = vunpack.c.l.b16 %v7931
      %v8445 = vunpack.c.l.b16 %v7932
      %v8446 = vunpack.c.l.b16 %v7933
      %v8447 = vunpack.c.l.b16 %v7934
      %v8448 = vunpack.c.l.b16 %v7935
      %v8449 = vunpack.c.l.b16 %v7936
      %v8450 = vunpack.c.l.b16 %v7937
      %v8451 = vunpack.c.l.b16 %v7938
      %v8452 = vunpack.c.l.b16 %v7939
      %v8453 = vunpack.c.l.b16 %v7940
      %v8454 = vunpack.c.l.b16 %v7941
      %v8455 = vunpack.c.l.b16 %v7942
      %v8456 = vunpack.c.l.b16 %v7943
      %v8457 = vunpack.c.l.b16 %v7944
      %v8458 = vunpack.c.l.b16 %v7945
      %v8459 = vunpack.c.l.b16 %v7946
      %v8460 = vunpack.c.l.b16 %v7947
      %v8461 = vunpack.c.l.b16 %v7948
      %v8462 = vunpack.c.l.b16 %v7949
      %v8463 = vunpack.c.l.b16 %v7950
      %v8464 = vunpack.c.l.b16 %v7951
      %v8465 = vunpack.c.l.b16 %v7952
      %v8466 = vunpack.c.l.b16 %v7953
      %v8467 = vunpack.c.l.b16 %v7954
      %v8468 = vunpack.c.l.b16 %v7955
      %v8469 = vunpack.c.l.b16 %v7956
      %v8470 = vunpack.c.l.b16 %v7957
      %v8471 = vunpack.c.l.b16 %v7958
      %v8472 = vunpack.c.l.b16 %v7959
      %v8473 = vunpack.c.l.b16 %v7960
      %v8474 = vunpack.c.l.b16 %v7961
      %v8475 = vunpack.c.l.b16 %v7962
      %v8476 = vunpack.c.l.b16 %v7963
      %v8477 = vunpack.c.l.b16 %v7964
      %v8478 = vunpack.c.l.b16 %v7965
      %v8479 = vunpack.c.l.b16 %v7966
      %v8480 = vunpack.c.l.b16 %v7967
      %v8481 = vunpack.c.l.b16 %v7968
      %v8482 = vunpack.c.l.b16 %v7969
      %v8483 = vunpack.c.l.b16 %v7970
      %v8484 = vunpack.c.l.b16 %v7971
      %v8485 = vunpack.c.l.b16 %v7972
      %v8486 = vunpack.c.l.b16 %v7973
      %v8487 = vunpack.c.l.b16 %v7974
      %v8488 = vunpack.c.l.b16 %v7975
      %v8489 = vunpack.c.l.b16 %v7976
      %v8490 = vunpack.c.l.b16 %v7977
      %v8491 = vunpack.c.l.b16 %v7978
      %v8492 = vunpack.c.l.b16 %v7979
      %v8493 = vunpack.c.l.b16 %v7980
      %v8494 = vunpack.c.l.b16 %v7981
      %v8495 = vunpack.c.l.b16 %v7982
      %v8496 = vunpack.c.l.b16 %v7983
      %v8497 = vunpack.c.l.b16 %v7984
      %v8498 = vunpack.c.l.b16 %v7985
      %v8499 = vunpack.c.l.b16 %v7986
      %v8500 = vunpack.c.l.b16 %v7987
      %v8501 = vunpack.c.l.b16 %v7988
      %v8502 = vunpack.c.l.b16 %v7989
      %v8503 = vunpack.c.l.b16 %v7990
      %v8504 = vunpack.c.l.b16 %v7991
      %v8505 = vunpack.c.l.b16 %v7992
      %v8506 = vunpack.c.l.b16 %v7993
      %v8507 = vunpack.c.l.b16 %v7994
      %v8508 = vunpack.c.l.b16 %v7995
      %v8509 = vunpack.c.l.b16 %v7996
      %v8510 = vunpack.c.l.b16 %v7997
      %v8511 = vunpack.c.l.b16 %v7998
      %v8512 = vunpack.c.l.b16 %v7999
      %v8513 = vunpack.c.l.b16 %v8000
      %v8514 = vunpack.c.l.b16 %v8001
      %v8515 = vunpack.c.l.b16 %v8002
      %v8516 = vunpack.c.l.b16 %v8003
      %v8517 = vunpack.c.l.b16 %v8004
      %v8518 = vunpack.c.l.b16 %v8005
      %v8519 = vunpack.c.l.b16 %v8006
      %v8520 = vunpack.c.l.b16 %v8007
      %v8521 = vunpack.c.l.b16 %v8008
      %v8522 = vunpack.c.l.b16 %v8009
      %v8523 = vunpack.c.l.b16 %v8010
      %v8524 = vunpack.c.l.b16 %v8011
      %v8525 = vunpack.c.l.b16 %v8012
      %v8526 = vunpack.c.l.b16 %v8013
      %v8527 = vunpack.c.l.b16 %v8014
      %v8528 = vunpack.c.l.b16 %v8015
      %v8529 = vunpack.c.l.b16 %v8016
      %v8530 = vunpack.c.l.b16 %v8017
      %v8531 = vunpack.c.l.b16 %v8018
      %v8532 = vunpack.c.l.b16 %v8019
      %v8533 = vunpack.c.l.b16 %v8020
      %v8534 = vunpack.c.l.b16 %v8021
      %v8535 = vunpack.c.l.b16 %v8022
      %v8536 = vunpack.c.l.b16 %v8023
      %v8537 = vunpack.c.l.b16 %v8024
      %v8538 = vunpack.c.l.b16 %v8025
      %v8539 = vunpack.c.l.b16 %v8026
      %v8540 = vunpack.c.l.b16 %v8027
      %v8541 = vunpack.c.l.b16 %v8028
      %v8542 = vunpack.c.l.b16 %v8029
      %v8543 = vunpack.c.l.b16 %v8030
      %v8544 = vunpack.c.l.b16 %v8031
      %v8545 = vunpack.c.l.b16 %v8032
      %v8546 = vunpack.c.l.b16 %v8033
      %v8547 = vunpack.c.l.b16 %v8034
      %v8548 = vunpack.c.l.b16 %v8035
      %v8549 = vunpack.c.l.b16 %v8036
      %v8550 = vunpack.c.l.b16 %v8037
      %v8551 = vunpack.c.l.b16 %v8038
      %v8552 = vunpack.c.l.b16 %v8039
      %v8553 = vunpack.c.l.b16 %v8040
      %v8554 = vunpack.c.l.b16 %v8041
      %v8555 = vunpack.c.l.b16 %v8042
      %v8556 = vunpack.c.l.b16 %v8043
      %v8557 = vunpack.c.l.b16 %v8044
      %v8558 = vunpack.c.l.b16 %v8045
      %v8559 = vunpack.c.l.b16 %v8046
      %v8560 = vunpack.c.l.b16 %v8047
      %v8561 = vunpack.c.l.b16 %v8048
      %v8562 = vunpack.c.l.b16 %v8049
      %v8563 = vunpack.c.l.b16 %v8050
      %v8564 = vunpack.c.l.b16 %v8051
      %v8565 = vunpack.c.l.b16 %v8052
      %v8566 = vunpack.c.l.b16 %v8053
      %v8567 = vunpack.c.l.b16 %v8054
      %v8568 = vunpack.c.l.b16 %v8055
      %v8569 = vunpack.c.l.b16 %v8056
      %v8570 = vunpack.c.l.b16 %v8057
      %v8571 = vunpack.c.l.b16 %v8058
      %v8572 = vunpack.c.l.b16 %v8059
      %v8573 = vunpack.c.l.b16 %v8060
      %v8574 = vunpack.c.l.b16 %v8061
      %v8575 = vunpack.c.l.b16 %v8062
      %v8576 = vunpack.c.l.b16 %v8063
      %v8577 = vunpack.c.l.b16 %v8064
      %v8578 = vunpack.c.l.b16 %v8065
      %v8579 = vunpack.c.l.b16 %v8066
      %v8580 = vunpack.c.l.b16 %v8067
      %v8581 = vunpack.c.l.b16 %v8068
      %v8582 = vunpack.c.l.b16 %v8069
      %v8583 = vunpack.c.l.b16 %v8070
      %v8584 = vunpack.c.l.b16 %v8071
      %v8585 = vunpack.c.l.b16 %v8072
      %v8586 = vunpack.c.l.b16 %v8073
      %v8587 = vunpack.c.l.b16 %v8074
      %v8588 = vunpack.c.l.b16 %v8075
      %v8589 = vunpack.c.l.b16 %v8076
      %v8590 = vunpack.c.l.b16 %v8077
      %v8591 = vunpack.c.l.b16 %v8078
      %v8592 = vunpack.c.l.b16 %v8079
      %v8593 = vunpack.c.l.b16 %v8080
      %v8594 = vunpack.c.l.b16 %v8081
      %v8595 = vunpack.c.l.b16 %v8082
      %v8596 = vunpack.c.l.b16 %v8083
      %v8597 = vunpack.c.l.b16 %v8084
      %v8598 = vunpack.c.l.b16 %v8085
      %v8599 = vunpack.c.l.b16 %v8086
      %v8600 = vunpack.c.l.b16 %v8087
      %v8601 = vunpack.c.l.b16 %v8088
      %v8602 = vunpack.c.l.b16 %v8089
      %v8603 = vunpack.c.l.b16 %v8090
      %v8604 = vunpack.c.l.b16 %v8091
      %v8605 = vunpack.c.l.b16 %v8092
      %v8606 = vunpack.c.l.b16 %v8093
      %v8607 = vunpack.c.l.b16 %v8094
      %v8608 = vunpack.c.l.b16 %v8095
      %v8609 = vunpack.c.l.b16 %v8096
      %v8610 = vunpack.c.l.b16 %v8097
      %v8611 = vunpack.c.l.b16 %v8098
      %v8612 = vunpack.c.l.b16 %v8099
      %v8613 = vunpack.c.l.b16 %v8100
      %v8614 = vunpack.c.l.b16 %v8101
      %v8615 = vunpack.c.l.b16 %v8102
      %v8616 = vunpack.c.l.b16 %v8103
      %v8617 = vunpack.c.l.b16 %v8104
      %v8618 = vunpack.c.l.b16 %v8105
      %v8619 = vpack.c.b16 %v8364, %v8363
      %v8620 = vpack.c.b16 %v8366, %v8365
      %v8621 = vpack.c.b16 %v8368, %v8367
      %v8622 = vpack.c.b16 %v8370, %v8369
      %v8623 = vpack.c.b16 %v8372, %v8371
      %v8624 = vpack.c.b16 %v8374, %v8373
      %v8625 = vpack.c.b16 %v8376, %v8375
      %v8626 = vpack.c.b16 %v8378, %v8377
      %v8627 = vpack.c.b16 %v8380, %v8379
      %v8628 = vpack.c.b16 %v8382, %v8381
      %v8629 = vpack.c.b16 %v8384, %v8383
      %v8630 = vpack.c.b16 %v8386, %v8385
      %v8631 = vpack.c.b16 %v8388, %v8387
      %v8632 = vpack.c.b16 %v8390, %v8389
      %v8633 = vpack.c.b16 %v8392, %v8391
      %v8634 = vpack.c.b16 %v8394, %v8393
      %v8635 = vpack.c.b16 %v8396, %v8395
      %v8636 = vpack.c.b16 %v8398, %v8397
      %v8637 = vpack.c.b16 %v8400, %v8399
      %v8638 = vpack.c.b16 %v8402, %v8401
      %v8639 = vpack.c.b16 %v8404, %v8403
      %v8640 = vpack.c.b16 %v8406, %v8405
      %v8641 = vpack.c.b16 %v8408, %v8407
      %v8642 = vpack.c.b16 %v8410, %v8409
      %v8643 = vpack.c.b16 %v8412, %v8411
      %v8644 = vpack.c.b16 %v8414, %v8413
      %v8645 = vpack.c.b16 %v8416, %v8415
      %v8646 = vpack.c.b16 %v8418, %v8417
      %v8647 = vpack.c.b16 %v8420, %v8419
      %v8648 = vpack.c.b16 %v8422, %v8421
      %v8649 = vpack.c.b16 %v8424, %v8423
      %v8650 = vpack.c.b16 %v8426, %v8425
      %v8651 = vpack.c.b16 %v8428, %v8427
      %v8652 = vpack.c.b16 %v8430, %v8429
      %v8653 = vpack.c.b16 %v8432, %v8431
      %v8654 = vpack.c.b16 %v8434, %v8433
      %v8655 = vpack.c.b16 %v8436, %v8435
      %v8656 = vpack.c.b16 %v8438, %v8437
      %v8657 = vpack.c.b16 %v8440, %v8439
      %v8658 = vpack.c.b16 %v8442, %v8441
      %v8659 = vpack.c.b16 %v8444, %v8443
      %v8660 = vpack.c.b16 %v8446, %v8445
      %v8661 = vpack.c.b16 %v8448, %v8447
      %v8662 = vpack.c.b16 %v8450, %v8449
      %v8663 = vpack.c.b16 %v8452, %v8451
      %v8664 = vpack.c.b16 %v8454, %v8453
      %v8665 = vpack.c.b16 %v8456, %v8455
      %v8666 = vpack.c.b16 %v8458, %v8457
      %v8667 = vpack.c.b16 %v8460, %v8459
      %v8668 = vpack.c.b16 %v8462, %v8461
      %v8669 = vpack.c.b16 %v8464, %v8463
      %v8670 = vpack.c.b16 %v8466, %v8465
      %v8671 = vpack.c.b16 %v8468, %v8467
      %v8672 = vpack.c.b16 %v8470, %v8469
      %v8673 = vpack.c.b16 %v8472, %v8471
      %v8674 = vpack.c.b16 %v8474, %v8473
      %v8675 = vpack.c.b16 %v8476, %v8475
      %v8676 = vpack.c.b16 %v8478, %v8477
      %v8677 = vpack.c.b16 %v8480, %v8479
      %v8678 = vpack.c.b16 %v8482, %v8481
      %v8679 = vpack.c.b16 %v8484, %v8483
      %v8680 = vpack.c.b16 %v8486, %v8485
      %v8681 = vpack.c.b16 %v8488, %v8487
      %v8682 = vpack.c.b16 %v8490, %v8489
      %v8683 = vpack.c.b16 %v8492, %v8491
      %v8684 = vpack.c.b16 %v8494, %v8493
      %v8685 = vpack.c.b16 %v8496, %v8495
      %v8686 = vpack.c.b16 %v8498, %v8497
      %v8687 = vpack.c.b16 %v8500, %v8499
      %v8688 = vpack.c.b16 %v8502, %v8501
      %v8689 = vpack.c.b16 %v8504, %v8503
      %v8690 = vpack.c.b16 %v8506, %v8505
      %v8691 = vpack.c.b16 %v8508, %v8507
      %v8692 = vpack.c.b16 %v8510, %v8509
      %v8693 = vpack.c.b16 %v8512, %v8511
      %v8694 = vpack.c.b16 %v8514, %v8513
      %v8695 = vpack.c.b16 %v8516, %v8515
      %v8696 = vpack.c.b16 %v8518, %v8517
      %v8697 = vpack.c.b16 %v8520, %v8519
      %v8698 = vpack.c.b16 %v8522, %v8521
      %v8699 = vpack.c.b16 %v8524, %v8523
      %v8700 = vpack.c.b16 %v8526, %v8525
      %v8701 = vpack.c.b16 %v8528, %v8527
      %v8702 = vpack.c.b16 %v8530, %v8529
      %v8703 = vpack.c.b16 %v8532, %v8531
      %v8704 = vpack.c.b16 %v8534, %v8533
      %v8705 = vpack.c.b16 %v8536, %v8535
      %v8706 = vpack.c.b16 %v8538, %v8537
      %v8707 = vpack.c.b16 %v8540, %v8539
      %v8708 = vpack.c.b16 %v8542, %v8541
      %v8709 = vpack.c.b16 %v8544, %v8543
      %v8710 = vpack.c.b16 %v8546, %v8545
      %v8711 = vpack.c.b16 %v8548, %v8547
      %v8712 = vpack.c.b16 %v8550, %v8549
      %v8713 = vpack.c.b16 %v8552, %v8551
      %v8714 = vpack.c.b16 %v8554, %v8553
      %v8715 = vpack.c.b16 %v8556, %v8555
      %v8716 = vpack.c.b16 %v8558, %v8557
      %v8717 = vpack.c.b16 %v8560, %v8559
      %v8718 = vpack.c.b16 %v8562, %v8561
      %v8719 = vpack.c.b16 %v8564, %v8563
      %v8720 = vpack.c.b16 %v8566, %v8565
      %v8721 = vpack.c.b16 %v8568, %v8567
      %v8722 = vpack.c.b16 %v8570, %v8569
      %v8723 = vpack.c.b16 %v8572, %v8571
      %v8724 = vpack.c.b16 %v8574, %v8573
      %v8725 = vpack.c.b16 %v8576, %v8575
      %v8726 = vpack.c.b16 %v8578, %v8577
      %v8727 = vpack.c.b16 %v8580, %v8579
      %v8728 = vpack.c.b16 %v8582, %v8581
      %v8729 = vpack.c.b16 %v8584, %v8583
      %v8730 = vpack.c.b16 %v8586, %v8585
      %v8731 = vpack.c.b16 %v8588, %v8587
      %v8732 = vpack.c.b16 %v8590, %v8589
      %v8733 = vpack.c.b16 %v8592, %v8591
      %v8734 = vpack.c.b16 %v8594, %v8593
      %v8735 = vpack.c.b16 %v8596, %v8595
      %v8736 = vpack.c.b16 %v8598, %v8597
      %v8737 = vpack.c.b16 %v8600, %v8599
      %v8738 = vpack.c.b16 %v8602, %v8601
      %v8739 = vpack.c.b16 %v8604, %v8603
      %v8740 = vpack.c.b16 %v8606, %v8605
      %v8741 = vpack.c.b16 %v8608, %v8607
      %v8742 = vpack.c.b16 %v8610, %v8609
      %v8743 = vpack.c.b16 %v8612, %v8611
      %v8744 = vpack.c.b16 %v8614, %v8613
      %v8745 = vpack.c.b16 %v8616, %v8615
      %v8746 = vpack.c.b16 %v8618, %v8617
      %8875 = vmatprep.subr.bf16.mxu0 0
      %8876 = vmatpush1.bf16.msra.mxu0 %v8626
      %8877 = vmatprep.subr.bf16.mxu0 0
      %8878 = vmatpush1.bf16.msra.mxu0 %v8625
      %8879 = vmatprep.subr.bf16.mxu0 0
      %8880 = vmatpush1.bf16.msra.mxu0 %v8624
      %8881 = vmatprep.subr.bf16.mxu0 0
      %8882 = vmatpush1.bf16.msra.mxu0 %v8623
      %8883 = vmatprep.subr.bf16.mxu0 0
      %8884 = vmatpush1.bf16.msra.mxu0 %v8622
      %8885 = vmatprep.subr.bf16.mxu0 0
      %8886 = vmatpush1.bf16.msra.mxu0 %v8621
      %8887 = vmatprep.subr.bf16.mxu0 0
      %8888 = vmatpush1.bf16.msra.mxu0 %v8620
      %8889 = vmatprep.subr.bf16.mxu0 0
      %8890 = vmatpush1.bf16.msra.mxu0 %v8619
      %8891 = vmatprep.subr.bf16.mxu0 0
      %8892 = vmatpush2.bf16.msra.mxu0 %v8634
      %8893 = vmatprep.subr.bf16.mxu0 0
      %8894 = vmatpush2.bf16.msra.mxu0 %v8633
      %8895 = vmatprep.subr.bf16.mxu0 0
      %8896 = vmatpush2.bf16.msra.mxu0 %v8632
      %8897 = vmatprep.subr.bf16.mxu0 0
      %8898 = vmatpush2.bf16.msra.mxu0 %v8631
      %8899 = vmatprep.subr.bf16.mxu0 0
      %8900 = vmatpush2.bf16.msra.mxu0 %v8630
      %8901 = vmatprep.subr.bf16.mxu0 0
      %8902 = vmatpush2.bf16.msra.mxu0 %v8629
      %8903 = vmatprep.subr.bf16.mxu0 0
      %8904 = vmatpush2.bf16.msra.mxu0 %v8628
      %8905 = vmatprep.subr.bf16.mxu0 0
      %8906 = vmatpush2.bf16.msra.mxu0 %v8627
      %8907 = vmatprep.mubr.bf16.mxu0 %v7835
      %8908 = vmatmul.mubr.bf16.gmra.mxu0 %v7834
      %v8909 = vpop.f32.mrf.mxu0
      %v8910 = vadd.f32 %v8106, %v8909
      %v8911 = vpop.f32.mrf.mxu0
      %v8912 = vpop.f32.mrf.mxu0
      %v8913 = vpop.f32.mrf.mxu0
      %8914 = vdwg.mxu0
      %8915 = vmatprep.subr.bf16.mxu0 0
      %8916 = vmatpush1.bf16.msra.mxu0 %v8642
      %8917 = vmatprep.subr.bf16.mxu0 0
      %8918 = vmatpush1.bf16.msra.mxu0 %v8641
      %8919 = vmatprep.subr.bf16.mxu0 0
      %8920 = vmatpush1.bf16.msra.mxu0 %v8640
      %8921 = vmatprep.subr.bf16.mxu0 0
      %8922 = vmatpush1.bf16.msra.mxu0 %v8639
      %8923 = vmatprep.subr.bf16.mxu0 0
      %8924 = vmatpush1.bf16.msra.mxu0 %v8638
      %8925 = vmatprep.subr.bf16.mxu0 0
      %8926 = vmatpush1.bf16.msra.mxu0 %v8637
      %8927 = vmatprep.subr.bf16.mxu0 0
      %8928 = vmatpush1.bf16.msra.mxu0 %v8636
      %8929 = vmatprep.subr.bf16.mxu0 0
      %8930 = vmatpush1.bf16.msra.mxu0 %v8635
      %8931 = vmatprep.subr.bf16.mxu0 0
      %8932 = vmatpush2.bf16.msra.mxu0 %v8650
      %8933 = vmatprep.subr.bf16.mxu0 0
      %8934 = vmatpush2.bf16.msra.mxu0 %v8649
      %8935 = vmatprep.subr.bf16.mxu0 0
      %8936 = vmatpush2.bf16.msra.mxu0 %v8648
      %8937 = vmatprep.subr.bf16.mxu0 0
      %8938 = vmatpush2.bf16.msra.mxu0 %v8647
      %8939 = vmatprep.subr.bf16.mxu0 0
      %8940 = vmatpush2.bf16.msra.mxu0 %v8646
      %8941 = vmatprep.subr.bf16.mxu0 0
      %8942 = vmatpush2.bf16.msra.mxu0 %v8645
      %8943 = vmatprep.subr.bf16.mxu0 0
      %8944 = vmatpush2.bf16.msra.mxu0 %v8644
      %8945 = vmatprep.subr.bf16.mxu0 0
      %8946 = vmatpush2.bf16.msra.mxu0 %v8643
      %8947 = vmatprep.mubr.bf16.mxu0 %v7837
      %8948 = vmatmul.mubr.bf16.gmra.mxu0 %v7836
      %v8949 = vpop.f32.mrf.mxu0
      %v8950 = vadd.f32 %v8910, %v8949
      %v8951 = vpop.f32.mrf.mxu0
      %v8952 = vpop.f32.mrf.mxu0
      %v8953 = vpop.f32.mrf.mxu0
      %8954 = vdwg.mxu0
      %8955 = vmatprep.subr.bf16.mxu0 0
      %8956 = vmatpush1.bf16.msra.mxu0 %v8658
      %8957 = vmatprep.subr.bf16.mxu0 0
      %8958 = vmatpush1.bf16.msra.mxu0 %v8657
      %8959 = vmatprep.subr.bf16.mxu0 0
      %8960 = vmatpush1.bf16.msra.mxu0 %v8656
      %8961 = vmatprep.subr.bf16.mxu0 0
      %8962 = vmatpush1.bf16.msra.mxu0 %v8655
      %8963 = vmatprep.subr.bf16.mxu0 0
      %8964 = vmatpush1.bf16.msra.mxu0 %v8654
      %8965 = vmatprep.subr.bf16.mxu0 0
      %8966 = vmatpush1.bf16.msra.mxu0 %v8653
      %8967 = vmatprep.subr.bf16.mxu0 0
      %8968 = vmatpush1.bf16.msra.mxu0 %v8652
      %8969 = vmatprep.subr.bf16.mxu0 0
      %8970 = vmatpush1.bf16.msra.mxu0 %v8651
      %8971 = vmatprep.subr.bf16.mxu0 0
      %8972 = vmatpush2.bf16.msra.mxu0 %v8666
      %8973 = vmatprep.subr.bf16.mxu0 0
      %8974 = vmatpush2.bf16.msra.mxu0 %v8665
      %8975 = vmatprep.subr.bf16.mxu0 0
      %8976 = vmatpush2.bf16.msra.mxu0 %v8664
      %8977 = vmatprep.subr.bf16.mxu0 0
      %8978 = vmatpush2.bf16.msra.mxu0 %v8663
      %8979 = vmatprep.subr.bf16.mxu0 0
      %8980 = vmatpush2.bf16.msra.mxu0 %v8662
      %8981 = vmatprep.subr.bf16.mxu0 0
      %8982 = vmatpush2.bf16.msra.mxu0 %v8661
      %8983 = vmatprep.subr.bf16.mxu0 0
      %8984 = vmatpush2.bf16.msra.mxu0 %v8660
      %8985 = vmatprep.subr.bf16.mxu0 0
      %8986 = vmatpush2.bf16.msra.mxu0 %v8659
      %8987 = vmatprep.mubr.bf16.mxu0 %v7839
      %8988 = vmatmul.mubr.bf16.gmra.mxu0 %v7838
      %v8989 = vpop.f32.mrf.mxu0
      %v8990 = vadd.f32 %v8950, %v8989
      %v8991 = vpop.f32.mrf.mxu0
      %v8992 = vpop.f32.mrf.mxu0
      %v8993 = vpop.f32.mrf.mxu0
      %8994 = vdwg.mxu0
      %8995 = vmatprep.subr.bf16.mxu0 0
      %8996 = vmatpush1.bf16.msra.mxu0 %v8674
      %8997 = vmatprep.subr.bf16.mxu0 0
      %8998 = vmatpush1.bf16.msra.mxu0 %v8673
      %8999 = vmatprep.subr.bf16.mxu0 0
      %9000 = vmatpush1.bf16.msra.mxu0 %v8672
      %9001 = vmatprep.subr.bf16.mxu0 0
      %9002 = vmatpush1.bf16.msra.mxu0 %v8671
      %9003 = vmatprep.subr.bf16.mxu0 0
      %9004 = vmatpush1.bf16.msra.mxu0 %v8670
      %9005 = vmatprep.subr.bf16.mxu0 0
      %9006 = vmatpush1.bf16.msra.mxu0 %v8669
      %9007 = vmatprep.subr.bf16.mxu0 0
      %9008 = vmatpush1.bf16.msra.mxu0 %v8668
      %9009 = vmatprep.subr.bf16.mxu0 0
      %9010 = vmatpush1.bf16.msra.mxu0 %v8667
      %9011 = vmatprep.subr.bf16.mxu0 0
      %9012 = vmatpush2.bf16.msra.mxu0 %v8682
      %9013 = vmatprep.subr.bf16.mxu0 0
      %9014 = vmatpush2.bf16.msra.mxu0 %v8681
      %9015 = vmatprep.subr.bf16.mxu0 0
      %9016 = vmatpush2.bf16.msra.mxu0 %v8680
      %9017 = vmatprep.subr.bf16.mxu0 0
      %9018 = vmatpush2.bf16.msra.mxu0 %v8679
      %9019 = vmatprep.subr.bf16.mxu0 0
      %9020 = vmatpush2.bf16.msra.mxu0 %v8678
      %9021 = vmatprep.subr.bf16.mxu0 0
      %9022 = vmatpush2.bf16.msra.mxu0 %v8677
      %9023 = vmatprep.subr.bf16.mxu0 0
      %9024 = vmatpush2.bf16.msra.mxu0 %v8676
      %9025 = vmatprep.subr.bf16.mxu0 0
      %9026 = vmatpush2.bf16.msra.mxu0 %v8675
      %9027 = vmatprep.mubr.bf16.mxu0 %v7841
      %9028 = vmatmul.mubr.bf16.gmra.mxu0 %v7840
      %v9029 = vpop.f32.mrf.mxu0
      %v9030 = vadd.f32 %v8990, %v9029
      %v9031 = vpop.f32.mrf.mxu0
      %v9032 = vpop.f32.mrf.mxu0
      %v9033 = vpop.f32.mrf.mxu0
      %9034 = vdwg.mxu0
      %9035 = vmatprep.subr.bf16.mxu0 0
      %9036 = vmatpush1.bf16.msra.mxu0 %v8690
      %9037 = vmatprep.subr.bf16.mxu0 0
      %9038 = vmatpush1.bf16.msra.mxu0 %v8689
      %9039 = vmatprep.subr.bf16.mxu0 0
      %9040 = vmatpush1.bf16.msra.mxu0 %v8688
      %9041 = vmatprep.subr.bf16.mxu0 0
      %9042 = vmatpush1.bf16.msra.mxu0 %v8687
      %9043 = vmatprep.subr.bf16.mxu0 0
      %9044 = vmatpush1.bf16.msra.mxu0 %v8686
      %9045 = vmatprep.subr.bf16.mxu0 0
      %9046 = vmatpush1.bf16.msra.mxu0 %v8685
      %9047 = vmatprep.subr.bf16.mxu0 0
      %9048 = vmatpush1.bf16.msra.mxu0 %v8684
      %9049 = vmatprep.subr.bf16.mxu0 0
      %9050 = vmatpush1.bf16.msra.mxu0 %v8683
      %9051 = vmatprep.subr.bf16.mxu0 0
      %9052 = vmatpush2.bf16.msra.mxu0 %v8698
      %9053 = vmatprep.subr.bf16.mxu0 0
      %9054 = vmatpush2.bf16.msra.mxu0 %v8697
      %9055 = vmatprep.subr.bf16.mxu0 0
      %9056 = vmatpush2.bf16.msra.mxu0 %v8696
      %9057 = vmatprep.subr.bf16.mxu0 0
      %9058 = vmatpush2.bf16.msra.mxu0 %v8695
      %9059 = vmatprep.subr.bf16.mxu0 0
      %9060 = vmatpush2.bf16.msra.mxu0 %v8694
      %9061 = vmatprep.subr.bf16.mxu0 0
      %9062 = vmatpush2.bf16.msra.mxu0 %v8693
      %9063 = vmatprep.subr.bf16.mxu0 0
      %9064 = vmatpush2.bf16.msra.mxu0 %v8692
      %9065 = vmatprep.subr.bf16.mxu0 0
      %9066 = vmatpush2.bf16.msra.mxu0 %v8691
      %9067 = vmatprep.mubr.bf16.mxu0 %v7843
      %9068 = vmatmul.mubr.bf16.gmra.mxu0 %v7842
      %v9069 = vpop.f32.mrf.mxu0
      %v9070 = vadd.f32 %v9030, %v9069
      %v9071 = vpop.f32.mrf.mxu0
      %v9072 = vpop.f32.mrf.mxu0
      %v9073 = vpop.f32.mrf.mxu0
      %9074 = vdwg.mxu0
      %9075 = vmatprep.subr.bf16.mxu0 0
      %9076 = vmatpush1.bf16.msra.mxu0 %v8706
      %9077 = vmatprep.subr.bf16.mxu0 0
      %9078 = vmatpush1.bf16.msra.mxu0 %v8705
      %9079 = vmatprep.subr.bf16.mxu0 0
      %9080 = vmatpush1.bf16.msra.mxu0 %v8704
      %9081 = vmatprep.subr.bf16.mxu0 0
      %9082 = vmatpush1.bf16.msra.mxu0 %v8703
      %9083 = vmatprep.subr.bf16.mxu0 0
      %9084 = vmatpush1.bf16.msra.mxu0 %v8702
      %9085 = vmatprep.subr.bf16.mxu0 0
      %9086 = vmatpush1.bf16.msra.mxu0 %v8701
      %9087 = vmatprep.subr.bf16.mxu0 0
      %9088 = vmatpush1.bf16.msra.mxu0 %v8700
      %9089 = vmatprep.subr.bf16.mxu0 0
      %9090 = vmatpush1.bf16.msra.mxu0 %v8699
      %9091 = vmatprep.subr.bf16.mxu0 0
      %9092 = vmatpush2.bf16.msra.mxu0 %v8714
      %9093 = vmatprep.subr.bf16.mxu0 0
      %9094 = vmatpush2.bf16.msra.mxu0 %v8713
      %9095 = vmatprep.subr.bf16.mxu0 0
      %9096 = vmatpush2.bf16.msra.mxu0 %v8712
      %9097 = vmatprep.subr.bf16.mxu0 0
      %9098 = vmatpush2.bf16.msra.mxu0 %v8711
      %9099 = vmatprep.subr.bf16.mxu0 0
      %9100 = vmatpush2.bf16.msra.mxu0 %v8710
      %9101 = vmatprep.subr.bf16.mxu0 0
      %9102 = vmatpush2.bf16.msra.mxu0 %v8709
      %9103 = vmatprep.subr.bf16.mxu0 0
      %9104 = vmatpush2.bf16.msra.mxu0 %v8708
      %9105 = vmatprep.subr.bf16.mxu0 0
      %9106 = vmatpush2.bf16.msra.mxu0 %v8707
      %9107 = vmatprep.mubr.bf16.mxu0 %v7845
      %9108 = vmatmul.mubr.bf16.gmra.mxu0 %v7844
      %v9109 = vpop.f32.mrf.mxu0
      %v9110 = vadd.f32 %v9070, %v9109
      %v9111 = vpop.f32.mrf.mxu0
      %v9112 = vpop.f32.mrf.mxu0
      %v9113 = vpop.f32.mrf.mxu0
      %9114 = vdwg.mxu0
      %9115 = vmatprep.subr.bf16.mxu0 0
      %9116 = vmatpush1.bf16.msra.mxu0 %v8722
      %9117 = vmatprep.subr.bf16.mxu0 0
      %9118 = vmatpush1.bf16.msra.mxu0 %v8721
      %9119 = vmatprep.subr.bf16.mxu0 0
      %9120 = vmatpush1.bf16.msra.mxu0 %v8720
      %9121 = vmatprep.subr.bf16.mxu0 0
      %9122 = vmatpush1.bf16.msra.mxu0 %v8719
      %9123 = vmatprep.subr.bf16.mxu0 0
      %9124 = vmatpush1.bf16.msra.mxu0 %v8718
      %9125 = vmatprep.subr.bf16.mxu0 0
      %9126 = vmatpush1.bf16.msra.mxu0 %v8717
      %9127 = vmatprep.subr.bf16.mxu0 0
      %9128 = vmatpush1.bf16.msra.mxu0 %v8716
      %9129 = vmatprep.subr.bf16.mxu0 0
      %9130 = vmatpush1.bf16.msra.mxu0 %v8715
      %9131 = vmatprep.subr.bf16.mxu0 0
      %9132 = vmatpush2.bf16.msra.mxu0 %v8730
      %9133 = vmatprep.subr.bf16.mxu0 0
      %9134 = vmatpush2.bf16.msra.mxu0 %v8729
      %9135 = vmatprep.subr.bf16.mxu0 0
      %9136 = vmatpush2.bf16.msra.mxu0 %v8728
      %9137 = vmatprep.subr.bf16.mxu0 0
      %9138 = vmatpush2.bf16.msra.mxu0 %v8727
      %9139 = vmatprep.subr.bf16.mxu0 0
      %9140 = vmatpush2.bf16.msra.mxu0 %v8726
      %9141 = vmatprep.subr.bf16.mxu0 0
      %9142 = vmatpush2.bf16.msra.mxu0 %v8725
      %9143 = vmatprep.subr.bf16.mxu0 0
      %9144 = vmatpush2.bf16.msra.mxu0 %v8724
      %9145 = vmatprep.subr.bf16.mxu0 0
      %9146 = vmatpush2.bf16.msra.mxu0 %v8723
      %9147 = vmatprep.mubr.bf16.mxu0 %v7847
      %9148 = vmatmul.mubr.bf16.gmra.mxu0 %v7846
      %v9149 = vpop.f32.mrf.mxu0
      %v9150 = vadd.f32 %v9110, %v9149
      %v9151 = vpop.f32.mrf.mxu0
      %v9152 = vpop.f32.mrf.mxu0
      %v9153 = vpop.f32.mrf.mxu0
      %9154 = vdwg.mxu0
      %9155 = vmatprep.subr.bf16.mxu0 0
      %9156 = vmatpush1.bf16.msra.mxu0 %v8738
      %9157 = vmatprep.subr.bf16.mxu0 0
      %9158 = vmatpush1.bf16.msra.mxu0 %v8737
      %9159 = vmatprep.subr.bf16.mxu0 0
      %9160 = vmatpush1.bf16.msra.mxu0 %v8736
      %9161 = vmatprep.subr.bf16.mxu0 0
      %9162 = vmatpush1.bf16.msra.mxu0 %v8735
      %9163 = vmatprep.subr.bf16.mxu0 0
      %9164 = vmatpush1.bf16.msra.mxu0 %v8734
      %9165 = vmatprep.subr.bf16.mxu0 0
      %9166 = vmatpush1.bf16.msra.mxu0 %v8733
      %9167 = vmatprep.subr.bf16.mxu0 0
      %9168 = vmatpush1.bf16.msra.mxu0 %v8732
      %9169 = vmatprep.subr.bf16.mxu0 0
      %9170 = vmatpush1.bf16.msra.mxu0 %v8731
      %9171 = vmatprep.subr.bf16.mxu0 0
      %9172 = vmatpush2.bf16.msra.mxu0 %v8746
      %9173 = vmatprep.subr.bf16.mxu0 0
      %9174 = vmatpush2.bf16.msra.mxu0 %v8745
      %9175 = vmatprep.subr.bf16.mxu0 0
      %9176 = vmatpush2.bf16.msra.mxu0 %v8744
      %9177 = vmatprep.subr.bf16.mxu0 0
      %9178 = vmatpush2.bf16.msra.mxu0 %v8743
      %9179 = vmatprep.subr.bf16.mxu0 0
      %9180 = vmatpush2.bf16.msra.mxu0 %v8742
      %9181 = vmatprep.subr.bf16.mxu0 0
      %9182 = vmatpush2.bf16.msra.mxu0 %v8741
      %9183 = vmatprep.subr.bf16.mxu0 0
      %9184 = vmatpush2.bf16.msra.mxu0 %v8740
      %9185 = vmatprep.subr.bf16.mxu0 0
      %9186 = vmatpush2.bf16.msra.mxu0 %v8739
      %9187 = vmatprep.mubr.bf16.mxu0 %v7849
      %9188 = vmatmul.mubr.bf16.gmra.mxu0 %v7848
      %v9189 = vpop.f32.mrf.mxu0
      %v9190 = vadd.f32 %v9150, %v9189
      %v9191 = vpop.f32.mrf.mxu0
      %v9192 = vpop.f32.mrf.mxu0
      %v9193 = vpop.f32.mrf.mxu0
      %9194 = vdwg.mxu0
      %v9195 = vpack.c.bf16 %v9190, %v9190
      %vm9196 = vcmask 1040384
      %vm9197 = vsmask.f32 256
      %vm9198 = vmand %vm9196, %vm9197
      %v9199 = vld [vmem:[%s217] sm:$0x1]
      %v9200 = vsel %vm9198, %v9195, %v9199
      %9201 = vst [vmem:[%s217] sm:$0x1] %v9200
      %p9202 = scmp.lt.s32.totalorder %s16, 1
      %s9203 = scalar_select %p9202, %s16, 1
      %s9204 = scalar_lea.vmem %s5, %s9203
      // Predicated region
      $region41: #{custom_model_forward.1} parent=39 // pred_check
        %p9205 = pneg %p144
      $region42: #{custom_model_forward.1} parent=39 // pred_check_branch
        %9207 = sbr.rel (%p9205) target = $region44
      $region43: #{custom_model_forward.1} parent=39 // pred_region
        _
      $region44: #{custom_model_forward.1} parent=39 // pred_fallthru
        _
    $region40: #{custom_model_forward.1} parent=5 // pred_fallthru
      _
    %p9208 = scmp.le.s32.totalorder 2, %s11
    // Predicated region
    $region45: #{custom_model_forward.1} parent=5 // pred_check
      %p9209 = pneg %p9208
    $region46: #{custom_model_forward.1} parent=5 // pred_check_branch
      %9211 = sbr.rel (%p9209) target = $region48
    $region47: #{custom_model_forward.1} parent=5 // pred_region
      %s9212 = ssub.s32 %s11, 2
      // Predicated region
      $region49: #{custom_model_forward.1} parent=47 // pred_check
        %p9213 = pneg %p150
      $region50: #{custom_model_forward.1} parent=47 // pred_check_branch
        %9215 = sbr.rel (%p9213) target = $region52
      $region51: #{custom_model_forward.1} parent=47 // pred_region
        %p9216 = scmp.lt.s32.totalorder %s17, 1
        %s9217 = scalar_select %p9216, %s17, 1
        %s9218 = scalar_lea.vmem %s5, %s9217
      $region52: #{custom_model_forward.1} parent=47 // pred_fallthru
        _
    $region48: #{custom_model_forward.1} parent=5 // pred_fallthru
      _
  $region6: #{custom_model_forward.1} parent=0 // loop_footer
    %s15 = sadd.s32 1, %s11
  $region7: #{custom_model_forward.1} parent=0 // loop_footer_branch
    %10 = sbr.rel target = $region3
  $region8: #{custom_model_forward.1} parent=0 // loop_exit
    _

</llo_original>
